<compile_context>
chip_gen: v7x
topology: tpu7x:2x2x1
jax: 0.10.0
libtpu: 0.0.40
codegen_flags: <defaults>
</compile_context>

<pallas_src>
import jax
import jax.numpy as jnp
from jax.experimental import pallas as pl
from jax.experimental.pallas import tpu as pltpu

_VMEM_LIMIT = 32 * 1024 * 1024     # safe on v5e/v6e/v7x; raise on v5e/v6e for long T
_MATMUL_DTYPE = jnp.bfloat16       # MXU operand dtype; accumulation stays f32
_ACT_DTYPE = jnp.bfloat16          # HBM dtype for pure intermediates (h, h3)


def _cp(semantics):
    return pltpu.CompilerParams(dimension_semantics=semantics,
                                vmem_limit_bytes=_VMEM_LIMIT)


# --------------------------- BN1 statistics (input x) ----------------------- #

def _x_stats_kernel(x_ref, sum_ref, sq_ref):
    """Per-batch, per-channel (sum, sumsq) partials — no shared accumulator, so
    the batch grid axis can be 'parallel' (v7x megacore friendly)."""
    x = x_ref[0].astype(jnp.float32)                      # (T, C)
    sum_ref[0] = jnp.sum(x, axis=0, keepdims=True)
    sq_ref[0] = jnp.sum(x * x, axis=0, keepdims=True)


def x_stats(x):
    B, T, C = x.shape
    return pl.pallas_call(
        _x_stats_kernel,
        grid=(B,),
        in_specs=[pl.BlockSpec((1, T, C), lambda b: (b, 0, 0))],
        out_specs=(pl.BlockSpec((1, 1, C), lambda b: (b, 0, 0)),
                   pl.BlockSpec((1, 1, C), lambda b: (b, 0, 0))),
        out_shape=(jax.ShapeDtypeStruct((B, 1, C), jnp.float32),
                   jax.ShapeDtypeStruct((B, 1, C), jnp.float32)),
        compiler_params=_cp(("parallel",)),
    )(x)


def cbn_scale_shift(sum_parts, sq_parts, count, cond, wg, wb, eps=1e-5):
    """Fold train-mode conditional BN into per-(batch, channel) scale/shift.

    y = x * scale + shift with gamma = 1 + cond @ Wg, beta = cond @ Wb.  The
    per-batch partial stats (produced inside the activation-producing kernels)
    are reduced here; this whole function is tiny (O(C), O(D*C)) XLA glue."""
    s = jnp.sum(sum_parts, axis=(0, 1))[None, :]          # (1, C)
    q = jnp.sum(sq_parts, axis=(0, 1))[None, :]
    mean = s / count
    var = jnp.maximum(q / count - mean * mean, 0.0)       # clamp: cancellation-safe
    inv = jax.lax.rsqrt(var + eps)
    gamma = 1.0 + cond.astype(jnp.float32) @ wg           # (N, C)
    beta = cond.astype(jnp.float32) @ wb
    scale = gamma * inv
    shift = beta - scale * mean
    return scale[:, None, :], shift[:, None, :]           # (N, 1, C)


# ------------- head kernel: BN1+ReLU+up1∘conv1  and  up_BN∘conv_BN ----------- #
#
# ConvTranspose1d(k=2, s=2) followed by Conv1d(k=3, pad=1) is linear, so the
# pair is composed into two K=2C matmuls acting directly on x:
#   out_even[t] = [x[t-1] | x[t]] @ [A1 Wp ; A0 Wc + A1 Wn] + b  (- ba Wp at t=0)
#   out_odd[t]  = [x[t] | x[t+1]] @ [A0 Wp + A1 Wc ; A0 Wn] + b  (- ba Wn at t=T-1)
# where A0/A1 are the convT taps (bias ba) and Wp/Wc/Wn the conv taps (bias bc),
# b = bc + ba (Wp + Wc + Wn).  out_even/out_odd are time rows 2t / 2t+1 of the
# upsampled-and-convolved signal; they are stored side-by-side as (T, 2C) and
# the (B, T, 2C) -> (B, 2T, C) interleave is a free contiguous reshape outside.

def _head_kernel(x_ref, sc_ref, sh_ref, wme_ref, wmo_ref, bm_ref,
                 wre_ref, wro_ref, br_ref,
                 h_ref, slab_ref, hsum_ref, hsq_ref, fsum_ref, fsq_ref):
    T = x_ref.shape[1]
    C = x_ref.shape[2]
    x = x_ref[0].astype(jnp.float32)                      # (T, C)
    t_col = jax.lax.broadcasted_iota(jnp.int32, (T, 1), 0)

    def up_conv(z, we_ref, wo_ref, b_ref):
        zb = z.astype(_MATMUL_DTYPE)
        z_prev = jnp.where(t_col > 0, pltpu.roll(z, shift=1, axis=0),
                           0.0).astype(_MATMUL_DTYPE)
        z_next = jnp.where(t_col < T - 1, pltpu.roll(z, shift=T - 1, axis=0),
                           0.0).astype(_MATMUL_DTYPE)
        oe = jnp.dot(jnp.concatenate([z_prev, zb], axis=1), we_ref[...],
                     preferred_element_type=jnp.float32)          # (T, C)
        oo = jnp.dot(jnp.concatenate([zb, z_next], axis=1), wo_ref[...],
                     preferred_element_type=jnp.float32)
        b = b_ref[...].astype(jnp.float32)                        # (3, C)
        oe = oe + b[0:1] - jnp.where(t_col == 0, 1.0, 0.0) * b[1:2]
        oo = oo + b[0:1] - jnp.where(t_col == T - 1, 1.0, 0.0) * b[2:3]
        return oe, oo

    # ---- main branch: conditional BN scale/shift + ReLU, then up1∘conv1 -----
    xm = jnp.maximum(x * sc_ref[0] + sh_ref[0], 0.0)
    he, ho = up_conv(xm, wme_ref, wmo_ref, bm_ref)
    h_ref[0, :, :C] = he.astype(h_ref.dtype)              # lane-aligned halves
    h_ref[0, :, C:] = ho.astype(h_ref.dtype)
    hsum_ref[0] = (jnp.sum(he, axis=0, keepdims=True)
                   + jnp.sum(ho, axis=0, keepdims=True))   # BN2 partials
    hsq_ref[0] = (jnp.sum(he * he, axis=0, keepdims=True)
                  + jnp.sum(ho * ho, axis=0, keepdims=True))

    # ---- residual branch: up_BN∘conv_BN on raw x, written into the slab -----
    fe, fo = up_conv(x, wre_ref, wro_ref, br_ref)
    slab_ref[0, :, :C] = fe.astype(slab_ref.dtype)
    slab_ref[0, :, C:] = fo.astype(slab_ref.dtype)
    fsum_ref[0] = (jnp.sum(fe, axis=0, keepdims=True)
                   + jnp.sum(fo, axis=0, keepdims=True))   # BN3 partials (feat part)
    fsq_ref[0] = (jnp.sum(fe * fe, axis=0, keepdims=True)
                  + jnp.sum(fo * fo, axis=0, keepdims=True))


def head_call(x, sc1, sh1, wme, wmo, bm, wre, wro, br):
    B, T, C = x.shape
    w_spec = pl.BlockSpec((2 * C, C), lambda b: (0, 0))
    b_spec = pl.BlockSpec((3, C), lambda b: (0, 0))
    v_spec = pl.BlockSpec((1, 1, C), lambda b: (b, 0, 0))
    return pl.pallas_call(
        _head_kernel,
        grid=(B,),
        in_specs=[pl.BlockSpec((1, T, C), lambda b: (b, 0, 0)),
                  v_spec, v_spec, w_spec, w_spec, b_spec, w_spec, w_spec, b_spec],
        out_specs=(
            pl.BlockSpec((1, T, 2 * C), lambda b: (b, 0, 0)),          # h (folded)
            pl.BlockSpec((1, T, 2 * C), lambda b: (3 * B + b, 0, 0)),  # slab rows [3B,4B)
            v_spec, v_spec, v_spec, v_spec),
        out_shape=(
            jax.ShapeDtypeStruct((B, T, 2 * C), _ACT_DTYPE),
            jax.ShapeDtypeStruct((4 * B, T, 2 * C), jnp.float32),
            jax.ShapeDtypeStruct((B, 1, C), jnp.float32),
            jax.ShapeDtypeStruct((B, 1, C), jnp.float32),
            jax.ShapeDtypeStruct((B, 1, C), jnp.float32),
            jax.ShapeDtypeStruct((B, 1, C), jnp.float32)),
        compiler_params=_cp(("parallel",)),
    )(x, sc1, sh1, wme, wmo, bm, wre, wro, br)


# --------------- fused BN scale/shift + ReLU + Conv1d(k=3, pad=1) ------------ #
# 'same' padding handled in-kernel (pltpu.roll on the XLU + (T,1) boundary
# masks); the three taps are packed into a single K=3C MXU contraction.

def _conv_body(x_ref, sc_ref, sh_ref, w_ref, b_ref, o_ref, sum_ref, sq_ref):
    Tt = x_ref.shape[1]
    x = x_ref[0].astype(jnp.float32)                      # (Tt, C)
    xn = jnp.maximum(x * sc_ref[0] + sh_ref[0], 0.0)      # CBN scale/shift + ReLU
    t_col = jax.lax.broadcasted_iota(jnp.int32, (Tt, 1), 0)
    xb = xn.astype(_MATMUL_DTYPE)
    x_prev = jnp.where(t_col > 0, pltpu.roll(xn, shift=1, axis=0),
                       0.0).astype(_MATMUL_DTYPE)
    x_next = jnp.where(t_col < Tt - 1, pltpu.roll(xn, shift=Tt - 1, axis=0),
                       0.0).astype(_MATMUL_DTYPE)
    y = jnp.dot(jnp.concatenate([x_prev, xb, x_next], axis=1), w_ref[...],
                preferred_element_type=jnp.float32)       # (Tt, 3C) @ (3C, C)
    y = y + b_ref[...].astype(jnp.float32)
    o_ref[0] = y.astype(o_ref.dtype)
    if sum_ref is not None:                               # BN partials for the consumer
        sum_ref[0] = jnp.sum(y, axis=0, keepdims=True)
        sq_ref[0] = jnp.sum(y * y, axis=0, keepdims=True)


def _conv_stats_alias_kernel(x_ref, sc_ref, sh_ref, w_ref, b_ref, dst_ref,
                             o_ref, sum_ref, sq_ref):
    del dst_ref   # aliased destination slab: preserved via aliasing, never read
    _conv_body(x_ref, sc_ref, sh_ref, w_ref, b_ref, o_ref, sum_ref, sq_ref)


def _conv_stats_kernel(x_ref, sc_ref, sh_ref, w_ref, b_ref, o_ref, sum_ref, sq_ref):
    _conv_body(x_ref, sc_ref, sh_ref, w_ref, b_ref, o_ref, sum_ref, sq_ref)


def _conv_alias_kernel(x_ref, sc_ref, sh_ref, w_ref, b_ref, dst_ref, o_ref):
    del dst_ref
    _conv_body(x_ref, sc_ref, sh_ref, w_ref, b_ref, o_ref, None, None)


def _conv_in_specs(T2, C):
    return [pl.BlockSpec((1, T2, C), lambda i: (i, 0, 0)),
            pl.BlockSpec((1, 1, C), lambda i: (i, 0, 0)),
            pl.BlockSpec((1, 1, C), lambda i: (i, 0, 0)),
            pl.BlockSpec((3 * C, C), lambda i: (0, 0)),
            pl.BlockSpec((1, C), lambda i: (0, 0))]


def conv2_into_slab(x, sc, sh, w, b, dst, *, out_off):
    """BN+ReLU+conv2, written in place into slab rows [out_off, out_off+B);
    also emits per-batch BN3 partial stats of its output."""
    Bn, T2, C = x.shape
    return pl.pallas_call(
        _conv_stats_alias_kernel,
        grid=(Bn,),
        in_specs=_conv_in_specs(T2, C) + [pl.BlockSpec(memory_space=pl.ANY)],
        out_specs=(pl.BlockSpec((1, T2, C), lambda i: (i + out_off, 0, 0)),
                   pl.BlockSpec((1, 1, C), lambda i: (i, 0, 0)),
                   pl.BlockSpec((1, 1, C), lambda i: (i, 0, 0))),
        out_shape=(jax.ShapeDtypeStruct(dst.shape, dst.dtype),
                   jax.ShapeDtypeStruct((Bn, 1, C), jnp.float32),
                   jax.ShapeDtypeStruct((Bn, 1, C), jnp.float32)),
        input_output_aliases={5: 0},
        compiler_params=_cp(("parallel",)),
    )(x, sc, sh, w, b, dst)


def conv3_with_stats(x, sc, sh, w, b, *, in_off, n_batch):
    """BN+ReLU+conv3 reading slab rows [in_off, in_off+n_batch); emits BN4 partials."""
    _, T2, C = x.shape
    specs = _conv_in_specs(T2, C)
    specs[0] = pl.BlockSpec((1, T2, C), lambda i: (i + in_off, 0, 0))
    return pl.pallas_call(
        _conv_stats_kernel,
        grid=(n_batch,),
        in_specs=specs,
        out_specs=(pl.BlockSpec((1, T2, C), lambda i: (i, 0, 0)),
                   pl.BlockSpec((1, 1, C), lambda i: (i, 0, 0)),
                   pl.BlockSpec((1, 1, C), lambda i: (i, 0, 0))),
        out_shape=(jax.ShapeDtypeStruct((n_batch, T2, C), _ACT_DTYPE),
                   jax.ShapeDtypeStruct((n_batch, 1, C), jnp.float32),
                   jax.ShapeDtypeStruct((n_batch, 1, C), jnp.float32)),
        compiler_params=_cp(("parallel",)),
    )(x, sc, sh, w, b)


def conv4_into_slab(x, sc, sh, w, b, dst, *, out_off):
    """BN+ReLU+conv4 written in place into slab rows [out_off, out_off+2B)."""
    Bn, T2, C = x.shape
    return pl.pallas_call(
        _conv_alias_kernel,
        grid=(Bn,),
        in_specs=_conv_in_specs(T2, C) + [pl.BlockSpec(memory_space=pl.ANY)],
        out_specs=pl.BlockSpec((1, T2, C), lambda i: (i + out_off, 0, 0)),
        out_shape=jax.ShapeDtypeStruct(dst.shape, dst.dtype),
        input_output_aliases={5: 0},
        compiler_params=_cp(("parallel",)),
    )(x, sc, sh, w, b, dst)


# ------------------------------ weight folding ------------------------------ #

def _compose_upconv(up_w, up_b, cv_w, cv_b):
    """Compose ConvTranspose1d(k=2,s=2) taps (A0,A1,ba) with Conv1d(k=3,pad=1)
    taps (Wp,Wc,Wn,bc) into per-phase (even/odd time) K=2C matmul weights."""
    a0, a1 = up_w[0], up_w[1]
    wp, wc, wn = cv_w[0], cv_w[1], cv_w[2]
    w_even = jnp.concatenate([a1 @ wp, a0 @ wc + a1 @ wn], axis=0)   # (2C, C)
    w_odd = jnp.concatenate([a0 @ wp + a1 @ wc, a0 @ wn], axis=0)    # (2C, C)
    b_full = cv_b + up_b @ (wp + wc + wn)                            # (1, C)
    bias = jnp.concatenate([b_full, up_b @ wp, up_b @ wn], axis=0)   # (3, C)
    return (w_even.astype(_MATMUL_DTYPE), w_odd.astype(_MATMUL_DTYPE),
            bias.astype(jnp.float32))


def _stack_conv(cv_w):
    # (3, C, C) taps -> (3C, C): one K=3C MXU contraction per conv.
    k, cin, cout = cv_w.shape
    return cv_w.reshape(k * cin, cout).astype(_MATMUL_DTYPE)


# ------------------------------ GBlock forward ------------------------------ #

def gblock_forward(x, cond, p):
    B, T, C = x.shape
    T2 = 2 * T

    # ---- fold / pre-cast weights once (tiny f32 matmuls, then bf16) ---------
    wme, wmo, bm = _compose_upconv(p["up1"]["w"], p["up1"]["b"],
                                   p["conv1"]["w"], p["conv1"]["b"])
    wre, wro, br = _compose_upconv(p["up_bn"]["w"], p["up_bn"]["b"],
                                   p["conv_bn"]["w"], p["conv_bn"]["b"])
    w2 = _stack_conv(p["conv2"]["w"])
    w3 = _stack_conv(p["conv3"]["w"])
    w4 = _stack_conv(p["conv4"]["w"])

    # ---- BN1 (x has no producer kernel in this block -> one stats pass) -----
    xsum, xsq = x_stats(x)
    sc1, sh1 = cbn_scale_shift(xsum, xsq, B * T, cond,
                               p["bn1"]["wg"], p["bn1"]["wb"])

    # ---- head: BN1+ReLU+up1∘conv1 (main) and up_BN∘conv_BN (residual) -------
    h_f, slab_f, hsum, hsq, fsum, fsq = head_call(
        x, sc1, sh1, wme, wmo, bm, wre, wro, br)
    h = h_f.reshape(B, T2, C)               # free contiguous even/odd interleave
    slab = slab_f.reshape(4 * B, T2, C)     # residual rows [3B,4B) already written

    # ---- BN2 + ReLU + conv2 -> slab rows [2B, 3B) ----------------------------
    sc2, sh2 = cbn_scale_shift(hsum, hsq, B * T2, cond,
                               p["bn2"]["wg"], p["bn2"]["wb"])
    slab, csum, csq = conv2_into_slab(h, sc2, sh2, w2, p["conv2"]["b"], slab,
                                      out_off=2 * B)
    # slab rows [2B, 4B) == torch.concatenate([conv2_out, conv_BN_out]) (no copy).

    # TODO(synk): the original torch code feeds a batch-B condition to a
    # batch-2B tensor (would not broadcast in PyTorch); we tile it along batch.
    cond2 = jnp.concatenate([cond, cond], axis=0)

    # ---- BN3 + ReLU + conv3 (stats come from the producers, no slab re-read) -
    sc3, sh3 = cbn_scale_shift(jnp.concatenate([csum, fsum], axis=0),
                               jnp.concatenate([csq, fsq], axis=0),
                               2 * B * T2, cond2, p["bn3"]["wg"], p["bn3"]["wb"])
    h3, s4sum, s4sq = conv3_with_stats(slab, sc3, sh3, w3, p["conv3"]["b"],
                                       in_off=2 * B, n_batch=2 * B)

    # ---- BN4 + ReLU + conv4 -> slab rows [0, 2B) -----------------------------
    sc4, sh4 = cbn_scale_shift(s4sum, s4sq, 2 * B * T2, cond2,
                               p["bn4"]["wg"], p["bn4"]["wb"])
    out = conv4_into_slab(h3, sc4, sh4, w4, p["conv4"]["b"], slab, out_off=0)
    # out == torch.concatenate([conv4_out, residual]) with zero copies.
    return out                                                      # (4B, 2T, C)


# -------------------------------- parameters -------------------------------- #

def init_params(key, C, cond_dim):
    keys = jax.random.split(key, 22)
    it = iter(keys)
    nrm = lambda k, shape: 0.1 * jax.random.normal(k, shape, jnp.float32)
    p = {}
    for name in ("bn1", "bn2", "bn3", "bn4"):
        p[name] = {"wg": nrm(next(it), (cond_dim, C)),
                   "wb": nrm(next(it), (cond_dim, C))}
    for name in ("up1", "up_bn"):                  # ConvTranspose1d, k=2, s=2
        p[name] = {"w": nrm(next(it), (2, C, C)), "b": nrm(next(it), (1, C))}
    for name in ("conv1", "conv2", "conv_bn", "conv3", "conv4"):  # Conv1d k=3 pad=1
        p[name] = {"w": nrm(next(it), (3, C, C)), "b": nrm(next(it), (1, C))}
    return p


if __name__ == "__main__":
    # Lane-dense channels (C = 128) so every store fills full vreg lanes.
    B, T, C, D = 2, 128, 128, 16
    key = jax.random.PRNGKey(0)
    kx, kc, kp = jax.random.split(key, 3)
    x = jax.random.normal(kx, (B, T, C), jnp.float32)     # (B, T, C) layout
    cond = jax.random.normal(kc, (B, D), jnp.float32)
    params = init_params(kp, C, D)

    out = jax.jit(gblock_forward)(x, cond, params)
    out = jax.block_until_ready(out)
    assert out.shape == (4 * B, 2 * T, C), out.shape
    assert bool(jnp.all(jnp.isfinite(out)))
    print("KERNEL_OK")
</pallas_src>

<mosaic_0001>
module attributes {stable_mosaic.version = 11 : i64} {
  func.func @_x_stats_kernel(%arg0: i32, %arg1: memref<1x128x128xf32, #tpu.memory_space<vmem>>, %arg2: memref<1x1x128xf32, #tpu.memory_space<vmem>>, %arg3: memref<1x1x128xf32, #tpu.memory_space<vmem>>) attributes {dimension_semantics = [#tpu.dimension_semantics<parallel>], iteration_bounds = array<i64: 2>, scalar_prefetch = 0 : i64, scratch_operands = 0 : i64, tpu.core_type = #tpu.core_type<tc>, window_params = [{transform_indices = @transform_0, window_bounds = array<i64: 1, 128, 128>}, {transform_indices = @transform_1, window_bounds = array<i64: 1, 1, 128>}, {transform_indices = @transform_2, window_bounds = array<i64: 1, 1, 128>}]} {
    %c0 = arith.constant 0 : index
    %c0_0 = arith.constant 0 : index
    %c0_1 = arith.constant 0 : index
    %0 = vector.load %arg1[%c0, %c0_0, %c0_1] : memref<1x128x128xf32, #tpu.memory_space<vmem>>, vector<1x128x128xf32>
    %1 = vector.shape_cast %0 : vector<1x128x128xf32> to vector<128x128xf32>
    %cst = arith.constant dense<0.000000e+00> : vector<128xf32>
    %2 = vector.multi_reduction <add>, %1, %cst [0] : vector<128x128xf32> to vector<128xf32>
    %3 = vector.shape_cast %2 : vector<128xf32> to vector<1x128xf32>
    %c0_2 = arith.constant 0 : index
    %c0_3 = arith.constant 0 : index
    %c0_4 = arith.constant 0 : index
    %4 = vector.load %arg2[%c0_2, %c0_3, %c0_4] : memref<1x1x128xf32, #tpu.memory_space<vmem>>, vector<1x1x128xf32>
    %5 = vector.shape_cast %4 : vector<1x1x128xf32> to vector<1x128xf32>
    %6 = vector.shape_cast %3 : vector<1x128xf32> to vector<1x1x128xf32>
    tpu.vector_store %arg2[%c0_2, %c0_3, %c0_4], %6 {strides = array<i32>} : memref<1x1x128xf32, #tpu.memory_space<vmem>>, vector<1x1x128xf32>,
    %7 = arith.mulf %1, %1 : vector<128x128xf32>
    %cst_5 = arith.constant dense<0.000000e+00> : vector<128xf32>
    %8 = vector.multi_reduction <add>, %7, %cst_5 [0] : vector<128x128xf32> to vector<128xf32>
    %9 = vector.shape_cast %8 : vector<128xf32> to vector<1x128xf32>
    %c0_6 = arith.constant 0 : index
    %c0_7 = arith.constant 0 : index
    %c0_8 = arith.constant 0 : index
    %10 = vector.load %arg3[%c0_6, %c0_7, %c0_8] : memref<1x1x128xf32, #tpu.memory_space<vmem>>, vector<1x1x128xf32>
    %11 = vector.shape_cast %10 : vector<1x1x128xf32> to vector<1x128xf32>
    %12 = vector.shape_cast %9 : vector<1x128xf32> to vector<1x1x128xf32>
    tpu.vector_store %arg3[%c0_6, %c0_7, %c0_8], %12 {strides = array<i32>} : memref<1x1x128xf32, #tpu.memory_space<vmem>>, vector<1x1x128xf32>,
    return
  }
  func.func @transform_0(%arg0: i32) -> (i32, i32, i32) {
    %c0_i32 = arith.constant 0 : i32
    %c0_i32_0 = arith.constant 0 : i32
    %c0_i32_1 = arith.constant 0 : i32
    return %arg0, %c0_i32, %c0_i32_0 : i32, i32, i32
  }
  func.func @transform_1(%arg0: i32) -> (i32, i32, i32) {
    %c0_i32 = arith.constant 0 : i32
    %c0_i32_0 = arith.constant 0 : i32
    %c0_i32_1 = arith.constant 0 : i32
    return %arg0, %c0_i32, %c0_i32_0 : i32, i32, i32
  }
  func.func @transform_2(%arg0: i32) -> (i32, i32, i32) {
    %c0_i32 = arith.constant 0 : i32
    %c0_i32_0 = arith.constant 0 : i32
    %c0_i32_1 = arith.constant 0 : i32
    return %arg0, %c0_i32, %c0_i32_0 : i32, i32, i32
  }
}

module attributes {stable_mosaic.version = 11 : i64} {
  func.func @_head_kernel(%arg0: i32, %arg1: memref<1x128x128xf32, #tpu.memory_space<vmem>>, %arg2: memref<1x1x128xf32, #tpu.memory_space<vmem>>, %arg3: memref<1x1x128xf32, #tpu.memory_space<vmem>>, %arg4: memref<256x128xbf16, #tpu.memory_space<vmem>>, %arg5: memref<256x128xbf16, #tpu.memory_space<vmem>>, %arg6: memref<3x128xf32, #tpu.memory_space<vmem>>, %arg7: memref<256x128xbf16, #tpu.memory_space<vmem>>, %arg8: memref<256x128xbf16, #tpu.memory_space<vmem>>, %arg9: memref<3x128xf32, #tpu.memory_space<vmem>>, %arg10: memref<1x128x256xbf16, #tpu.memory_space<vmem>>, %arg11: memref<1x128x256xf32, #tpu.memory_space<vmem>>, %arg12: memref<1x1x128xf32, #tpu.memory_space<vmem>>, %arg13: memref<1x1x128xf32, #tpu.memory_space<vmem>>, %arg14: memref<1x1x128xf32, #tpu.memory_space<vmem>>, %arg15: memref<1x1x128xf32, #tpu.memory_space<vmem>>) attributes {dimension_semantics = [#tpu.dimension_semantics<parallel>], iteration_bounds = array<i64: 2>, scalar_prefetch = 0 : i64, scratch_operands = 0 : i64, tpu.core_type = #tpu.core_type<tc>, window_params = [{transform_indices = @transform_0, window_bounds = array<i64: 1, 128, 128>}, {transform_indices = @transform_1, window_bounds = array<i64: 1, 1, 128>}, {transform_indices = @transform_2, window_bounds = array<i64: 1, 1, 128>}, {pipeline_mode = #tpu.pipeline_mode<synchronous>, transform_indices = @transform_3, window_bounds = array<i64: 256, 128>}, {pipeline_mode = #tpu.pipeline_mode<synchronous>, transform_indices = @transform_4, window_bounds = array<i64: 256, 128>}, {pipeline_mode = #tpu.pipeline_mode<synchronous>, transform_indices = @transform_5, window_bounds = array<i64: 3, 128>}, {pipeline_mode = #tpu.pipeline_mode<synchronous>, transform_indices = @transform_6, window_bounds = array<i64: 256, 128>}, {pipeline_mode = #tpu.pipeline_mode<synchronous>, transform_indices = @transform_7, window_bounds = array<i64: 256, 128>}, {pipeline_mode = #tpu.pipeline_mode<synchronous>, transform_indices = @transform_8, window_bounds = array<i64: 3, 128>}, {transform_indices = @transform_9, window_bounds = array<i64: 1, 128, 256>}, {transform_indices = @transform_10, window_bounds = array<i64: 1, 128, 256>}, {transform_indices = @transform_11, window_bounds = array<i64: 1, 1, 128>}, {transform_indices = @transform_12, window_bounds = array<i64: 1, 1, 128>}, {transform_indices = @transform_13, window_bounds = array<i64: 1, 1, 128>}, {transform_indices = @transform_14, window_bounds = array<i64: 1, 1, 128>}]} {
    %c0 = arith.constant 0 : index
    %c0_0 = arith.constant 0 : index
    %c0_1 = arith.constant 0 : index
    %0 = vector.load %arg1[%c0, %c0_0, %c0_1] : memref<1x128x128xf32, #tpu.memory_space<vmem>>, vector<1x128x128xf32>
    %1 = vector.shape_cast %0 : vector<1x128x128xf32> to vector<128x128xf32>
    %2 = tpu.iota {dimensions = array<i32: 0>} : vector<128x1xi32>
    %c0_2 = arith.constant 0 : index
    %c0_3 = arith.constant 0 : index
    %c0_4 = arith.constant 0 : index
    %3 = vector.load %arg2[%c0_2, %c0_3, %c0_4] : memref<1x1x128xf32, #tpu.memory_space<vmem>>, vector<1x1x128xf32>
    %4 = vector.shape_cast %3 : vector<1x1x128xf32> to vector<1x128xf32>
    %5 = vector.broadcast %4 : vector<1x128xf32> to vector<128x128xf32>
    %6 = arith.mulf %1, %5 : vector<128x128xf32>
    %c0_5 = arith.constant 0 : index
    %c0_6 = arith.constant 0 : index
    %c0_7 = arith.constant 0 : index
    %7 = vector.load %arg3[%c0_5, %c0_6, %c0_7] : memref<1x1x128xf32, #tpu.memory_space<vmem>>, vector<1x1x128xf32>
    %8 = vector.shape_cast %7 : vector<1x1x128xf32> to vector<1x128xf32>
    %9 = vector.broadcast %8 : vector<1x128xf32> to vector<128x128xf32>
    %10 = arith.addf %6, %9 : vector<128x128xf32>
    %cst = arith.constant 0.000000e+00 : f32
    %11 = vector.broadcast %cst : f32 to vector<128x128xf32>
    %12 = arith.maximumf %10, %11 : vector<128x128xf32>
    %13 = arith.truncf %12 : vector<128x128xf32> to vector<128x128xbf16>
    %c0_i32 = arith.constant 0 : i32
    %14 = vector.broadcast %c0_i32 : i32 to vector<128x1xi32>
    %15 = arith.cmpi sgt, %2, %14 : vector<128x1xi32>
    %c1_i32 = arith.constant 1 : i32
    %16 = tpu.dynamic_rotate %12 by %c1_i32 dim 0 : vector<128x128xf32>, i32 -> vector<128x128xf32>
    %cst_8 = arith.constant 0.000000e+00 : f32
    %17 = vector.shape_cast %15 : vector<128x1xi1> to vector<128x1xi1>
    %18 = vector.broadcast %17 : vector<128x1xi1> to vector<128x128xi1>
    %19 = vector.broadcast %cst_8 : f32 to vector<128x128xf32>
    %20 = arith.select %18, %16, %19 : vector<128x128xi1>, vector<128x128xf32>
    %21 = arith.truncf %20 : vector<128x128xf32> to vector<128x128xbf16>
    %c127_i32 = arith.constant 127 : i32
    %22 = vector.broadcast %c127_i32 : i32 to vector<128x1xi32>
    %23 = arith.cmpi slt, %2, %22 : vector<128x1xi32>
    %c127_i32_9 = arith.constant 127 : i32
    %24 = tpu.dynamic_rotate %12 by %c127_i32_9 dim 0 : vector<128x128xf32>, i32 -> vector<128x128xf32>
    %cst_10 = arith.constant 0.000000e+00 : f32
    %25 = vector.shape_cast %23 : vector<128x1xi1> to vector<128x1xi1>
    %26 = vector.broadcast %25 : vector<128x1xi1> to vector<128x128xi1>
    %27 = vector.broadcast %cst_10 : f32 to vector<128x128xf32>
    %28 = arith.select %26, %24, %27 : vector<128x128xi1>, vector<128x128xf32>
    %29 = arith.truncf %28 : vector<128x128xf32> to vector<128x128xbf16>
    %30 = tpu.concatenate %21, %13 in 1 : vector<128x128xbf16>, vector<128x128xbf16> -> vector<128x256xbf16>
    %c0_11 = arith.constant 0 : index
    %c0_12 = arith.constant 0 : index
    %31 = vector.load %arg4[%c0_11, %c0_12] : memref<256x128xbf16, #tpu.memory_space<vmem>>, vector<256x128xbf16>
    %cst_13 = arith.constant dense<0.000000e+00> : vector<128x128xf32>
    %32 = tpu.matmul %30, %31, %cst_13 {dimension_numbers = #tpu.dot_dimension_numbers<[1], [0], [0], [1], [0, 0, 1, 1], [], []>} : vector<128x256xbf16>, vector<256x128xbf16>, vector<128x128xf32> -> vector<128x128xf32>
    %33 = tpu.concatenate %13, %29 in 1 : vector<128x128xbf16>, vector<128x128xbf16> -> vector<128x256xbf16>
    %c0_14 = arith.constant 0 : index
    %c0_15 = arith.constant 0 : index
    %34 = vector.load %arg5[%c0_14, %c0_15] : memref<256x128xbf16, #tpu.memory_space<vmem>>, vector<256x128xbf16>
    %cst_16 = arith.constant dense<0.000000e+00> : vector<128x128xf32>
    %35 = tpu.matmul %33, %34, %cst_16 {dimension_numbers = #tpu.dot_dimension_numbers<[1], [0], [0], [1], [0, 0, 1, 1], [], []>} : vector<128x256xbf16>, vector<256x128xbf16>, vector<128x128xf32> -> vector<128x128xf32>
    %c0_17 = arith.constant 0 : index
    %c0_18 = arith.constant 0 : index
    %36 = vector.load %arg6[%c0_17, %c0_18] : memref<3x128xf32, #tpu.memory_space<vmem>>, vector<3x128xf32>
    %37 = vector.extract_strided_slice %36 {offsets = [0, 0], sizes = [1, 128], strides = [1, 1]} : vector<3x128xf32> to vector<1x128xf32>
    %38 = vector.broadcast %37 : vector<1x128xf32> to vector<128x128xf32>
    %39 = arith.addf %32, %38 : vector<128x128xf32>
    %c0_i32_19 = arith.constant 0 : i32
    %40 = vector.broadcast %c0_i32_19 : i32 to vector<128x1xi32>
    %41 = arith.cmpi eq, %2, %40 : vector<128x1xi32>
    %cst_20 = arith.constant 1.000000e+00 : f32
    %cst_21 = arith.constant 0.000000e+00 : f32
    %42 = vector.broadcast %cst_20 : f32 to vector<128x1xf32>
    %43 = vector.broadcast %cst_21 : f32 to vector<128x1xf32>
    %44 = arith.select %41, %42, %43 : vector<128x1xi1>, vector<128x1xf32>
    %45 = vector.extract_strided_slice %36 {offsets = [1, 0], sizes = [1, 128], strides = [1, 1]} : vector<3x128xf32> to vector<1x128xf32>
    %46 = vector.broadcast %44 : vector<128x1xf32> to vector<128x128xf32>
    %47 = vector.broadcast %45 : vector<1x128xf32> to vector<128x128xf32>
    %48 = arith.mulf %46, %47 : vector<128x128xf32>
    %49 = arith.subf %39, %48 : vector<128x128xf32>
    %50 = vector.extract_strided_slice %36 {offsets = [0, 0], sizes = [1, 128], strides = [1, 1]} : vector<3x128xf32> to vector<1x128xf32>
    %51 = vector.broadcast %50 : vector<1x128xf32> to vector<128x128xf32>
    %52 = arith.addf %35, %51 : vector<128x128xf32>
    %c127_i32_22 = arith.constant 127 : i32
    %53 = vector.broadcast %c127_i32_22 : i32 to vector<128x1xi32>
    %54 = arith.cmpi eq, %2, %53 : vector<128x1xi32>
    %cst_23 = arith.constant 1.000000e+00 : f32
    %cst_24 = arith.constant 0.000000e+00 : f32
    %55 = vector.broadcast %cst_23 : f32 to vector<128x1xf32>
    %56 = vector.broadcast %cst_24 : f32 to vector<128x1xf32>
    %57 = arith.select %54, %55, %56 : vector<128x1xi1>, vector<128x1xf32>
    %58 = vector.extract_strided_slice %36 {offsets = [2, 0], sizes = [1, 128], strides = [1, 1]} : vector<3x128xf32> to vector<1x128xf32>
    %59 = vector.broadcast %57 : vector<128x1xf32> to vector<128x128xf32>
    %60 = vector.broadcast %58 : vector<1x128xf32> to vector<128x128xf32>
    %61 = arith.mulf %59, %60 : vector<128x128xf32>
    %62 = arith.subf %52, %61 : vector<128x128xf32>
    %63 = arith.truncf %49 : vector<128x128xf32> to vector<128x128xbf16>
    %c0_25 = arith.constant 0 : index
    %c0_26 = arith.constant 0 : index
    %c0_27 = arith.constant 0 : index
    %64 = vector.load %arg10[%c0_25, %c0_26, %c0_27] : memref<1x128x256xbf16, #tpu.memory_space<vmem>>, vector<1x128x128xbf16>
    %65 = vector.shape_cast %64 : vector<1x128x128xbf16> to vector<128x128xbf16>
    %66 = vector.shape_cast %63 : vector<128x128xbf16> to vector<1x128x128xbf16>
    tpu.vector_store %arg10[%c0_25, %c0_26, %c0_27], %66 {strides = array<i32>} : memref<1x128x256xbf16, #tpu.memory_space<vmem>>, vector<1x128x128xbf16>,
    %67 = arith.truncf %62 : vector<128x128xf32> to vector<128x128xbf16>
    %c0_28 = arith.constant 0 : index
    %c0_29 = arith.constant 0 : index
    %c128 = arith.constant 128 : index
    %68 = vector.load %arg10[%c0_28, %c0_29, %c128] : memref<1x128x256xbf16, #tpu.memory_space<vmem>>, vector<1x128x128xbf16>
    %69 = vector.shape_cast %68 : vector<1x128x128xbf16> to vector<128x128xbf16>
    %70 = vector.shape_cast %67 : vector<128x128xbf16> to vector<1x128x128xbf16>
    tpu.vector_store %arg10[%c0_28, %c0_29, %c128], %70 {strides = array<i32>} : memref<1x128x256xbf16, #tpu.memory_space<vmem>>, vector<1x128x128xbf16>,
    %cst_30 = arith.constant dense<0.000000e+00> : vector<128xf32>
    %71 = vector.multi_reduction <add>, %49, %cst_30 [0] : vector<128x128xf32> to vector<128xf32>
    %72 = vector.shape_cast %71 : vector<128xf32> to vector<1x128xf32>
    %cst_31 = arith.constant dense<0.000000e+00> : vector<128xf32>
    %73 = vector.multi_reduction <add>, %62, %cst_31 [0] : vector<128x128xf32> to vector<128xf32>
    %74 = vector.shape_cast %73 : vector<128xf32> to vector<1x128xf32>
    %75 = arith.addf %72, %74 : vector<1x128xf32>
    %c0_32 = arith.constant 0 : index
    %c0_33 = arith.constant 0 : index
    %c0_34 = arith.constant 0 : index
    %76 = vector.load %arg12[%c0_32, %c0_33, %c0_34] : memref<1x1x128xf32, #tpu.memory_space<vmem>>, vector<1x1x128xf32>
    %77 = vector.shape_cast %76 : vector<1x1x128xf32> to vector<1x128xf32>
    %78 = vector.shape_cast %75 : vector<1x128xf32> to vector<1x1x128xf32>
    tpu.vector_store %arg12[%c0_32, %c0_33, %c0_34], %78 {strides = array<i32>} : memref<1x1x128xf32, #tpu.memory_space<vmem>>, vector<1x1x128xf32>,
    %79 = arith.mulf %49, %49 : vector<128x128xf32>
    %cst_35 = arith.constant dense<0.000000e+00> : vector<128xf32>
    %80 = vector.multi_reduction <add>, %79, %cst_35 [0] : vector<128x128xf32> to vector<128xf32>
    %81 = vector.shape_cast %80 : vector<128xf32> to vector<1x128xf32>
    %82 = arith.mulf %62, %62 : vector<128x128xf32>
    %cst_36 = arith.constant dense<0.000000e+00> : vector<128xf32>
    %83 = vector.multi_reduction <add>, %82, %cst_36 [0] : vector<128x128xf32> to vector<128xf32>
    %84 = vector.shape_cast %83 : vector<128xf32> to vector<1x128xf32>
    %85 = arith.addf %81, %84 : vector<1x128xf32>
    %c0_37 = arith.constant 0 : index
    %c0_38 = arith.constant 0 : index
    %c0_39 = arith.constant 0 : index
    %86 = vector.load %arg13[%c0_37, %c0_38, %c0_39] : memref<1x1x128xf32, #tpu.memory_space<vmem>>, vector<1x1x128xf32>
    %87 = vector.shape_cast %86 : vector<1x1x128xf32> to vector<1x128xf32>
    %88 = vector.shape_cast %85 : vector<1x128xf32> to vector<1x1x128xf32>
    tpu.vector_store %arg13[%c0_37, %c0_38, %c0_39], %88 {strides = array<i32>} : memref<1x1x128xf32, #tpu.memory_space<vmem>>, vector<1x1x128xf32>,
    %89 = arith.truncf %1 : vector<128x128xf32> to vector<128x128xbf16>
    %c0_i32_40 = arith.constant 0 : i32
    %90 = vector.broadcast %c0_i32_40 : i32 to vector<128x1xi32>
    %91 = arith.cmpi sgt, %2, %90 : vector<128x1xi32>
    %c1_i32_41 = arith.constant 1 : i32
    %92 = tpu.dynamic_rotate %1 by %c1_i32_41 dim 0 : vector<128x128xf32>, i32 -> vector<128x128xf32>
    %cst_42 = arith.constant 0.000000e+00 : f32
    %93 = vector.shape_cast %91 : vector<128x1xi1> to vector<128x1xi1>
    %94 = vector.broadcast %93 : vector<128x1xi1> to vector<128x128xi1>
    %95 = vector.broadcast %cst_42 : f32 to vector<128x128xf32>
    %96 = arith.select %94, %92, %95 : vector<128x128xi1>, vector<128x128xf32>
    %97 = arith.truncf %96 : vector<128x128xf32> to vector<128x128xbf16>
    %c127_i32_43 = arith.constant 127 : i32
    %98 = vector.broadcast %c127_i32_43 : i32 to vector<128x1xi32>
    %99 = arith.cmpi slt, %2, %98 : vector<128x1xi32>
    %c127_i32_44 = arith.constant 127 : i32
    %100 = tpu.dynamic_rotate %1 by %c127_i32_44 dim 0 : vector<128x128xf32>, i32 -> vector<128x128xf32>
    %cst_45 = arith.constant 0.000000e+00 : f32
    %101 = vector.shape_cast %99 : vector<128x1xi1> to vector<128x1xi1>
    %102 = vector.broadcast %101 : vector<128x1xi1> to vector<128x128xi1>
    %103 = vector.broadcast %cst_45 : f32 to vector<128x128xf32>
    %104 = arith.select %102, %100, %103 : vector<128x128xi1>, vector<128x128xf32>
    %105 = arith.truncf %104 : vector<128x128xf32> to vector<128x128xbf16>
    %106 = tpu.concatenate %97, %89 in 1 : vector<128x128xbf16>, vector<128x128xbf16> -> vector<128x256xbf16>
    %c0_46 = arith.constant 0 : index
    %c0_47 = arith.constant 0 : index
    %107 = vector.load %arg7[%c0_46, %c0_47] : memref<256x128xbf16, #tpu.memory_space<vmem>>, vector<256x128xbf16>
    %cst_48 = arith.constant dense<0.000000e+00> : vector<128x128xf32>
    %108 = tpu.matmul %106, %107, %cst_48 {dimension_numbers = #tpu.dot_dimension_numbers<[1], [0], [0], [1], [0, 0, 1, 1], [], []>} : vector<128x256xbf16>, vector<256x128xbf16>, vector<128x128xf32> -> vector<128x128xf32>
    %109 = tpu.concatenate %89, %105 in 1 : vector<128x128xbf16>, vector<128x128xbf16> -> vector<128x256xbf16>
    %c0_49 = arith.constant 0 : index
    %c0_50 = arith.constant 0 : index
    %110 = vector.load %arg8[%c0_49, %c0_50] : memref<256x128xbf16, #tpu.memory_space<vmem>>, vector<256x128xbf16>
    %cst_51 = arith.constant dense<0.000000e+00> : vector<128x128xf32>
    %111 = tpu.matmul %109, %110, %cst_51 {dimension_numbers = #tpu.dot_dimension_numbers<[1], [0], [0], [1], [0, 0, 1, 1], [], []>} : vector<128x256xbf16>, vector<256x128xbf16>, vector<128x128xf32> -> vector<128x128xf32>
    %c0_52 = arith.constant 0 : index
    %c0_53 = arith.constant 0 : index
    %112 = vector.load %arg9[%c0_52, %c0_53] : memref<3x128xf32, #tpu.memory_space<vmem>>, vector<3x128xf32>
    %113 = vector.extract_strided_slice %112 {offsets = [0, 0], sizes = [1, 128], strides = [1, 1]} : vector<3x128xf32> to vector<1x128xf32>
    %114 = vector.broadcast %113 : vector<1x128xf32> to vector<128x128xf32>
    %115 = arith.addf %108, %114 : vector<128x128xf32>
    %c0_i32_54 = arith.constant 0 : i32
    %116 = vector.broadcast %c0_i32_54 : i32 to vector<128x1xi32>
    %117 = arith.cmpi eq, %2, %116 : vector<128x1xi32>
    %cst_55 = arith.constant 1.000000e+00 : f32
    %cst_56 = arith.constant 0.000000e+00 : f32
    %118 = vector.broadcast %cst_55 : f32 to vector<128x1xf32>
    %119 = vector.broadcast %cst_56 : f32 to vector<128x1xf32>
    %120 = arith.select %117, %118, %119 : vector<128x1xi1>, vector<128x1xf32>
    %121 = vector.extract_strided_slice %112 {offsets = [1, 0], sizes = [1, 128], strides = [1, 1]} : vector<3x128xf32> to vector<1x128xf32>
    %122 = vector.broadcast %120 : vector<128x1xf32> to vector<128x128xf32>
    %123 = vector.broadcast %121 : vector<1x128xf32> to vector<128x128xf32>
    %124 = arith.mulf %122, %123 : vector<128x128xf32>
    %125 = arith.subf %115, %124 : vector<128x128xf32>
    %126 = vector.extract_strided_slice %112 {offsets = [0, 0], sizes = [1, 128], strides = [1, 1]} : vector<3x128xf32> to vector<1x128xf32>
    %127 = vector.broadcast %126 : vector<1x128xf32> to vector<128x128xf32>
    %128 = arith.addf %111, %127 : vector<128x128xf32>
    %c127_i32_57 = arith.constant 127 : i32
    %129 = vector.broadcast %c127_i32_57 : i32 to vector<128x1xi32>
    %130 = arith.cmpi eq, %2, %129 : vector<128x1xi32>
    %cst_58 = arith.constant 1.000000e+00 : f32
    %cst_59 = arith.constant 0.000000e+00 : f32
    %131 = vector.broadcast %cst_58 : f32 to vector<128x1xf32>
    %132 = vector.broadcast %cst_59 : f32 to vector<128x1xf32>
    %133 = arith.select %130, %131, %132 : vector<128x1xi1>, vector<128x1xf32>
    %134 = vector.extract_strided_slice %112 {offsets = [2, 0], sizes = [1, 128], strides = [1, 1]} : vector<3x128xf32> to vector<1x128xf32>
    %135 = vector.broadcast %133 : vector<128x1xf32> to vector<128x128xf32>
    %136 = vector.broadcast %134 : vector<1x128xf32> to vector<128x128xf32>
    %137 = arith.mulf %135, %136 : vector<128x128xf32>
    %138 = arith.subf %128, %137 : vector<128x128xf32>
    %c0_60 = arith.constant 0 : index
    %c0_61 = arith.constant 0 : index
    %c0_62 = arith.constant 0 : index
    %139 = vector.load %arg11[%c0_60, %c0_61, %c0_62] : memref<1x128x256xf32, #tpu.memory_space<vmem>>, vector<1x128x128xf32>
    %140 = vector.shape_cast %139 : vector<1x128x128xf32> to vector<128x128xf32>
    %141 = vector.shape_cast %125 : vector<128x128xf32> to vector<1x128x128xf32>
    tpu.vector_store %arg11[%c0_60, %c0_61, %c0_62], %141 {strides = array<i32>} : memref<1x128x256xf32, #tpu.memory_space<vmem>>, vector<1x128x128xf32>,
    %c0_63 = arith.constant 0 : index
    %c0_64 = arith.constant 0 : index
    %c128_65 = arith.constant 128 : index
    %142 = vector.load %arg11[%c0_63, %c0_64, %c128_65] : memref<1x128x256xf32, #tpu.memory_space<vmem>>, vector<1x128x128xf32>
    %143 = vector.shape_cast %142 : vector<1x128x128xf32> to vector<128x128xf32>
    %144 = vector.shape_cast %138 : vector<128x128xf32> to vector<1x128x128xf32>
    tpu.vector_store %arg11[%c0_63, %c0_64, %c128_65], %144 {strides = array<i32>} : memref<1x128x256xf32, #tpu.memory_space<vmem>>, vector<1x128x128xf32>,
    %cst_66 = arith.constant dense<0.000000e+00> : vector<128xf32>
    %145 = vector.multi_reduction <add>, %125, %cst_66 [0] : vector<128x128xf32> to vector<128xf32>
    %146 = vector.shape_cast %145 : vector<128xf32> to vector<1x128xf32>
    %cst_67 = arith.constant dense<0.000000e+00> : vector<128xf32>
    %147 = vector.multi_reduction <add>, %138, %cst_67 [0] : vector<128x128xf32> to vector<128xf32>
    %148 = vector.shape_cast %147 : vector<128xf32> to vector<1x128xf32>
    %149 = arith.addf %146, %148 : vector<1x128xf32>
    %c0_68 = arith.constant 0 : index
    %c0_69 = arith.constant 0 : index
    %c0_70 = arith.constant 0 : index
    %150 = vector.load %arg14[%c0_68, %c0_69, %c0_70] : memref<1x1x128xf32, #tpu.memory_space<vmem>>, vector<1x1x128xf32>
    %151 = vector.shape_cast %150 : vector<1x1x128xf32> to vector<1x128xf32>
    %152 = vector.shape_cast %149 : vector<1x128xf32> to vector<1x1x128xf32>
    tpu.vector_store %arg14[%c0_68, %c0_69, %c0_70], %152 {strides = array<i32>} : memref<1x1x128xf32, #tpu.memory_space<vmem>>, vector<1x1x128xf32>,
    %153 = arith.mulf %125, %125 : vector<128x128xf32>
    %cst_71 = arith.constant dense<0.000000e+00> : vector<128xf32>
    %154 = vector.multi_reduction <add>, %153, %cst_71 [0] : vector<128x128xf32> to vector<128xf32>
    %155 = vector.shape_cast %154 : vector<128xf32> to vector<1x128xf32>
    %156 = arith.mulf %138, %138 : vector<128x128xf32>
    %cst_72 = arith.constant dense<0.000000e+00> : vector<128xf32>
    %157 = vector.multi_reduction <add>, %156, %cst_72 [0] : vector<128x128xf32> to vector<128xf32>
    %158 = vector.shape_cast %157 : vector<128xf32> to vector<1x128xf32>
    %159 = arith.addf %155, %158 : vector<1x128xf32>
    %c0_73 = arith.constant 0 : index
    %c0_74 = arith.constant 0 : index
    %c0_75 = arith.constant 0 : index
    %160 = vector.load %arg15[%c0_73, %c0_74, %c0_75] : memref<1x1x128xf32, #tpu.memory_space<vmem>>, vector<1x1x128xf32>
    %161 = vector.shape_cast %160 : vector<1x1x128xf32> to vector<1x128xf32>
    %162 = vector.shape_cast %159 : vector<1x128xf32> to vector<1x1x128xf32>
    tpu.vector_store %arg15[%c0_73, %c0_74, %c0_75], %162 {strides = array<i32>} : memref<1x1x128xf32, #tpu.memory_space<vmem>>, vector<1x1x128xf32>,
    return
  }
  func.func @transform_0(%arg0: i32) -> (i32, i32, i32) {
    %c0_i32 = arith.constant 0 : i32
    %c0_i32_0 = arith.constant 0 : i32
    %c0_i32_1 = arith.constant 0 : i32
    return %arg0, %c0_i32, %c0_i32_0 : i32, i32, i32
  }
  func.func @transform_1(%arg0: i32) -> (i32, i32, i32) {
    %c0_i32 = arith.constant 0 : i32
    %c0_i32_0 = arith.constant 0 : i32
    %c0_i32_1 = arith.constant 0 : i32
    return %arg0, %c0_i32, %c0_i32_0 : i32, i32, i32
  }
  func.func @transform_2(%arg0: i32) -> (i32, i32, i32) {
    %c0_i32 = arith.constant 0 : i32
    %c0_i32_0 = arith.constant 0 : i32
    %c0_i32_1 = arith.constant 0 : i32
    return %arg0, %c0_i32, %c0_i32_0 : i32, i32, i32
  }
  func.func @transform_3(%arg0: i32) -> (i32, i32) {
    %c0_i32 = arith.constant 0 : i32
    %c0_i32_0 = arith.constant 0 : i32
    %c0_i32_1 = arith.constant 0 : i32
    return %c0_i32, %c0_i32_0 : i32, i32
  }
  func.func @transform_4(%arg0: i32) -> (i32, i32) {
    %c0_i32 = arith.constant 0 : i32
    %c0_i32_0 = arith.constant 0 : i32
    %c0_i32_1 = arith.constant 0 : i32
    return %c0_i32, %c0_i32_0 : i32, i32
  }
  func.func @transform_5(%arg0: i32) -> (i32, i32) {
    %c0_i32 = arith.constant 0 : i32
    %c0_i32_0 = arith.constant 0 : i32
    %c0_i32_1 = arith.constant 0 : i32
    return %c0_i32, %c0_i32_0 : i32, i32
  }
  func.func @transform_6(%arg0: i32) -> (i32, i32) {
    %c0_i32 = arith.constant 0 : i32
    %c0_i32_0 = arith.constant 0 : i32
    %c0_i32_1 = arith.constant 0 : i32
    return %c0_i32, %c0_i32_0 : i32, i32
  }
  func.func @transform_7(%arg0: i32) -> (i32, i32) {
    %c0_i32 = arith.constant 0 : i32
    %c0_i32_0 = arith.constant 0 : i32
    %c0_i32_1 = arith.constant 0 : i32
    return %c0_i32, %c0_i32_0 : i32, i32
  }
  func.func @transform_8(%arg0: i32) -> (i32, i32) {
    %c0_i32 = arith.constant 0 : i32
    %c0_i32_0 = arith.constant 0 : i32
    %c0_i32_1 = arith.constant 0 : i32
    return %c0_i32, %c0_i32_0 : i32, i32
  }
  func.func @transform_9(%arg0: i32) -> (i32, i32, i32) {
    %c0_i32 = arith.constant 0 : i32
    %c0_i32_0 = arith.constant 0 : i32
    %c0_i32_1 = arith.constant 0 : i32
    return %arg0, %c0_i32, %c0_i32_0 : i32, i32, i32
  }
  func.func @transform_10(%arg0: i32) -> (i32, i32, i32) {
    %c6_i32 = arith.constant 6 : i32
    %0 = arith.addi %c6_i32, %arg0 : i32
    %c0_i32 = arith.constant 0 : i32
    %c0_i32_0 = arith.constant 0 : i32
    %c0_i32_1 = arith.constant 0 : i32
    return %0, %c0_i32, %c0_i32_0 : i32, i32, i32
  }
  func.func @transform_11(%arg0: i32) -> (i32, i32, i32) {
    %c0_i32 = arith.constant 0 : i32
    %c0_i32_0 = arith.constant 0 : i32
    %c0_i32_1 = arith.constant 0 : i32
    return %arg0, %c0_i32, %c0_i32_0 : i32, i32, i32
  }
  func.func @transform_12(%arg0: i32) -> (i32, i32, i32) {
    %c0_i32 = arith.constant 0 : i32
    %c0_i32_0 = arith.constant 0 : i32
    %c0_i32_1 = arith.constant 0 : i32
    return %arg0, %c0_i32, %c0_i32_0 : i32, i32, i32
  }
  func.func @transform_13(%arg0: i32) -> (i32, i32, i32) {
    %c0_i32 = arith.constant 0 : i32
    %c0_i32_0 = arith.constant 0 : i32
    %c0_i32_1 = arith.constant 0 : i32
    return %arg0, %c0_i32, %c0_i32_0 : i32, i32, i32
  }
  func.func @transform_14(%arg0: i32) -> (i32, i32, i32) {
    %c0_i32 = arith.constant 0 : i32
    %c0_i32_0 = arith.constant 0 : i32
    %c0_i32_1 = arith.constant 0 : i32
    return %arg0, %c0_i32, %c0_i32_0 : i32, i32, i32
  }
}

module attributes {stable_mosaic.version = 11 : i64} {
  func.func @_conv_stats_alias_kernel(%arg0: i32, %arg1: memref<1x256x128xbf16, #tpu.memory_space<vmem>>, %arg2: memref<1x1x128xf32, #tpu.memory_space<vmem>>, %arg3: memref<1x1x128xf32, #tpu.memory_space<vmem>>, %arg4: memref<384x128xbf16, #tpu.memory_space<vmem>>, %arg5: memref<1x128xf32, #tpu.memory_space<vmem>>, %arg6: memref<8x256x128xf32, #tpu.memory_space<any>>, %arg7: memref<1x256x128xf32, #tpu.memory_space<vmem>>, %arg8: memref<1x1x128xf32, #tpu.memory_space<vmem>>, %arg9: memref<1x1x128xf32, #tpu.memory_space<vmem>>) attributes {dimension_semantics = [#tpu.dimension_semantics<parallel>], iteration_bounds = array<i64: 2>, scalar_prefetch = 0 : i64, scratch_operands = 0 : i64, tpu.core_type = #tpu.core_type<tc>, window_params = [{transform_indices = @transform_0, window_bounds = array<i64: 1, 256, 128>}, {transform_indices = @transform_1, window_bounds = array<i64: 1, 1, 128>}, {transform_indices = @transform_2, window_bounds = array<i64: 1, 1, 128>}, {pipeline_mode = #tpu.pipeline_mode<synchronous>, transform_indices = @transform_3, window_bounds = array<i64: 384, 128>}, {pipeline_mode = #tpu.pipeline_mode<synchronous>, transform_indices = @transform_4, window_bounds = array<i64: 1, 128>}, {}, {transform_indices = @transform_6, window_bounds = array<i64: 1, 256, 128>}, {transform_indices = @transform_7, window_bounds = array<i64: 1, 1, 128>}, {transform_indices = @transform_8, window_bounds = array<i64: 1, 1, 128>}]} {
    %c0 = arith.constant 0 : index
    %c0_0 = arith.constant 0 : index
    %c0_1 = arith.constant 0 : index
    %0 = vector.load %arg1[%c0, %c0_0, %c0_1] : memref<1x256x128xbf16, #tpu.memory_space<vmem>>, vector<1x256x128xbf16>
    %1 = vector.shape_cast %0 : vector<1x256x128xbf16> to vector<256x128xbf16>
    %2 = arith.extf %1 : vector<256x128xbf16> to vector<256x128xf32>
    %c0_2 = arith.constant 0 : index
    %c0_3 = arith.constant 0 : index
    %c0_4 = arith.constant 0 : index
    %3 = vector.load %arg2[%c0_2, %c0_3, %c0_4] : memref<1x1x128xf32, #tpu.memory_space<vmem>>, vector<1x1x128xf32>
    %4 = vector.shape_cast %3 : vector<1x1x128xf32> to vector<1x128xf32>
    %5 = vector.broadcast %4 : vector<1x128xf32> to vector<256x128xf32>
    %6 = arith.mulf %2, %5 : vector<256x128xf32>
    %c0_5 = arith.constant 0 : index
    %c0_6 = arith.constant 0 : index
    %c0_7 = arith.constant 0 : index
    %7 = vector.load %arg3[%c0_5, %c0_6, %c0_7] : memref<1x1x128xf32, #tpu.memory_space<vmem>>, vector<1x1x128xf32>
    %8 = vector.shape_cast %7 : vector<1x1x128xf32> to vector<1x128xf32>
    %9 = vector.broadcast %8 : vector<1x128xf32> to vector<256x128xf32>
    %10 = arith.addf %6, %9 : vector<256x128xf32>
    %cst = arith.constant 0.000000e+00 : f32
    %11 = vector.broadcast %cst : f32 to vector<256x128xf32>
    %12 = arith.maximumf %10, %11 : vector<256x128xf32>
    %13 = tpu.iota {dimensions = array<i32: 0>} : vector<256x1xi32>
    %14 = arith.truncf %12 : vector<256x128xf32> to vector<256x128xbf16>
    %c0_i32 = arith.constant 0 : i32
    %15 = vector.broadcast %c0_i32 : i32 to vector<256x1xi32>
    %16 = arith.cmpi sgt, %13, %15 : vector<256x1xi32>
    %c1_i32 = arith.constant 1 : i32
    %17 = tpu.dynamic_rotate %12 by %c1_i32 dim 0 : vector<256x128xf32>, i32 -> vector<256x128xf32>
    %cst_8 = arith.constant 0.000000e+00 : f32
    %18 = vector.shape_cast %16 : vector<256x1xi1> to vector<256x1xi1>
    %19 = vector.broadcast %18 : vector<256x1xi1> to vector<256x128xi1>
    %20 = vector.broadcast %cst_8 : f32 to vector<256x128xf32>
    %21 = arith.select %19, %17, %20 : vector<256x128xi1>, vector<256x128xf32>
    %22 = arith.truncf %21 : vector<256x128xf32> to vector<256x128xbf16>
    %c255_i32 = arith.constant 255 : i32
    %23 = vector.broadcast %c255_i32 : i32 to vector<256x1xi32>
    %24 = arith.cmpi slt, %13, %23 : vector<256x1xi32>
    %c255_i32_9 = arith.constant 255 : i32
    %25 = tpu.dynamic_rotate %12 by %c255_i32_9 dim 0 : vector<256x128xf32>, i32 -> vector<256x128xf32>
    %cst_10 = arith.constant 0.000000e+00 : f32
    %26 = vector.shape_cast %24 : vector<256x1xi1> to vector<256x1xi1>
    %27 = vector.broadcast %26 : vector<256x1xi1> to vector<256x128xi1>
    %28 = vector.broadcast %cst_10 : f32 to vector<256x128xf32>
    %29 = arith.select %27, %25, %28 : vector<256x128xi1>, vector<256x128xf32>
    %30 = arith.truncf %29 : vector<256x128xf32> to vector<256x128xbf16>
    %31 = tpu.concatenate %22, %14, %30 in 1 : vector<256x128xbf16>, vector<256x128xbf16>, vector<256x128xbf16> -> vector<256x384xbf16>
    %c0_11 = arith.constant 0 : index
    %c0_12 = arith.constant 0 : index
    %32 = vector.load %arg4[%c0_11, %c0_12] : memref<384x128xbf16, #tpu.memory_space<vmem>>, vector<384x128xbf16>
    %cst_13 = arith.constant dense<0.000000e+00> : vector<256x128xf32>
    %33 = tpu.matmul %31, %32, %cst_13 {dimension_numbers = #tpu.dot_dimension_numbers<[1], [0], [0], [1], [0, 0, 1, 1], [], []>} : vector<256x384xbf16>, vector<384x128xbf16>, vector<256x128xf32> -> vector<256x128xf32>
    %c0_14 = arith.constant 0 : index
    %c0_15 = arith.constant 0 : index
    %34 = vector.load %arg5[%c0_14, %c0_15] : memref<1x128xf32, #tpu.memory_space<vmem>>, vector<1x128xf32>
    %35 = vector.broadcast %34 : vector<1x128xf32> to vector<256x128xf32>
    %36 = arith.addf %33, %35 : vector<256x128xf32>
    %c0_16 = arith.constant 0 : index
    %c0_17 = arith.constant 0 : index
    %c0_18 = arith.constant 0 : index
    %37 = vector.load %arg7[%c0_16, %c0_17, %c0_18] : memref<1x256x128xf32, #tpu.memory_space<vmem>>, vector<1x256x128xf32>
    %38 = vector.shape_cast %37 : vector<1x256x128xf32> to vector<256x128xf32>
    %39 = vector.shape_cast %36 : vector<256x128xf32> to vector<1x256x128xf32>
    tpu.vector_store %arg7[%c0_16, %c0_17, %c0_18], %39 {strides = array<i32>} : memref<1x256x128xf32, #tpu.memory_space<vmem>>, vector<1x256x128xf32>,
    %cst_19 = arith.constant dense<0.000000e+00> : vector<128xf32>
    %40 = vector.multi_reduction <add>, %36, %cst_19 [0] : vector<256x128xf32> to vector<128xf32>
    %41 = vector.shape_cast %40 : vector<128xf32> to vector<1x128xf32>
    %c0_20 = arith.constant 0 : index
    %c0_21 = arith.constant 0 : index
    %c0_22 = arith.constant 0 : index
    %42 = vector.load %arg8[%c0_20, %c0_21, %c0_22] : memref<1x1x128xf32, #tpu.memory_space<vmem>>, vector<1x1x128xf32>
    %43 = vector.shape_cast %42 : vector<1x1x128xf32> to vector<1x128xf32>
    %44 = vector.shape_cast %41 : vector<1x128xf32> to vector<1x1x128xf32>
    tpu.vector_store %arg8[%c0_20, %c0_21, %c0_22], %44 {strides = array<i32>} : memref<1x1x128xf32, #tpu.memory_space<vmem>>, vector<1x1x128xf32>,
    %45 = arith.mulf %36, %36 : vector<256x128xf32>
    %cst_23 = arith.constant dense<0.000000e+00> : vector<128xf32>
    %46 = vector.multi_reduction <add>, %45, %cst_23 [0] : vector<256x128xf32> to vector<128xf32>
    %47 = vector.shape_cast %46 : vector<128xf32> to vector<1x128xf32>
    %c0_24 = arith.constant 0 : index
    %c0_25 = arith.constant 0 : index
    %c0_26 = arith.constant 0 : index
    %48 = vector.load %arg9[%c0_24, %c0_25, %c0_26] : memref<1x1x128xf32, #tpu.memory_space<vmem>>, vector<1x1x128xf32>
    %49 = vector.shape_cast %48 : vector<1x1x128xf32> to vector<1x128xf32>
    %50 = vector.shape_cast %47 : vector<1x128xf32> to vector<1x1x128xf32>
    tpu.vector_store %arg9[%c0_24, %c0_25, %c0_26], %50 {strides = array<i32>} : memref<1x1x128xf32, #tpu.memory_space<vmem>>, vector<1x1x128xf32>,
    return
  }
  func.func @transform_0(%arg0: i32) -> (i32, i32, i32) {
    %c0_i32 = arith.constant 0 : i32
    %c0_i32_0 = arith.constant 0 : i32
    %c0_i32_1 = arith.constant 0 : i32
    return %arg0, %c0_i32, %c0_i32_0 : i32, i32, i32
  }
  func.func @transform_1(%arg0: i32) -> (i32, i32, i32) {
    %c0_i32 = arith.constant 0 : i32
    %c0_i32_0 = arith.constant 0 : i32
    %c0_i32_1 = arith.constant 0 : i32
    return %arg0, %c0_i32, %c0_i32_0 : i32, i32, i32
  }
  func.func @transform_2(%arg0: i32) -> (i32, i32, i32) {
    %c0_i32 = arith.constant 0 : i32
    %c0_i32_0 = arith.constant 0 : i32
    %c0_i32_1 = arith.constant 0 : i32
    return %arg0, %c0_i32, %c0_i32_0 : i32, i32, i32
  }
  func.func @transform_3(%arg0: i32) -> (i32, i32) {
    %c0_i32 = arith.constant 0 : i32
    %c0_i32_0 = arith.constant 0 : i32
    %c0_i32_1 = arith.constant 0 : i32
    return %c0_i32, %c0_i32_0 : i32, i32
  }
  func.func @transform_4(%arg0: i32) -> (i32, i32) {
    %c0_i32 = arith.constant 0 : i32
    %c0_i32_0 = arith.constant 0 : i32
    %c0_i32_1 = arith.constant 0 : i32
    return %c0_i32, %c0_i32_0 : i32, i32
  }
  func.func @transform_6(%arg0: i32) -> (i32, i32, i32) {
    %c4_i32 = arith.constant 4 : i32
    %0 = arith.addi %arg0, %c4_i32 : i32
    %c0_i32 = arith.constant 0 : i32
    %c0_i32_0 = arith.constant 0 : i32
    %c0_i32_1 = arith.constant 0 : i32
    return %0, %c0_i32, %c0_i32_0 : i32, i32, i32
  }
  func.func @transform_7(%arg0: i32) -> (i32, i32, i32) {
    %c0_i32 = arith.constant 0 : i32
    %c0_i32_0 = arith.constant 0 : i32
    %c0_i32_1 = arith.constant 0 : i32
    return %arg0, %c0_i32, %c0_i32_0 : i32, i32, i32
  }
  func.func @transform_8(%arg0: i32) -> (i32, i32, i32) {
    %c0_i32 = arith.constant 0 : i32
    %c0_i32_0 = arith.constant 0 : i32
    %c0_i32_1 = arith.constant 0 : i32
    return %arg0, %c0_i32, %c0_i32_0 : i32, i32, i32
  }
}

module attributes {stable_mosaic.version = 11 : i64} {
  func.func @_conv_stats_kernel(%arg0: i32, %arg1: memref<1x256x128xf32, #tpu.memory_space<vmem>>, %arg2: memref<1x1x128xf32, #tpu.memory_space<vmem>>, %arg3: memref<1x1x128xf32, #tpu.memory_space<vmem>>, %arg4: memref<384x128xbf16, #tpu.memory_space<vmem>>, %arg5: memref<1x128xf32, #tpu.memory_space<vmem>>, %arg6: memref<1x256x128xbf16, #tpu.memory_space<vmem>>, %arg7: memref<1x1x128xf32, #tpu.memory_space<vmem>>, %arg8: memref<1x1x128xf32, #tpu.memory_space<vmem>>) attributes {dimension_semantics = [#tpu.dimension_semantics<parallel>], iteration_bounds = array<i64: 4>, scalar_prefetch = 0 : i64, scratch_operands = 0 : i64, tpu.core_type = #tpu.core_type<tc>, window_params = [{transform_indices = @transform_0, window_bounds = array<i64: 1, 256, 128>}, {transform_indices = @transform_1, window_bounds = array<i64: 1, 1, 128>}, {transform_indices = @transform_2, window_bounds = array<i64: 1, 1, 128>}, {pipeline_mode = #tpu.pipeline_mode<synchronous>, transform_indices = @transform_3, window_bounds = array<i64: 384, 128>}, {pipeline_mode = #tpu.pipeline_mode<synchronous>, transform_indices = @transform_4, window_bounds = array<i64: 1, 128>}, {transform_indices = @transform_5, window_bounds = array<i64: 1, 256, 128>}, {transform_indices = @transform_6, window_bounds = array<i64: 1, 1, 128>}, {transform_indices = @transform_7, window_bounds = array<i64: 1, 1, 128>}]} {
    %c0 = arith.constant 0 : index
    %c0_0 = arith.constant 0 : index
    %c0_1 = arith.constant 0 : index
    %0 = vector.load %arg1[%c0, %c0_0, %c0_1] : memref<1x256x128xf32, #tpu.memory_space<vmem>>, vector<1x256x128xf32>
    %1 = vector.shape_cast %0 : vector<1x256x128xf32> to vector<256x128xf32>
    %c0_2 = arith.constant 0 : index
    %c0_3 = arith.constant 0 : index
    %c0_4 = arith.constant 0 : index
    %2 = vector.load %arg2[%c0_2, %c0_3, %c0_4] : memref<1x1x128xf32, #tpu.memory_space<vmem>>, vector<1x1x128xf32>
    %3 = vector.shape_cast %2 : vector<1x1x128xf32> to vector<1x128xf32>
    %4 = vector.broadcast %3 : vector<1x128xf32> to vector<256x128xf32>
    %5 = arith.mulf %1, %4 : vector<256x128xf32>
    %c0_5 = arith.constant 0 : index
    %c0_6 = arith.constant 0 : index
    %c0_7 = arith.constant 0 : index
    %6 = vector.load %arg3[%c0_5, %c0_6, %c0_7] : memref<1x1x128xf32, #tpu.memory_space<vmem>>, vector<1x1x128xf32>
    %7 = vector.shape_cast %6 : vector<1x1x128xf32> to vector<1x128xf32>
    %8 = vector.broadcast %7 : vector<1x128xf32> to vector<256x128xf32>
    %9 = arith.addf %5, %8 : vector<256x128xf32>
    %cst = arith.constant 0.000000e+00 : f32
    %10 = vector.broadcast %cst : f32 to vector<256x128xf32>
    %11 = arith.maximumf %9, %10 : vector<256x128xf32>
    %12 = tpu.iota {dimensions = array<i32: 0>} : vector<256x1xi32>
    %13 = arith.truncf %11 : vector<256x128xf32> to vector<256x128xbf16>
    %c0_i32 = arith.constant 0 : i32
    %14 = vector.broadcast %c0_i32 : i32 to vector<256x1xi32>
    %15 = arith.cmpi sgt, %12, %14 : vector<256x1xi32>
    %c1_i32 = arith.constant 1 : i32
    %16 = tpu.dynamic_rotate %11 by %c1_i32 dim 0 : vector<256x128xf32>, i32 -> vector<256x128xf32>
    %cst_8 = arith.constant 0.000000e+00 : f32
    %17 = vector.shape_cast %15 : vector<256x1xi1> to vector<256x1xi1>
    %18 = vector.broadcast %17 : vector<256x1xi1> to vector<256x128xi1>
    %19 = vector.broadcast %cst_8 : f32 to vector<256x128xf32>
    %20 = arith.select %18, %16, %19 : vector<256x128xi1>, vector<256x128xf32>
    %21 = arith.truncf %20 : vector<256x128xf32> to vector<256x128xbf16>
    %c255_i32 = arith.constant 255 : i32
    %22 = vector.broadcast %c255_i32 : i32 to vector<256x1xi32>
    %23 = arith.cmpi slt, %12, %22 : vector<256x1xi32>
    %c255_i32_9 = arith.constant 255 : i32
    %24 = tpu.dynamic_rotate %11 by %c255_i32_9 dim 0 : vector<256x128xf32>, i32 -> vector<256x128xf32>
    %cst_10 = arith.constant 0.000000e+00 : f32
    %25 = vector.shape_cast %23 : vector<256x1xi1> to vector<256x1xi1>
    %26 = vector.broadcast %25 : vector<256x1xi1> to vector<256x128xi1>
    %27 = vector.broadcast %cst_10 : f32 to vector<256x128xf32>
    %28 = arith.select %26, %24, %27 : vector<256x128xi1>, vector<256x128xf32>
    %29 = arith.truncf %28 : vector<256x128xf32> to vector<256x128xbf16>
    %30 = tpu.concatenate %21, %13, %29 in 1 : vector<256x128xbf16>, vector<256x128xbf16>, vector<256x128xbf16> -> vector<256x384xbf16>
    %c0_11 = arith.constant 0 : index
    %c0_12 = arith.constant 0 : index
    %31 = vector.load %arg4[%c0_11, %c0_12] : memref<384x128xbf16, #tpu.memory_space<vmem>>, vector<384x128xbf16>
    %cst_13 = arith.constant dense<0.000000e+00> : vector<256x128xf32>
    %32 = tpu.matmul %30, %31, %cst_13 {dimension_numbers = #tpu.dot_dimension_numbers<[1], [0], [0], [1], [0, 0, 1, 1], [], []>} : vector<256x384xbf16>, vector<384x128xbf16>, vector<256x128xf32> -> vector<256x128xf32>
    %c0_14 = arith.constant 0 : index
    %c0_15 = arith.constant 0 : index
    %33 = vector.load %arg5[%c0_14, %c0_15] : memref<1x128xf32, #tpu.memory_space<vmem>>, vector<1x128xf32>
    %34 = vector.broadcast %33 : vector<1x128xf32> to vector<256x128xf32>
    %35 = arith.addf %32, %34 : vector<256x128xf32>
    %36 = arith.truncf %35 : vector<256x128xf32> to vector<256x128xbf16>
    %c0_16 = arith.constant 0 : index
    %c0_17 = arith.constant 0 : index
    %c0_18 = arith.constant 0 : index
    %37 = vector.load %arg6[%c0_16, %c0_17, %c0_18] : memref<1x256x128xbf16, #tpu.memory_space<vmem>>, vector<1x256x128xbf16>
    %38 = vector.shape_cast %37 : vector<1x256x128xbf16> to vector<256x128xbf16>
    %39 = vector.shape_cast %36 : vector<256x128xbf16> to vector<1x256x128xbf16>
    tpu.vector_store %arg6[%c0_16, %c0_17, %c0_18], %39 {strides = array<i32>} : memref<1x256x128xbf16, #tpu.memory_space<vmem>>, vector<1x256x128xbf16>,
    %cst_19 = arith.constant dense<0.000000e+00> : vector<128xf32>
    %40 = vector.multi_reduction <add>, %35, %cst_19 [0] : vector<256x128xf32> to vector<128xf32>
    %41 = vector.shape_cast %40 : vector<128xf32> to vector<1x128xf32>
    %c0_20 = arith.constant 0 : index
    %c0_21 = arith.constant 0 : index
    %c0_22 = arith.constant 0 : index
    %42 = vector.load %arg7[%c0_20, %c0_21, %c0_22] : memref<1x1x128xf32, #tpu.memory_space<vmem>>, vector<1x1x128xf32>
    %43 = vector.shape_cast %42 : vector<1x1x128xf32> to vector<1x128xf32>
    %44 = vector.shape_cast %41 : vector<1x128xf32> to vector<1x1x128xf32>
    tpu.vector_store %arg7[%c0_20, %c0_21, %c0_22], %44 {strides = array<i32>} : memref<1x1x128xf32, #tpu.memory_space<vmem>>, vector<1x1x128xf32>,
    %45 = arith.mulf %35, %35 : vector<256x128xf32>
    %cst_23 = arith.constant dense<0.000000e+00> : vector<128xf32>
    %46 = vector.multi_reduction <add>, %45, %cst_23 [0] : vector<256x128xf32> to vector<128xf32>
    %47 = vector.shape_cast %46 : vector<128xf32> to vector<1x128xf32>
    %c0_24 = arith.constant 0 : index
    %c0_25 = arith.constant 0 : index
    %c0_26 = arith.constant 0 : index
    %48 = vector.load %arg8[%c0_24, %c0_25, %c0_26] : memref<1x1x128xf32, #tpu.memory_space<vmem>>, vector<1x1x128xf32>
    %49 = vector.shape_cast %48 : vector<1x1x128xf32> to vector<1x128xf32>
    %50 = vector.shape_cast %47 : vector<1x128xf32> to vector<1x1x128xf32>
    tpu.vector_store %arg8[%c0_24, %c0_25, %c0_26], %50 {strides = array<i32>} : memref<1x1x128xf32, #tpu.memory_space<vmem>>, vector<1x1x128xf32>,
    return
  }
  func.func @transform_0(%arg0: i32) -> (i32, i32, i32) {
    %c4_i32 = arith.constant 4 : i32
    %0 = arith.addi %arg0, %c4_i32 : i32
    %c0_i32 = arith.constant 0 : i32
    %c0_i32_0 = arith.constant 0 : i32
    %c0_i32_1 = arith.constant 0 : i32
    return %0, %c0_i32, %c0_i32_0 : i32, i32, i32
  }
  func.func @transform_1(%arg0: i32) -> (i32, i32, i32) {
    %c0_i32 = arith.constant 0 : i32
    %c0_i32_0 = arith.constant 0 : i32
    %c0_i32_1 = arith.constant 0 : i32
    return %arg0, %c0_i32, %c0_i32_0 : i32, i32, i32
  }
  func.func @transform_2(%arg0: i32) -> (i32, i32, i32) {
    %c0_i32 = arith.constant 0 : i32
    %c0_i32_0 = arith.constant 0 : i32
    %c0_i32_1 = arith.constant 0 : i32
    return %arg0, %c0_i32, %c0_i32_0 : i32, i32, i32
  }
  func.func @transform_3(%arg0: i32) -> (i32, i32) {
    %c0_i32 = arith.constant 0 : i32
    %c0_i32_0 = arith.constant 0 : i32
    %c0_i32_1 = arith.constant 0 : i32
    return %c0_i32, %c0_i32_0 : i32, i32
  }
  func.func @transform_4(%arg0: i32) -> (i32, i32) {
    %c0_i32 = arith.constant 0 : i32
    %c0_i32_0 = arith.constant 0 : i32
    %c0_i32_1 = arith.constant 0 : i32
    return %c0_i32, %c0_i32_0 : i32, i32
  }
  func.func @transform_5(%arg0: i32) -> (i32, i32, i32) {
    %c0_i32 = arith.constant 0 : i32
    %c0_i32_0 = arith.constant 0 : i32
    %c0_i32_1 = arith.constant 0 : i32
    return %arg0, %c0_i32, %c0_i32_0 : i32, i32, i32
  }
  func.func @transform_6(%arg0: i32) -> (i32, i32, i32) {
    %c0_i32 = arith.constant 0 : i32
    %c0_i32_0 = arith.constant 0 : i32
    %c0_i32_1 = arith.constant 0 : i32
    return %arg0, %c0_i32, %c0_i32_0 : i32, i32, i32
  }
  func.func @transform_7(%arg0: i32) -> (i32, i32, i32) {
    %c0_i32 = arith.constant 0 : i32
    %c0_i32_0 = arith.constant 0 : i32
    %c0_i32_1 = arith.constant 0 : i32
    return %arg0, %c0_i32, %c0_i32_0 : i32, i32, i32
  }
}

module attributes {stable_mosaic.version = 11 : i64} {
  func.func @_conv_alias_kernel(%arg0: i32, %arg1: memref<1x256x128xbf16, #tpu.memory_space<vmem>>, %arg2: memref<1x1x128xf32, #tpu.memory_space<vmem>>, %arg3: memref<1x1x128xf32, #tpu.memory_space<vmem>>, %arg4: memref<384x128xbf16, #tpu.memory_space<vmem>>, %arg5: memref<1x128xf32, #tpu.memory_space<vmem>>, %arg6: memref<8x256x128xf32, #tpu.memory_space<any>>, %arg7: memref<1x256x128xf32, #tpu.memory_space<vmem>>) attributes {dimension_semantics = [#tpu.dimension_semantics<parallel>], iteration_bounds = array<i64: 4>, scalar_prefetch = 0 : i64, scratch_operands = 0 : i64, tpu.core_type = #tpu.core_type<tc>, window_params = [{transform_indices = @transform_0, window_bounds = array<i64: 1, 256, 128>}, {transform_indices = @transform_1, window_bounds = array<i64: 1, 1, 128>}, {transform_indices = @transform_2, window_bounds = array<i64: 1, 1, 128>}, {pipeline_mode = #tpu.pipeline_mode<synchronous>, transform_indices = @transform_3, window_bounds = array<i64: 384, 128>}, {pipeline_mode = #tpu.pipeline_mode<synchronous>, transform_indices = @transform_4, window_bounds = array<i64: 1, 128>}, {}, {transform_indices = @transform_6, window_bounds = array<i64: 1, 256, 128>}]} {
    %c0 = arith.constant 0 : index
    %c0_0 = arith.constant 0 : index
    %c0_1 = arith.constant 0 : index
    %0 = vector.load %arg1[%c0, %c0_0, %c0_1] : memref<1x256x128xbf16, #tpu.memory_space<vmem>>, vector<1x256x128xbf16>
    %1 = vector.shape_cast %0 : vector<1x256x128xbf16> to vector<256x128xbf16>
    %2 = arith.extf %1 : vector<256x128xbf16> to vector<256x128xf32>
    %c0_2 = arith.constant 0 : index
    %c0_3 = arith.constant 0 : index
    %c0_4 = arith.constant 0 : index
    %3 = vector.load %arg2[%c0_2, %c0_3, %c0_4] : memref<1x1x128xf32, #tpu.memory_space<vmem>>, vector<1x1x128xf32>
    %4 = vector.shape_cast %3 : vector<1x1x128xf32> to vector<1x128xf32>
    %5 = vector.broadcast %4 : vector<1x128xf32> to vector<256x128xf32>
    %6 = arith.mulf %2, %5 : vector<256x128xf32>
    %c0_5 = arith.constant 0 : index
    %c0_6 = arith.constant 0 : index
    %c0_7 = arith.constant 0 : index
    %7 = vector.load %arg3[%c0_5, %c0_6, %c0_7] : memref<1x1x128xf32, #tpu.memory_space<vmem>>, vector<1x1x128xf32>
    %8 = vector.shape_cast %7 : vector<1x1x128xf32> to vector<1x128xf32>
    %9 = vector.broadcast %8 : vector<1x128xf32> to vector<256x128xf32>
    %10 = arith.addf %6, %9 : vector<256x128xf32>
    %cst = arith.constant 0.000000e+00 : f32
    %11 = vector.broadcast %cst : f32 to vector<256x128xf32>
    %12 = arith.maximumf %10, %11 : vector<256x128xf32>
    %13 = tpu.iota {dimensions = array<i32: 0>} : vector<256x1xi32>
    %14 = arith.truncf %12 : vector<256x128xf32> to vector<256x128xbf16>
    %c0_i32 = arith.constant 0 : i32
    %15 = vector.broadcast %c0_i32 : i32 to vector<256x1xi32>
    %16 = arith.cmpi sgt, %13, %15 : vector<256x1xi32>
    %c1_i32 = arith.constant 1 : i32
    %17 = tpu.dynamic_rotate %12 by %c1_i32 dim 0 : vector<256x128xf32>, i32 -> vector<256x128xf32>
    %cst_8 = arith.constant 0.000000e+00 : f32
    %18 = vector.shape_cast %16 : vector<256x1xi1> to vector<256x1xi1>
    %19 = vector.broadcast %18 : vector<256x1xi1> to vector<256x128xi1>
    %20 = vector.broadcast %cst_8 : f32 to vector<256x128xf32>
    %21 = arith.select %19, %17, %20 : vector<256x128xi1>, vector<256x128xf32>
    %22 = arith.truncf %21 : vector<256x128xf32> to vector<256x128xbf16>
    %c255_i32 = arith.constant 255 : i32
    %23 = vector.broadcast %c255_i32 : i32 to vector<256x1xi32>
    %24 = arith.cmpi slt, %13, %23 : vector<256x1xi32>
    %c255_i32_9 = arith.constant 255 : i32
    %25 = tpu.dynamic_rotate %12 by %c255_i32_9 dim 0 : vector<256x128xf32>, i32 -> vector<256x128xf32>
    %cst_10 = arith.constant 0.000000e+00 : f32
    %26 = vector.shape_cast %24 : vector<256x1xi1> to vector<256x1xi1>
    %27 = vector.broadcast %26 : vector<256x1xi1> to vector<256x128xi1>
    %28 = vector.broadcast %cst_10 : f32 to vector<256x128xf32>
    %29 = arith.select %27, %25, %28 : vector<256x128xi1>, vector<256x128xf32>
    %30 = arith.truncf %29 : vector<256x128xf32> to vector<256x128xbf16>
    %31 = tpu.concatenate %22, %14, %30 in 1 : vector<256x128xbf16>, vector<256x128xbf16>, vector<256x128xbf16> -> vector<256x384xbf16>
    %c0_11 = arith.constant 0 : index
    %c0_12 = arith.constant 0 : index
    %32 = vector.load %arg4[%c0_11, %c0_12] : memref<384x128xbf16, #tpu.memory_space<vmem>>, vector<384x128xbf16>
    %cst_13 = arith.constant dense<0.000000e+00> : vector<256x128xf32>
    %33 = tpu.matmul %31, %32, %cst_13 {dimension_numbers = #tpu.dot_dimension_numbers<[1], [0], [0], [1], [0, 0, 1, 1], [], []>} : vector<256x384xbf16>, vector<384x128xbf16>, vector<256x128xf32> -> vector<256x128xf32>
    %c0_14 = arith.constant 0 : index
    %c0_15 = arith.constant 0 : index
    %34 = vector.load %arg5[%c0_14, %c0_15] : memref<1x128xf32, #tpu.memory_space<vmem>>, vector<1x128xf32>
    %35 = vector.broadcast %34 : vector<1x128xf32> to vector<256x128xf32>
    %36 = arith.addf %33, %35 : vector<256x128xf32>
    %c0_16 = arith.constant 0 : index
    %c0_17 = arith.constant 0 : index
    %c0_18 = arith.constant 0 : index
    %37 = vector.load %arg7[%c0_16, %c0_17, %c0_18] : memref<1x256x128xf32, #tpu.memory_space<vmem>>, vector<1x256x128xf32>
    %38 = vector.shape_cast %37 : vector<1x256x128xf32> to vector<256x128xf32>
    %39 = vector.shape_cast %36 : vector<256x128xf32> to vector<1x256x128xf32>
    tpu.vector_store %arg7[%c0_16, %c0_17, %c0_18], %39 {strides = array<i32>} : memref<1x256x128xf32, #tpu.memory_space<vmem>>, vector<1x256x128xf32>,
    return
  }
  func.func @transform_0(%arg0: i32) -> (i32, i32, i32) {
    %c0_i32 = arith.constant 0 : i32
    %c0_i32_0 = arith.constant 0 : i32
    %c0_i32_1 = arith.constant 0 : i32
    return %arg0, %c0_i32, %c0_i32_0 : i32, i32, i32
  }
  func.func @transform_1(%arg0: i32) -> (i32, i32, i32) {
    %c0_i32 = arith.constant 0 : i32
    %c0_i32_0 = arith.constant 0 : i32
    %c0_i32_1 = arith.constant 0 : i32
    return %arg0, %c0_i32, %c0_i32_0 : i32, i32, i32
  }
  func.func @transform_2(%arg0: i32) -> (i32, i32, i32) {
    %c0_i32 = arith.constant 0 : i32
    %c0_i32_0 = arith.constant 0 : i32
    %c0_i32_1 = arith.constant 0 : i32
    return %arg0, %c0_i32, %c0_i32_0 : i32, i32, i32
  }
  func.func @transform_3(%arg0: i32) -> (i32, i32) {
    %c0_i32 = arith.constant 0 : i32
    %c0_i32_0 = arith.constant 0 : i32
    %c0_i32_1 = arith.constant 0 : i32
    return %c0_i32, %c0_i32_0 : i32, i32
  }
  func.func @transform_4(%arg0: i32) -> (i32, i32) {
    %c0_i32 = arith.constant 0 : i32
    %c0_i32_0 = arith.constant 0 : i32
    %c0_i32_1 = arith.constant 0 : i32
    return %c0_i32, %c0_i32_0 : i32, i32
  }
  func.func @transform_6(%arg0: i32) -> (i32, i32, i32) {
    %c0_i32 = arith.constant 0 : i32
    %0 = arith.addi %arg0, %c0_i32 : i32
    %c0_i32_0 = arith.constant 0 : i32
    %c0_i32_1 = arith.constant 0 : i32
    %c0_i32_2 = arith.constant 0 : i32
    return %0, %c0_i32_0, %c0_i32_1 : i32, i32, i32
  }
}

</mosaic_0001>

<llo_original>
// kernel: gblock_forward.5
$region0: #{gblock_forward.5}
  #allocation0 [shape = 'u32[]', space=smem, size = 0x4, offset = 0x4, fixed_abs, tag = 'smem constant byte address 0x4 - core index']
  #allocation1 [shape = 'u32[144,128]{1,0:T(1,128)}', space=vmem, size = 0x12000, scoped, tag = 'internal scratch']
  %s0 = inlined_call_operand.vmem [shape: f32[2,128,128], index: 0, kind: input, shape index: {}]
  %s1 = inlined_call_operand.vmem [shape: f32[2,1,128], index: 1, kind: output, shape index: {0}]
  %s2 = inlined_call_operand.vmem [shape: f32[2,1,128], index: 2, kind: output, shape index: {1}]
  %3 = xla_tuple %s1, %s2
  %s4 = sld [smem:[#allocation0]]
  $region45: #{gblock_forward.5} parent=0
    _
  %s6 = ssub.s32 1, %s4
  %s7 = scalar_select 0, %s6, %s4
  loop: start=0, step=1, limit=4
  $region2: #{gblock_forward.5} parent=0 // loop_pre_header
    _
  $region3: #{gblock_forward.5} parent=0 // loop_header
    %s9 = sphi 0, %s13
    %p10 = scmp.ge.s32.totalorder %s9, 4
    %s19 = sphi 0, %s21
    %s22 = sphi 0, %s19
    %s23 = sphi 0, %s22
    %s39 = sphi 0, %s23
    %s45 = sphi 0, %s47
    %s48 = sphi 0, %s45
    %s49 = sphi 0, %s48
    %s65 = sphi 0, %s49
    %s71 = sphi 0, %s73
    %s74 = sphi 0, %s71
    %s75 = sphi 0, %s74
    %s91 = sphi 0, %s75
  $region4: #{gblock_forward.5} parent=0 // loop_header_branch
    %12 = sbr.rel (%p10) target = $region8
  $region5: #{gblock_forward.5} parent=0 // loop_body
    %s14 = ssub.s32 %s9, 1
    %s15 = ssub.s32 %s9, 2
    %s16 = sadd.s32 %s9, 1
    %s17 = ssub.s32 %s9, %s16
    %p18 = scmp.eq.s32.totalorder %s17, 0
    %s20 = sadd.s32 %s19, 1
    %s21 = scalar_select %p18, %s19, %s20
    %p24 = pneg %p18
    %p25 = scmp.eq.s32.totalorder %s9, 1
    %p26 = por %p24, %p25
    %p27 = scmp.ne.s32.totalorder %s19, %s22
    %p28 = scmp.eq.s32.totalorder %s9, 0
    %p29 = por %p27, %p28
    %p30 = scmp.ne.s32.totalorder %s19, %s22
    %p31 = scmp.eq.s32.totalorder %s14, 1
    %p32 = por %p30, %p31
    %p33 = scmp.ne.s32.totalorder %s22, %s23
    %p34 = scmp.eq.s32.totalorder %s14, 0
    %p35 = por %p33, %p34
    %p36 = scmp.ne.s32.totalorder %s22, %s23
    %p37 = scmp.eq.s32.totalorder %s15, 1
    %p38 = por %p36, %p37
    %p40 = scmp.ne.s32.totalorder %s23, %s39
    %p41 = scmp.eq.s32.totalorder %s15, 0
    %p42 = por %p40, %p41
    %s43 = ssub.s32 %s9, %s16
    %p44 = scmp.eq.s32.totalorder %s43, 0
    %s46 = sadd.s32 %s45, 1
    %s47 = scalar_select %p44, %s45, %s46
    %p50 = pneg %p44
    %p51 = scmp.eq.s32.totalorder %s9, 1
    %p52 = por %p50, %p51
    %p53 = scmp.ne.s32.totalorder %s45, %s48
    %p54 = scmp.eq.s32.totalorder %s9, 0
    %p55 = por %p53, %p54
    %p56 = scmp.ne.s32.totalorder %s45, %s48
    %p57 = scmp.eq.s32.totalorder %s14, 1
    %p58 = por %p56, %p57
    %p59 = scmp.ne.s32.totalorder %s48, %s49
    %p60 = scmp.eq.s32.totalorder %s14, 0
    %p61 = por %p59, %p60
    %p62 = scmp.ne.s32.totalorder %s48, %s49
    %p63 = scmp.eq.s32.totalorder %s15, 1
    %p64 = por %p62, %p63
    %p66 = scmp.ne.s32.totalorder %s49, %s65
    %p67 = scmp.eq.s32.totalorder %s15, 0
    %p68 = por %p66, %p67
    %s69 = ssub.s32 %s9, %s16
    %p70 = scmp.eq.s32.totalorder %s69, 0
    %s72 = sadd.s32 %s71, 1
    %s73 = scalar_select %p70, %s71, %s72
    %p76 = pneg %p70
    %p77 = scmp.eq.s32.totalorder %s9, 1
    %p78 = por %p76, %p77
    %p79 = scmp.ne.s32.totalorder %s71, %s74
    %p80 = scmp.eq.s32.totalorder %s9, 0
    %p81 = por %p79, %p80
    %p82 = scmp.ne.s32.totalorder %s71, %s74
    %p83 = scmp.eq.s32.totalorder %s14, 1
    %p84 = por %p82, %p83
    %p85 = scmp.ne.s32.totalorder %s74, %s75
    %p86 = scmp.eq.s32.totalorder %s14, 0
    %p87 = por %p85, %p86
    %p88 = scmp.ne.s32.totalorder %s74, %s75
    %p89 = scmp.eq.s32.totalorder %s15, 1
    %p90 = por %p88, %p89
    %p92 = scmp.ne.s32.totalorder %s75, %s91
    %p93 = scmp.eq.s32.totalorder %s15, 0
    %p94 = por %p92, %p93
    %p95 = scmp.le.s32.totalorder 1, %s9
    %p96 = scmp.lt.s32.totalorder %s9, 3
    %p97 = pnand %p95, %p96
    %p98 = pneg %p97
    // Predicated region
    $region9: #{gblock_forward.5} parent=5 // pred_check
      _
    $region10: #{gblock_forward.5} parent=5 // pred_check_branch
      %100 = sbr.rel (%p97) target = $region12
    $region11: #{gblock_forward.5} parent=5 // pred_region
      %s101 = ssub.s32 %s9, 1
    $region12: #{gblock_forward.5} parent=5 // pred_fallthru
      _
    %p102 = scmp.lt.s32.totalorder %s9, 2
    // Predicated region
    $region13: #{gblock_forward.5} parent=5 // pred_check
      %p103 = pneg %p102
    $region14: #{gblock_forward.5} parent=5 // pred_check_branch
      %105 = sbr.rel (%p103) target = $region16
    $region15: #{gblock_forward.5} parent=5 // pred_region
      // Predicated region
      $region17: #{gblock_forward.5} parent=15 // pred_check
        %p106 = pneg %p29
      $region18: #{gblock_forward.5} parent=15 // pred_check_branch
        %108 = sbr.rel (%p106) target = $region20
      $region19: #{gblock_forward.5} parent=15 // pred_region
        %p109 = scmp.lt.s32.totalorder %s9, 1
        %s110 = scalar_select %p109, %s9, 1
        %s111 = smul.addr %s110, 16
        %s112 = smul.addr %s111, 8
        %s113 = scalar_lea.vmem %s0, %s112
      $region20: #{gblock_forward.5} parent=15 // pred_fallthru
        _
    $region16: #{gblock_forward.5} parent=5 // pred_fallthru
      _
    %p114 = scmp.le.s32.totalorder 1, %s9
    %p115 = scmp.lt.s32.totalorder %s9, 3
    %p116 = pnand %p114, %p115
    %p117 = pneg %p116
    // Predicated region
    $region21: #{gblock_forward.5} parent=5 // pred_check
      _
    $region22: #{gblock_forward.5} parent=5 // pred_check_branch
      %119 = sbr.rel (%p116) target = $region24
    $region23: #{gblock_forward.5} parent=5 // pred_region
      %s120 = ssub.s32 %s9, 1
      %p121 = scmp.lt.s32.totalorder %s14, 1
      %s122 = scalar_select %p121, %s14, 1
      %s123 = smul.addr %s122, 16
      %s124 = smul.addr %s123, 8
      %s125 = scalar_lea.vmem %s0, %s124
      %p126 = pneg %p35
      %p127 = pneg %p32
      %p128 = pneg %p61
      %p129 = pneg %p58
      %p130 = scmp.lt.s32.totalorder %s14, 1
      %s131 = scalar_select %p130, %s14, 1
      %s132 = scalar_lea.vmem %s1, %s131
      %p133 = pneg %p87
      %p134 = pneg %p84
      %p135 = scmp.lt.s32.totalorder %s14, 1
      %s136 = scalar_select %p135, %s14, 1
      %s137 = scalar_lea.vmem %s2, %s136
      %p138 = scmp.lt.s32.totalorder %s14, 1
      %s139 = scalar_select %p138, %s14, 1
      %s140 = smul.addr %s139, 16
      %s141 = smul.addr %s140, 8
      %s142 = scalar_lea.vmem %s0, %s141
      %p143 = scmp.lt.s32.totalorder %s14, 1
      %s144 = scalar_select %p143, %s14, 1
      %s145 = scalar_lea.vmem %s1, %s144
      %p146 = scmp.lt.s32.totalorder %s14, 1
      %s147 = scalar_select %p146, %s14, 1
      %s148 = scalar_lea.vmem %s2, %s147
      %v149 = vld [vmem:[%s142] sm:$0xff]
      %v150 = vld [vmem:[%s142 + $0x8] sm:$0xff]
      %v151 = vld [vmem:[%s142 + $0x10] sm:$0xff]
      %v152 = vld [vmem:[%s142 + $0x18] sm:$0xff]
      %v153 = vld [vmem:[%s142 + $0x20] sm:$0xff]
      %v154 = vld [vmem:[%s142 + $0x28] sm:$0xff]
      %v155 = vld [vmem:[%s142 + $0x30] sm:$0xff]
      %v156 = vld [vmem:[%s142 + $0x38] sm:$0xff]
      %v157 = vld [vmem:[%s142 + $0x40] sm:$0xff]
      %v158 = vld [vmem:[%s142 + $0x48] sm:$0xff]
      %v159 = vld [vmem:[%s142 + $0x50] sm:$0xff]
      %v160 = vld [vmem:[%s142 + $0x58] sm:$0xff]
      %v161 = vld [vmem:[%s142 + $0x60] sm:$0xff]
      %v162 = vld [vmem:[%s142 + $0x68] sm:$0xff]
      %v163 = vld [vmem:[%s142 + $0x70] sm:$0xff]
      %v164 = vld [vmem:[%s142 + $0x78] sm:$0xff]
      %v165 = vadd.f32 %v149, %v150
      %v166 = vadd.f32 %v165, %v151
      %v167 = vadd.f32 %v166, %v152
      %v168 = vadd.f32 %v167, %v153
      %v169 = vadd.f32 %v168, %v154
      %v170 = vadd.f32 %v169, %v155
      %v171 = vadd.f32 %v170, %v156
      %v172 = vadd.f32 %v171, %v157
      %v173 = vadd.f32 %v172, %v158
      %v174 = vadd.f32 %v173, %v159
      %v175 = vadd.f32 %v174, %v160
      %v176 = vadd.f32 %v175, %v161
      %v177 = vadd.f32 %v176, %v162
      %v178 = vadd.f32 %v177, %v163
      %v179 = vadd.f32 %v178, %v164
      %v180 = vrot.slane %v179, 4
      %v181 = vadd.f32 %v179, %v180
      %v182 = vrot.slane %v181, 2
      %v183 = vadd.f32 %v181, %v182
      %v184 = vrot.slane %v183, 1
      %v185 = vadd.f32 %v183, %v184
      %186 = vst [vmem:[%s145] sm:$0x1] %v185
      %v187 = vmul.f32 %v149, %v149
      %v188 = vmul.f32 %v150, %v150
      %v189 = vmul.f32 %v151, %v151
      %v190 = vmul.f32 %v152, %v152
      %v191 = vmul.f32 %v153, %v153
      %v192 = vmul.f32 %v154, %v154
      %v193 = vmul.f32 %v155, %v155
      %v194 = vmul.f32 %v156, %v156
      %v195 = vmul.f32 %v157, %v157
      %v196 = vmul.f32 %v158, %v158
      %v197 = vmul.f32 %v159, %v159
      %v198 = vmul.f32 %v160, %v160
      %v199 = vmul.f32 %v161, %v161
      %v200 = vmul.f32 %v162, %v162
      %v201 = vmul.f32 %v163, %v163
      %v202 = vmul.f32 %v164, %v164
      %v203 = vadd.f32 %v187, %v188
      %v204 = vadd.f32 %v203, %v189
      %v205 = vadd.f32 %v204, %v190
      %v206 = vadd.f32 %v205, %v191
      %v207 = vadd.f32 %v206, %v192
      %v208 = vadd.f32 %v207, %v193
      %v209 = vadd.f32 %v208, %v194
      %v210 = vadd.f32 %v209, %v195
      %v211 = vadd.f32 %v210, %v196
      %v212 = vadd.f32 %v211, %v197
      %v213 = vadd.f32 %v212, %v198
      %v214 = vadd.f32 %v213, %v199
      %v215 = vadd.f32 %v214, %v200
      %v216 = vadd.f32 %v215, %v201
      %v217 = vadd.f32 %v216, %v202
      %v218 = vrot.slane %v217, 4
      %v219 = vadd.f32 %v217, %v218
      %v220 = vrot.slane %v219, 2
      %v221 = vadd.f32 %v219, %v220
      %v222 = vrot.slane %v221, 1
      %v223 = vadd.f32 %v221, %v222
      %224 = vst [vmem:[%s148] sm:$0x1] %v223
      %p225 = scmp.lt.s32.totalorder %s14, 1
      %s226 = scalar_select %p225, %s14, 1
      %s227 = scalar_lea.vmem %s1, %s226
      %p228 = scmp.lt.s32.totalorder %s14, 1
      %s229 = scalar_select %p228, %s14, 1
      %s230 = scalar_lea.vmem %s2, %s229
      // Predicated region
      $region25: #{gblock_forward.5} parent=23 // pred_check
        %p231 = pneg %p58
      $region26: #{gblock_forward.5} parent=23 // pred_check_branch
        %233 = sbr.rel (%p231) target = $region28
      $region27: #{gblock_forward.5} parent=23 // pred_region
        _
      $region28: #{gblock_forward.5} parent=23 // pred_fallthru
        _
      // Predicated region
      $region29: #{gblock_forward.5} parent=23 // pred_check
        %p234 = pneg %p84
      $region30: #{gblock_forward.5} parent=23 // pred_check_branch
        %236 = sbr.rel (%p234) target = $region32
      $region31: #{gblock_forward.5} parent=23 // pred_region
        _
      $region32: #{gblock_forward.5} parent=23 // pred_fallthru
        _
    $region24: #{gblock_forward.5} parent=5 // pred_fallthru
      _
    %p237 = scmp.le.s32.totalorder 2, %s9
    // Predicated region
    $region33: #{gblock_forward.5} parent=5 // pred_check
      %p238 = pneg %p237
    $region34: #{gblock_forward.5} parent=5 // pred_check_branch
      %240 = sbr.rel (%p238) target = $region36
    $region35: #{gblock_forward.5} parent=5 // pred_region
      %s241 = ssub.s32 %s9, 2
      // Predicated region
      $region37: #{gblock_forward.5} parent=35 // pred_check
        %p242 = pneg %p64
      $region38: #{gblock_forward.5} parent=35 // pred_check_branch
        %244 = sbr.rel (%p242) target = $region40
      $region39: #{gblock_forward.5} parent=35 // pred_region
        %p245 = scmp.lt.s32.totalorder %s15, 1
        %s246 = scalar_select %p245, %s15, 1
        %s247 = scalar_lea.vmem %s1, %s246
      $region40: #{gblock_forward.5} parent=35 // pred_fallthru
        _
      // Predicated region
      $region41: #{gblock_forward.5} parent=35 // pred_check
        %p248 = pneg %p90
      $region42: #{gblock_forward.5} parent=35 // pred_check_branch
        %250 = sbr.rel (%p248) target = $region44
      $region43: #{gblock_forward.5} parent=35 // pred_region
        %p251 = scmp.lt.s32.totalorder %s15, 1
        %s252 = scalar_select %p251, %s15, 1
        %s253 = scalar_lea.vmem %s2, %s252
      $region44: #{gblock_forward.5} parent=35 // pred_fallthru
        _
    $region36: #{gblock_forward.5} parent=5 // pred_fallthru
      _
  $region6: #{gblock_forward.5} parent=0 // loop_footer
    %s13 = sadd.s32 1, %s9
  $region7: #{gblock_forward.5} parent=0 // loop_footer_branch
    %8 = sbr.rel target = $region3
  $region8: #{gblock_forward.5} parent=0 // loop_exit
    _

// kernel: gblock_forward.7
$region0: #{gblock_forward.7}
  #allocation0 [shape = 'u32[]', space=smem, size = 0x4, offset = 0x4, fixed_abs, tag = 'smem constant byte address 0x4 - core index']
  #allocation1 [shape = 'u32[144,128]{1,0:T(1,128)}', space=vmem, size = 0x12000, scoped, tag = 'internal scratch']
  %s0 = inlined_call_operand.vmem [shape: bf16[2,256,128], index: 0, kind: input, shape index: {}]
  %s1 = inlined_call_operand.vmem [shape: f32[2,1,128], index: 1, kind: input, shape index: {}]
  %s2 = inlined_call_operand.vmem [shape: f32[2,1,128], index: 2, kind: input, shape index: {}]
  %s3 = inlined_call_operand.vmem [shape: bf16[384,128], index: 3, kind: input, shape index: {}]
  %s4 = inlined_call_operand.vmem [shape: f32[1,128], index: 4, kind: input, shape index: {}]
  %s5 = inlined_call_operand.vmem [shape: f32[8,256,128], index: 5, kind: input, shape index: {}, may-alias: {5,6}]
  %s6 = inlined_call_operand.vmem [shape: f32[8,256,128], index: 6, kind: output, shape index: {0}, may-alias: {5,6}]
  %s7 = inlined_call_operand.vmem [shape: f32[2,1,128], index: 7, kind: output, shape index: {1}]
  %s8 = inlined_call_operand.vmem [shape: f32[2,1,128], index: 8, kind: output, shape index: {2}]
  %9 = xla_tuple %s6, %s7, %s8
  %s10 = sld [smem:[#allocation0]]
  $region69: #{gblock_forward.7} parent=0
    _
  %s12 = ssub.s32 1, %s10
  %s13 = scalar_select 0, %s12, %s10
  loop: start=0, step=1, limit=4
  $region2: #{gblock_forward.7} parent=0 // loop_pre_header
    _
  $region3: #{gblock_forward.7} parent=0 // loop_header
    %s15 = sphi 0, %s19
    %p16 = scmp.ge.s32.totalorder %s15, 4
    %s25 = sphi 0, %s27
    %s28 = sphi 0, %s25
    %s29 = sphi 0, %s28
    %s45 = sphi 0, %s29
    %s51 = sphi 0, %s53
    %s54 = sphi 0, %s51
    %s55 = sphi 0, %s54
    %s71 = sphi 0, %s55
    %s77 = sphi 0, %s79
    %s80 = sphi 0, %s77
    %s81 = sphi 0, %s80
    %s97 = sphi 0, %s81
    %s101 = sphi 0, %s101
    %s103 = sphi 0, %s101
    %s104 = sphi 0, %s103
    %s118 = sphi 0, %s104
    %s122 = sphi 0, %s122
    %s124 = sphi 0, %s122
    %s125 = sphi 0, %s124
    %s139 = sphi 0, %s125
    %s147 = sphi 0, %s149
    %s150 = sphi 0, %s147
    %s151 = sphi 0, %s150
    %s167 = sphi 0, %s151
    %s173 = sphi 0, %s175
    %s176 = sphi 0, %s173
    %s177 = sphi 0, %s176
    %s193 = sphi 0, %s177
    %s199 = sphi 0, %s201
    %s202 = sphi 0, %s199
    %s203 = sphi 0, %s202
    %s219 = sphi 0, %s203
  $region4: #{gblock_forward.7} parent=0 // loop_header_branch
    %18 = sbr.rel (%p16) target = $region8
  $region5: #{gblock_forward.7} parent=0 // loop_body
    %s20 = ssub.s32 %s15, 1
    %s21 = ssub.s32 %s15, 2
    %s22 = sadd.s32 %s15, 1
    %s23 = ssub.s32 %s15, %s22
    %p24 = scmp.eq.s32.totalorder %s23, 0
    %s26 = sadd.s32 %s25, 1
    %s27 = scalar_select %p24, %s25, %s26
    %p30 = pneg %p24
    %p31 = scmp.eq.s32.totalorder %s15, 1
    %p32 = por %p30, %p31
    %p33 = scmp.ne.s32.totalorder %s25, %s28
    %p34 = scmp.eq.s32.totalorder %s15, 0
    %p35 = por %p33, %p34
    %p36 = scmp.ne.s32.totalorder %s25, %s28
    %p37 = scmp.eq.s32.totalorder %s20, 1
    %p38 = por %p36, %p37
    %p39 = scmp.ne.s32.totalorder %s28, %s29
    %p40 = scmp.eq.s32.totalorder %s20, 0
    %p41 = por %p39, %p40
    %p42 = scmp.ne.s32.totalorder %s28, %s29
    %p43 = scmp.eq.s32.totalorder %s21, 1
    %p44 = por %p42, %p43
    %p46 = scmp.ne.s32.totalorder %s29, %s45
    %p47 = scmp.eq.s32.totalorder %s21, 0
    %p48 = por %p46, %p47
    %s49 = ssub.s32 %s15, %s22
    %p50 = scmp.eq.s32.totalorder %s49, 0
    %s52 = sadd.s32 %s51, 1
    %s53 = scalar_select %p50, %s51, %s52
    %p56 = pneg %p50
    %p57 = scmp.eq.s32.totalorder %s15, 1
    %p58 = por %p56, %p57
    %p59 = scmp.ne.s32.totalorder %s51, %s54
    %p60 = scmp.eq.s32.totalorder %s15, 0
    %p61 = por %p59, %p60
    %p62 = scmp.ne.s32.totalorder %s51, %s54
    %p63 = scmp.eq.s32.totalorder %s20, 1
    %p64 = por %p62, %p63
    %p65 = scmp.ne.s32.totalorder %s54, %s55
    %p66 = scmp.eq.s32.totalorder %s20, 0
    %p67 = por %p65, %p66
    %p68 = scmp.ne.s32.totalorder %s54, %s55
    %p69 = scmp.eq.s32.totalorder %s21, 1
    %p70 = por %p68, %p69
    %p72 = scmp.ne.s32.totalorder %s55, %s71
    %p73 = scmp.eq.s32.totalorder %s21, 0
    %p74 = por %p72, %p73
    %s75 = ssub.s32 %s15, %s22
    %p76 = scmp.eq.s32.totalorder %s75, 0
    %s78 = sadd.s32 %s77, 1
    %s79 = scalar_select %p76, %s77, %s78
    %p82 = pneg %p76
    %p83 = scmp.eq.s32.totalorder %s15, 1
    %p84 = por %p82, %p83
    %p85 = scmp.ne.s32.totalorder %s77, %s80
    %p86 = scmp.eq.s32.totalorder %s15, 0
    %p87 = por %p85, %p86
    %p88 = scmp.ne.s32.totalorder %s77, %s80
    %p89 = scmp.eq.s32.totalorder %s20, 1
    %p90 = por %p88, %p89
    %p91 = scmp.ne.s32.totalorder %s80, %s81
    %p92 = scmp.eq.s32.totalorder %s20, 0
    %p93 = por %p91, %p92
    %p94 = scmp.ne.s32.totalorder %s80, %s81
    %p95 = scmp.eq.s32.totalorder %s21, 1
    %p96 = por %p94, %p95
    %p98 = scmp.ne.s32.totalorder %s81, %s97
    %p99 = scmp.eq.s32.totalorder %s21, 0
    %p100 = por %p98, %p99
    %s102 = sadd.s32 %s101, 1
    %p105 = scmp.eq.s32.totalorder %s15, 1
    %p106 = scmp.ne.s32.totalorder %s101, %s103
    %p107 = scmp.eq.s32.totalorder %s15, 0
    %p108 = por %p106, %p107
    %p109 = scmp.ne.s32.totalorder %s101, %s103
    %p110 = scmp.eq.s32.totalorder %s20, 1
    %p111 = por %p109, %p110
    %p112 = scmp.ne.s32.totalorder %s103, %s104
    %p113 = scmp.eq.s32.totalorder %s20, 0
    %p114 = por %p112, %p113
    %p115 = scmp.ne.s32.totalorder %s103, %s104
    %p116 = scmp.eq.s32.totalorder %s21, 1
    %p117 = por %p115, %p116
    %p119 = scmp.ne.s32.totalorder %s104, %s118
    %p120 = scmp.eq.s32.totalorder %s21, 0
    %p121 = por %p119, %p120
    %s123 = sadd.s32 %s122, 1
    %p126 = scmp.eq.s32.totalorder %s15, 1
    %p127 = scmp.ne.s32.totalorder %s122, %s124
    %p128 = scmp.eq.s32.totalorder %s15, 0
    %p129 = por %p127, %p128
    %p130 = scmp.ne.s32.totalorder %s122, %s124
    %p131 = scmp.eq.s32.totalorder %s20, 1
    %p132 = por %p130, %p131
    %p133 = scmp.ne.s32.totalorder %s124, %s125
    %p134 = scmp.eq.s32.totalorder %s20, 0
    %p135 = por %p133, %p134
    %p136 = scmp.ne.s32.totalorder %s124, %s125
    %p137 = scmp.eq.s32.totalorder %s21, 1
    %p138 = por %p136, %p137
    %p140 = scmp.ne.s32.totalorder %s125, %s139
    %p141 = scmp.eq.s32.totalorder %s21, 0
    %p142 = por %p140, %p141
    %s143 = sadd.s32 %s15, 4
    %s144 = sadd.s32 %s22, 4
    %s145 = ssub.s32 %s143, %s144
    %p146 = scmp.eq.s32.totalorder %s145, 0
    %s148 = sadd.s32 %s147, 1
    %s149 = scalar_select %p146, %s147, %s148
    %p152 = pneg %p146
    %p153 = scmp.eq.s32.totalorder %s15, 1
    %p154 = por %p152, %p153
    %p155 = scmp.ne.s32.totalorder %s147, %s150
    %p156 = scmp.eq.s32.totalorder %s15, 0
    %p157 = por %p155, %p156
    %p158 = scmp.ne.s32.totalorder %s147, %s150
    %p159 = scmp.eq.s32.totalorder %s20, 1
    %p160 = por %p158, %p159
    %p161 = scmp.ne.s32.totalorder %s150, %s151
    %p162 = scmp.eq.s32.totalorder %s20, 0
    %p163 = por %p161, %p162
    %p164 = scmp.ne.s32.totalorder %s150, %s151
    %p165 = scmp.eq.s32.totalorder %s21, 1
    %p166 = por %p164, %p165
    %p168 = scmp.ne.s32.totalorder %s151, %s167
    %p169 = scmp.eq.s32.totalorder %s21, 0
    %p170 = por %p168, %p169
    %s171 = ssub.s32 %s15, %s22
    %p172 = scmp.eq.s32.totalorder %s171, 0
    %s174 = sadd.s32 %s173, 1
    %s175 = scalar_select %p172, %s173, %s174
    %p178 = pneg %p172
    %p179 = scmp.eq.s32.totalorder %s15, 1
    %p180 = por %p178, %p179
    %p181 = scmp.ne.s32.totalorder %s173, %s176
    %p182 = scmp.eq.s32.totalorder %s15, 0
    %p183 = por %p181, %p182
    %p184 = scmp.ne.s32.totalorder %s173, %s176
    %p185 = scmp.eq.s32.totalorder %s20, 1
    %p186 = por %p184, %p185
    %p187 = scmp.ne.s32.totalorder %s176, %s177
    %p188 = scmp.eq.s32.totalorder %s20, 0
    %p189 = por %p187, %p188
    %p190 = scmp.ne.s32.totalorder %s176, %s177
    %p191 = scmp.eq.s32.totalorder %s21, 1
    %p192 = por %p190, %p191
    %p194 = scmp.ne.s32.totalorder %s177, %s193
    %p195 = scmp.eq.s32.totalorder %s21, 0
    %p196 = por %p194, %p195
    %s197 = ssub.s32 %s15, %s22
    %p198 = scmp.eq.s32.totalorder %s197, 0
    %s200 = sadd.s32 %s199, 1
    %s201 = scalar_select %p198, %s199, %s200
    %p204 = pneg %p198
    %p205 = scmp.eq.s32.totalorder %s15, 1
    %p206 = por %p204, %p205
    %p207 = scmp.ne.s32.totalorder %s199, %s202
    %p208 = scmp.eq.s32.totalorder %s15, 0
    %p209 = por %p207, %p208
    %p210 = scmp.ne.s32.totalorder %s199, %s202
    %p211 = scmp.eq.s32.totalorder %s20, 1
    %p212 = por %p210, %p211
    %p213 = scmp.ne.s32.totalorder %s202, %s203
    %p214 = scmp.eq.s32.totalorder %s20, 0
    %p215 = por %p213, %p214
    %p216 = scmp.ne.s32.totalorder %s202, %s203
    %p217 = scmp.eq.s32.totalorder %s21, 1
    %p218 = por %p216, %p217
    %p220 = scmp.ne.s32.totalorder %s203, %s219
    %p221 = scmp.eq.s32.totalorder %s21, 0
    %p222 = por %p220, %p221
    %p223 = scmp.le.s32.totalorder 1, %s15
    %p224 = scmp.lt.s32.totalorder %s15, 3
    %p225 = pnand %p223, %p224
    %p226 = pneg %p225
    // Predicated region
    $region9: #{gblock_forward.7} parent=5 // pred_check
      _
    $region10: #{gblock_forward.7} parent=5 // pred_check_branch
      %228 = sbr.rel (%p225) target = $region12
    $region11: #{gblock_forward.7} parent=5 // pred_region
      %s229 = ssub.s32 %s15, 1
      // Predicated region
      $region13: #{gblock_forward.7} parent=11 // pred_check
        %p230 = pneg %p114
      $region14: #{gblock_forward.7} parent=11 // pred_check_branch
        %232 = sbr.rel (%p230) target = $region16
      $region15: #{gblock_forward.7} parent=11 // pred_region
        _
      $region16: #{gblock_forward.7} parent=11 // pred_fallthru
        _
      // Predicated region
      $region17: #{gblock_forward.7} parent=11 // pred_check
        %p233 = pneg %p135
      $region18: #{gblock_forward.7} parent=11 // pred_check_branch
        %235 = sbr.rel (%p233) target = $region20
      $region19: #{gblock_forward.7} parent=11 // pred_region
        _
      $region20: #{gblock_forward.7} parent=11 // pred_fallthru
        _
    $region12: #{gblock_forward.7} parent=5 // pred_fallthru
      _
    %p236 = scmp.lt.s32.totalorder %s15, 2
    // Predicated region
    $region21: #{gblock_forward.7} parent=5 // pred_check
      %p237 = pneg %p236
    $region22: #{gblock_forward.7} parent=5 // pred_check_branch
      %239 = sbr.rel (%p237) target = $region24
    $region23: #{gblock_forward.7} parent=5 // pred_region
      // Predicated region
      $region25: #{gblock_forward.7} parent=23 // pred_check
        %p240 = pneg %p35
      $region26: #{gblock_forward.7} parent=23 // pred_check_branch
        %242 = sbr.rel (%p240) target = $region28
      $region27: #{gblock_forward.7} parent=23 // pred_region
        %p243 = scmp.lt.s32.totalorder %s15, 1
        %s244 = scalar_select %p243, %s15, 1
        %s245 = smul.addr %s244, 32
        %s246 = smul.addr %s245, 4
        %s247 = scalar_lea.vmem %s0, %s246
      $region28: #{gblock_forward.7} parent=23 // pred_fallthru
        _
      // Predicated region
      $region29: #{gblock_forward.7} parent=23 // pred_check
        %p248 = pneg %p61
      $region30: #{gblock_forward.7} parent=23 // pred_check_branch
        %250 = sbr.rel (%p248) target = $region32
      $region31: #{gblock_forward.7} parent=23 // pred_region
        %p251 = scmp.lt.s32.totalorder %s15, 1
        %s252 = scalar_select %p251, %s15, 1
        %s253 = scalar_lea.vmem %s1, %s252
      $region32: #{gblock_forward.7} parent=23 // pred_fallthru
        _
      // Predicated region
      $region33: #{gblock_forward.7} parent=23 // pred_check
        %p254 = pneg %p87
      $region34: #{gblock_forward.7} parent=23 // pred_check_branch
        %256 = sbr.rel (%p254) target = $region36
      $region35: #{gblock_forward.7} parent=23 // pred_region
        %p257 = scmp.lt.s32.totalorder %s15, 1
        %s258 = scalar_select %p257, %s15, 1
        %s259 = scalar_lea.vmem %s2, %s258
      $region36: #{gblock_forward.7} parent=23 // pred_fallthru
        _
    $region24: #{gblock_forward.7} parent=5 // pred_fallthru
      _
    %p260 = scmp.le.s32.totalorder 1, %s15
    %p261 = scmp.lt.s32.totalorder %s15, 3
    %p262 = pnand %p260, %p261
    %p263 = pneg %p262
    // Predicated region
    $region37: #{gblock_forward.7} parent=5 // pred_check
      _
    $region38: #{gblock_forward.7} parent=5 // pred_check_branch
      %265 = sbr.rel (%p262) target = $region40
    $region39: #{gblock_forward.7} parent=5 // pred_region
      %s266 = ssub.s32 %s15, 1
      %p267 = scmp.lt.s32.totalorder %s20, 1
      %s268 = scalar_select %p267, %s20, 1
      %s269 = smul.addr %s268, 32
      %s270 = smul.addr %s269, 4
      %s271 = scalar_lea.vmem %s0, %s270
      %p272 = pneg %p41
      %p273 = pneg %p38
      %p274 = scmp.lt.s32.totalorder %s20, 1
      %s275 = scalar_select %p274, %s20, 1
      %s276 = scalar_lea.vmem %s1, %s275
      %p277 = pneg %p67
      %p278 = pneg %p64
      %p279 = scmp.lt.s32.totalorder %s20, 1
      %s280 = scalar_select %p279, %s20, 1
      %s281 = scalar_lea.vmem %s2, %s280
      %p282 = pneg %p93
      %p283 = pneg %p90
      %p284 = pneg %p114
      %p285 = pneg %p111
      %p286 = pneg %p135
      %p287 = pneg %p132
      %p288 = pneg %p163
      %p289 = pneg %p160
      %s290 = sadd.s32 %s20, 4
      %p291 = scmp.lt.s32.totalorder %s290, 7
      %s292 = scalar_select %p291, %s290, 7
      %s293 = smul.addr %s292, 32
      %s294 = smul.addr %s293, 8
      %s295 = scalar_lea.vmem %s6, %s294
      %p296 = pneg %p189
      %p297 = pneg %p186
      %p298 = scmp.lt.s32.totalorder %s20, 1
      %s299 = scalar_select %p298, %s20, 1
      %s300 = scalar_lea.vmem %s7, %s299
      %p301 = pneg %p215
      %p302 = pneg %p212
      %p303 = scmp.lt.s32.totalorder %s20, 1
      %s304 = scalar_select %p303, %s20, 1
      %s305 = scalar_lea.vmem %s8, %s304
      %p306 = scmp.lt.s32.totalorder %s20, 1
      %s307 = scalar_select %p306, %s20, 1
      %s308 = smul.addr %s307, 32
      %s309 = smul.addr %s308, 4
      %s310 = scalar_lea.vmem %s0, %s309
      %p311 = scmp.lt.s32.totalorder %s20, 1
      %s312 = scalar_select %p311, %s20, 1
      %s313 = scalar_lea.vmem %s1, %s312
      %p314 = scmp.lt.s32.totalorder %s20, 1
      %s315 = scalar_select %p314, %s20, 1
      %s316 = scalar_lea.vmem %s2, %s315
      %s317 = sadd.s32 %s20, 4
      %p318 = scmp.lt.s32.totalorder %s317, 7
      %s319 = scalar_select %p318, %s317, 7
      %s320 = smul.addr %s319, 32
      %s321 = smul.addr %s320, 8
      %s322 = scalar_lea.vmem %s6, %s321
      %s323 = sadd.s32 %s20, 4
      %p324 = scmp.lt.s32.totalorder %s20, 1
      %s325 = scalar_select %p324, %s20, 1
      %s326 = scalar_lea.vmem %s7, %s325
      %p327 = scmp.lt.s32.totalorder %s20, 1
      %s328 = scalar_select %p327, %s20, 1
      %s329 = scalar_lea.vmem %s8, %s328
      %v331 = vld [vmem:[%s310] sm:$0xf]
      %v332 = vld [vmem:[%s310 + $0x4] sm:$0xf]
      %v333 = vld [vmem:[%s310 + $0x8] sm:$0xf]
      %v334 = vld [vmem:[%s310 + $0xc] sm:$0xf]
      %v335 = vld [vmem:[%s310 + $0x10] sm:$0xf]
      %v336 = vld [vmem:[%s310 + $0x14] sm:$0xf]
      %v337 = vld [vmem:[%s310 + $0x18] sm:$0xf]
      %v338 = vld [vmem:[%s310 + $0x1c] sm:$0xf]
      %v339 = vld [vmem:[%s310 + $0x20] sm:$0xf]
      %v340 = vld [vmem:[%s310 + $0x24] sm:$0xf]
      %v341 = vld [vmem:[%s310 + $0x28] sm:$0xf]
      %v342 = vld [vmem:[%s310 + $0x2c] sm:$0xf]
      %v343 = vld [vmem:[%s310 + $0x30] sm:$0xf]
      %v344 = vld [vmem:[%s310 + $0x34] sm:$0xf]
      %v345 = vld [vmem:[%s310 + $0x38] sm:$0xf]
      %v346 = vld [vmem:[%s310 + $0x3c] sm:$0xf]
      %v347 = vld [vmem:[%s310 + $0x40] sm:$0xf]
      %v348 = vld [vmem:[%s310 + $0x44] sm:$0xf]
      %v349 = vld [vmem:[%s310 + $0x48] sm:$0xf]
      %v350 = vld [vmem:[%s310 + $0x4c] sm:$0xf]
      %v351 = vld [vmem:[%s310 + $0x50] sm:$0xf]
      %v352 = vld [vmem:[%s310 + $0x54] sm:$0xf]
      %v353 = vld [vmem:[%s310 + $0x58] sm:$0xf]
      %v354 = vld [vmem:[%s310 + $0x5c] sm:$0xf]
      %v355 = vld [vmem:[%s310 + $0x60] sm:$0xf]
      %v356 = vld [vmem:[%s310 + $0x64] sm:$0xf]
      %v357 = vld [vmem:[%s310 + $0x68] sm:$0xf]
      %v358 = vld [vmem:[%s310 + $0x6c] sm:$0xf]
      %v359 = vld [vmem:[%s310 + $0x70] sm:$0xf]
      %v360 = vld [vmem:[%s310 + $0x74] sm:$0xf]
      %v361 = vld [vmem:[%s310 + $0x78] sm:$0xf]
      %v362 = vld [vmem:[%s310 + $0x7c] sm:$0xf]
      %v363 = vunpack.c.l.bf16 %v331
      %v364 = vunpack.c.l.bf16 %v332
      %v365 = vunpack.c.l.bf16 %v333
      %v366 = vunpack.c.l.bf16 %v334
      %v367 = vunpack.c.l.bf16 %v335
      %v368 = vunpack.c.l.bf16 %v336
      %v369 = vunpack.c.l.bf16 %v337
      %v370 = vunpack.c.l.bf16 %v338
      %v371 = vunpack.c.l.bf16 %v339
      %v372 = vunpack.c.l.bf16 %v340
      %v373 = vunpack.c.l.bf16 %v341
      %v374 = vunpack.c.l.bf16 %v342
      %v375 = vunpack.c.l.bf16 %v343
      %v376 = vunpack.c.l.bf16 %v344
      %v377 = vunpack.c.l.bf16 %v345
      %v378 = vunpack.c.l.bf16 %v346
      %v379 = vunpack.c.l.bf16 %v347
      %v380 = vunpack.c.l.bf16 %v348
      %v381 = vunpack.c.l.bf16 %v349
      %v382 = vunpack.c.l.bf16 %v350
      %v383 = vunpack.c.l.bf16 %v351
      %v384 = vunpack.c.l.bf16 %v352
      %v385 = vunpack.c.l.bf16 %v353
      %v386 = vunpack.c.l.bf16 %v354
      %v387 = vunpack.c.l.bf16 %v355
      %v388 = vunpack.c.l.bf16 %v356
      %v389 = vunpack.c.l.bf16 %v357
      %v390 = vunpack.c.l.bf16 %v358
      %v391 = vunpack.c.l.bf16 %v359
      %v392 = vunpack.c.l.bf16 %v360
      %v393 = vunpack.c.l.bf16 %v361
      %v394 = vunpack.c.l.bf16 %v362
      %v395 = vld [vmem:[%s313] sm:$0x1]
      %v397 = vlaneseq
      %v398 = vshrl.u32 %v397, 7
      %v399 = vsub.s32 0, %v398
      %v400 = vrot.slane %v395, %v399
      %v402 = vmul.f32 %v363, %v400
      %v403 = vmul.f32 %v364, %v400
      %v404 = vmul.f32 %v365, %v400
      %v405 = vmul.f32 %v366, %v400
      %v406 = vmul.f32 %v367, %v400
      %v407 = vmul.f32 %v368, %v400
      %v408 = vmul.f32 %v369, %v400
      %v409 = vmul.f32 %v370, %v400
      %v410 = vmul.f32 %v371, %v400
      %v411 = vmul.f32 %v372, %v400
      %v412 = vmul.f32 %v373, %v400
      %v413 = vmul.f32 %v374, %v400
      %v414 = vmul.f32 %v375, %v400
      %v415 = vmul.f32 %v376, %v400
      %v416 = vmul.f32 %v377, %v400
      %v417 = vmul.f32 %v378, %v400
      %v418 = vmul.f32 %v379, %v400
      %v419 = vmul.f32 %v380, %v400
      %v420 = vmul.f32 %v381, %v400
      %v421 = vmul.f32 %v382, %v400
      %v422 = vmul.f32 %v383, %v400
      %v423 = vmul.f32 %v384, %v400
      %v424 = vmul.f32 %v385, %v400
      %v425 = vmul.f32 %v386, %v400
      %v426 = vmul.f32 %v387, %v400
      %v427 = vmul.f32 %v388, %v400
      %v428 = vmul.f32 %v389, %v400
      %v429 = vmul.f32 %v390, %v400
      %v430 = vmul.f32 %v391, %v400
      %v431 = vmul.f32 %v392, %v400
      %v432 = vmul.f32 %v393, %v400
      %v433 = vmul.f32 %v394, %v400
      %v434 = vld [vmem:[%s316] sm:$0x1]
      %v436 = vlaneseq
      %v437 = vshrl.u32 %v436, 7
      %v438 = vsub.s32 0, %v437
      %v439 = vrot.slane %v434, %v438
      %v441 = vadd.f32 %v402, %v439
      %v442 = vadd.f32 %v403, %v439
      %v443 = vadd.f32 %v404, %v439
      %v444 = vadd.f32 %v405, %v439
      %v445 = vadd.f32 %v406, %v439
      %v446 = vadd.f32 %v407, %v439
      %v447 = vadd.f32 %v408, %v439
      %v448 = vadd.f32 %v409, %v439
      %v449 = vadd.f32 %v410, %v439
      %v450 = vadd.f32 %v411, %v439
      %v451 = vadd.f32 %v412, %v439
      %v452 = vadd.f32 %v413, %v439
      %v453 = vadd.f32 %v414, %v439
      %v454 = vadd.f32 %v415, %v439
      %v455 = vadd.f32 %v416, %v439
      %v456 = vadd.f32 %v417, %v439
      %v457 = vadd.f32 %v418, %v439
      %v458 = vadd.f32 %v419, %v439
      %v459 = vadd.f32 %v420, %v439
      %v460 = vadd.f32 %v421, %v439
      %v461 = vadd.f32 %v422, %v439
      %v462 = vadd.f32 %v423, %v439
      %v463 = vadd.f32 %v424, %v439
      %v464 = vadd.f32 %v425, %v439
      %v465 = vadd.f32 %v426, %v439
      %v466 = vadd.f32 %v427, %v439
      %v467 = vadd.f32 %v428, %v439
      %v468 = vadd.f32 %v429, %v439
      %v469 = vadd.f32 %v430, %v439
      %v470 = vadd.f32 %v431, %v439
      %v471 = vadd.f32 %v432, %v439
      %v472 = vadd.f32 %v433, %v439
      %v473 = vmax.f32 %v441, 0.0
      %v474 = vmax.f32 %v442, 0.0
      %v475 = vmax.f32 %v443, 0.0
      %v476 = vmax.f32 %v444, 0.0
      %v477 = vmax.f32 %v445, 0.0
      %v478 = vmax.f32 %v446, 0.0
      %v479 = vmax.f32 %v447, 0.0
      %v480 = vmax.f32 %v448, 0.0
      %v481 = vmax.f32 %v449, 0.0
      %v482 = vmax.f32 %v450, 0.0
      %v483 = vmax.f32 %v451, 0.0
      %v484 = vmax.f32 %v452, 0.0
      %v485 = vmax.f32 %v453, 0.0
      %v486 = vmax.f32 %v454, 0.0
      %v487 = vmax.f32 %v455, 0.0
      %v488 = vmax.f32 %v456, 0.0
      %v489 = vmax.f32 %v457, 0.0
      %v490 = vmax.f32 %v458, 0.0
      %v491 = vmax.f32 %v459, 0.0
      %v492 = vmax.f32 %v460, 0.0
      %v493 = vmax.f32 %v461, 0.0
      %v494 = vmax.f32 %v462, 0.0
      %v495 = vmax.f32 %v463, 0.0
      %v496 = vmax.f32 %v464, 0.0
      %v497 = vmax.f32 %v465, 0.0
      %v498 = vmax.f32 %v466, 0.0
      %v499 = vmax.f32 %v467, 0.0
      %v500 = vmax.f32 %v468, 0.0
      %v501 = vmax.f32 %v469, 0.0
      %v502 = vmax.f32 %v470, 0.0
      %v503 = vmax.f32 %v471, 0.0
      %v504 = vmax.f32 %v472, 0.0
      %v505 = vlaneseq
      %v506 = vshrl.u32 %v505, 7
      %v507 = vadd.s32 %v506, 8
      %v508 = vadd.s32 %v506, 16
      %v509 = vadd.s32 %v506, 24
      %v510 = vadd.s32 %v506, 32
      %v511 = vadd.s32 %v506, 40
      %v512 = vadd.s32 %v506, 48
      %v513 = vadd.s32 %v506, 56
      %v514 = vadd.s32 %v506, 64
      %v515 = vadd.s32 %v506, 72
      %v516 = vadd.s32 %v506, 80
      %v517 = vadd.s32 %v506, 88
      %v518 = vadd.s32 %v506, 96
      %v519 = vadd.s32 %v506, 104
      %v520 = vadd.s32 %v506, 112
      %v521 = vadd.s32 %v506, 120
      %v522 = vadd.s32 %v506, 128
      %v523 = vadd.s32 %v506, 136
      %v524 = vadd.s32 %v506, 144
      %v525 = vadd.s32 %v506, 152
      %v526 = vadd.s32 %v506, 160
      %v527 = vadd.s32 %v506, 168
      %v528 = vadd.s32 %v506, 176
      %v529 = vadd.s32 %v506, 184
      %v530 = vadd.s32 %v506, 192
      %v531 = vadd.s32 %v506, 200
      %v532 = vadd.s32 %v506, 208
      %v533 = vadd.s32 %v506, 216
      %v534 = vadd.s32 %v506, 224
      %v535 = vadd.s32 %v506, 232
      %v536 = vadd.s32 %v506, 240
      %v537 = vadd.s32 %v506, 248
      %v538 = vpack.c.bf16 %v474, %v473
      %v539 = vpack.c.bf16 %v476, %v475
      %v540 = vpack.c.bf16 %v478, %v477
      %v541 = vpack.c.bf16 %v480, %v479
      %v542 = vpack.c.bf16 %v482, %v481
      %v543 = vpack.c.bf16 %v484, %v483
      %v544 = vpack.c.bf16 %v486, %v485
      %v545 = vpack.c.bf16 %v488, %v487
      %v546 = vpack.c.bf16 %v490, %v489
      %v547 = vpack.c.bf16 %v492, %v491
      %v548 = vpack.c.bf16 %v494, %v493
      %v549 = vpack.c.bf16 %v496, %v495
      %v550 = vpack.c.bf16 %v498, %v497
      %v551 = vpack.c.bf16 %v500, %v499
      %v552 = vpack.c.bf16 %v502, %v501
      %v553 = vpack.c.bf16 %v504, %v503
      %vm554 = vcmp.gt.s32.totalorder %v506, 0
      %vm555 = vcmp.gt.s32.totalorder %v507, 0
      %vm556 = vcmp.gt.s32.totalorder %v508, 0
      %vm557 = vcmp.gt.s32.totalorder %v509, 0
      %vm558 = vcmp.gt.s32.totalorder %v510, 0
      %vm559 = vcmp.gt.s32.totalorder %v511, 0
      %vm560 = vcmp.gt.s32.totalorder %v512, 0
      %vm561 = vcmp.gt.s32.totalorder %v513, 0
      %vm562 = vcmp.gt.s32.totalorder %v514, 0
      %vm563 = vcmp.gt.s32.totalorder %v515, 0
      %vm564 = vcmp.gt.s32.totalorder %v516, 0
      %vm565 = vcmp.gt.s32.totalorder %v517, 0
      %vm566 = vcmp.gt.s32.totalorder %v518, 0
      %vm567 = vcmp.gt.s32.totalorder %v519, 0
      %vm568 = vcmp.gt.s32.totalorder %v520, 0
      %vm569 = vcmp.gt.s32.totalorder %v521, 0
      %vm570 = vcmp.gt.s32.totalorder %v522, 0
      %vm571 = vcmp.gt.s32.totalorder %v523, 0
      %vm572 = vcmp.gt.s32.totalorder %v524, 0
      %vm573 = vcmp.gt.s32.totalorder %v525, 0
      %vm574 = vcmp.gt.s32.totalorder %v526, 0
      %vm575 = vcmp.gt.s32.totalorder %v527, 0
      %vm576 = vcmp.gt.s32.totalorder %v528, 0
      %vm577 = vcmp.gt.s32.totalorder %v529, 0
      %vm578 = vcmp.gt.s32.totalorder %v530, 0
      %vm579 = vcmp.gt.s32.totalorder %v531, 0
      %vm580 = vcmp.gt.s32.totalorder %v532, 0
      %vm581 = vcmp.gt.s32.totalorder %v533, 0
      %vm582 = vcmp.gt.s32.totalorder %v534, 0
      %vm583 = vcmp.gt.s32.totalorder %v535, 0
      %vm584 = vcmp.gt.s32.totalorder %v536, 0
      %vm585 = vcmp.gt.s32.totalorder %v537, 0
      %v586 = vrot.slane %v473, 7
      %v587 = vrot.slane %v474, 7
      %v588 = vrot.slane %v475, 7
      %v589 = vrot.slane %v476, 7
      %v590 = vrot.slane %v477, 7
      %v591 = vrot.slane %v478, 7
      %v592 = vrot.slane %v479, 7
      %v593 = vrot.slane %v480, 7
      %v594 = vrot.slane %v481, 7
      %v595 = vrot.slane %v482, 7
      %v596 = vrot.slane %v483, 7
      %v597 = vrot.slane %v484, 7
      %v598 = vrot.slane %v485, 7
      %v599 = vrot.slane %v486, 7
      %v600 = vrot.slane %v487, 7
      %v601 = vrot.slane %v488, 7
      %v602 = vrot.slane %v489, 7
      %v603 = vrot.slane %v490, 7
      %v604 = vrot.slane %v491, 7
      %v605 = vrot.slane %v492, 7
      %v606 = vrot.slane %v493, 7
      %v607 = vrot.slane %v494, 7
      %v608 = vrot.slane %v495, 7
      %v609 = vrot.slane %v496, 7
      %v610 = vrot.slane %v497, 7
      %v611 = vrot.slane %v498, 7
      %v612 = vrot.slane %v499, 7
      %v613 = vrot.slane %v500, 7
      %v614 = vrot.slane %v501, 7
      %v615 = vrot.slane %v502, 7
      %v616 = vrot.slane %v503, 7
      %v617 = vrot.slane %v504, 7
      %vm618 = vcmp.lt.s32.totalorder %v506, 1
      %v619 = vsel %vm618, %v616, %v617
      %v620 = vsel %vm618, %v615, %v616
      %v621 = vsel %vm618, %v614, %v615
      %v622 = vsel %vm618, %v613, %v614
      %v623 = vsel %vm618, %v612, %v613
      %v624 = vsel %vm618, %v611, %v612
      %v625 = vsel %vm618, %v610, %v611
      %v626 = vsel %vm618, %v609, %v610
      %v627 = vsel %vm618, %v608, %v609
      %v628 = vsel %vm618, %v607, %v608
      %v629 = vsel %vm618, %v606, %v607
      %v630 = vsel %vm618, %v605, %v606
      %v631 = vsel %vm618, %v604, %v605
      %v632 = vsel %vm618, %v603, %v604
      %v633 = vsel %vm618, %v602, %v603
      %v634 = vsel %vm618, %v601, %v602
      %v635 = vsel %vm618, %v600, %v601
      %v636 = vsel %vm618, %v599, %v600
      %v637 = vsel %vm618, %v598, %v599
      %v638 = vsel %vm618, %v597, %v598
      %v639 = vsel %vm618, %v596, %v597
      %v640 = vsel %vm618, %v595, %v596
      %v641 = vsel %vm618, %v594, %v595
      %v642 = vsel %vm618, %v593, %v594
      %v643 = vsel %vm618, %v592, %v593
      %v644 = vsel %vm618, %v591, %v592
      %v645 = vsel %vm618, %v590, %v591
      %v646 = vsel %vm618, %v589, %v590
      %v647 = vsel %vm618, %v588, %v589
      %v648 = vsel %vm618, %v587, %v588
      %v649 = vsel %vm618, %v586, %v587
      %v650 = vsel %vm618, %v617, %v586
      %v651 = vsel %vm554, 1, 0
      %v652 = vsel %vm555, 1, 0
      %v653 = vsel %vm556, 1, 0
      %v654 = vsel %vm557, 1, 0
      %v655 = vsel %vm558, 1, 0
      %v656 = vsel %vm559, 1, 0
      %v657 = vsel %vm560, 1, 0
      %v658 = vsel %vm561, 1, 0
      %v659 = vsel %vm562, 1, 0
      %v660 = vsel %vm563, 1, 0
      %v661 = vsel %vm564, 1, 0
      %v662 = vsel %vm565, 1, 0
      %v663 = vsel %vm566, 1, 0
      %v664 = vsel %vm567, 1, 0
      %v665 = vsel %vm568, 1, 0
      %v666 = vsel %vm569, 1, 0
      %v667 = vsel %vm570, 1, 0
      %v668 = vsel %vm571, 1, 0
      %v669 = vsel %vm572, 1, 0
      %v670 = vsel %vm573, 1, 0
      %v671 = vsel %vm574, 1, 0
      %v672 = vsel %vm575, 1, 0
      %v673 = vsel %vm576, 1, 0
      %v674 = vsel %vm577, 1, 0
      %v675 = vsel %vm578, 1, 0
      %v676 = vsel %vm579, 1, 0
      %v677 = vsel %vm580, 1, 0
      %v678 = vsel %vm581, 1, 0
      %v679 = vsel %vm582, 1, 0
      %v680 = vsel %vm583, 1, 0
      %v681 = vsel %vm584, 1, 0
      %v682 = vsel %vm585, 1, 0
      %vm683 = vcmp.eq.s32.totalorder %v651, 1
      %vm684 = vcmp.eq.s32.totalorder %v652, 1
      %vm685 = vcmp.eq.s32.totalorder %v653, 1
      %vm686 = vcmp.eq.s32.totalorder %v654, 1
      %vm687 = vcmp.eq.s32.totalorder %v655, 1
      %vm688 = vcmp.eq.s32.totalorder %v656, 1
      %vm689 = vcmp.eq.s32.totalorder %v657, 1
      %vm690 = vcmp.eq.s32.totalorder %v658, 1
      %vm691 = vcmp.eq.s32.totalorder %v659, 1
      %vm692 = vcmp.eq.s32.totalorder %v660, 1
      %vm693 = vcmp.eq.s32.totalorder %v661, 1
      %vm694 = vcmp.eq.s32.totalorder %v662, 1
      %vm695 = vcmp.eq.s32.totalorder %v663, 1
      %vm696 = vcmp.eq.s32.totalorder %v664, 1
      %vm697 = vcmp.eq.s32.totalorder %v665, 1
      %vm698 = vcmp.eq.s32.totalorder %v666, 1
      %vm699 = vcmp.eq.s32.totalorder %v667, 1
      %vm700 = vcmp.eq.s32.totalorder %v668, 1
      %vm701 = vcmp.eq.s32.totalorder %v669, 1
      %vm702 = vcmp.eq.s32.totalorder %v670, 1
      %vm703 = vcmp.eq.s32.totalorder %v671, 1
      %vm704 = vcmp.eq.s32.totalorder %v672, 1
      %vm705 = vcmp.eq.s32.totalorder %v673, 1
      %vm706 = vcmp.eq.s32.totalorder %v674, 1
      %vm707 = vcmp.eq.s32.totalorder %v675, 1
      %vm708 = vcmp.eq.s32.totalorder %v676, 1
      %vm709 = vcmp.eq.s32.totalorder %v677, 1
      %vm710 = vcmp.eq.s32.totalorder %v678, 1
      %vm711 = vcmp.eq.s32.totalorder %v679, 1
      %vm712 = vcmp.eq.s32.totalorder %v680, 1
      %vm713 = vcmp.eq.s32.totalorder %v681, 1
      %vm714 = vcmp.eq.s32.totalorder %v682, 1
      %v715 = vsel %vm683, %v650, 0.0
      %v716 = vsel %vm684, %v649, 0.0
      %v717 = vsel %vm685, %v648, 0.0
      %v718 = vsel %vm686, %v647, 0.0
      %v719 = vsel %vm687, %v646, 0.0
      %v720 = vsel %vm688, %v645, 0.0
      %v721 = vsel %vm689, %v644, 0.0
      %v722 = vsel %vm690, %v643, 0.0
      %v723 = vsel %vm691, %v642, 0.0
      %v724 = vsel %vm692, %v641, 0.0
      %v725 = vsel %vm693, %v640, 0.0
      %v726 = vsel %vm694, %v639, 0.0
      %v727 = vsel %vm695, %v638, 0.0
      %v728 = vsel %vm696, %v637, 0.0
      %v729 = vsel %vm697, %v636, 0.0
      %v730 = vsel %vm698, %v635, 0.0
      %v731 = vsel %vm699, %v634, 0.0
      %v732 = vsel %vm700, %v633, 0.0
      %v733 = vsel %vm701, %v632, 0.0
      %v734 = vsel %vm702, %v631, 0.0
      %v735 = vsel %vm703, %v630, 0.0
      %v736 = vsel %vm704, %v629, 0.0
      %v737 = vsel %vm705, %v628, 0.0
      %v738 = vsel %vm706, %v627, 0.0
      %v739 = vsel %vm707, %v626, 0.0
      %v740 = vsel %vm708, %v625, 0.0
      %v741 = vsel %vm709, %v624, 0.0
      %v742 = vsel %vm710, %v623, 0.0
      %v743 = vsel %vm711, %v622, 0.0
      %v744 = vsel %vm712, %v621, 0.0
      %v745 = vsel %vm713, %v620, 0.0
      %v746 = vsel %vm714, %v619, 0.0
      %v747 = vpack.c.bf16 %v716, %v715
      %v748 = vpack.c.bf16 %v718, %v717
      %v749 = vpack.c.bf16 %v720, %v719
      %v750 = vpack.c.bf16 %v722, %v721
      %v751 = vpack.c.bf16 %v724, %v723
      %v752 = vpack.c.bf16 %v726, %v725
      %v753 = vpack.c.bf16 %v728, %v727
      %v754 = vpack.c.bf16 %v730, %v729
      %v755 = vpack.c.bf16 %v732, %v731
      %v756 = vpack.c.bf16 %v734, %v733
      %v757 = vpack.c.bf16 %v736, %v735
      %v758 = vpack.c.bf16 %v738, %v737
      %v759 = vpack.c.bf16 %v740, %v739
      %v760 = vpack.c.bf16 %v742, %v741
      %v761 = vpack.c.bf16 %v744, %v743
      %v762 = vpack.c.bf16 %v746, %v745
      %vm763 = vcmp.lt.s32.totalorder %v506, 255
      %vm764 = vcmp.lt.s32.totalorder %v507, 255
      %vm765 = vcmp.lt.s32.totalorder %v508, 255
      %vm766 = vcmp.lt.s32.totalorder %v509, 255
      %vm767 = vcmp.lt.s32.totalorder %v510, 255
      %vm768 = vcmp.lt.s32.totalorder %v511, 255
      %vm769 = vcmp.lt.s32.totalorder %v512, 255
      %vm770 = vcmp.lt.s32.totalorder %v513, 255
      %vm771 = vcmp.lt.s32.totalorder %v514, 255
      %vm772 = vcmp.lt.s32.totalorder %v515, 255
      %vm773 = vcmp.lt.s32.totalorder %v516, 255
      %vm774 = vcmp.lt.s32.totalorder %v517, 255
      %vm775 = vcmp.lt.s32.totalorder %v518, 255
      %vm776 = vcmp.lt.s32.totalorder %v519, 255
      %vm777 = vcmp.lt.s32.totalorder %v520, 255
      %vm778 = vcmp.lt.s32.totalorder %v521, 255
      %vm779 = vcmp.lt.s32.totalorder %v522, 255
      %vm780 = vcmp.lt.s32.totalorder %v523, 255
      %vm781 = vcmp.lt.s32.totalorder %v524, 255
      %vm782 = vcmp.lt.s32.totalorder %v525, 255
      %vm783 = vcmp.lt.s32.totalorder %v526, 255
      %vm784 = vcmp.lt.s32.totalorder %v527, 255
      %vm785 = vcmp.lt.s32.totalorder %v528, 255
      %vm786 = vcmp.lt.s32.totalorder %v529, 255
      %vm787 = vcmp.lt.s32.totalorder %v530, 255
      %vm788 = vcmp.lt.s32.totalorder %v531, 255
      %vm789 = vcmp.lt.s32.totalorder %v532, 255
      %vm790 = vcmp.lt.s32.totalorder %v533, 255
      %vm791 = vcmp.lt.s32.totalorder %v534, 255
      %vm792 = vcmp.lt.s32.totalorder %v535, 255
      %vm793 = vcmp.lt.s32.totalorder %v536, 255
      %vm794 = vcmp.lt.s32.totalorder %v537, 255
      %v795 = vrot.slane %v473, 1
      %v796 = vrot.slane %v474, 1
      %v797 = vrot.slane %v475, 1
      %v798 = vrot.slane %v476, 1
      %v799 = vrot.slane %v477, 1
      %v800 = vrot.slane %v478, 1
      %v801 = vrot.slane %v479, 1
      %v802 = vrot.slane %v480, 1
      %v803 = vrot.slane %v481, 1
      %v804 = vrot.slane %v482, 1
      %v805 = vrot.slane %v483, 1
      %v806 = vrot.slane %v484, 1
      %v807 = vrot.slane %v485, 1
      %v808 = vrot.slane %v486, 1
      %v809 = vrot.slane %v487, 1
      %v810 = vrot.slane %v488, 1
      %v811 = vrot.slane %v489, 1
      %v812 = vrot.slane %v490, 1
      %v813 = vrot.slane %v491, 1
      %v814 = vrot.slane %v492, 1
      %v815 = vrot.slane %v493, 1
      %v816 = vrot.slane %v494, 1
      %v817 = vrot.slane %v495, 1
      %v818 = vrot.slane %v496, 1
      %v819 = vrot.slane %v497, 1
      %v820 = vrot.slane %v498, 1
      %v821 = vrot.slane %v499, 1
      %v822 = vrot.slane %v500, 1
      %v823 = vrot.slane %v501, 1
      %v824 = vrot.slane %v502, 1
      %v825 = vrot.slane %v503, 1
      %v826 = vrot.slane %v504, 1
      %vm827 = vcmp.lt.s32.totalorder %v506, 7
      %v828 = vsel %vm827, %v825, %v826
      %v829 = vsel %vm827, %v824, %v825
      %v830 = vsel %vm827, %v823, %v824
      %v831 = vsel %vm827, %v822, %v823
      %v832 = vsel %vm827, %v821, %v822
      %v833 = vsel %vm827, %v820, %v821
      %v834 = vsel %vm827, %v819, %v820
      %v835 = vsel %vm827, %v818, %v819
      %v836 = vsel %vm827, %v817, %v818
      %v837 = vsel %vm827, %v816, %v817
      %v838 = vsel %vm827, %v815, %v816
      %v839 = vsel %vm827, %v814, %v815
      %v840 = vsel %vm827, %v813, %v814
      %v841 = vsel %vm827, %v812, %v813
      %v842 = vsel %vm827, %v811, %v812
      %v843 = vsel %vm827, %v810, %v811
      %v844 = vsel %vm827, %v809, %v810
      %v845 = vsel %vm827, %v808, %v809
      %v846 = vsel %vm827, %v807, %v808
      %v847 = vsel %vm827, %v806, %v807
      %v848 = vsel %vm827, %v805, %v806
      %v849 = vsel %vm827, %v804, %v805
      %v850 = vsel %vm827, %v803, %v804
      %v851 = vsel %vm827, %v802, %v803
      %v852 = vsel %vm827, %v801, %v802
      %v853 = vsel %vm827, %v800, %v801
      %v854 = vsel %vm827, %v799, %v800
      %v855 = vsel %vm827, %v798, %v799
      %v856 = vsel %vm827, %v797, %v798
      %v857 = vsel %vm827, %v796, %v797
      %v858 = vsel %vm827, %v795, %v796
      %v859 = vsel %vm827, %v826, %v795
      %v860 = vsel %vm763, 1, 0
      %v861 = vsel %vm764, 1, 0
      %v862 = vsel %vm765, 1, 0
      %v863 = vsel %vm766, 1, 0
      %v864 = vsel %vm767, 1, 0
      %v865 = vsel %vm768, 1, 0
      %v866 = vsel %vm769, 1, 0
      %v867 = vsel %vm770, 1, 0
      %v868 = vsel %vm771, 1, 0
      %v869 = vsel %vm772, 1, 0
      %v870 = vsel %vm773, 1, 0
      %v871 = vsel %vm774, 1, 0
      %v872 = vsel %vm775, 1, 0
      %v873 = vsel %vm776, 1, 0
      %v874 = vsel %vm777, 1, 0
      %v875 = vsel %vm778, 1, 0
      %v876 = vsel %vm779, 1, 0
      %v877 = vsel %vm780, 1, 0
      %v878 = vsel %vm781, 1, 0
      %v879 = vsel %vm782, 1, 0
      %v880 = vsel %vm783, 1, 0
      %v881 = vsel %vm784, 1, 0
      %v882 = vsel %vm785, 1, 0
      %v883 = vsel %vm786, 1, 0
      %v884 = vsel %vm787, 1, 0
      %v885 = vsel %vm788, 1, 0
      %v886 = vsel %vm789, 1, 0
      %v887 = vsel %vm790, 1, 0
      %v888 = vsel %vm791, 1, 0
      %v889 = vsel %vm792, 1, 0
      %v890 = vsel %vm793, 1, 0
      %v891 = vsel %vm794, 1, 0
      %vm892 = vcmp.eq.s32.totalorder %v860, 1
      %vm893 = vcmp.eq.s32.totalorder %v861, 1
      %vm894 = vcmp.eq.s32.totalorder %v862, 1
      %vm895 = vcmp.eq.s32.totalorder %v863, 1
      %vm896 = vcmp.eq.s32.totalorder %v864, 1
      %vm897 = vcmp.eq.s32.totalorder %v865, 1
      %vm898 = vcmp.eq.s32.totalorder %v866, 1
      %vm899 = vcmp.eq.s32.totalorder %v867, 1
      %vm900 = vcmp.eq.s32.totalorder %v868, 1
      %vm901 = vcmp.eq.s32.totalorder %v869, 1
      %vm902 = vcmp.eq.s32.totalorder %v870, 1
      %vm903 = vcmp.eq.s32.totalorder %v871, 1
      %vm904 = vcmp.eq.s32.totalorder %v872, 1
      %vm905 = vcmp.eq.s32.totalorder %v873, 1
      %vm906 = vcmp.eq.s32.totalorder %v874, 1
      %vm907 = vcmp.eq.s32.totalorder %v875, 1
      %vm908 = vcmp.eq.s32.totalorder %v876, 1
      %vm909 = vcmp.eq.s32.totalorder %v877, 1
      %vm910 = vcmp.eq.s32.totalorder %v878, 1
      %vm911 = vcmp.eq.s32.totalorder %v879, 1
      %vm912 = vcmp.eq.s32.totalorder %v880, 1
      %vm913 = vcmp.eq.s32.totalorder %v881, 1
      %vm914 = vcmp.eq.s32.totalorder %v882, 1
      %vm915 = vcmp.eq.s32.totalorder %v883, 1
      %vm916 = vcmp.eq.s32.totalorder %v884, 1
      %vm917 = vcmp.eq.s32.totalorder %v885, 1
      %vm918 = vcmp.eq.s32.totalorder %v886, 1
      %vm919 = vcmp.eq.s32.totalorder %v887, 1
      %vm920 = vcmp.eq.s32.totalorder %v888, 1
      %vm921 = vcmp.eq.s32.totalorder %v889, 1
      %vm922 = vcmp.eq.s32.totalorder %v890, 1
      %vm923 = vcmp.eq.s32.totalorder %v891, 1
      %v924 = vsel %vm892, %v858, 0.0
      %v925 = vsel %vm893, %v857, 0.0
      %v926 = vsel %vm894, %v856, 0.0
      %v927 = vsel %vm895, %v855, 0.0
      %v928 = vsel %vm896, %v854, 0.0
      %v929 = vsel %vm897, %v853, 0.0
      %v930 = vsel %vm898, %v852, 0.0
      %v931 = vsel %vm899, %v851, 0.0
      %v932 = vsel %vm900, %v850, 0.0
      %v933 = vsel %vm901, %v849, 0.0
      %v934 = vsel %vm902, %v848, 0.0
      %v935 = vsel %vm903, %v847, 0.0
      %v936 = vsel %vm904, %v846, 0.0
      %v937 = vsel %vm905, %v845, 0.0
      %v938 = vsel %vm906, %v844, 0.0
      %v939 = vsel %vm907, %v843, 0.0
      %v940 = vsel %vm908, %v842, 0.0
      %v941 = vsel %vm909, %v841, 0.0
      %v942 = vsel %vm910, %v840, 0.0
      %v943 = vsel %vm911, %v839, 0.0
      %v944 = vsel %vm912, %v838, 0.0
      %v945 = vsel %vm913, %v837, 0.0
      %v946 = vsel %vm914, %v836, 0.0
      %v947 = vsel %vm915, %v835, 0.0
      %v948 = vsel %vm916, %v834, 0.0
      %v949 = vsel %vm917, %v833, 0.0
      %v950 = vsel %vm918, %v832, 0.0
      %v951 = vsel %vm919, %v831, 0.0
      %v952 = vsel %vm920, %v830, 0.0
      %v953 = vsel %vm921, %v829, 0.0
      %v954 = vsel %vm922, %v828, 0.0
      %v955 = vsel %vm923, %v859, 0.0
      %v956 = vpack.c.bf16 %v925, %v924
      %v957 = vpack.c.bf16 %v927, %v926
      %v958 = vpack.c.bf16 %v929, %v928
      %v959 = vpack.c.bf16 %v931, %v930
      %v960 = vpack.c.bf16 %v933, %v932
      %v961 = vpack.c.bf16 %v935, %v934
      %v962 = vpack.c.bf16 %v937, %v936
      %v963 = vpack.c.bf16 %v939, %v938
      %v964 = vpack.c.bf16 %v941, %v940
      %v965 = vpack.c.bf16 %v943, %v942
      %v966 = vpack.c.bf16 %v945, %v944
      %v967 = vpack.c.bf16 %v947, %v946
      %v968 = vpack.c.bf16 %v949, %v948
      %v969 = vpack.c.bf16 %v951, %v950
      %v970 = vpack.c.bf16 %v953, %v952
      %v971 = vpack.c.bf16 %v955, %v954
      %v972 = vld [vmem:[%s3] sm:$0xf]
      %v973 = vld [vmem:[%s3 + $0x4] sm:$0xf]
      %v974 = vld [vmem:[%s3 + $0x8] sm:$0xf]
      %v975 = vld [vmem:[%s3 + $0xc] sm:$0xf]
      %v976 = vld [vmem:[%s3 + $0x10] sm:$0xf]
      %v977 = vld [vmem:[%s3 + $0x14] sm:$0xf]
      %v978 = vld [vmem:[%s3 + $0x18] sm:$0xf]
      %v979 = vld [vmem:[%s3 + $0x1c] sm:$0xf]
      %v980 = vld [vmem:[%s3 + $0x20] sm:$0xf]
      %v981 = vld [vmem:[%s3 + $0x24] sm:$0xf]
      %v982 = vld [vmem:[%s3 + $0x28] sm:$0xf]
      %v983 = vld [vmem:[%s3 + $0x2c] sm:$0xf]
      %v984 = vld [vmem:[%s3 + $0x30] sm:$0xf]
      %v985 = vld [vmem:[%s3 + $0x34] sm:$0xf]
      %v986 = vld [vmem:[%s3 + $0x38] sm:$0xf]
      %v987 = vld [vmem:[%s3 + $0x3c] sm:$0xf]
      %v988 = vld [vmem:[%s3 + $0x40] sm:$0xf]
      %v989 = vld [vmem:[%s3 + $0x44] sm:$0xf]
      %v990 = vld [vmem:[%s3 + $0x48] sm:$0xf]
      %v991 = vld [vmem:[%s3 + $0x4c] sm:$0xf]
      %v992 = vld [vmem:[%s3 + $0x50] sm:$0xf]
      %v993 = vld [vmem:[%s3 + $0x54] sm:$0xf]
      %v994 = vld [vmem:[%s3 + $0x58] sm:$0xf]
      %v995 = vld [vmem:[%s3 + $0x5c] sm:$0xf]
      %v996 = vld [vmem:[%s3 + $0x60] sm:$0xf]
      %v997 = vld [vmem:[%s3 + $0x64] sm:$0xf]
      %v998 = vld [vmem:[%s3 + $0x68] sm:$0xf]
      %v999 = vld [vmem:[%s3 + $0x6c] sm:$0xf]
      %v1000 = vld [vmem:[%s3 + $0x70] sm:$0xf]
      %v1001 = vld [vmem:[%s3 + $0x74] sm:$0xf]
      %v1002 = vld [vmem:[%s3 + $0x78] sm:$0xf]
      %v1003 = vld [vmem:[%s3 + $0x7c] sm:$0xf]
      %v1004 = vld [vmem:[%s3 + $0x80] sm:$0xf]
      %v1005 = vld [vmem:[%s3 + $0x84] sm:$0xf]
      %v1006 = vld [vmem:[%s3 + $0x88] sm:$0xf]
      %v1007 = vld [vmem:[%s3 + $0x8c] sm:$0xf]
      %v1008 = vld [vmem:[%s3 + $0x90] sm:$0xf]
      %v1009 = vld [vmem:[%s3 + $0x94] sm:$0xf]
      %v1010 = vld [vmem:[%s3 + $0x98] sm:$0xf]
      %v1011 = vld [vmem:[%s3 + $0x9c] sm:$0xf]
      %v1012 = vld [vmem:[%s3 + $0xa0] sm:$0xf]
      %v1013 = vld [vmem:[%s3 + $0xa4] sm:$0xf]
      %v1014 = vld [vmem:[%s3 + $0xa8] sm:$0xf]
      %v1015 = vld [vmem:[%s3 + $0xac] sm:$0xf]
      %v1016 = vld [vmem:[%s3 + $0xb0] sm:$0xf]
      %v1017 = vld [vmem:[%s3 + $0xb4] sm:$0xf]
      %v1018 = vld [vmem:[%s3 + $0xb8] sm:$0xf]
      %v1019 = vld [vmem:[%s3 + $0xbc] sm:$0xf]
      %v1020 = vld [vmem:[%s4] sm:$0x1]
      %v1022 = vlaneseq
      %v1023 = vshrl.u32 %v1022, 7
      %v1024 = vsub.s32 0, %v1023
      %v1025 = vrot.slane %v1020, %v1024
      %v1075 = vunpack.c.l.b16 %v972
      %v1076 = vunpack.c.l.b16 %v973
      %v1077 = vunpack.c.l.b16 %v974
      %v1078 = vunpack.c.l.b16 %v975
      %v1079 = vunpack.c.l.b16 %v976
      %v1080 = vunpack.c.l.b16 %v977
      %v1081 = vunpack.c.l.b16 %v978
      %v1082 = vunpack.c.l.b16 %v979
      %v1083 = vunpack.c.l.b16 %v980
      %v1084 = vunpack.c.l.b16 %v981
      %v1085 = vunpack.c.l.b16 %v982
      %v1086 = vunpack.c.l.b16 %v983
      %v1087 = vunpack.c.l.b16 %v984
      %v1088 = vunpack.c.l.b16 %v985
      %v1089 = vunpack.c.l.b16 %v986
      %v1090 = vunpack.c.l.b16 %v987
      %v1091 = vunpack.c.l.b16 %v988
      %v1092 = vunpack.c.l.b16 %v989
      %v1093 = vunpack.c.l.b16 %v990
      %v1094 = vunpack.c.l.b16 %v991
      %v1095 = vunpack.c.l.b16 %v992
      %v1096 = vunpack.c.l.b16 %v993
      %v1097 = vunpack.c.l.b16 %v994
      %v1098 = vunpack.c.l.b16 %v995
      %v1099 = vunpack.c.l.b16 %v996
      %v1100 = vunpack.c.l.b16 %v997
      %v1101 = vunpack.c.l.b16 %v998
      %v1102 = vunpack.c.l.b16 %v999
      %v1103 = vunpack.c.l.b16 %v1000
      %v1104 = vunpack.c.l.b16 %v1001
      %v1105 = vunpack.c.l.b16 %v1002
      %v1106 = vunpack.c.l.b16 %v1003
      %v1107 = vunpack.c.l.b16 %v1004
      %v1108 = vunpack.c.l.b16 %v1005
      %v1109 = vunpack.c.l.b16 %v1006
      %v1110 = vunpack.c.l.b16 %v1007
      %v1111 = vunpack.c.l.b16 %v1008
      %v1112 = vunpack.c.l.b16 %v1009
      %v1113 = vunpack.c.l.b16 %v1010
      %v1114 = vunpack.c.l.b16 %v1011
      %v1115 = vunpack.c.l.b16 %v1012
      %v1116 = vunpack.c.l.b16 %v1013
      %v1117 = vunpack.c.l.b16 %v1014
      %v1118 = vunpack.c.l.b16 %v1015
      %v1119 = vunpack.c.l.b16 %v1016
      %v1120 = vunpack.c.l.b16 %v1017
      %v1121 = vunpack.c.l.b16 %v1018
      %v1122 = vunpack.c.l.b16 %v1019
      %v1123 = vpack.c.b16 %v1076, %v1075
      %v1124 = vpack.c.b16 %v1078, %v1077
      %v1125 = vpack.c.b16 %v1080, %v1079
      %v1126 = vpack.c.b16 %v1082, %v1081
      %v1127 = vpack.c.b16 %v1084, %v1083
      %v1128 = vpack.c.b16 %v1086, %v1085
      %v1129 = vpack.c.b16 %v1088, %v1087
      %v1130 = vpack.c.b16 %v1090, %v1089
      %v1131 = vpack.c.b16 %v1092, %v1091
      %v1132 = vpack.c.b16 %v1094, %v1093
      %v1133 = vpack.c.b16 %v1096, %v1095
      %v1134 = vpack.c.b16 %v1098, %v1097
      %v1135 = vpack.c.b16 %v1100, %v1099
      %v1136 = vpack.c.b16 %v1102, %v1101
      %v1137 = vpack.c.b16 %v1104, %v1103
      %v1138 = vpack.c.b16 %v1106, %v1105
      %v1139 = vpack.c.b16 %v1108, %v1107
      %v1140 = vpack.c.b16 %v1110, %v1109
      %v1141 = vpack.c.b16 %v1112, %v1111
      %v1142 = vpack.c.b16 %v1114, %v1113
      %v1143 = vpack.c.b16 %v1116, %v1115
      %v1144 = vpack.c.b16 %v1118, %v1117
      %v1145 = vpack.c.b16 %v1120, %v1119
      %v1146 = vpack.c.b16 %v1122, %v1121
      %1171 = vmatprep.subr.bf16.mxu0 0
      %1172 = vmatpush1.bf16.msra.mxu0 %v1123
      %1173 = vmatprep.subr.bf16.mxu0 0
      %1174 = vmatpush1.bf16.msra.mxu0 %v1124
      %1175 = vmatprep.subr.bf16.mxu0 0
      %1176 = vmatpush1.bf16.msra.mxu0 %v1125
      %1177 = vmatprep.subr.bf16.mxu0 0
      %1178 = vmatpush1.bf16.msra.mxu0 %v1126
      %1179 = vmatprep.subr.bf16.mxu0 0
      %1180 = vmatpush1.bf16.msra.mxu0 %v1127
      %1181 = vmatprep.subr.bf16.mxu0 0
      %1182 = vmatpush1.bf16.msra.mxu0 %v1128
      %1183 = vmatprep.subr.bf16.mxu0 0
      %1184 = vmatpush1.bf16.msra.mxu0 %v1129
      %1185 = vmatprep.subr.bf16.mxu0 0
      %1186 = vmatpush1.bf16.msra.mxu0 %v1130
      %1187 = vmatprep.subr.bf16.mxu0 0
      %1188 = vmatpush1.bf16.msra.mxu0 %v1131
      %1189 = vmatprep.subr.bf16.mxu0 0
      %1190 = vmatpush1.bf16.msra.mxu0 %v1132
      %1191 = vmatprep.subr.bf16.mxu0 0
      %1192 = vmatpush1.bf16.msra.mxu0 %v1133
      %1193 = vmatprep.subr.bf16.mxu0 0
      %1194 = vmatpush1.bf16.msra.mxu0 %v1134
      %1195 = vmatprep.subr.bf16.mxu0 0
      %1196 = vmatpush1.bf16.msra.mxu0 %v1135
      %1197 = vmatprep.subr.bf16.mxu0 0
      %1198 = vmatpush1.bf16.msra.mxu0 %v1136
      %1199 = vmatprep.subr.bf16.mxu0 0
      %1200 = vmatpush1.bf16.msra.mxu0 %v1137
      %1201 = vmatprep.subr.bf16.mxu0 0
      %1202 = vmatpush1.bf16.msra.mxu0 %v1138
      %1203 = vmatprep.mubr.bf16.mxu0 %v538
      %1204 = vmatmul.mubr.bf16.gmra.mrb[0].mxu0 %v747
      %v1205 = vpop.f32.mrb[0].mxu0
      %v1206 = vadd.f32 %v1025, %v1205
      %v1207 = vpop.f32.mrb[0].mxu0
      %v1208 = vpop.f32.mrb[0].mxu0
      %v1209 = vadd.f32 %v1025, %v1208
      %v1210 = vpop.f32.mrb[0].mxu0
      %1211 = vmatprep.mubr.bf16.mxu0 %v539
      %1212 = vmatmul.mubr.bf16.gmra.mrb[0].mxu0 %v748
      %v1213 = vpop.f32.mrb[0].mxu0
      %v1214 = vadd.f32 %v1025, %v1213
      %v1215 = vpop.f32.mrb[0].mxu0
      %v1216 = vpop.f32.mrb[0].mxu0
      %v1217 = vadd.f32 %v1025, %v1216
      %v1218 = vpop.f32.mrb[0].mxu0
      %1219 = vmatprep.mubr.bf16.mxu0 %v540
      %1220 = vmatmul.mubr.bf16.gmra.mrb[0].mxu0 %v749
      %v1221 = vpop.f32.mrb[0].mxu0
      %v1222 = vadd.f32 %v1025, %v1221
      %v1223 = vpop.f32.mrb[0].mxu0
      %v1224 = vpop.f32.mrb[0].mxu0
      %v1225 = vadd.f32 %v1025, %v1224
      %v1226 = vpop.f32.mrb[0].mxu0
      %1227 = vmatprep.mubr.bf16.mxu0 %v541
      %1228 = vmatmul.mubr.bf16.gmra.mrb[0].mxu0 %v750
      %v1229 = vpop.f32.mrb[0].mxu0
      %v1230 = vadd.f32 %v1025, %v1229
      %v1231 = vpop.f32.mrb[0].mxu0
      %v1232 = vpop.f32.mrb[0].mxu0
      %v1233 = vadd.f32 %v1025, %v1232
      %v1234 = vpop.f32.mrb[0].mxu0
      %1235 = vmatprep.mubr.bf16.mxu0 %v542
      %1236 = vmatmul.mubr.bf16.gmra.mrb[0].mxu0 %v751
      %v1237 = vpop.f32.mrb[0].mxu0
      %v1238 = vadd.f32 %v1025, %v1237
      %v1239 = vpop.f32.mrb[0].mxu0
      %v1240 = vpop.f32.mrb[0].mxu0
      %v1241 = vadd.f32 %v1025, %v1240
      %v1242 = vpop.f32.mrb[0].mxu0
      %1243 = vmatprep.mubr.bf16.mxu0 %v543
      %1244 = vmatmul.mubr.bf16.gmra.mrb[0].mxu0 %v752
      %v1245 = vpop.f32.mrb[0].mxu0
      %v1246 = vadd.f32 %v1025, %v1245
      %v1247 = vpop.f32.mrb[0].mxu0
      %v1248 = vpop.f32.mrb[0].mxu0
      %v1249 = vadd.f32 %v1025, %v1248
      %v1250 = vpop.f32.mrb[0].mxu0
      %1251 = vmatprep.mubr.bf16.mxu0 %v544
      %1252 = vmatmul.mubr.bf16.gmra.mrb[0].mxu0 %v753
      %v1253 = vpop.f32.mrb[0].mxu0
      %v1254 = vadd.f32 %v1025, %v1253
      %v1255 = vpop.f32.mrb[0].mxu0
      %v1256 = vpop.f32.mrb[0].mxu0
      %v1257 = vadd.f32 %v1025, %v1256
      %v1258 = vpop.f32.mrb[0].mxu0
      %1259 = vmatprep.mubr.bf16.mxu0 %v545
      %1260 = vmatmul.mubr.bf16.gmra.mrb[0].mxu0 %v754
      %v1261 = vpop.f32.mrb[0].mxu0
      %v1262 = vadd.f32 %v1025, %v1261
      %v1263 = vpop.f32.mrb[0].mxu0
      %v1264 = vpop.f32.mrb[0].mxu0
      %v1265 = vadd.f32 %v1025, %v1264
      %v1266 = vpop.f32.mrb[0].mxu0
      %1267 = vmatprep.mubr.bf16.mxu0 %v546
      %1268 = vmatmul.mubr.bf16.gmra.mrb[0].mxu0 %v755
      %v1269 = vpop.f32.mrb[0].mxu0
      %v1270 = vadd.f32 %v1025, %v1269
      %v1271 = vpop.f32.mrb[0].mxu0
      %v1272 = vpop.f32.mrb[0].mxu0
      %v1273 = vadd.f32 %v1025, %v1272
      %v1274 = vpop.f32.mrb[0].mxu0
      %1275 = vmatprep.mubr.bf16.mxu0 %v547
      %1276 = vmatmul.mubr.bf16.gmra.mrb[0].mxu0 %v756
      %v1277 = vpop.f32.mrb[0].mxu0
      %v1278 = vadd.f32 %v1025, %v1277
      %v1279 = vpop.f32.mrb[0].mxu0
      %v1280 = vpop.f32.mrb[0].mxu0
      %v1281 = vadd.f32 %v1025, %v1280
      %v1282 = vpop.f32.mrb[0].mxu0
      %1283 = vmatprep.mubr.bf16.mxu0 %v548
      %1284 = vmatmul.mubr.bf16.gmra.mrb[0].mxu0 %v757
      %v1285 = vpop.f32.mrb[0].mxu0
      %v1286 = vadd.f32 %v1025, %v1285
      %v1287 = vpop.f32.mrb[0].mxu0
      %v1288 = vpop.f32.mrb[0].mxu0
      %v1289 = vadd.f32 %v1025, %v1288
      %v1290 = vpop.f32.mrb[0].mxu0
      %1291 = vmatprep.mubr.bf16.mxu0 %v549
      %1292 = vmatmul.mubr.bf16.gmra.mrb[0].mxu0 %v758
      %v1293 = vpop.f32.mrb[0].mxu0
      %v1294 = vadd.f32 %v1025, %v1293
      %v1295 = vpop.f32.mrb[0].mxu0
      %v1296 = vpop.f32.mrb[0].mxu0
      %v1297 = vadd.f32 %v1025, %v1296
      %v1298 = vpop.f32.mrb[0].mxu0
      %1299 = vmatprep.mubr.bf16.mxu0 %v550
      %1300 = vmatmul.mubr.bf16.gmra.mrb[0].mxu0 %v759
      %v1301 = vpop.f32.mrb[0].mxu0
      %v1302 = vadd.f32 %v1025, %v1301
      %v1303 = vpop.f32.mrb[0].mxu0
      %v1304 = vpop.f32.mrb[0].mxu0
      %v1305 = vadd.f32 %v1025, %v1304
      %v1306 = vpop.f32.mrb[0].mxu0
      %1307 = vmatprep.mubr.bf16.mxu0 %v551
      %1308 = vmatmul.mubr.bf16.gmra.mrb[0].mxu0 %v760
      %v1309 = vpop.f32.mrb[0].mxu0
      %v1310 = vadd.f32 %v1025, %v1309
      %v1311 = vpop.f32.mrb[0].mxu0
      %v1312 = vpop.f32.mrb[0].mxu0
      %v1313 = vadd.f32 %v1025, %v1312
      %v1314 = vpop.f32.mrb[0].mxu0
      %1315 = vmatprep.mubr.bf16.mxu0 %v552
      %1316 = vmatmul.mubr.bf16.gmra.mrb[0].mxu0 %v761
      %v1317 = vpop.f32.mrb[0].mxu0
      %v1318 = vadd.f32 %v1025, %v1317
      %v1319 = vpop.f32.mrb[0].mxu0
      %v1320 = vpop.f32.mrb[0].mxu0
      %v1321 = vadd.f32 %v1025, %v1320
      %v1322 = vpop.f32.mrb[0].mxu0
      %1323 = vmatprep.mubr.bf16.mxu0 %v553
      %1324 = vmatmul.mubr.bf16.gmra.mrb[0].mxu0 %v762
      %v1325 = vpop.f32.mrb[0].mxu0
      %v1326 = vadd.f32 %v1025, %v1325
      %v1327 = vpop.f32.mrb[0].mxu0
      %v1328 = vpop.f32.mrb[0].mxu0
      %v1329 = vadd.f32 %v1025, %v1328
      %v1330 = vpop.f32.mrb[0].mxu0
      %1331 = vdwg.mxu0
      %1332 = vmatprep.subr.bf16.mxu0 0
      %1333 = vmatpush1.bf16.msra.mxu0 %v1139
      %1334 = vmatprep.subr.bf16.mxu0 0
      %1335 = vmatpush1.bf16.msra.mxu0 %v1140
      %1336 = vmatprep.subr.bf16.mxu0 0
      %1337 = vmatpush1.bf16.msra.mxu0 %v1141
      %1338 = vmatprep.subr.bf16.mxu0 0
      %1339 = vmatpush1.bf16.msra.mxu0 %v1142
      %1340 = vmatprep.subr.bf16.mxu0 0
      %1341 = vmatpush1.bf16.msra.mxu0 %v1143
      %1342 = vmatprep.subr.bf16.mxu0 0
      %1343 = vmatpush1.bf16.msra.mxu0 %v1144
      %1344 = vmatprep.subr.bf16.mxu0 0
      %1345 = vmatpush1.bf16.msra.mxu0 %v1145
      %1346 = vmatprep.subr.bf16.mxu0 0
      %1347 = vmatpush1.bf16.msra.mxu0 %v1146
      %1348 = vmatprep.subr.bf16.mxu0 0
      %1349 = vmatpush1.bf16.msra.mxu0 0
      %1350 = vmatprep.subr.bf16.mxu0 0
      %1351 = vmatpush1.bf16.msra.mxu0 0
      %1352 = vmatprep.subr.bf16.mxu0 0
      %1353 = vmatpush1.bf16.msra.mxu0 0
      %1354 = vmatprep.subr.bf16.mxu0 0
      %1355 = vmatpush1.bf16.msra.mxu0 0
      %1356 = vmatprep.subr.bf16.mxu0 0
      %1357 = vmatpush1.bf16.msra.mxu0 0
      %1358 = vmatprep.subr.bf16.mxu0 0
      %1359 = vmatpush1.bf16.msra.mxu0 0
      %1360 = vmatprep.subr.bf16.mxu0 0
      %1361 = vmatpush1.bf16.msra.mxu0 0
      %1362 = vmatprep.subr.bf16.mxu0 0
      %1363 = vmatpush1.bf16.msra.mxu0 0
      %1364 = vmatprep.mubr.bf16.mxu0 0
      %1365 = vmatmul.mubr.bf16.gmra.mrb[0].mxu0 %v956
      %v1366 = vpop.f32.mrb[0].mxu0
      %v1367 = vadd.f32 %v1206, %v1366
      %v1368 = vpop.f32.mrb[0].mxu0
      %v1369 = vpop.f32.mrb[0].mxu0
      %v1370 = vadd.f32 %v1209, %v1369
      %v1371 = vpop.f32.mrb[0].mxu0
      %1372 = vmatprep.mubr.bf16.mxu0 0
      %1373 = vmatmul.mubr.bf16.gmra.mrb[0].mxu0 %v957
      %v1374 = vpop.f32.mrb[0].mxu0
      %v1375 = vadd.f32 %v1214, %v1374
      %v1376 = vpop.f32.mrb[0].mxu0
      %v1377 = vpop.f32.mrb[0].mxu0
      %v1378 = vadd.f32 %v1217, %v1377
      %v1379 = vpop.f32.mrb[0].mxu0
      %1380 = vmatprep.mubr.bf16.mxu0 0
      %1381 = vmatmul.mubr.bf16.gmra.mrb[0].mxu0 %v958
      %v1382 = vpop.f32.mrb[0].mxu0
      %v1383 = vadd.f32 %v1222, %v1382
      %v1384 = vpop.f32.mrb[0].mxu0
      %v1385 = vpop.f32.mrb[0].mxu0
      %v1386 = vadd.f32 %v1225, %v1385
      %v1387 = vpop.f32.mrb[0].mxu0
      %1388 = vmatprep.mubr.bf16.mxu0 0
      %1389 = vmatmul.mubr.bf16.gmra.mrb[0].mxu0 %v959
      %v1390 = vpop.f32.mrb[0].mxu0
      %v1391 = vadd.f32 %v1230, %v1390
      %v1392 = vpop.f32.mrb[0].mxu0
      %v1393 = vpop.f32.mrb[0].mxu0
      %v1394 = vadd.f32 %v1233, %v1393
      %v1395 = vpop.f32.mrb[0].mxu0
      %1396 = vmatprep.mubr.bf16.mxu0 0
      %1397 = vmatmul.mubr.bf16.gmra.mrb[0].mxu0 %v960
      %v1398 = vpop.f32.mrb[0].mxu0
      %v1399 = vadd.f32 %v1238, %v1398
      %v1400 = vpop.f32.mrb[0].mxu0
      %v1401 = vpop.f32.mrb[0].mxu0
      %v1402 = vadd.f32 %v1241, %v1401
      %v1403 = vpop.f32.mrb[0].mxu0
      %1404 = vmatprep.mubr.bf16.mxu0 0
      %1405 = vmatmul.mubr.bf16.gmra.mrb[0].mxu0 %v961
      %v1406 = vpop.f32.mrb[0].mxu0
      %v1407 = vadd.f32 %v1246, %v1406
      %v1408 = vpop.f32.mrb[0].mxu0
      %v1409 = vpop.f32.mrb[0].mxu0
      %v1410 = vadd.f32 %v1249, %v1409
      %v1411 = vpop.f32.mrb[0].mxu0
      %1412 = vmatprep.mubr.bf16.mxu0 0
      %1413 = vmatmul.mubr.bf16.gmra.mrb[0].mxu0 %v962
      %v1414 = vpop.f32.mrb[0].mxu0
      %v1415 = vadd.f32 %v1254, %v1414
      %v1416 = vpop.f32.mrb[0].mxu0
      %v1417 = vpop.f32.mrb[0].mxu0
      %v1418 = vadd.f32 %v1257, %v1417
      %v1419 = vpop.f32.mrb[0].mxu0
      %1420 = vmatprep.mubr.bf16.mxu0 0
      %1421 = vmatmul.mubr.bf16.gmra.mrb[0].mxu0 %v963
      %v1422 = vpop.f32.mrb[0].mxu0
      %v1423 = vadd.f32 %v1262, %v1422
      %v1424 = vpop.f32.mrb[0].mxu0
      %v1425 = vpop.f32.mrb[0].mxu0
      %v1426 = vadd.f32 %v1265, %v1425
      %v1427 = vpop.f32.mrb[0].mxu0
      %1428 = vmatprep.mubr.bf16.mxu0 0
      %1429 = vmatmul.mubr.bf16.gmra.mrb[0].mxu0 %v964
      %v1430 = vpop.f32.mrb[0].mxu0
      %v1431 = vadd.f32 %v1270, %v1430
      %v1432 = vpop.f32.mrb[0].mxu0
      %v1433 = vpop.f32.mrb[0].mxu0
      %v1434 = vadd.f32 %v1273, %v1433
      %v1435 = vpop.f32.mrb[0].mxu0
      %1436 = vmatprep.mubr.bf16.mxu0 0
      %1437 = vmatmul.mubr.bf16.gmra.mrb[0].mxu0 %v965
      %v1438 = vpop.f32.mrb[0].mxu0
      %v1439 = vadd.f32 %v1278, %v1438
      %v1440 = vpop.f32.mrb[0].mxu0
      %v1441 = vpop.f32.mrb[0].mxu0
      %v1442 = vadd.f32 %v1281, %v1441
      %v1443 = vpop.f32.mrb[0].mxu0
      %1444 = vmatprep.mubr.bf16.mxu0 0
      %1445 = vmatmul.mubr.bf16.gmra.mrb[0].mxu0 %v966
      %v1446 = vpop.f32.mrb[0].mxu0
      %v1447 = vadd.f32 %v1286, %v1446
      %v1448 = vpop.f32.mrb[0].mxu0
      %v1449 = vpop.f32.mrb[0].mxu0
      %v1450 = vadd.f32 %v1289, %v1449
      %v1451 = vpop.f32.mrb[0].mxu0
      %1452 = vmatprep.mubr.bf16.mxu0 0
      %1453 = vmatmul.mubr.bf16.gmra.mrb[0].mxu0 %v967
      %v1454 = vpop.f32.mrb[0].mxu0
      %v1455 = vadd.f32 %v1294, %v1454
      %v1456 = vpop.f32.mrb[0].mxu0
      %v1457 = vpop.f32.mrb[0].mxu0
      %v1458 = vadd.f32 %v1297, %v1457
      %v1459 = vpop.f32.mrb[0].mxu0
      %1460 = vmatprep.mubr.bf16.mxu0 0
      %1461 = vmatmul.mubr.bf16.gmra.mrb[0].mxu0 %v968
      %v1462 = vpop.f32.mrb[0].mxu0
      %v1463 = vadd.f32 %v1302, %v1462
      %v1464 = vpop.f32.mrb[0].mxu0
      %v1465 = vpop.f32.mrb[0].mxu0
      %v1466 = vadd.f32 %v1305, %v1465
      %v1467 = vpop.f32.mrb[0].mxu0
      %1468 = vmatprep.mubr.bf16.mxu0 0
      %1469 = vmatmul.mubr.bf16.gmra.mrb[0].mxu0 %v969
      %v1470 = vpop.f32.mrb[0].mxu0
      %v1471 = vadd.f32 %v1310, %v1470
      %v1472 = vpop.f32.mrb[0].mxu0
      %v1473 = vpop.f32.mrb[0].mxu0
      %v1474 = vadd.f32 %v1313, %v1473
      %v1475 = vpop.f32.mrb[0].mxu0
      %1476 = vmatprep.mubr.bf16.mxu0 0
      %1477 = vmatmul.mubr.bf16.gmra.mrb[0].mxu0 %v970
      %v1478 = vpop.f32.mrb[0].mxu0
      %v1479 = vadd.f32 %v1318, %v1478
      %v1480 = vpop.f32.mrb[0].mxu0
      %v1481 = vpop.f32.mrb[0].mxu0
      %v1482 = vadd.f32 %v1321, %v1481
      %v1483 = vpop.f32.mrb[0].mxu0
      %1484 = vmatprep.mubr.bf16.mxu0 0
      %1485 = vmatmul.mubr.bf16.gmra.mrb[0].mxu0 %v971
      %v1486 = vpop.f32.mrb[0].mxu0
      %v1487 = vadd.f32 %v1326, %v1486
      %v1488 = vpop.f32.mrb[0].mxu0
      %v1489 = vpop.f32.mrb[0].mxu0
      %v1490 = vadd.f32 %v1329, %v1489
      %v1491 = vpop.f32.mrb[0].mxu0
      %1492 = vdwg.mxu0
      %1493 = vst [vmem:[%s322] sm:$0xff] %v1367
      %1494 = vst [vmem:[%s322 + $0x8] sm:$0xff] %v1370
      %1495 = vst [vmem:[%s322 + $0x10] sm:$0xff] %v1375
      %1496 = vst [vmem:[%s322 + $0x18] sm:$0xff] %v1378
      %1497 = vst [vmem:[%s322 + $0x20] sm:$0xff] %v1383
      %1498 = vst [vmem:[%s322 + $0x28] sm:$0xff] %v1386
      %1499 = vst [vmem:[%s322 + $0x30] sm:$0xff] %v1391
      %1500 = vst [vmem:[%s322 + $0x38] sm:$0xff] %v1394
      %1501 = vst [vmem:[%s322 + $0x40] sm:$0xff] %v1399
      %1502 = vst [vmem:[%s322 + $0x48] sm:$0xff] %v1402
      %1503 = vst [vmem:[%s322 + $0x50] sm:$0xff] %v1407
      %1504 = vst [vmem:[%s322 + $0x58] sm:$0xff] %v1410
      %1505 = vst [vmem:[%s322 + $0x60] sm:$0xff] %v1415
      %1506 = vst [vmem:[%s322 + $0x68] sm:$0xff] %v1418
      %1507 = vst [vmem:[%s322 + $0x70] sm:$0xff] %v1423
      %1508 = vst [vmem:[%s322 + $0x78] sm:$0xff] %v1426
      %1509 = vst [vmem:[%s322 + $0x80] sm:$0xff] %v1431
      %1510 = vst [vmem:[%s322 + $0x88] sm:$0xff] %v1434
      %1511 = vst [vmem:[%s322 + $0x90] sm:$0xff] %v1439
      %1512 = vst [vmem:[%s322 + $0x98] sm:$0xff] %v1442
      %1513 = vst [vmem:[%s322 + $0xa0] sm:$0xff] %v1447
      %1514 = vst [vmem:[%s322 + $0xa8] sm:$0xff] %v1450
      %1515 = vst [vmem:[%s322 + $0xb0] sm:$0xff] %v1455
      %1516 = vst [vmem:[%s322 + $0xb8] sm:$0xff] %v1458
      %1517 = vst [vmem:[%s322 + $0xc0] sm:$0xff] %v1463
      %1518 = vst [vmem:[%s322 + $0xc8] sm:$0xff] %v1466
      %1519 = vst [vmem:[%s322 + $0xd0] sm:$0xff] %v1471
      %1520 = vst [vmem:[%s322 + $0xd8] sm:$0xff] %v1474
      %1521 = vst [vmem:[%s322 + $0xe0] sm:$0xff] %v1479
      %1522 = vst [vmem:[%s322 + $0xe8] sm:$0xff] %v1482
      %1523 = vst [vmem:[%s322 + $0xf0] sm:$0xff] %v1487
      %1524 = vst [vmem:[%s322 + $0xf8] sm:$0xff] %v1490
      %v1525 = vadd.f32 %v1367, %v1370
      %v1526 = vadd.f32 %v1525, %v1375
      %v1527 = vadd.f32 %v1526, %v1378
      %v1528 = vadd.f32 %v1527, %v1383
      %v1529 = vadd.f32 %v1528, %v1386
      %v1530 = vadd.f32 %v1529, %v1391
      %v1531 = vadd.f32 %v1530, %v1394
      %v1532 = vadd.f32 %v1531, %v1399
      %v1533 = vadd.f32 %v1532, %v1402
      %v1534 = vadd.f32 %v1533, %v1407
      %v1535 = vadd.f32 %v1534, %v1410
      %v1536 = vadd.f32 %v1535, %v1415
      %v1537 = vadd.f32 %v1536, %v1418
      %v1538 = vadd.f32 %v1537, %v1423
      %v1539 = vadd.f32 %v1538, %v1426
      %v1540 = vadd.f32 %v1539, %v1431
      %v1541 = vadd.f32 %v1540, %v1434
      %v1542 = vadd.f32 %v1541, %v1439
      %v1543 = vadd.f32 %v1542, %v1442
      %v1544 = vadd.f32 %v1543, %v1447
      %v1545 = vadd.f32 %v1544, %v1450
      %v1546 = vadd.f32 %v1545, %v1455
      %v1547 = vadd.f32 %v1546, %v1458
      %v1548 = vadd.f32 %v1547, %v1463
      %v1549 = vadd.f32 %v1548, %v1466
      %v1550 = vadd.f32 %v1549, %v1471
      %v1551 = vadd.f32 %v1550, %v1474
      %v1552 = vadd.f32 %v1551, %v1479
      %v1553 = vadd.f32 %v1552, %v1482
      %v1554 = vadd.f32 %v1553, %v1487
      %v1555 = vadd.f32 %v1554, %v1490
      %v1556 = vrot.slane %v1555, 4
      %v1557 = vadd.f32 %v1555, %v1556
      %v1558 = vrot.slane %v1557, 2
      %v1559 = vadd.f32 %v1557, %v1558
      %v1560 = vrot.slane %v1559, 1
      %v1561 = vadd.f32 %v1559, %v1560
      %1562 = vst [vmem:[%s326] sm:$0x1] %v1561
      %v1563 = vmul.f32 %v1367, %v1367
      %v1564 = vmul.f32 %v1370, %v1370
      %v1565 = vmul.f32 %v1375, %v1375
      %v1566 = vmul.f32 %v1378, %v1378
      %v1567 = vmul.f32 %v1383, %v1383
      %v1568 = vmul.f32 %v1386, %v1386
      %v1569 = vmul.f32 %v1391, %v1391
      %v1570 = vmul.f32 %v1394, %v1394
      %v1571 = vmul.f32 %v1399, %v1399
      %v1572 = vmul.f32 %v1402, %v1402
      %v1573 = vmul.f32 %v1407, %v1407
      %v1574 = vmul.f32 %v1410, %v1410
      %v1575 = vmul.f32 %v1415, %v1415
      %v1576 = vmul.f32 %v1418, %v1418
      %v1577 = vmul.f32 %v1423, %v1423
      %v1578 = vmul.f32 %v1426, %v1426
      %v1579 = vmul.f32 %v1431, %v1431
      %v1580 = vmul.f32 %v1434, %v1434
      %v1581 = vmul.f32 %v1439, %v1439
      %v1582 = vmul.f32 %v1442, %v1442
      %v1583 = vmul.f32 %v1447, %v1447
      %v1584 = vmul.f32 %v1450, %v1450
      %v1585 = vmul.f32 %v1455, %v1455
      %v1586 = vmul.f32 %v1458, %v1458
      %v1587 = vmul.f32 %v1463, %v1463
      %v1588 = vmul.f32 %v1466, %v1466
      %v1589 = vmul.f32 %v1471, %v1471
      %v1590 = vmul.f32 %v1474, %v1474
      %v1591 = vmul.f32 %v1479, %v1479
      %v1592 = vmul.f32 %v1482, %v1482
      %v1593 = vmul.f32 %v1487, %v1487
      %v1594 = vmul.f32 %v1490, %v1490
      %v1595 = vadd.f32 %v1563, %v1564
      %v1596 = vadd.f32 %v1595, %v1565
      %v1597 = vadd.f32 %v1596, %v1566
      %v1598 = vadd.f32 %v1597, %v1567
      %v1599 = vadd.f32 %v1598, %v1568
      %v1600 = vadd.f32 %v1599, %v1569
      %v1601 = vadd.f32 %v1600, %v1570
      %v1602 = vadd.f32 %v1601, %v1571
      %v1603 = vadd.f32 %v1602, %v1572
      %v1604 = vadd.f32 %v1603, %v1573
      %v1605 = vadd.f32 %v1604, %v1574
      %v1606 = vadd.f32 %v1605, %v1575
      %v1607 = vadd.f32 %v1606, %v1576
      %v1608 = vadd.f32 %v1607, %v1577
      %v1609 = vadd.f32 %v1608, %v1578
      %v1610 = vadd.f32 %v1609, %v1579
      %v1611 = vadd.f32 %v1610, %v1580
      %v1612 = vadd.f32 %v1611, %v1581
      %v1613 = vadd.f32 %v1612, %v1582
      %v1614 = vadd.f32 %v1613, %v1583
      %v1615 = vadd.f32 %v1614, %v1584
      %v1616 = vadd.f32 %v1615, %v1585
      %v1617 = vadd.f32 %v1616, %v1586
      %v1618 = vadd.f32 %v1617, %v1587
      %v1619 = vadd.f32 %v1618, %v1588
      %v1620 = vadd.f32 %v1619, %v1589
      %v1621 = vadd.f32 %v1620, %v1590
      %v1622 = vadd.f32 %v1621, %v1591
      %v1623 = vadd.f32 %v1622, %v1592
      %v1624 = vadd.f32 %v1623, %v1593
      %v1625 = vadd.f32 %v1624, %v1594
      %v1626 = vrot.slane %v1625, 4
      %v1627 = vadd.f32 %v1625, %v1626
      %v1628 = vrot.slane %v1627, 2
      %v1629 = vadd.f32 %v1627, %v1628
      %v1630 = vrot.slane %v1629, 1
      %v1631 = vadd.f32 %v1629, %v1630
      %1632 = vst [vmem:[%s329] sm:$0x1] %v1631
      %s1633 = sadd.s32 %s20, 4
      %p1634 = scmp.lt.s32.totalorder %s1633, 7
      %s1635 = scalar_select %p1634, %s1633, 7
      %s1636 = smul.addr %s1635, 32
      %s1637 = smul.addr %s1636, 8
      %s1638 = scalar_lea.vmem %s6, %s1637
      %p1639 = scmp.lt.s32.totalorder %s20, 1
      %s1640 = scalar_select %p1639, %s20, 1
      %s1641 = scalar_lea.vmem %s7, %s1640
      %p1642 = scmp.lt.s32.totalorder %s20, 1
      %s1643 = scalar_select %p1642, %s20, 1
      %s1644 = scalar_lea.vmem %s8, %s1643
      // Predicated region
      $region41: #{gblock_forward.7} parent=39 // pred_check
        %p1645 = pneg %p160
      $region42: #{gblock_forward.7} parent=39 // pred_check_branch
        %1647 = sbr.rel (%p1645) target = $region44
      $region43: #{gblock_forward.7} parent=39 // pred_region
        %s1648 = sadd.s32 %s20, 4
      $region44: #{gblock_forward.7} parent=39 // pred_fallthru
        _
      // Predicated region
      $region45: #{gblock_forward.7} parent=39 // pred_check
        %p1649 = pneg %p186
      $region46: #{gblock_forward.7} parent=39 // pred_check_branch
        %1651 = sbr.rel (%p1649) target = $region48
      $region47: #{gblock_forward.7} parent=39 // pred_region
        _
      $region48: #{gblock_forward.7} parent=39 // pred_fallthru
        _
      // Predicated region
      $region49: #{gblock_forward.7} parent=39 // pred_check
        %p1652 = pneg %p212
      $region50: #{gblock_forward.7} parent=39 // pred_check_branch
        %1654 = sbr.rel (%p1652) target = $region52
      $region51: #{gblock_forward.7} parent=39 // pred_region
        _
      $region52: #{gblock_forward.7} parent=39 // pred_fallthru
        _
    $region40: #{gblock_forward.7} parent=5 // pred_fallthru
      _
    %p1655 = scmp.le.s32.totalorder 2, %s15
    // Predicated region
    $region53: #{gblock_forward.7} parent=5 // pred_check
      %p1656 = pneg %p1655
    $region54: #{gblock_forward.7} parent=5 // pred_check_branch
      %1658 = sbr.rel (%p1656) target = $region56
    $region55: #{gblock_forward.7} parent=5 // pred_region
      %s1659 = ssub.s32 %s15, 2
      // Predicated region
      $region57: #{gblock_forward.7} parent=55 // pred_check
        %p1660 = pneg %p166
      $region58: #{gblock_forward.7} parent=55 // pred_check_branch
        %1662 = sbr.rel (%p1660) target = $region60
      $region59: #{gblock_forward.7} parent=55 // pred_region
        %s1663 = sadd.s32 %s21, 4
        %p1664 = scmp.lt.s32.totalorder %s1663, 7
        %s1665 = scalar_select %p1664, %s1663, 7
        %s1666 = smul.addr %s1665, 32
        %s1667 = smul.addr %s1666, 8
        %s1668 = scalar_lea.vmem %s6, %s1667
      $region60: #{gblock_forward.7} parent=55 // pred_fallthru
        _
      // Predicated region
      $region61: #{gblock_forward.7} parent=55 // pred_check
        %p1669 = pneg %p192
      $region62: #{gblock_forward.7} parent=55 // pred_check_branch
        %1671 = sbr.rel (%p1669) target = $region64
      $region63: #{gblock_forward.7} parent=55 // pred_region
        %p1672 = scmp.lt.s32.totalorder %s21, 1
        %s1673 = scalar_select %p1672, %s21, 1
        %s1674 = scalar_lea.vmem %s7, %s1673
      $region64: #{gblock_forward.7} parent=55 // pred_fallthru
        _
      // Predicated region
      $region65: #{gblock_forward.7} parent=55 // pred_check
        %p1675 = pneg %p218
      $region66: #{gblock_forward.7} parent=55 // pred_check_branch
        %1677 = sbr.rel (%p1675) target = $region68
      $region67: #{gblock_forward.7} parent=55 // pred_region
        %p1678 = scmp.lt.s32.totalorder %s21, 1
        %s1679 = scalar_select %p1678, %s21, 1
        %s1680 = scalar_lea.vmem %s8, %s1679
      $region68: #{gblock_forward.7} parent=55 // pred_fallthru
        _
    $region56: #{gblock_forward.7} parent=5 // pred_fallthru
      _
  $region6: #{gblock_forward.7} parent=0 // loop_footer
    %s19 = sadd.s32 1, %s15
  $region7: #{gblock_forward.7} parent=0 // loop_footer_branch
    %14 = sbr.rel target = $region3
  $region8: #{gblock_forward.7} parent=0 // loop_exit
    _

// kernel: gblock_forward.6
$region0: #{gblock_forward.6}
  #allocation0 [shape = 'u32[]', space=smem, size = 0x4, offset = 0x4, fixed_abs, tag = 'smem constant byte address 0x4 - core index']
  #allocation1 [shape = 'u32[144,128]{1,0:T(1,128)}', space=vmem, size = 0x12000, scoped, tag = 'internal scratch']
  %s0 = inlined_call_operand.vmem [shape: f32[2,128,128], index: 0, kind: input, shape index: {}]
  %s1 = inlined_call_operand.vmem [shape: f32[2,1,128], index: 1, kind: input, shape index: {}]
  %s2 = inlined_call_operand.vmem [shape: f32[2,1,128], index: 2, kind: input, shape index: {}]
  %s3 = inlined_call_operand.vmem [shape: bf16[256,128], index: 3, kind: input, shape index: {}]
  %s4 = inlined_call_operand.vmem [shape: bf16[256,128], index: 4, kind: input, shape index: {}]
  %s5 = inlined_call_operand.vmem [shape: f32[3,128], index: 5, kind: input, shape index: {}]
  %s6 = inlined_call_operand.vmem [shape: bf16[256,128], index: 6, kind: input, shape index: {}]
  %s7 = inlined_call_operand.vmem [shape: bf16[256,128], index: 7, kind: input, shape index: {}]
  %s8 = inlined_call_operand.vmem [shape: f32[3,128], index: 8, kind: input, shape index: {}]
  %s9 = inlined_call_operand.vmem [shape: bf16[2,128,256], index: 9, kind: output, shape index: {0}]
  %s10 = inlined_call_operand.vmem [shape: f32[8,128,256], index: 10, kind: output, shape index: {1}]
  %s11 = inlined_call_operand.vmem [shape: f32[2,1,128], index: 11, kind: output, shape index: {2}]
  %s12 = inlined_call_operand.vmem [shape: f32[2,1,128], index: 12, kind: output, shape index: {3}]
  %s13 = inlined_call_operand.vmem [shape: f32[2,1,128], index: 13, kind: output, shape index: {4}]
  %s14 = inlined_call_operand.vmem [shape: f32[2,1,128], index: 14, kind: output, shape index: {5}]
  %15 = xla_tuple %s9, %s10, %s11, %s12, %s13, %s14
  %s16 = sld [smem:[#allocation0]]
  $region109: #{gblock_forward.6} parent=0
    _
  %s18 = ssub.s32 1, %s16
  %s19 = scalar_select 0, %s18, %s16
  loop: start=0, step=1, limit=4
  $region2: #{gblock_forward.6} parent=0 // loop_pre_header
    _
  $region3: #{gblock_forward.6} parent=0 // loop_header
    %s21 = sphi 0, %s25
    %p22 = scmp.ge.s32.totalorder %s21, 4
    %s31 = sphi 0, %s33
    %s34 = sphi 0, %s31
    %s35 = sphi 0, %s34
    %s51 = sphi 0, %s35
    %s57 = sphi 0, %s59
    %s60 = sphi 0, %s57
    %s61 = sphi 0, %s60
    %s77 = sphi 0, %s61
    %s83 = sphi 0, %s85
    %s86 = sphi 0, %s83
    %s87 = sphi 0, %s86
    %s103 = sphi 0, %s87
    %s107 = sphi 0, %s107
    %s109 = sphi 0, %s107
    %s110 = sphi 0, %s109
    %s124 = sphi 0, %s110
    %s128 = sphi 0, %s128
    %s130 = sphi 0, %s128
    %s131 = sphi 0, %s130
    %s145 = sphi 0, %s131
    %s149 = sphi 0, %s149
    %s151 = sphi 0, %s149
    %s152 = sphi 0, %s151
    %s166 = sphi 0, %s152
    %s170 = sphi 0, %s170
    %s172 = sphi 0, %s170
    %s173 = sphi 0, %s172
    %s187 = sphi 0, %s173
    %s191 = sphi 0, %s191
    %s193 = sphi 0, %s191
    %s194 = sphi 0, %s193
    %s208 = sphi 0, %s194
    %s212 = sphi 0, %s212
    %s214 = sphi 0, %s212
    %s215 = sphi 0, %s214
    %s229 = sphi 0, %s215
    %s235 = sphi 0, %s237
    %s238 = sphi 0, %s235
    %s239 = sphi 0, %s238
    %s255 = sphi 0, %s239
    %s263 = sphi 0, %s265
    %s266 = sphi 0, %s263
    %s267 = sphi 0, %s266
    %s283 = sphi 0, %s267
    %s289 = sphi 0, %s291
    %s292 = sphi 0, %s289
    %s293 = sphi 0, %s292
    %s309 = sphi 0, %s293
    %s315 = sphi 0, %s317
    %s318 = sphi 0, %s315
    %s319 = sphi 0, %s318
    %s335 = sphi 0, %s319
    %s341 = sphi 0, %s343
    %s344 = sphi 0, %s341
    %s345 = sphi 0, %s344
    %s361 = sphi 0, %s345
    %s367 = sphi 0, %s369
    %s370 = sphi 0, %s367
    %s371 = sphi 0, %s370
    %s387 = sphi 0, %s371
  $region4: #{gblock_forward.6} parent=0 // loop_header_branch
    %24 = sbr.rel (%p22) target = $region8
  $region5: #{gblock_forward.6} parent=0 // loop_body
    %s26 = ssub.s32 %s21, 1
    %s27 = ssub.s32 %s21, 2
    %s28 = sadd.s32 %s21, 1
    %s29 = ssub.s32 %s21, %s28
    %p30 = scmp.eq.s32.totalorder %s29, 0
    %s32 = sadd.s32 %s31, 1
    %s33 = scalar_select %p30, %s31, %s32
    %p36 = pneg %p30
    %p37 = scmp.eq.s32.totalorder %s21, 1
    %p38 = por %p36, %p37
    %p39 = scmp.ne.s32.totalorder %s31, %s34
    %p40 = scmp.eq.s32.totalorder %s21, 0
    %p41 = por %p39, %p40
    %p42 = scmp.ne.s32.totalorder %s31, %s34
    %p43 = scmp.eq.s32.totalorder %s26, 1
    %p44 = por %p42, %p43
    %p45 = scmp.ne.s32.totalorder %s34, %s35
    %p46 = scmp.eq.s32.totalorder %s26, 0
    %p47 = por %p45, %p46
    %p48 = scmp.ne.s32.totalorder %s34, %s35
    %p49 = scmp.eq.s32.totalorder %s27, 1
    %p50 = por %p48, %p49
    %p52 = scmp.ne.s32.totalorder %s35, %s51
    %p53 = scmp.eq.s32.totalorder %s27, 0
    %p54 = por %p52, %p53
    %s55 = ssub.s32 %s21, %s28
    %p56 = scmp.eq.s32.totalorder %s55, 0
    %s58 = sadd.s32 %s57, 1
    %s59 = scalar_select %p56, %s57, %s58
    %p62 = pneg %p56
    %p63 = scmp.eq.s32.totalorder %s21, 1
    %p64 = por %p62, %p63
    %p65 = scmp.ne.s32.totalorder %s57, %s60
    %p66 = scmp.eq.s32.totalorder %s21, 0
    %p67 = por %p65, %p66
    %p68 = scmp.ne.s32.totalorder %s57, %s60
    %p69 = scmp.eq.s32.totalorder %s26, 1
    %p70 = por %p68, %p69
    %p71 = scmp.ne.s32.totalorder %s60, %s61
    %p72 = scmp.eq.s32.totalorder %s26, 0
    %p73 = por %p71, %p72
    %p74 = scmp.ne.s32.totalorder %s60, %s61
    %p75 = scmp.eq.s32.totalorder %s27, 1
    %p76 = por %p74, %p75
    %p78 = scmp.ne.s32.totalorder %s61, %s77
    %p79 = scmp.eq.s32.totalorder %s27, 0
    %p80 = por %p78, %p79
    %s81 = ssub.s32 %s21, %s28
    %p82 = scmp.eq.s32.totalorder %s81, 0
    %s84 = sadd.s32 %s83, 1
    %s85 = scalar_select %p82, %s83, %s84
    %p88 = pneg %p82
    %p89 = scmp.eq.s32.totalorder %s21, 1
    %p90 = por %p88, %p89
    %p91 = scmp.ne.s32.totalorder %s83, %s86
    %p92 = scmp.eq.s32.totalorder %s21, 0
    %p93 = por %p91, %p92
    %p94 = scmp.ne.s32.totalorder %s83, %s86
    %p95 = scmp.eq.s32.totalorder %s26, 1
    %p96 = por %p94, %p95
    %p97 = scmp.ne.s32.totalorder %s86, %s87
    %p98 = scmp.eq.s32.totalorder %s26, 0
    %p99 = por %p97, %p98
    %p100 = scmp.ne.s32.totalorder %s86, %s87
    %p101 = scmp.eq.s32.totalorder %s27, 1
    %p102 = por %p100, %p101
    %p104 = scmp.ne.s32.totalorder %s87, %s103
    %p105 = scmp.eq.s32.totalorder %s27, 0
    %p106 = por %p104, %p105
    %s108 = sadd.s32 %s107, 1
    %p111 = scmp.eq.s32.totalorder %s21, 1
    %p112 = scmp.ne.s32.totalorder %s107, %s109
    %p113 = scmp.eq.s32.totalorder %s21, 0
    %p114 = por %p112, %p113
    %p115 = scmp.ne.s32.totalorder %s107, %s109
    %p116 = scmp.eq.s32.totalorder %s26, 1
    %p117 = por %p115, %p116
    %p118 = scmp.ne.s32.totalorder %s109, %s110
    %p119 = scmp.eq.s32.totalorder %s26, 0
    %p120 = por %p118, %p119
    %p121 = scmp.ne.s32.totalorder %s109, %s110
    %p122 = scmp.eq.s32.totalorder %s27, 1
    %p123 = por %p121, %p122
    %p125 = scmp.ne.s32.totalorder %s110, %s124
    %p126 = scmp.eq.s32.totalorder %s27, 0
    %p127 = por %p125, %p126
    %s129 = sadd.s32 %s128, 1
    %p132 = scmp.eq.s32.totalorder %s21, 1
    %p133 = scmp.ne.s32.totalorder %s128, %s130
    %p134 = scmp.eq.s32.totalorder %s21, 0
    %p135 = por %p133, %p134
    %p136 = scmp.ne.s32.totalorder %s128, %s130
    %p137 = scmp.eq.s32.totalorder %s26, 1
    %p138 = por %p136, %p137
    %p139 = scmp.ne.s32.totalorder %s130, %s131
    %p140 = scmp.eq.s32.totalorder %s26, 0
    %p141 = por %p139, %p140
    %p142 = scmp.ne.s32.totalorder %s130, %s131
    %p143 = scmp.eq.s32.totalorder %s27, 1
    %p144 = por %p142, %p143
    %p146 = scmp.ne.s32.totalorder %s131, %s145
    %p147 = scmp.eq.s32.totalorder %s27, 0
    %p148 = por %p146, %p147
    %s150 = sadd.s32 %s149, 1
    %p153 = scmp.eq.s32.totalorder %s21, 1
    %p154 = scmp.ne.s32.totalorder %s149, %s151
    %p155 = scmp.eq.s32.totalorder %s21, 0
    %p156 = por %p154, %p155
    %p157 = scmp.ne.s32.totalorder %s149, %s151
    %p158 = scmp.eq.s32.totalorder %s26, 1
    %p159 = por %p157, %p158
    %p160 = scmp.ne.s32.totalorder %s151, %s152
    %p161 = scmp.eq.s32.totalorder %s26, 0
    %p162 = por %p160, %p161
    %p163 = scmp.ne.s32.totalorder %s151, %s152
    %p164 = scmp.eq.s32.totalorder %s27, 1
    %p165 = por %p163, %p164
    %p167 = scmp.ne.s32.totalorder %s152, %s166
    %p168 = scmp.eq.s32.totalorder %s27, 0
    %p169 = por %p167, %p168
    %s171 = sadd.s32 %s170, 1
    %p174 = scmp.eq.s32.totalorder %s21, 1
    %p175 = scmp.ne.s32.totalorder %s170, %s172
    %p176 = scmp.eq.s32.totalorder %s21, 0
    %p177 = por %p175, %p176
    %p178 = scmp.ne.s32.totalorder %s170, %s172
    %p179 = scmp.eq.s32.totalorder %s26, 1
    %p180 = por %p178, %p179
    %p181 = scmp.ne.s32.totalorder %s172, %s173
    %p182 = scmp.eq.s32.totalorder %s26, 0
    %p183 = por %p181, %p182
    %p184 = scmp.ne.s32.totalorder %s172, %s173
    %p185 = scmp.eq.s32.totalorder %s27, 1
    %p186 = por %p184, %p185
    %p188 = scmp.ne.s32.totalorder %s173, %s187
    %p189 = scmp.eq.s32.totalorder %s27, 0
    %p190 = por %p188, %p189
    %s192 = sadd.s32 %s191, 1
    %p195 = scmp.eq.s32.totalorder %s21, 1
    %p196 = scmp.ne.s32.totalorder %s191, %s193
    %p197 = scmp.eq.s32.totalorder %s21, 0
    %p198 = por %p196, %p197
    %p199 = scmp.ne.s32.totalorder %s191, %s193
    %p200 = scmp.eq.s32.totalorder %s26, 1
    %p201 = por %p199, %p200
    %p202 = scmp.ne.s32.totalorder %s193, %s194
    %p203 = scmp.eq.s32.totalorder %s26, 0
    %p204 = por %p202, %p203
    %p205 = scmp.ne.s32.totalorder %s193, %s194
    %p206 = scmp.eq.s32.totalorder %s27, 1
    %p207 = por %p205, %p206
    %p209 = scmp.ne.s32.totalorder %s194, %s208
    %p210 = scmp.eq.s32.totalorder %s27, 0
    %p211 = por %p209, %p210
    %s213 = sadd.s32 %s212, 1
    %p216 = scmp.eq.s32.totalorder %s21, 1
    %p217 = scmp.ne.s32.totalorder %s212, %s214
    %p218 = scmp.eq.s32.totalorder %s21, 0
    %p219 = por %p217, %p218
    %p220 = scmp.ne.s32.totalorder %s212, %s214
    %p221 = scmp.eq.s32.totalorder %s26, 1
    %p222 = por %p220, %p221
    %p223 = scmp.ne.s32.totalorder %s214, %s215
    %p224 = scmp.eq.s32.totalorder %s26, 0
    %p225 = por %p223, %p224
    %p226 = scmp.ne.s32.totalorder %s214, %s215
    %p227 = scmp.eq.s32.totalorder %s27, 1
    %p228 = por %p226, %p227
    %p230 = scmp.ne.s32.totalorder %s215, %s229
    %p231 = scmp.eq.s32.totalorder %s27, 0
    %p232 = por %p230, %p231
    %s233 = ssub.s32 %s21, %s28
    %p234 = scmp.eq.s32.totalorder %s233, 0
    %s236 = sadd.s32 %s235, 1
    %s237 = scalar_select %p234, %s235, %s236
    %p240 = pneg %p234
    %p241 = scmp.eq.s32.totalorder %s21, 1
    %p242 = por %p240, %p241
    %p243 = scmp.ne.s32.totalorder %s235, %s238
    %p244 = scmp.eq.s32.totalorder %s21, 0
    %p245 = por %p243, %p244
    %p246 = scmp.ne.s32.totalorder %s235, %s238
    %p247 = scmp.eq.s32.totalorder %s26, 1
    %p248 = por %p246, %p247
    %p249 = scmp.ne.s32.totalorder %s238, %s239
    %p250 = scmp.eq.s32.totalorder %s26, 0
    %p251 = por %p249, %p250
    %p252 = scmp.ne.s32.totalorder %s238, %s239
    %p253 = scmp.eq.s32.totalorder %s27, 1
    %p254 = por %p252, %p253
    %p256 = scmp.ne.s32.totalorder %s239, %s255
    %p257 = scmp.eq.s32.totalorder %s27, 0
    %p258 = por %p256, %p257
    %s259 = sadd.s32 %s21, 6
    %s260 = sadd.s32 %s28, 6
    %s261 = ssub.s32 %s259, %s260
    %p262 = scmp.eq.s32.totalorder %s261, 0
    %s264 = sadd.s32 %s263, 1
    %s265 = scalar_select %p262, %s263, %s264
    %p268 = pneg %p262
    %p269 = scmp.eq.s32.totalorder %s21, 1
    %p270 = por %p268, %p269
    %p271 = scmp.ne.s32.totalorder %s263, %s266
    %p272 = scmp.eq.s32.totalorder %s21, 0
    %p273 = por %p271, %p272
    %p274 = scmp.ne.s32.totalorder %s263, %s266
    %p275 = scmp.eq.s32.totalorder %s26, 1
    %p276 = por %p274, %p275
    %p277 = scmp.ne.s32.totalorder %s266, %s267
    %p278 = scmp.eq.s32.totalorder %s26, 0
    %p279 = por %p277, %p278
    %p280 = scmp.ne.s32.totalorder %s266, %s267
    %p281 = scmp.eq.s32.totalorder %s27, 1
    %p282 = por %p280, %p281
    %p284 = scmp.ne.s32.totalorder %s267, %s283
    %p285 = scmp.eq.s32.totalorder %s27, 0
    %p286 = por %p284, %p285
    %s287 = ssub.s32 %s21, %s28
    %p288 = scmp.eq.s32.totalorder %s287, 0
    %s290 = sadd.s32 %s289, 1
    %s291 = scalar_select %p288, %s289, %s290
    %p294 = pneg %p288
    %p295 = scmp.eq.s32.totalorder %s21, 1
    %p296 = por %p294, %p295
    %p297 = scmp.ne.s32.totalorder %s289, %s292
    %p298 = scmp.eq.s32.totalorder %s21, 0
    %p299 = por %p297, %p298
    %p300 = scmp.ne.s32.totalorder %s289, %s292
    %p301 = scmp.eq.s32.totalorder %s26, 1
    %p302 = por %p300, %p301
    %p303 = scmp.ne.s32.totalorder %s292, %s293
    %p304 = scmp.eq.s32.totalorder %s26, 0
    %p305 = por %p303, %p304
    %p306 = scmp.ne.s32.totalorder %s292, %s293
    %p307 = scmp.eq.s32.totalorder %s27, 1
    %p308 = por %p306, %p307
    %p310 = scmp.ne.s32.totalorder %s293, %s309
    %p311 = scmp.eq.s32.totalorder %s27, 0
    %p312 = por %p310, %p311
    %s313 = ssub.s32 %s21, %s28
    %p314 = scmp.eq.s32.totalorder %s313, 0
    %s316 = sadd.s32 %s315, 1
    %s317 = scalar_select %p314, %s315, %s316
    %p320 = pneg %p314
    %p321 = scmp.eq.s32.totalorder %s21, 1
    %p322 = por %p320, %p321
    %p323 = scmp.ne.s32.totalorder %s315, %s318
    %p324 = scmp.eq.s32.totalorder %s21, 0
    %p325 = por %p323, %p324
    %p326 = scmp.ne.s32.totalorder %s315, %s318
    %p327 = scmp.eq.s32.totalorder %s26, 1
    %p328 = por %p326, %p327
    %p329 = scmp.ne.s32.totalorder %s318, %s319
    %p330 = scmp.eq.s32.totalorder %s26, 0
    %p331 = por %p329, %p330
    %p332 = scmp.ne.s32.totalorder %s318, %s319
    %p333 = scmp.eq.s32.totalorder %s27, 1
    %p334 = por %p332, %p333
    %p336 = scmp.ne.s32.totalorder %s319, %s335
    %p337 = scmp.eq.s32.totalorder %s27, 0
    %p338 = por %p336, %p337
    %s339 = ssub.s32 %s21, %s28
    %p340 = scmp.eq.s32.totalorder %s339, 0
    %s342 = sadd.s32 %s341, 1
    %s343 = scalar_select %p340, %s341, %s342
    %p346 = pneg %p340
    %p347 = scmp.eq.s32.totalorder %s21, 1
    %p348 = por %p346, %p347
    %p349 = scmp.ne.s32.totalorder %s341, %s344
    %p350 = scmp.eq.s32.totalorder %s21, 0
    %p351 = por %p349, %p350
    %p352 = scmp.ne.s32.totalorder %s341, %s344
    %p353 = scmp.eq.s32.totalorder %s26, 1
    %p354 = por %p352, %p353
    %p355 = scmp.ne.s32.totalorder %s344, %s345
    %p356 = scmp.eq.s32.totalorder %s26, 0
    %p357 = por %p355, %p356
    %p358 = scmp.ne.s32.totalorder %s344, %s345
    %p359 = scmp.eq.s32.totalorder %s27, 1
    %p360 = por %p358, %p359
    %p362 = scmp.ne.s32.totalorder %s345, %s361
    %p363 = scmp.eq.s32.totalorder %s27, 0
    %p364 = por %p362, %p363
    %s365 = ssub.s32 %s21, %s28
    %p366 = scmp.eq.s32.totalorder %s365, 0
    %s368 = sadd.s32 %s367, 1
    %s369 = scalar_select %p366, %s367, %s368
    %p372 = pneg %p366
    %p373 = scmp.eq.s32.totalorder %s21, 1
    %p374 = por %p372, %p373
    %p375 = scmp.ne.s32.totalorder %s367, %s370
    %p376 = scmp.eq.s32.totalorder %s21, 0
    %p377 = por %p375, %p376
    %p378 = scmp.ne.s32.totalorder %s367, %s370
    %p379 = scmp.eq.s32.totalorder %s26, 1
    %p380 = por %p378, %p379
    %p381 = scmp.ne.s32.totalorder %s370, %s371
    %p382 = scmp.eq.s32.totalorder %s26, 0
    %p383 = por %p381, %p382
    %p384 = scmp.ne.s32.totalorder %s370, %s371
    %p385 = scmp.eq.s32.totalorder %s27, 1
    %p386 = por %p384, %p385
    %p388 = scmp.ne.s32.totalorder %s371, %s387
    %p389 = scmp.eq.s32.totalorder %s27, 0
    %p390 = por %p388, %p389
    %p391 = scmp.le.s32.totalorder 1, %s21
    %p392 = scmp.lt.s32.totalorder %s21, 3
    %p393 = pnand %p391, %p392
    %p394 = pneg %p393
    // Predicated region
    $region9: #{gblock_forward.6} parent=5 // pred_check
      _
    $region10: #{gblock_forward.6} parent=5 // pred_check_branch
      %396 = sbr.rel (%p393) target = $region12
    $region11: #{gblock_forward.6} parent=5 // pred_region
      %s397 = ssub.s32 %s21, 1
      // Predicated region
      $region13: #{gblock_forward.6} parent=11 // pred_check
        %p398 = pneg %p120
      $region14: #{gblock_forward.6} parent=11 // pred_check_branch
        %400 = sbr.rel (%p398) target = $region16
      $region15: #{gblock_forward.6} parent=11 // pred_region
        _
      $region16: #{gblock_forward.6} parent=11 // pred_fallthru
        _
      // Predicated region
      $region17: #{gblock_forward.6} parent=11 // pred_check
        %p401 = pneg %p141
      $region18: #{gblock_forward.6} parent=11 // pred_check_branch
        %403 = sbr.rel (%p401) target = $region20
      $region19: #{gblock_forward.6} parent=11 // pred_region
        _
      $region20: #{gblock_forward.6} parent=11 // pred_fallthru
        _
      // Predicated region
      $region21: #{gblock_forward.6} parent=11 // pred_check
        %p404 = pneg %p162
      $region22: #{gblock_forward.6} parent=11 // pred_check_branch
        %406 = sbr.rel (%p404) target = $region24
      $region23: #{gblock_forward.6} parent=11 // pred_region
        _
      $region24: #{gblock_forward.6} parent=11 // pred_fallthru
        _
      // Predicated region
      $region25: #{gblock_forward.6} parent=11 // pred_check
        %p407 = pneg %p183
      $region26: #{gblock_forward.6} parent=11 // pred_check_branch
        %409 = sbr.rel (%p407) target = $region28
      $region27: #{gblock_forward.6} parent=11 // pred_region
        _
      $region28: #{gblock_forward.6} parent=11 // pred_fallthru
        _
      // Predicated region
      $region29: #{gblock_forward.6} parent=11 // pred_check
        %p410 = pneg %p204
      $region30: #{gblock_forward.6} parent=11 // pred_check_branch
        %412 = sbr.rel (%p410) target = $region32
      $region31: #{gblock_forward.6} parent=11 // pred_region
        _
      $region32: #{gblock_forward.6} parent=11 // pred_fallthru
        _
      // Predicated region
      $region33: #{gblock_forward.6} parent=11 // pred_check
        %p413 = pneg %p225
      $region34: #{gblock_forward.6} parent=11 // pred_check_branch
        %415 = sbr.rel (%p413) target = $region36
      $region35: #{gblock_forward.6} parent=11 // pred_region
        _
      $region36: #{gblock_forward.6} parent=11 // pred_fallthru
        _
    $region12: #{gblock_forward.6} parent=5 // pred_fallthru
      _
    %p416 = scmp.lt.s32.totalorder %s21, 2
    // Predicated region
    $region37: #{gblock_forward.6} parent=5 // pred_check
      %p417 = pneg %p416
    $region38: #{gblock_forward.6} parent=5 // pred_check_branch
      %419 = sbr.rel (%p417) target = $region40
    $region39: #{gblock_forward.6} parent=5 // pred_region
      // Predicated region
      $region41: #{gblock_forward.6} parent=39 // pred_check
        %p420 = pneg %p41
      $region42: #{gblock_forward.6} parent=39 // pred_check_branch
        %422 = sbr.rel (%p420) target = $region44
      $region43: #{gblock_forward.6} parent=39 // pred_region
        %p423 = scmp.lt.s32.totalorder %s21, 1
        %s424 = scalar_select %p423, %s21, 1
        %s425 = smul.addr %s424, 16
        %s426 = smul.addr %s425, 8
        %s427 = scalar_lea.vmem %s0, %s426
      $region44: #{gblock_forward.6} parent=39 // pred_fallthru
        _
      // Predicated region
      $region45: #{gblock_forward.6} parent=39 // pred_check
        %p428 = pneg %p67
      $region46: #{gblock_forward.6} parent=39 // pred_check_branch
        %430 = sbr.rel (%p428) target = $region48
      $region47: #{gblock_forward.6} parent=39 // pred_region
        %p431 = scmp.lt.s32.totalorder %s21, 1
        %s432 = scalar_select %p431, %s21, 1
        %s433 = scalar_lea.vmem %s1, %s432
      $region48: #{gblock_forward.6} parent=39 // pred_fallthru
        _
      // Predicated region
      $region49: #{gblock_forward.6} parent=39 // pred_check
        %p434 = pneg %p93
      $region50: #{gblock_forward.6} parent=39 // pred_check_branch
        %436 = sbr.rel (%p434) target = $region52
      $region51: #{gblock_forward.6} parent=39 // pred_region
        %p437 = scmp.lt.s32.totalorder %s21, 1
        %s438 = scalar_select %p437, %s21, 1
        %s439 = scalar_lea.vmem %s2, %s438
      $region52: #{gblock_forward.6} parent=39 // pred_fallthru
        _
    $region40: #{gblock_forward.6} parent=5 // pred_fallthru
      _
    %p440 = scmp.le.s32.totalorder 1, %s21
    %p441 = scmp.lt.s32.totalorder %s21, 3
    %p442 = pnand %p440, %p441
    %p443 = pneg %p442
    // Predicated region
    $region53: #{gblock_forward.6} parent=5 // pred_check
      _
    $region54: #{gblock_forward.6} parent=5 // pred_check_branch
      %445 = sbr.rel (%p442) target = $region56
    $region55: #{gblock_forward.6} parent=5 // pred_region
      %s446 = ssub.s32 %s21, 1
      %p447 = scmp.lt.s32.totalorder %s26, 1
      %s448 = scalar_select %p447, %s26, 1
      %s449 = smul.addr %s448, 16
      %s450 = smul.addr %s449, 8
      %s451 = scalar_lea.vmem %s0, %s450
      %p452 = pneg %p47
      %p453 = pneg %p44
      %p454 = scmp.lt.s32.totalorder %s26, 1
      %s455 = scalar_select %p454, %s26, 1
      %s456 = scalar_lea.vmem %s1, %s455
      %p457 = pneg %p73
      %p458 = pneg %p70
      %p459 = scmp.lt.s32.totalorder %s26, 1
      %s460 = scalar_select %p459, %s26, 1
      %s461 = scalar_lea.vmem %s2, %s460
      %p462 = pneg %p99
      %p463 = pneg %p96
      %p464 = pneg %p120
      %p465 = pneg %p117
      %p466 = pneg %p141
      %p467 = pneg %p138
      %p468 = pneg %p162
      %p469 = pneg %p159
      %p470 = pneg %p183
      %p471 = pneg %p180
      %p472 = pneg %p204
      %p473 = pneg %p201
      %p474 = pneg %p225
      %p475 = pneg %p222
      %p476 = pneg %p251
      %p477 = pneg %p248
      %p478 = scmp.lt.s32.totalorder %s26, 1
      %s479 = scalar_select %p478, %s26, 1
      %s480 = smul.addr %s479, 32
      %s481 = smul.addr %s480, 4
      %s482 = scalar_lea.vmem %s9, %s481
      %p483 = pneg %p279
      %p484 = pneg %p276
      %s485 = sadd.s32 %s26, 6
      %p486 = scmp.lt.s32.totalorder %s485, 7
      %s487 = scalar_select %p486, %s485, 7
      %s488 = smul.addr %s487, 32
      %s489 = smul.addr %s488, 8
      %s490 = scalar_lea.vmem %s10, %s489
      %p491 = pneg %p305
      %p492 = pneg %p302
      %p493 = scmp.lt.s32.totalorder %s26, 1
      %s494 = scalar_select %p493, %s26, 1
      %s495 = scalar_lea.vmem %s11, %s494
      %p496 = pneg %p331
      %p497 = pneg %p328
      %p498 = scmp.lt.s32.totalorder %s26, 1
      %s499 = scalar_select %p498, %s26, 1
      %s500 = scalar_lea.vmem %s12, %s499
      %p501 = pneg %p357
      %p502 = pneg %p354
      %p503 = scmp.lt.s32.totalorder %s26, 1
      %s504 = scalar_select %p503, %s26, 1
      %s505 = scalar_lea.vmem %s13, %s504
      %p506 = pneg %p383
      %p507 = pneg %p380
      %p508 = scmp.lt.s32.totalorder %s26, 1
      %s509 = scalar_select %p508, %s26, 1
      %s510 = scalar_lea.vmem %s14, %s509
      %p511 = scmp.lt.s32.totalorder %s26, 1
      %s512 = scalar_select %p511, %s26, 1
      %s513 = smul.addr %s512, 16
      %s514 = smul.addr %s513, 8
      %s515 = scalar_lea.vmem %s0, %s514
      %p516 = scmp.lt.s32.totalorder %s26, 1
      %s517 = scalar_select %p516, %s26, 1
      %s518 = scalar_lea.vmem %s1, %s517
      %p519 = scmp.lt.s32.totalorder %s26, 1
      %s520 = scalar_select %p519, %s26, 1
      %s521 = scalar_lea.vmem %s2, %s520
      %p522 = scmp.lt.s32.totalorder %s26, 1
      %s523 = scalar_select %p522, %s26, 1
      %s524 = smul.addr %s523, 32
      %s525 = smul.addr %s524, 4
      %s526 = scalar_lea.vmem %s9, %s525
      %s527 = sadd.s32 %s26, 6
      %p528 = scmp.lt.s32.totalorder %s527, 7
      %s529 = scalar_select %p528, %s527, 7
      %s530 = smul.addr %s529, 32
      %s531 = smul.addr %s530, 8
      %s532 = scalar_lea.vmem %s10, %s531
      %s533 = sadd.s32 %s26, 6
      %p534 = scmp.lt.s32.totalorder %s26, 1
      %s535 = scalar_select %p534, %s26, 1
      %s536 = scalar_lea.vmem %s11, %s535
      %p537 = scmp.lt.s32.totalorder %s26, 1
      %s538 = scalar_select %p537, %s26, 1
      %s539 = scalar_lea.vmem %s12, %s538
      %p540 = scmp.lt.s32.totalorder %s26, 1
      %s541 = scalar_select %p540, %s26, 1
      %s542 = scalar_lea.vmem %s13, %s541
      %p543 = scmp.lt.s32.totalorder %s26, 1
      %s544 = scalar_select %p543, %s26, 1
      %s545 = scalar_lea.vmem %s14, %s544
      %v547 = vld [vmem:[%s515] sm:$0xff]
      %v548 = vld [vmem:[%s515 + $0x8] sm:$0xff]
      %v549 = vld [vmem:[%s515 + $0x10] sm:$0xff]
      %v550 = vld [vmem:[%s515 + $0x18] sm:$0xff]
      %v551 = vld [vmem:[%s515 + $0x20] sm:$0xff]
      %v552 = vld [vmem:[%s515 + $0x28] sm:$0xff]
      %v553 = vld [vmem:[%s515 + $0x30] sm:$0xff]
      %v554 = vld [vmem:[%s515 + $0x38] sm:$0xff]
      %v555 = vld [vmem:[%s515 + $0x40] sm:$0xff]
      %v556 = vld [vmem:[%s515 + $0x48] sm:$0xff]
      %v557 = vld [vmem:[%s515 + $0x50] sm:$0xff]
      %v558 = vld [vmem:[%s515 + $0x58] sm:$0xff]
      %v559 = vld [vmem:[%s515 + $0x60] sm:$0xff]
      %v560 = vld [vmem:[%s515 + $0x68] sm:$0xff]
      %v561 = vld [vmem:[%s515 + $0x70] sm:$0xff]
      %v562 = vld [vmem:[%s515 + $0x78] sm:$0xff]
      %v563 = vlaneseq
      %v564 = vshrl.u32 %v563, 7
      %v565 = vadd.s32 %v564, 8
      %v566 = vadd.s32 %v564, 16
      %v567 = vadd.s32 %v564, 24
      %v568 = vadd.s32 %v564, 32
      %v569 = vadd.s32 %v564, 40
      %v570 = vadd.s32 %v564, 48
      %v571 = vadd.s32 %v564, 56
      %v572 = vadd.s32 %v564, 64
      %v573 = vadd.s32 %v564, 72
      %v574 = vadd.s32 %v564, 80
      %v575 = vadd.s32 %v564, 88
      %v576 = vadd.s32 %v564, 96
      %v577 = vadd.s32 %v564, 104
      %v578 = vadd.s32 %v564, 112
      %v579 = vadd.s32 %v564, 120
      %v580 = vld [vmem:[%s518] sm:$0x1]
      %v582 = vlaneseq
      %v583 = vshrl.u32 %v582, 7
      %v584 = vsub.s32 0, %v583
      %v585 = vrot.slane %v580, %v584
      %v587 = vmul.f32 %v547, %v585
      %v588 = vmul.f32 %v548, %v585
      %v589 = vmul.f32 %v549, %v585
      %v590 = vmul.f32 %v550, %v585
      %v591 = vmul.f32 %v551, %v585
      %v592 = vmul.f32 %v552, %v585
      %v593 = vmul.f32 %v553, %v585
      %v594 = vmul.f32 %v554, %v585
      %v595 = vmul.f32 %v555, %v585
      %v596 = vmul.f32 %v556, %v585
      %v597 = vmul.f32 %v557, %v585
      %v598 = vmul.f32 %v558, %v585
      %v599 = vmul.f32 %v559, %v585
      %v600 = vmul.f32 %v560, %v585
      %v601 = vmul.f32 %v561, %v585
      %v602 = vmul.f32 %v562, %v585
      %v603 = vld [vmem:[%s521] sm:$0x1]
      %v605 = vlaneseq
      %v606 = vshrl.u32 %v605, 7
      %v607 = vsub.s32 0, %v606
      %v608 = vrot.slane %v603, %v607
      %v610 = vadd.f32 %v587, %v608
      %v611 = vadd.f32 %v588, %v608
      %v612 = vadd.f32 %v589, %v608
      %v613 = vadd.f32 %v590, %v608
      %v614 = vadd.f32 %v591, %v608
      %v615 = vadd.f32 %v592, %v608
      %v616 = vadd.f32 %v593, %v608
      %v617 = vadd.f32 %v594, %v608
      %v618 = vadd.f32 %v595, %v608
      %v619 = vadd.f32 %v596, %v608
      %v620 = vadd.f32 %v597, %v608
      %v621 = vadd.f32 %v598, %v608
      %v622 = vadd.f32 %v599, %v608
      %v623 = vadd.f32 %v600, %v608
      %v624 = vadd.f32 %v601, %v608
      %v625 = vadd.f32 %v602, %v608
      %v626 = vmax.f32 %v610, 0.0
      %v627 = vmax.f32 %v611, 0.0
      %v628 = vmax.f32 %v612, 0.0
      %v629 = vmax.f32 %v613, 0.0
      %v630 = vmax.f32 %v614, 0.0
      %v631 = vmax.f32 %v615, 0.0
      %v632 = vmax.f32 %v616, 0.0
      %v633 = vmax.f32 %v617, 0.0
      %v634 = vmax.f32 %v618, 0.0
      %v635 = vmax.f32 %v619, 0.0
      %v636 = vmax.f32 %v620, 0.0
      %v637 = vmax.f32 %v621, 0.0
      %v638 = vmax.f32 %v622, 0.0
      %v639 = vmax.f32 %v623, 0.0
      %v640 = vmax.f32 %v624, 0.0
      %v641 = vmax.f32 %v625, 0.0
      %v642 = vpack.c.bf16 %v627, %v626
      %v643 = vpack.c.bf16 %v629, %v628
      %v644 = vpack.c.bf16 %v631, %v630
      %v645 = vpack.c.bf16 %v633, %v632
      %v646 = vpack.c.bf16 %v635, %v634
      %v647 = vpack.c.bf16 %v637, %v636
      %v648 = vpack.c.bf16 %v639, %v638
      %v649 = vpack.c.bf16 %v641, %v640
      %vm650 = vcmp.gt.s32.totalorder %v564, 0
      %vm651 = vcmp.gt.s32.totalorder %v565, 0
      %vm652 = vcmp.gt.s32.totalorder %v566, 0
      %vm653 = vcmp.gt.s32.totalorder %v567, 0
      %vm654 = vcmp.gt.s32.totalorder %v568, 0
      %vm655 = vcmp.gt.s32.totalorder %v569, 0
      %vm656 = vcmp.gt.s32.totalorder %v570, 0
      %vm657 = vcmp.gt.s32.totalorder %v571, 0
      %vm658 = vcmp.gt.s32.totalorder %v572, 0
      %vm659 = vcmp.gt.s32.totalorder %v573, 0
      %vm660 = vcmp.gt.s32.totalorder %v574, 0
      %vm661 = vcmp.gt.s32.totalorder %v575, 0
      %vm662 = vcmp.gt.s32.totalorder %v576, 0
      %vm663 = vcmp.gt.s32.totalorder %v577, 0
      %vm664 = vcmp.gt.s32.totalorder %v578, 0
      %vm665 = vcmp.gt.s32.totalorder %v579, 0
      %v666 = vrot.slane %v626, 7
      %v667 = vrot.slane %v627, 7
      %v668 = vrot.slane %v628, 7
      %v669 = vrot.slane %v629, 7
      %v670 = vrot.slane %v630, 7
      %v671 = vrot.slane %v631, 7
      %v672 = vrot.slane %v632, 7
      %v673 = vrot.slane %v633, 7
      %v674 = vrot.slane %v634, 7
      %v675 = vrot.slane %v635, 7
      %v676 = vrot.slane %v636, 7
      %v677 = vrot.slane %v637, 7
      %v678 = vrot.slane %v638, 7
      %v679 = vrot.slane %v639, 7
      %v680 = vrot.slane %v640, 7
      %v681 = vrot.slane %v641, 7
      %vm682 = vcmp.lt.s32.totalorder %v564, 1
      %v683 = vsel %vm682, %v680, %v681
      %v684 = vsel %vm682, %v679, %v680
      %v685 = vsel %vm682, %v678, %v679
      %v686 = vsel %vm682, %v677, %v678
      %v687 = vsel %vm682, %v676, %v677
      %v688 = vsel %vm682, %v675, %v676
      %v689 = vsel %vm682, %v674, %v675
      %v690 = vsel %vm682, %v673, %v674
      %v691 = vsel %vm682, %v672, %v673
      %v692 = vsel %vm682, %v671, %v672
      %v693 = vsel %vm682, %v670, %v671
      %v694 = vsel %vm682, %v669, %v670
      %v695 = vsel %vm682, %v668, %v669
      %v696 = vsel %vm682, %v667, %v668
      %v697 = vsel %vm682, %v666, %v667
      %v698 = vsel %vm682, %v681, %v666
      %v699 = vsel %vm650, 1, 0
      %v700 = vsel %vm651, 1, 0
      %v701 = vsel %vm652, 1, 0
      %v702 = vsel %vm653, 1, 0
      %v703 = vsel %vm654, 1, 0
      %v704 = vsel %vm655, 1, 0
      %v705 = vsel %vm656, 1, 0
      %v706 = vsel %vm657, 1, 0
      %v707 = vsel %vm658, 1, 0
      %v708 = vsel %vm659, 1, 0
      %v709 = vsel %vm660, 1, 0
      %v710 = vsel %vm661, 1, 0
      %v711 = vsel %vm662, 1, 0
      %v712 = vsel %vm663, 1, 0
      %v713 = vsel %vm664, 1, 0
      %v714 = vsel %vm665, 1, 0
      %vm715 = vcmp.eq.s32.totalorder %v699, 1
      %vm716 = vcmp.eq.s32.totalorder %v700, 1
      %vm717 = vcmp.eq.s32.totalorder %v701, 1
      %vm718 = vcmp.eq.s32.totalorder %v702, 1
      %vm719 = vcmp.eq.s32.totalorder %v703, 1
      %vm720 = vcmp.eq.s32.totalorder %v704, 1
      %vm721 = vcmp.eq.s32.totalorder %v705, 1
      %vm722 = vcmp.eq.s32.totalorder %v706, 1
      %vm723 = vcmp.eq.s32.totalorder %v707, 1
      %vm724 = vcmp.eq.s32.totalorder %v708, 1
      %vm725 = vcmp.eq.s32.totalorder %v709, 1
      %vm726 = vcmp.eq.s32.totalorder %v710, 1
      %vm727 = vcmp.eq.s32.totalorder %v711, 1
      %vm728 = vcmp.eq.s32.totalorder %v712, 1
      %vm729 = vcmp.eq.s32.totalorder %v713, 1
      %vm730 = vcmp.eq.s32.totalorder %v714, 1
      %v731 = vsel %vm715, %v698, 0.0
      %v732 = vsel %vm716, %v697, 0.0
      %v733 = vsel %vm717, %v696, 0.0
      %v734 = vsel %vm718, %v695, 0.0
      %v735 = vsel %vm719, %v694, 0.0
      %v736 = vsel %vm720, %v693, 0.0
      %v737 = vsel %vm721, %v692, 0.0
      %v738 = vsel %vm722, %v691, 0.0
      %v739 = vsel %vm723, %v690, 0.0
      %v740 = vsel %vm724, %v689, 0.0
      %v741 = vsel %vm725, %v688, 0.0
      %v742 = vsel %vm726, %v687, 0.0
      %v743 = vsel %vm727, %v686, 0.0
      %v744 = vsel %vm728, %v685, 0.0
      %v745 = vsel %vm729, %v684, 0.0
      %v746 = vsel %vm730, %v683, 0.0
      %v747 = vpack.c.bf16 %v732, %v731
      %v748 = vpack.c.bf16 %v734, %v733
      %v749 = vpack.c.bf16 %v736, %v735
      %v750 = vpack.c.bf16 %v738, %v737
      %v751 = vpack.c.bf16 %v740, %v739
      %v752 = vpack.c.bf16 %v742, %v741
      %v753 = vpack.c.bf16 %v744, %v743
      %v754 = vpack.c.bf16 %v746, %v745
      %vm755 = vcmp.lt.s32.totalorder %v564, 127
      %vm756 = vcmp.lt.s32.totalorder %v565, 127
      %vm757 = vcmp.lt.s32.totalorder %v566, 127
      %vm758 = vcmp.lt.s32.totalorder %v567, 127
      %vm759 = vcmp.lt.s32.totalorder %v568, 127
      %vm760 = vcmp.lt.s32.totalorder %v569, 127
      %vm761 = vcmp.lt.s32.totalorder %v570, 127
      %vm762 = vcmp.lt.s32.totalorder %v571, 127
      %vm763 = vcmp.lt.s32.totalorder %v572, 127
      %vm764 = vcmp.lt.s32.totalorder %v573, 127
      %vm765 = vcmp.lt.s32.totalorder %v574, 127
      %vm766 = vcmp.lt.s32.totalorder %v575, 127
      %vm767 = vcmp.lt.s32.totalorder %v576, 127
      %vm768 = vcmp.lt.s32.totalorder %v577, 127
      %vm769 = vcmp.lt.s32.totalorder %v578, 127
      %vm770 = vcmp.lt.s32.totalorder %v579, 127
      %v771 = vrot.slane %v626, 1
      %v772 = vrot.slane %v627, 1
      %v773 = vrot.slane %v628, 1
      %v774 = vrot.slane %v629, 1
      %v775 = vrot.slane %v630, 1
      %v776 = vrot.slane %v631, 1
      %v777 = vrot.slane %v632, 1
      %v778 = vrot.slane %v633, 1
      %v779 = vrot.slane %v634, 1
      %v780 = vrot.slane %v635, 1
      %v781 = vrot.slane %v636, 1
      %v782 = vrot.slane %v637, 1
      %v783 = vrot.slane %v638, 1
      %v784 = vrot.slane %v639, 1
      %v785 = vrot.slane %v640, 1
      %v786 = vrot.slane %v641, 1
      %vm787 = vcmp.lt.s32.totalorder %v564, 7
      %v788 = vsel %vm787, %v785, %v786
      %v789 = vsel %vm787, %v784, %v785
      %v790 = vsel %vm787, %v783, %v784
      %v791 = vsel %vm787, %v782, %v783
      %v792 = vsel %vm787, %v781, %v782
      %v793 = vsel %vm787, %v780, %v781
      %v794 = vsel %vm787, %v779, %v780
      %v795 = vsel %vm787, %v778, %v779
      %v796 = vsel %vm787, %v777, %v778
      %v797 = vsel %vm787, %v776, %v777
      %v798 = vsel %vm787, %v775, %v776
      %v799 = vsel %vm787, %v774, %v775
      %v800 = vsel %vm787, %v773, %v774
      %v801 = vsel %vm787, %v772, %v773
      %v802 = vsel %vm787, %v771, %v772
      %v803 = vsel %vm787, %v786, %v771
      %v804 = vsel %vm755, 1, 0
      %v805 = vsel %vm756, 1, 0
      %v806 = vsel %vm757, 1, 0
      %v807 = vsel %vm758, 1, 0
      %v808 = vsel %vm759, 1, 0
      %v809 = vsel %vm760, 1, 0
      %v810 = vsel %vm761, 1, 0
      %v811 = vsel %vm762, 1, 0
      %v812 = vsel %vm763, 1, 0
      %v813 = vsel %vm764, 1, 0
      %v814 = vsel %vm765, 1, 0
      %v815 = vsel %vm766, 1, 0
      %v816 = vsel %vm767, 1, 0
      %v817 = vsel %vm768, 1, 0
      %v818 = vsel %vm769, 1, 0
      %v819 = vsel %vm770, 1, 0
      %vm820 = vcmp.eq.s32.totalorder %v804, 1
      %vm821 = vcmp.eq.s32.totalorder %v805, 1
      %vm822 = vcmp.eq.s32.totalorder %v806, 1
      %vm823 = vcmp.eq.s32.totalorder %v807, 1
      %vm824 = vcmp.eq.s32.totalorder %v808, 1
      %vm825 = vcmp.eq.s32.totalorder %v809, 1
      %vm826 = vcmp.eq.s32.totalorder %v810, 1
      %vm827 = vcmp.eq.s32.totalorder %v811, 1
      %vm828 = vcmp.eq.s32.totalorder %v812, 1
      %vm829 = vcmp.eq.s32.totalorder %v813, 1
      %vm830 = vcmp.eq.s32.totalorder %v814, 1
      %vm831 = vcmp.eq.s32.totalorder %v815, 1
      %vm832 = vcmp.eq.s32.totalorder %v816, 1
      %vm833 = vcmp.eq.s32.totalorder %v817, 1
      %vm834 = vcmp.eq.s32.totalorder %v818, 1
      %vm835 = vcmp.eq.s32.totalorder %v819, 1
      %v836 = vsel %vm820, %v802, 0.0
      %v837 = vsel %vm821, %v801, 0.0
      %v838 = vsel %vm822, %v800, 0.0
      %v839 = vsel %vm823, %v799, 0.0
      %v840 = vsel %vm824, %v798, 0.0
      %v841 = vsel %vm825, %v797, 0.0
      %v842 = vsel %vm826, %v796, 0.0
      %v843 = vsel %vm827, %v795, 0.0
      %v844 = vsel %vm828, %v794, 0.0
      %v845 = vsel %vm829, %v793, 0.0
      %v846 = vsel %vm830, %v792, 0.0
      %v847 = vsel %vm831, %v791, 0.0
      %v848 = vsel %vm832, %v790, 0.0
      %v849 = vsel %vm833, %v789, 0.0
      %v850 = vsel %vm834, %v788, 0.0
      %v851 = vsel %vm835, %v803, 0.0
      %v852 = vpack.c.bf16 %v837, %v836
      %v853 = vpack.c.bf16 %v839, %v838
      %v854 = vpack.c.bf16 %v841, %v840
      %v855 = vpack.c.bf16 %v843, %v842
      %v856 = vpack.c.bf16 %v845, %v844
      %v857 = vpack.c.bf16 %v847, %v846
      %v858 = vpack.c.bf16 %v849, %v848
      %v859 = vpack.c.bf16 %v851, %v850
      %v860 = vld [vmem:[%s3] sm:$0xf]
      %v861 = vld [vmem:[%s3 + $0x4] sm:$0xf]
      %v862 = vld [vmem:[%s3 + $0x8] sm:$0xf]
      %v863 = vld [vmem:[%s3 + $0xc] sm:$0xf]
      %v864 = vld [vmem:[%s3 + $0x10] sm:$0xf]
      %v865 = vld [vmem:[%s3 + $0x14] sm:$0xf]
      %v866 = vld [vmem:[%s3 + $0x18] sm:$0xf]
      %v867 = vld [vmem:[%s3 + $0x1c] sm:$0xf]
      %v868 = vld [vmem:[%s3 + $0x20] sm:$0xf]
      %v869 = vld [vmem:[%s3 + $0x24] sm:$0xf]
      %v870 = vld [vmem:[%s3 + $0x28] sm:$0xf]
      %v871 = vld [vmem:[%s3 + $0x2c] sm:$0xf]
      %v872 = vld [vmem:[%s3 + $0x30] sm:$0xf]
      %v873 = vld [vmem:[%s3 + $0x34] sm:$0xf]
      %v874 = vld [vmem:[%s3 + $0x38] sm:$0xf]
      %v875 = vld [vmem:[%s3 + $0x3c] sm:$0xf]
      %v876 = vld [vmem:[%s3 + $0x40] sm:$0xf]
      %v877 = vld [vmem:[%s3 + $0x44] sm:$0xf]
      %v878 = vld [vmem:[%s3 + $0x48] sm:$0xf]
      %v879 = vld [vmem:[%s3 + $0x4c] sm:$0xf]
      %v880 = vld [vmem:[%s3 + $0x50] sm:$0xf]
      %v881 = vld [vmem:[%s3 + $0x54] sm:$0xf]
      %v882 = vld [vmem:[%s3 + $0x58] sm:$0xf]
      %v883 = vld [vmem:[%s3 + $0x5c] sm:$0xf]
      %v884 = vld [vmem:[%s3 + $0x60] sm:$0xf]
      %v885 = vld [vmem:[%s3 + $0x64] sm:$0xf]
      %v886 = vld [vmem:[%s3 + $0x68] sm:$0xf]
      %v887 = vld [vmem:[%s3 + $0x6c] sm:$0xf]
      %v888 = vld [vmem:[%s3 + $0x70] sm:$0xf]
      %v889 = vld [vmem:[%s3 + $0x74] sm:$0xf]
      %v890 = vld [vmem:[%s3 + $0x78] sm:$0xf]
      %v891 = vld [vmem:[%s3 + $0x7c] sm:$0xf]
      %v892 = vld [vmem:[%s4] sm:$0xf]
      %v893 = vld [vmem:[%s4 + $0x4] sm:$0xf]
      %v894 = vld [vmem:[%s4 + $0x8] sm:$0xf]
      %v895 = vld [vmem:[%s4 + $0xc] sm:$0xf]
      %v896 = vld [vmem:[%s4 + $0x10] sm:$0xf]
      %v897 = vld [vmem:[%s4 + $0x14] sm:$0xf]
      %v898 = vld [vmem:[%s4 + $0x18] sm:$0xf]
      %v899 = vld [vmem:[%s4 + $0x1c] sm:$0xf]
      %v900 = vld [vmem:[%s4 + $0x20] sm:$0xf]
      %v901 = vld [vmem:[%s4 + $0x24] sm:$0xf]
      %v902 = vld [vmem:[%s4 + $0x28] sm:$0xf]
      %v903 = vld [vmem:[%s4 + $0x2c] sm:$0xf]
      %v904 = vld [vmem:[%s4 + $0x30] sm:$0xf]
      %v905 = vld [vmem:[%s4 + $0x34] sm:$0xf]
      %v906 = vld [vmem:[%s4 + $0x38] sm:$0xf]
      %v907 = vld [vmem:[%s4 + $0x3c] sm:$0xf]
      %v908 = vld [vmem:[%s4 + $0x40] sm:$0xf]
      %v909 = vld [vmem:[%s4 + $0x44] sm:$0xf]
      %v910 = vld [vmem:[%s4 + $0x48] sm:$0xf]
      %v911 = vld [vmem:[%s4 + $0x4c] sm:$0xf]
      %v912 = vld [vmem:[%s4 + $0x50] sm:$0xf]
      %v913 = vld [vmem:[%s4 + $0x54] sm:$0xf]
      %v914 = vld [vmem:[%s4 + $0x58] sm:$0xf]
      %v915 = vld [vmem:[%s4 + $0x5c] sm:$0xf]
      %v916 = vld [vmem:[%s4 + $0x60] sm:$0xf]
      %v917 = vld [vmem:[%s4 + $0x64] sm:$0xf]
      %v918 = vld [vmem:[%s4 + $0x68] sm:$0xf]
      %v919 = vld [vmem:[%s4 + $0x6c] sm:$0xf]
      %v920 = vld [vmem:[%s4 + $0x70] sm:$0xf]
      %v921 = vld [vmem:[%s4 + $0x74] sm:$0xf]
      %v922 = vld [vmem:[%s4 + $0x78] sm:$0xf]
      %v923 = vld [vmem:[%s4 + $0x7c] sm:$0xf]
      %v924 = vld [vmem:[%s5] sm:$0x7]
      %v925 = vlaneseq
      %v926 = vshrl.u32 %v925, 7
      %v927 = vsub.s32 0, %v926
      %v928 = vrot.slane %v924, %v927
      %v961 = vunpack.c.l.b16 %v860
      %v962 = vunpack.c.l.b16 %v861
      %v963 = vunpack.c.l.b16 %v862
      %v964 = vunpack.c.l.b16 %v863
      %v965 = vunpack.c.l.b16 %v864
      %v966 = vunpack.c.l.b16 %v865
      %v967 = vunpack.c.l.b16 %v866
      %v968 = vunpack.c.l.b16 %v867
      %v969 = vunpack.c.l.b16 %v868
      %v970 = vunpack.c.l.b16 %v869
      %v971 = vunpack.c.l.b16 %v870
      %v972 = vunpack.c.l.b16 %v871
      %v973 = vunpack.c.l.b16 %v872
      %v974 = vunpack.c.l.b16 %v873
      %v975 = vunpack.c.l.b16 %v874
      %v976 = vunpack.c.l.b16 %v875
      %v977 = vunpack.c.l.b16 %v876
      %v978 = vunpack.c.l.b16 %v877
      %v979 = vunpack.c.l.b16 %v878
      %v980 = vunpack.c.l.b16 %v879
      %v981 = vunpack.c.l.b16 %v880
      %v982 = vunpack.c.l.b16 %v881
      %v983 = vunpack.c.l.b16 %v882
      %v984 = vunpack.c.l.b16 %v883
      %v985 = vunpack.c.l.b16 %v884
      %v986 = vunpack.c.l.b16 %v885
      %v987 = vunpack.c.l.b16 %v886
      %v988 = vunpack.c.l.b16 %v887
      %v989 = vunpack.c.l.b16 %v888
      %v990 = vunpack.c.l.b16 %v889
      %v991 = vunpack.c.l.b16 %v890
      %v992 = vunpack.c.l.b16 %v891
      %v993 = vpack.c.b16 %v962, %v961
      %v994 = vpack.c.b16 %v964, %v963
      %v995 = vpack.c.b16 %v966, %v965
      %v996 = vpack.c.b16 %v968, %v967
      %v997 = vpack.c.b16 %v970, %v969
      %v998 = vpack.c.b16 %v972, %v971
      %v999 = vpack.c.b16 %v974, %v973
      %v1000 = vpack.c.b16 %v976, %v975
      %v1001 = vpack.c.b16 %v978, %v977
      %v1002 = vpack.c.b16 %v980, %v979
      %v1003 = vpack.c.b16 %v982, %v981
      %v1004 = vpack.c.b16 %v984, %v983
      %v1005 = vpack.c.b16 %v986, %v985
      %v1006 = vpack.c.b16 %v988, %v987
      %v1007 = vpack.c.b16 %v990, %v989
      %v1008 = vpack.c.b16 %v992, %v991
      %1025 = vmatprep.subr.bf16.mxu0 0
      %1026 = vmatpush1.bf16.msra.mxu0 %v993
      %1027 = vmatprep.subr.bf16.mxu0 0
      %1028 = vmatpush1.bf16.msra.mxu0 %v994
      %1029 = vmatprep.subr.bf16.mxu0 0
      %1030 = vmatpush1.bf16.msra.mxu0 %v995
      %1031 = vmatprep.subr.bf16.mxu0 0
      %1032 = vmatpush1.bf16.msra.mxu0 %v996
      %1033 = vmatprep.subr.bf16.mxu0 0
      %1034 = vmatpush1.bf16.msra.mxu0 %v997
      %1035 = vmatprep.subr.bf16.mxu0 0
      %1036 = vmatpush1.bf16.msra.mxu0 %v998
      %1037 = vmatprep.subr.bf16.mxu0 0
      %1038 = vmatpush1.bf16.msra.mxu0 %v999
      %1039 = vmatprep.subr.bf16.mxu0 0
      %1040 = vmatpush1.bf16.msra.mxu0 %v1000
      %1041 = vmatprep.subr.bf16.mxu0 0
      %1042 = vmatpush1.bf16.msra.mxu0 %v1001
      %1043 = vmatprep.subr.bf16.mxu0 0
      %1044 = vmatpush1.bf16.msra.mxu0 %v1002
      %1045 = vmatprep.subr.bf16.mxu0 0
      %1046 = vmatpush1.bf16.msra.mxu0 %v1003
      %1047 = vmatprep.subr.bf16.mxu0 0
      %1048 = vmatpush1.bf16.msra.mxu0 %v1004
      %1049 = vmatprep.subr.bf16.mxu0 0
      %1050 = vmatpush1.bf16.msra.mxu0 %v1005
      %1051 = vmatprep.subr.bf16.mxu0 0
      %1052 = vmatpush1.bf16.msra.mxu0 %v1006
      %1053 = vmatprep.subr.bf16.mxu0 0
      %1054 = vmatpush1.bf16.msra.mxu0 %v1007
      %1055 = vmatprep.subr.bf16.mxu0 0
      %1056 = vmatpush1.bf16.msra.mxu0 %v1008
      %1057 = vmatprep.mubr.bf16.mxu0 %v642
      %1058 = vmatmul.mubr.bf16.gmra.mrb[0].mxu0 %v747
      %v1059 = vpop.f32.mrb[0].mxu0
      %v1060 = vadd.f32 %v928, %v1059
      %v1061 = vpop.f32.mrb[0].mxu0
      %v1062 = vpop.f32.mrb[0].mxu0
      %v1063 = vadd.f32 %v928, %v1062
      %v1064 = vpop.f32.mrb[0].mxu0
      %1065 = vmatprep.mubr.bf16.mxu0 %v643
      %1066 = vmatmul.mubr.bf16.gmra.mrb[0].mxu0 %v748
      %v1067 = vpop.f32.mrb[0].mxu0
      %v1068 = vadd.f32 %v928, %v1067
      %v1069 = vpop.f32.mrb[0].mxu0
      %v1070 = vpop.f32.mrb[0].mxu0
      %v1071 = vadd.f32 %v928, %v1070
      %v1072 = vpop.f32.mrb[0].mxu0
      %1073 = vmatprep.mubr.bf16.mxu0 %v644
      %1074 = vmatmul.mubr.bf16.gmra.mrb[0].mxu0 %v749
      %v1075 = vpop.f32.mrb[0].mxu0
      %v1076 = vadd.f32 %v928, %v1075
      %v1077 = vpop.f32.mrb[0].mxu0
      %v1078 = vpop.f32.mrb[0].mxu0
      %v1079 = vadd.f32 %v928, %v1078
      %v1080 = vpop.f32.mrb[0].mxu0
      %1081 = vmatprep.mubr.bf16.mxu0 %v645
      %1082 = vmatmul.mubr.bf16.gmra.mrb[0].mxu0 %v750
      %v1083 = vpop.f32.mrb[0].mxu0
      %v1084 = vadd.f32 %v928, %v1083
      %v1085 = vpop.f32.mrb[0].mxu0
      %v1086 = vpop.f32.mrb[0].mxu0
      %v1087 = vadd.f32 %v928, %v1086
      %v1088 = vpop.f32.mrb[0].mxu0
      %1089 = vmatprep.mubr.bf16.mxu0 %v646
      %1090 = vmatmul.mubr.bf16.gmra.mrb[0].mxu0 %v751
      %v1091 = vpop.f32.mrb[0].mxu0
      %v1092 = vadd.f32 %v928, %v1091
      %v1093 = vpop.f32.mrb[0].mxu0
      %v1094 = vpop.f32.mrb[0].mxu0
      %v1095 = vadd.f32 %v928, %v1094
      %v1096 = vpop.f32.mrb[0].mxu0
      %1097 = vmatprep.mubr.bf16.mxu0 %v647
      %1098 = vmatmul.mubr.bf16.gmra.mrb[0].mxu0 %v752
      %v1099 = vpop.f32.mrb[0].mxu0
      %v1100 = vadd.f32 %v928, %v1099
      %v1101 = vpop.f32.mrb[0].mxu0
      %v1102 = vpop.f32.mrb[0].mxu0
      %v1103 = vadd.f32 %v928, %v1102
      %v1104 = vpop.f32.mrb[0].mxu0
      %1105 = vmatprep.mubr.bf16.mxu0 %v648
      %1106 = vmatmul.mubr.bf16.gmra.mrb[0].mxu0 %v753
      %v1107 = vpop.f32.mrb[0].mxu0
      %v1108 = vadd.f32 %v928, %v1107
      %v1109 = vpop.f32.mrb[0].mxu0
      %v1110 = vpop.f32.mrb[0].mxu0
      %v1111 = vadd.f32 %v928, %v1110
      %v1112 = vpop.f32.mrb[0].mxu0
      %1113 = vmatprep.mubr.bf16.mxu0 %v649
      %1114 = vmatmul.mubr.bf16.gmra.mrb[0].mxu0 %v754
      %v1115 = vpop.f32.mrb[0].mxu0
      %v1116 = vadd.f32 %v928, %v1115
      %v1117 = vpop.f32.mrb[0].mxu0
      %v1118 = vpop.f32.mrb[0].mxu0
      %v1119 = vadd.f32 %v928, %v1118
      %v1120 = vpop.f32.mrb[0].mxu0
      %1121 = vdwg.mxu0
      %vm1122 = vcmp.eq.s32.totalorder %v564, 0
      %vm1123 = vcmp.eq.s32.totalorder %v565, 0
      %vm1124 = vcmp.eq.s32.totalorder %v566, 0
      %vm1125 = vcmp.eq.s32.totalorder %v567, 0
      %vm1126 = vcmp.eq.s32.totalorder %v568, 0
      %vm1127 = vcmp.eq.s32.totalorder %v569, 0
      %vm1128 = vcmp.eq.s32.totalorder %v570, 0
      %vm1129 = vcmp.eq.s32.totalorder %v571, 0
      %vm1130 = vcmp.eq.s32.totalorder %v572, 0
      %vm1131 = vcmp.eq.s32.totalorder %v573, 0
      %vm1132 = vcmp.eq.s32.totalorder %v574, 0
      %vm1133 = vcmp.eq.s32.totalorder %v575, 0
      %vm1134 = vcmp.eq.s32.totalorder %v576, 0
      %vm1135 = vcmp.eq.s32.totalorder %v577, 0
      %vm1136 = vcmp.eq.s32.totalorder %v578, 0
      %vm1137 = vcmp.eq.s32.totalorder %v579, 0
      %v1138 = vsel %vm1122, 1.0, 0.0
      %v1139 = vsel %vm1123, 1.0, 0.0
      %v1140 = vsel %vm1124, 1.0, 0.0
      %v1141 = vsel %vm1125, 1.0, 0.0
      %v1142 = vsel %vm1126, 1.0, 0.0
      %v1143 = vsel %vm1127, 1.0, 0.0
      %v1144 = vsel %vm1128, 1.0, 0.0
      %v1145 = vsel %vm1129, 1.0, 0.0
      %v1146 = vsel %vm1130, 1.0, 0.0
      %v1147 = vsel %vm1131, 1.0, 0.0
      %v1148 = vsel %vm1132, 1.0, 0.0
      %v1149 = vsel %vm1133, 1.0, 0.0
      %v1150 = vsel %vm1134, 1.0, 0.0
      %v1151 = vsel %vm1135, 1.0, 0.0
      %v1152 = vsel %vm1136, 1.0, 0.0
      %v1153 = vsel %vm1137, 1.0, 0.0
      %v1154 = vlaneseq
      %v1155 = vshrl.u32 %v1154, 7
      %v1156 = vsub.s32 1, %v1155
      %v1157 = vrot.slane %v924, %v1156
      %v1158 = vmul.f32 %v1138, %v1157
      %v1159 = vmul.f32 %v1139, %v1157
      %v1160 = vmul.f32 %v1140, %v1157
      %v1161 = vmul.f32 %v1141, %v1157
      %v1162 = vmul.f32 %v1142, %v1157
      %v1163 = vmul.f32 %v1143, %v1157
      %v1164 = vmul.f32 %v1144, %v1157
      %v1165 = vmul.f32 %v1145, %v1157
      %v1166 = vmul.f32 %v1146, %v1157
      %v1167 = vmul.f32 %v1147, %v1157
      %v1168 = vmul.f32 %v1148, %v1157
      %v1169 = vmul.f32 %v1149, %v1157
      %v1170 = vmul.f32 %v1150, %v1157
      %v1171 = vmul.f32 %v1151, %v1157
      %v1172 = vmul.f32 %v1152, %v1157
      %v1173 = vmul.f32 %v1153, %v1157
      %v1174 = vsub.f32 %v1060, %v1158
      %v1175 = vsub.f32 %v1063, %v1159
      %v1176 = vsub.f32 %v1068, %v1160
      %v1177 = vsub.f32 %v1071, %v1161
      %v1178 = vsub.f32 %v1076, %v1162
      %v1179 = vsub.f32 %v1079, %v1163
      %v1180 = vsub.f32 %v1084, %v1164
      %v1181 = vsub.f32 %v1087, %v1165
      %v1182 = vsub.f32 %v1092, %v1166
      %v1183 = vsub.f32 %v1095, %v1167
      %v1184 = vsub.f32 %v1100, %v1168
      %v1185 = vsub.f32 %v1103, %v1169
      %v1186 = vsub.f32 %v1108, %v1170
      %v1187 = vsub.f32 %v1111, %v1171
      %v1188 = vsub.f32 %v1116, %v1172
      %v1189 = vsub.f32 %v1119, %v1173
      %v1222 = vunpack.c.l.b16 %v892
      %v1223 = vunpack.c.l.b16 %v893
      %v1224 = vunpack.c.l.b16 %v894
      %v1225 = vunpack.c.l.b16 %v895
      %v1226 = vunpack.c.l.b16 %v896
      %v1227 = vunpack.c.l.b16 %v897
      %v1228 = vunpack.c.l.b16 %v898
      %v1229 = vunpack.c.l.b16 %v899
      %v1230 = vunpack.c.l.b16 %v900
      %v1231 = vunpack.c.l.b16 %v901
      %v1232 = vunpack.c.l.b16 %v902
      %v1233 = vunpack.c.l.b16 %v903
      %v1234 = vunpack.c.l.b16 %v904
      %v1235 = vunpack.c.l.b16 %v905
      %v1236 = vunpack.c.l.b16 %v906
      %v1237 = vunpack.c.l.b16 %v907
      %v1238 = vunpack.c.l.b16 %v908
      %v1239 = vunpack.c.l.b16 %v909
      %v1240 = vunpack.c.l.b16 %v910
      %v1241 = vunpack.c.l.b16 %v911
      %v1242 = vunpack.c.l.b16 %v912
      %v1243 = vunpack.c.l.b16 %v913
      %v1244 = vunpack.c.l.b16 %v914
      %v1245 = vunpack.c.l.b16 %v915
      %v1246 = vunpack.c.l.b16 %v916
      %v1247 = vunpack.c.l.b16 %v917
      %v1248 = vunpack.c.l.b16 %v918
      %v1249 = vunpack.c.l.b16 %v919
      %v1250 = vunpack.c.l.b16 %v920
      %v1251 = vunpack.c.l.b16 %v921
      %v1252 = vunpack.c.l.b16 %v922
      %v1253 = vunpack.c.l.b16 %v923
      %v1254 = vpack.c.b16 %v1223, %v1222
      %v1255 = vpack.c.b16 %v1225, %v1224
      %v1256 = vpack.c.b16 %v1227, %v1226
      %v1257 = vpack.c.b16 %v1229, %v1228
      %v1258 = vpack.c.b16 %v1231, %v1230
      %v1259 = vpack.c.b16 %v1233, %v1232
      %v1260 = vpack.c.b16 %v1235, %v1234
      %v1261 = vpack.c.b16 %v1237, %v1236
      %v1262 = vpack.c.b16 %v1239, %v1238
      %v1263 = vpack.c.b16 %v1241, %v1240
      %v1264 = vpack.c.b16 %v1243, %v1242
      %v1265 = vpack.c.b16 %v1245, %v1244
      %v1266 = vpack.c.b16 %v1247, %v1246
      %v1267 = vpack.c.b16 %v1249, %v1248
      %v1268 = vpack.c.b16 %v1251, %v1250
      %v1269 = vpack.c.b16 %v1253, %v1252
      %1286 = vmatprep.subr.bf16.mxu0 0
      %1287 = vmatpush1.bf16.msra.mxu0 %v1254
      %1288 = vmatprep.subr.bf16.mxu0 0
      %1289 = vmatpush1.bf16.msra.mxu0 %v1255
      %1290 = vmatprep.subr.bf16.mxu0 0
      %1291 = vmatpush1.bf16.msra.mxu0 %v1256
      %1292 = vmatprep.subr.bf16.mxu0 0
      %1293 = vmatpush1.bf16.msra.mxu0 %v1257
      %1294 = vmatprep.subr.bf16.mxu0 0
      %1295 = vmatpush1.bf16.msra.mxu0 %v1258
      %1296 = vmatprep.subr.bf16.mxu0 0
      %1297 = vmatpush1.bf16.msra.mxu0 %v1259
      %1298 = vmatprep.subr.bf16.mxu0 0
      %1299 = vmatpush1.bf16.msra.mxu0 %v1260
      %1300 = vmatprep.subr.bf16.mxu0 0
      %1301 = vmatpush1.bf16.msra.mxu0 %v1261
      %1302 = vmatprep.subr.bf16.mxu0 0
      %1303 = vmatpush1.bf16.msra.mxu0 %v1262
      %1304 = vmatprep.subr.bf16.mxu0 0
      %1305 = vmatpush1.bf16.msra.mxu0 %v1263
      %1306 = vmatprep.subr.bf16.mxu0 0
      %1307 = vmatpush1.bf16.msra.mxu0 %v1264
      %1308 = vmatprep.subr.bf16.mxu0 0
      %1309 = vmatpush1.bf16.msra.mxu0 %v1265
      %1310 = vmatprep.subr.bf16.mxu0 0
      %1311 = vmatpush1.bf16.msra.mxu0 %v1266
      %1312 = vmatprep.subr.bf16.mxu0 0
      %1313 = vmatpush1.bf16.msra.mxu0 %v1267
      %1314 = vmatprep.subr.bf16.mxu0 0
      %1315 = vmatpush1.bf16.msra.mxu0 %v1268
      %1316 = vmatprep.subr.bf16.mxu0 0
      %1317 = vmatpush1.bf16.msra.mxu0 %v1269
      %1318 = vmatprep.mubr.bf16.mxu0 %v852
      %1319 = vmatmul.mubr.bf16.gmra.mrb[0].mxu0 %v642
      %v1320 = vpop.f32.mrb[0].mxu0
      %v1321 = vadd.f32 %v928, %v1320
      %v1322 = vpop.f32.mrb[0].mxu0
      %v1323 = vpop.f32.mrb[0].mxu0
      %v1324 = vadd.f32 %v928, %v1323
      %v1325 = vpop.f32.mrb[0].mxu0
      %1326 = vmatprep.mubr.bf16.mxu0 %v853
      %1327 = vmatmul.mubr.bf16.gmra.mrb[0].mxu0 %v643
      %v1328 = vpop.f32.mrb[0].mxu0
      %v1329 = vadd.f32 %v928, %v1328
      %v1330 = vpop.f32.mrb[0].mxu0
      %v1331 = vpop.f32.mrb[0].mxu0
      %v1332 = vadd.f32 %v928, %v1331
      %v1333 = vpop.f32.mrb[0].mxu0
      %1334 = vmatprep.mubr.bf16.mxu0 %v854
      %1335 = vmatmul.mubr.bf16.gmra.mrb[0].mxu0 %v644
      %v1336 = vpop.f32.mrb[0].mxu0
      %v1337 = vadd.f32 %v928, %v1336
      %v1338 = vpop.f32.mrb[0].mxu0
      %v1339 = vpop.f32.mrb[0].mxu0
      %v1340 = vadd.f32 %v928, %v1339
      %v1341 = vpop.f32.mrb[0].mxu0
      %1342 = vmatprep.mubr.bf16.mxu0 %v855
      %1343 = vmatmul.mubr.bf16.gmra.mrb[0].mxu0 %v645
      %v1344 = vpop.f32.mrb[0].mxu0
      %v1345 = vadd.f32 %v928, %v1344
      %v1346 = vpop.f32.mrb[0].mxu0
      %v1347 = vpop.f32.mrb[0].mxu0
      %v1348 = vadd.f32 %v928, %v1347
      %v1349 = vpop.f32.mrb[0].mxu0
      %1350 = vmatprep.mubr.bf16.mxu0 %v856
      %1351 = vmatmul.mubr.bf16.gmra.mrb[0].mxu0 %v646
      %v1352 = vpop.f32.mrb[0].mxu0
      %v1353 = vadd.f32 %v928, %v1352
      %v1354 = vpop.f32.mrb[0].mxu0
      %v1355 = vpop.f32.mrb[0].mxu0
      %v1356 = vadd.f32 %v928, %v1355
      %v1357 = vpop.f32.mrb[0].mxu0
      %1358 = vmatprep.mubr.bf16.mxu0 %v857
      %1359 = vmatmul.mubr.bf16.gmra.mrb[0].mxu0 %v647
      %v1360 = vpop.f32.mrb[0].mxu0
      %v1361 = vadd.f32 %v928, %v1360
      %v1362 = vpop.f32.mrb[0].mxu0
      %v1363 = vpop.f32.mrb[0].mxu0
      %v1364 = vadd.f32 %v928, %v1363
      %v1365 = vpop.f32.mrb[0].mxu0
      %1366 = vmatprep.mubr.bf16.mxu0 %v858
      %1367 = vmatmul.mubr.bf16.gmra.mrb[0].mxu0 %v648
      %v1368 = vpop.f32.mrb[0].mxu0
      %v1369 = vadd.f32 %v928, %v1368
      %v1370 = vpop.f32.mrb[0].mxu0
      %v1371 = vpop.f32.mrb[0].mxu0
      %v1372 = vadd.f32 %v928, %v1371
      %v1373 = vpop.f32.mrb[0].mxu0
      %1374 = vmatprep.mubr.bf16.mxu0 %v859
      %1375 = vmatmul.mubr.bf16.gmra.mrb[0].mxu0 %v649
      %v1376 = vpop.f32.mrb[0].mxu0
      %v1377 = vadd.f32 %v928, %v1376
      %v1378 = vpop.f32.mrb[0].mxu0
      %v1379 = vpop.f32.mrb[0].mxu0
      %v1380 = vadd.f32 %v928, %v1379
      %v1381 = vpop.f32.mrb[0].mxu0
      %1382 = vdwg.mxu0
      %vm1383 = vcmp.eq.s32.totalorder %v564, 127
      %vm1384 = vcmp.eq.s32.totalorder %v565, 127
      %vm1385 = vcmp.eq.s32.totalorder %v566, 127
      %vm1386 = vcmp.eq.s32.totalorder %v567, 127
      %vm1387 = vcmp.eq.s32.totalorder %v568, 127
      %vm1388 = vcmp.eq.s32.totalorder %v569, 127
      %vm1389 = vcmp.eq.s32.totalorder %v570, 127
      %vm1390 = vcmp.eq.s32.totalorder %v571, 127
      %vm1391 = vcmp.eq.s32.totalorder %v572, 127
      %vm1392 = vcmp.eq.s32.totalorder %v573, 127
      %vm1393 = vcmp.eq.s32.totalorder %v574, 127
      %vm1394 = vcmp.eq.s32.totalorder %v575, 127
      %vm1395 = vcmp.eq.s32.totalorder %v576, 127
      %vm1396 = vcmp.eq.s32.totalorder %v577, 127
      %vm1397 = vcmp.eq.s32.totalorder %v578, 127
      %vm1398 = vcmp.eq.s32.totalorder %v579, 127
      %v1399 = vsel %vm1383, 1.0, 0.0
      %v1400 = vsel %vm1384, 1.0, 0.0
      %v1401 = vsel %vm1385, 1.0, 0.0
      %v1402 = vsel %vm1386, 1.0, 0.0
      %v1403 = vsel %vm1387, 1.0, 0.0
      %v1404 = vsel %vm1388, 1.0, 0.0
      %v1405 = vsel %vm1389, 1.0, 0.0
      %v1406 = vsel %vm1390, 1.0, 0.0
      %v1407 = vsel %vm1391, 1.0, 0.0
      %v1408 = vsel %vm1392, 1.0, 0.0
      %v1409 = vsel %vm1393, 1.0, 0.0
      %v1410 = vsel %vm1394, 1.0, 0.0
      %v1411 = vsel %vm1395, 1.0, 0.0
      %v1412 = vsel %vm1396, 1.0, 0.0
      %v1413 = vsel %vm1397, 1.0, 0.0
      %v1414 = vsel %vm1398, 1.0, 0.0
      %v1415 = vlaneseq
      %v1416 = vshrl.u32 %v1415, 7
      %v1417 = vsub.s32 2, %v1416
      %v1418 = vrot.slane %v924, %v1417
      %v1419 = vmul.f32 %v1399, %v1418
      %v1420 = vmul.f32 %v1400, %v1418
      %v1421 = vmul.f32 %v1401, %v1418
      %v1422 = vmul.f32 %v1402, %v1418
      %v1423 = vmul.f32 %v1403, %v1418
      %v1424 = vmul.f32 %v1404, %v1418
      %v1425 = vmul.f32 %v1405, %v1418
      %v1426 = vmul.f32 %v1406, %v1418
      %v1427 = vmul.f32 %v1407, %v1418
      %v1428 = vmul.f32 %v1408, %v1418
      %v1429 = vmul.f32 %v1409, %v1418
      %v1430 = vmul.f32 %v1410, %v1418
      %v1431 = vmul.f32 %v1411, %v1418
      %v1432 = vmul.f32 %v1412, %v1418
      %v1433 = vmul.f32 %v1413, %v1418
      %v1434 = vmul.f32 %v1414, %v1418
      %v1435 = vsub.f32 %v1321, %v1419
      %v1436 = vsub.f32 %v1324, %v1420
      %v1437 = vsub.f32 %v1329, %v1421
      %v1438 = vsub.f32 %v1332, %v1422
      %v1439 = vsub.f32 %v1337, %v1423
      %v1440 = vsub.f32 %v1340, %v1424
      %v1441 = vsub.f32 %v1345, %v1425
      %v1442 = vsub.f32 %v1348, %v1426
      %v1443 = vsub.f32 %v1353, %v1427
      %v1444 = vsub.f32 %v1356, %v1428
      %v1445 = vsub.f32 %v1361, %v1429
      %v1446 = vsub.f32 %v1364, %v1430
      %v1447 = vsub.f32 %v1369, %v1431
      %v1448 = vsub.f32 %v1372, %v1432
      %v1449 = vsub.f32 %v1377, %v1433
      %v1450 = vsub.f32 %v1380, %v1434
      %v1451 = vpack.c.bf16 %v1175, %v1174
      %v1452 = vpack.c.bf16 %v1177, %v1176
      %v1453 = vpack.c.bf16 %v1179, %v1178
      %v1454 = vpack.c.bf16 %v1181, %v1180
      %v1455 = vpack.c.bf16 %v1183, %v1182
      %v1456 = vpack.c.bf16 %v1185, %v1184
      %v1457 = vpack.c.bf16 %v1187, %v1186
      %v1458 = vpack.c.bf16 %v1189, %v1188
      %v1467 = vunpack.c.l.b16 %v1451
      %v1468 = vunpack.c.h.b16 %v1451
      %v1469 = vunpack.c.l.b16 %v1452
      %v1470 = vunpack.c.h.b16 %v1452
      %v1471 = vunpack.c.l.b16 %v1453
      %v1472 = vunpack.c.h.b16 %v1453
      %v1473 = vunpack.c.l.b16 %v1454
      %v1474 = vunpack.c.h.b16 %v1454
      %v1475 = vunpack.c.l.b16 %v1455
      %v1476 = vunpack.c.h.b16 %v1455
      %v1477 = vunpack.c.l.b16 %v1456
      %v1478 = vunpack.c.h.b16 %v1456
      %v1479 = vunpack.c.l.b16 %v1457
      %v1480 = vunpack.c.h.b16 %v1457
      %v1481 = vunpack.c.l.b16 %v1458
      %v1482 = vunpack.c.h.b16 %v1458
      %v1483 = vpack.c.b16 %v1467, %v1467
      %v1484 = vpack.c.b16 %v1468, %v1468
      %v1485 = vpack.c.b16 %v1469, %v1469
      %v1486 = vpack.c.b16 %v1470, %v1470
      %v1487 = vpack.c.b16 %v1471, %v1471
      %v1488 = vpack.c.b16 %v1472, %v1472
      %v1489 = vpack.c.b16 %v1473, %v1473
      %v1490 = vpack.c.b16 %v1474, %v1474
      %v1491 = vpack.c.b16 %v1475, %v1475
      %v1492 = vpack.c.b16 %v1476, %v1476
      %v1493 = vpack.c.b16 %v1477, %v1477
      %v1494 = vpack.c.b16 %v1478, %v1478
      %v1495 = vpack.c.b16 %v1479, %v1479
      %v1496 = vpack.c.b16 %v1480, %v1480
      %v1497 = vpack.c.b16 %v1481, %v1481
      %v1498 = vpack.c.b16 %v1482, %v1482
      %1515 = vst [vmem:[%s526] sm:$0xf] %v1483
      %1516 = vst [vmem:[%s526 + $0x8] sm:$0xf] %v1484
      %1517 = vst [vmem:[%s526 + $0x10] sm:$0xf] %v1485
      %1518 = vst [vmem:[%s526 + $0x18] sm:$0xf] %v1486
      %1519 = vst [vmem:[%s526 + $0x20] sm:$0xf] %v1487
      %1520 = vst [vmem:[%s526 + $0x28] sm:$0xf] %v1488
      %1521 = vst [vmem:[%s526 + $0x30] sm:$0xf] %v1489
      %1522 = vst [vmem:[%s526 + $0x38] sm:$0xf] %v1490
      %1523 = vst [vmem:[%s526 + $0x40] sm:$0xf] %v1491
      %1524 = vst [vmem:[%s526 + $0x48] sm:$0xf] %v1492
      %1525 = vst [vmem:[%s526 + $0x50] sm:$0xf] %v1493
      %1526 = vst [vmem:[%s526 + $0x58] sm:$0xf] %v1494
      %1527 = vst [vmem:[%s526 + $0x60] sm:$0xf] %v1495
      %1528 = vst [vmem:[%s526 + $0x68] sm:$0xf] %v1496
      %1529 = vst [vmem:[%s526 + $0x70] sm:$0xf] %v1497
      %1530 = vst [vmem:[%s526 + $0x78] sm:$0xf] %v1498
      %v1531 = vpack.c.bf16 %v1436, %v1435
      %v1532 = vpack.c.bf16 %v1438, %v1437
      %v1533 = vpack.c.bf16 %v1440, %v1439
      %v1534 = vpack.c.bf16 %v1442, %v1441
      %v1535 = vpack.c.bf16 %v1444, %v1443
      %v1536 = vpack.c.bf16 %v1446, %v1445
      %v1537 = vpack.c.bf16 %v1448, %v1447
      %v1538 = vpack.c.bf16 %v1450, %v1449
      %v1547 = vunpack.c.l.b16 %v1531
      %v1548 = vunpack.c.h.b16 %v1531
      %v1549 = vunpack.c.l.b16 %v1532
      %v1550 = vunpack.c.h.b16 %v1532
      %v1551 = vunpack.c.l.b16 %v1533
      %v1552 = vunpack.c.h.b16 %v1533
      %v1553 = vunpack.c.l.b16 %v1534
      %v1554 = vunpack.c.h.b16 %v1534
      %v1555 = vunpack.c.l.b16 %v1535
      %v1556 = vunpack.c.h.b16 %v1535
      %v1557 = vunpack.c.l.b16 %v1536
      %v1558 = vunpack.c.h.b16 %v1536
      %v1559 = vunpack.c.l.b16 %v1537
      %v1560 = vunpack.c.h.b16 %v1537
      %v1561 = vunpack.c.l.b16 %v1538
      %v1562 = vunpack.c.h.b16 %v1538
      %v1563 = vpack.c.b16 %v1547, %v1547
      %v1564 = vpack.c.b16 %v1548, %v1548
      %v1565 = vpack.c.b16 %v1549, %v1549
      %v1566 = vpack.c.b16 %v1550, %v1550
      %v1567 = vpack.c.b16 %v1551, %v1551
      %v1568 = vpack.c.b16 %v1552, %v1552
      %v1569 = vpack.c.b16 %v1553, %v1553
      %v1570 = vpack.c.b16 %v1554, %v1554
      %v1571 = vpack.c.b16 %v1555, %v1555
      %v1572 = vpack.c.b16 %v1556, %v1556
      %v1573 = vpack.c.b16 %v1557, %v1557
      %v1574 = vpack.c.b16 %v1558, %v1558
      %v1575 = vpack.c.b16 %v1559, %v1559
      %v1576 = vpack.c.b16 %v1560, %v1560
      %v1577 = vpack.c.b16 %v1561, %v1561
      %v1578 = vpack.c.b16 %v1562, %v1562
      %1595 = vst [vmem:[%s526 + $0x4] sm:$0xf] %v1563
      %1596 = vst [vmem:[%s526 + $0xc] sm:$0xf] %v1564
      %1597 = vst [vmem:[%s526 + $0x14] sm:$0xf] %v1565
      %1598 = vst [vmem:[%s526 + $0x1c] sm:$0xf] %v1566
      %1599 = vst [vmem:[%s526 + $0x24] sm:$0xf] %v1567
      %1600 = vst [vmem:[%s526 + $0x2c] sm:$0xf] %v1568
      %1601 = vst [vmem:[%s526 + $0x34] sm:$0xf] %v1569
      %1602 = vst [vmem:[%s526 + $0x3c] sm:$0xf] %v1570
      %1603 = vst [vmem:[%s526 + $0x44] sm:$0xf] %v1571
      %1604 = vst [vmem:[%s526 + $0x4c] sm:$0xf] %v1572
      %1605 = vst [vmem:[%s526 + $0x54] sm:$0xf] %v1573
      %1606 = vst [vmem:[%s526 + $0x5c] sm:$0xf] %v1574
      %1607 = vst [vmem:[%s526 + $0x64] sm:$0xf] %v1575
      %1608 = vst [vmem:[%s526 + $0x6c] sm:$0xf] %v1576
      %1609 = vst [vmem:[%s526 + $0x74] sm:$0xf] %v1577
      %1610 = vst [vmem:[%s526 + $0x7c] sm:$0xf] %v1578
      %v1611 = vadd.f32 %v1174, %v1175
      %v1612 = vadd.f32 %v1611, %v1176
      %v1613 = vadd.f32 %v1612, %v1177
      %v1614 = vadd.f32 %v1613, %v1178
      %v1615 = vadd.f32 %v1614, %v1179
      %v1616 = vadd.f32 %v1615, %v1180
      %v1617 = vadd.f32 %v1616, %v1181
      %v1618 = vadd.f32 %v1617, %v1182
      %v1619 = vadd.f32 %v1618, %v1183
      %v1620 = vadd.f32 %v1619, %v1184
      %v1621 = vadd.f32 %v1620, %v1185
      %v1622 = vadd.f32 %v1621, %v1186
      %v1623 = vadd.f32 %v1622, %v1187
      %v1624 = vadd.f32 %v1623, %v1188
      %v1625 = vadd.f32 %v1624, %v1189
      %v1626 = vrot.slane %v1625, 4
      %v1627 = vadd.f32 %v1625, %v1626
      %v1628 = vrot.slane %v1627, 2
      %v1629 = vadd.f32 %v1627, %v1628
      %v1630 = vrot.slane %v1629, 1
      %v1631 = vadd.f32 %v1629, %v1630
      %v1632 = vadd.f32 %v1435, %v1436
      %v1633 = vadd.f32 %v1632, %v1437
      %v1634 = vadd.f32 %v1633, %v1438
      %v1635 = vadd.f32 %v1634, %v1439
      %v1636 = vadd.f32 %v1635, %v1440
      %v1637 = vadd.f32 %v1636, %v1441
      %v1638 = vadd.f32 %v1637, %v1442
      %v1639 = vadd.f32 %v1638, %v1443
      %v1640 = vadd.f32 %v1639, %v1444
      %v1641 = vadd.f32 %v1640, %v1445
      %v1642 = vadd.f32 %v1641, %v1446
      %v1643 = vadd.f32 %v1642, %v1447
      %v1644 = vadd.f32 %v1643, %v1448
      %v1645 = vadd.f32 %v1644, %v1449
      %v1646 = vadd.f32 %v1645, %v1450
      %v1647 = vrot.slane %v1646, 4
      %v1648 = vadd.f32 %v1646, %v1647
      %v1649 = vrot.slane %v1648, 2
      %v1650 = vadd.f32 %v1648, %v1649
      %v1651 = vrot.slane %v1650, 1
      %v1652 = vadd.f32 %v1650, %v1651
      %v1653 = vadd.f32 %v1631, %v1652
      %1654 = vst [vmem:[%s536] sm:$0x1] %v1653
      %v1655 = vmul.f32 %v1174, %v1174
      %v1656 = vmul.f32 %v1175, %v1175
      %v1657 = vmul.f32 %v1176, %v1176
      %v1658 = vmul.f32 %v1177, %v1177
      %v1659 = vmul.f32 %v1178, %v1178
      %v1660 = vmul.f32 %v1179, %v1179
      %v1661 = vmul.f32 %v1180, %v1180
      %v1662 = vmul.f32 %v1181, %v1181
      %v1663 = vmul.f32 %v1182, %v1182
      %v1664 = vmul.f32 %v1183, %v1183
      %v1665 = vmul.f32 %v1184, %v1184
      %v1666 = vmul.f32 %v1185, %v1185
      %v1667 = vmul.f32 %v1186, %v1186
      %v1668 = vmul.f32 %v1187, %v1187
      %v1669 = vmul.f32 %v1188, %v1188
      %v1670 = vmul.f32 %v1189, %v1189
      %v1671 = vadd.f32 %v1655, %v1656
      %v1672 = vadd.f32 %v1671, %v1657
      %v1673 = vadd.f32 %v1672, %v1658
      %v1674 = vadd.f32 %v1673, %v1659
      %v1675 = vadd.f32 %v1674, %v1660
      %v1676 = vadd.f32 %v1675, %v1661
      %v1677 = vadd.f32 %v1676, %v1662
      %v1678 = vadd.f32 %v1677, %v1663
      %v1679 = vadd.f32 %v1678, %v1664
      %v1680 = vadd.f32 %v1679, %v1665
      %v1681 = vadd.f32 %v1680, %v1666
      %v1682 = vadd.f32 %v1681, %v1667
      %v1683 = vadd.f32 %v1682, %v1668
      %v1684 = vadd.f32 %v1683, %v1669
      %v1685 = vadd.f32 %v1684, %v1670
      %v1686 = vrot.slane %v1685, 4
      %v1687 = vadd.f32 %v1685, %v1686
      %v1688 = vrot.slane %v1687, 2
      %v1689 = vadd.f32 %v1687, %v1688
      %v1690 = vrot.slane %v1689, 1
      %v1691 = vadd.f32 %v1689, %v1690
      %v1692 = vmul.f32 %v1435, %v1435
      %v1693 = vmul.f32 %v1436, %v1436
      %v1694 = vmul.f32 %v1437, %v1437
      %v1695 = vmul.f32 %v1438, %v1438
      %v1696 = vmul.f32 %v1439, %v1439
      %v1697 = vmul.f32 %v1440, %v1440
      %v1698 = vmul.f32 %v1441, %v1441
      %v1699 = vmul.f32 %v1442, %v1442
      %v1700 = vmul.f32 %v1443, %v1443
      %v1701 = vmul.f32 %v1444, %v1444
      %v1702 = vmul.f32 %v1445, %v1445
      %v1703 = vmul.f32 %v1446, %v1446
      %v1704 = vmul.f32 %v1447, %v1447
      %v1705 = vmul.f32 %v1448, %v1448
      %v1706 = vmul.f32 %v1449, %v1449
      %v1707 = vmul.f32 %v1450, %v1450
      %v1708 = vadd.f32 %v1692, %v1693
      %v1709 = vadd.f32 %v1708, %v1694
      %v1710 = vadd.f32 %v1709, %v1695
      %v1711 = vadd.f32 %v1710, %v1696
      %v1712 = vadd.f32 %v1711, %v1697
      %v1713 = vadd.f32 %v1712, %v1698
      %v1714 = vadd.f32 %v1713, %v1699
      %v1715 = vadd.f32 %v1714, %v1700
      %v1716 = vadd.f32 %v1715, %v1701
      %v1717 = vadd.f32 %v1716, %v1702
      %v1718 = vadd.f32 %v1717, %v1703
      %v1719 = vadd.f32 %v1718, %v1704
      %v1720 = vadd.f32 %v1719, %v1705
      %v1721 = vadd.f32 %v1720, %v1706
      %v1722 = vadd.f32 %v1721, %v1707
      %v1723 = vrot.slane %v1722, 4
      %v1724 = vadd.f32 %v1722, %v1723
      %v1725 = vrot.slane %v1724, 2
      %v1726 = vadd.f32 %v1724, %v1725
      %v1727 = vrot.slane %v1726, 1
      %v1728 = vadd.f32 %v1726, %v1727
      %v1729 = vadd.f32 %v1691, %v1728
      %1730 = vst [vmem:[%s539] sm:$0x1] %v1729
      %v1731 = vpack.c.bf16 %v548, %v547
      %v1732 = vpack.c.bf16 %v550, %v549
      %v1733 = vpack.c.bf16 %v552, %v551
      %v1734 = vpack.c.bf16 %v554, %v553
      %v1735 = vpack.c.bf16 %v556, %v555
      %v1736 = vpack.c.bf16 %v558, %v557
      %v1737 = vpack.c.bf16 %v560, %v559
      %v1738 = vpack.c.bf16 %v562, %v561
      %v1739 = vrot.slane %v547, 7
      %v1740 = vrot.slane %v548, 7
      %v1741 = vrot.slane %v549, 7
      %v1742 = vrot.slane %v550, 7
      %v1743 = vrot.slane %v551, 7
      %v1744 = vrot.slane %v552, 7
      %v1745 = vrot.slane %v553, 7
      %v1746 = vrot.slane %v554, 7
      %v1747 = vrot.slane %v555, 7
      %v1748 = vrot.slane %v556, 7
      %v1749 = vrot.slane %v557, 7
      %v1750 = vrot.slane %v558, 7
      %v1751 = vrot.slane %v559, 7
      %v1752 = vrot.slane %v560, 7
      %v1753 = vrot.slane %v561, 7
      %v1754 = vrot.slane %v562, 7
      %v1755 = vsel %vm682, %v1753, %v1754
      %v1756 = vsel %vm682, %v1752, %v1753
      %v1757 = vsel %vm682, %v1751, %v1752
      %v1758 = vsel %vm682, %v1750, %v1751
      %v1759 = vsel %vm682, %v1749, %v1750
      %v1760 = vsel %vm682, %v1748, %v1749
      %v1761 = vsel %vm682, %v1747, %v1748
      %v1762 = vsel %vm682, %v1746, %v1747
      %v1763 = vsel %vm682, %v1745, %v1746
      %v1764 = vsel %vm682, %v1744, %v1745
      %v1765 = vsel %vm682, %v1743, %v1744
      %v1766 = vsel %vm682, %v1742, %v1743
      %v1767 = vsel %vm682, %v1741, %v1742
      %v1768 = vsel %vm682, %v1740, %v1741
      %v1769 = vsel %vm682, %v1739, %v1740
      %v1770 = vsel %vm682, %v1754, %v1739
      %v1771 = vsel %vm715, %v1770, 0.0
      %v1772 = vsel %vm716, %v1769, 0.0
      %v1773 = vsel %vm717, %v1768, 0.0
      %v1774 = vsel %vm718, %v1767, 0.0
      %v1775 = vsel %vm719, %v1766, 0.0
      %v1776 = vsel %vm720, %v1765, 0.0
      %v1777 = vsel %vm721, %v1764, 0.0
      %v1778 = vsel %vm722, %v1763, 0.0
      %v1779 = vsel %vm723, %v1762, 0.0
      %v1780 = vsel %vm724, %v1761, 0.0
      %v1781 = vsel %vm725, %v1760, 0.0
      %v1782 = vsel %vm726, %v1759, 0.0
      %v1783 = vsel %vm727, %v1758, 0.0
      %v1784 = vsel %vm728, %v1757, 0.0
      %v1785 = vsel %vm729, %v1756, 0.0
      %v1786 = vsel %vm730, %v1755, 0.0
      %v1787 = vpack.c.bf16 %v1772, %v1771
      %v1788 = vpack.c.bf16 %v1774, %v1773
      %v1789 = vpack.c.bf16 %v1776, %v1775
      %v1790 = vpack.c.bf16 %v1778, %v1777
      %v1791 = vpack.c.bf16 %v1780, %v1779
      %v1792 = vpack.c.bf16 %v1782, %v1781
      %v1793 = vpack.c.bf16 %v1784, %v1783
      %v1794 = vpack.c.bf16 %v1786, %v1785
      %v1795 = vrot.slane %v547, 1
      %v1796 = vrot.slane %v548, 1
      %v1797 = vrot.slane %v549, 1
      %v1798 = vrot.slane %v550, 1
      %v1799 = vrot.slane %v551, 1
      %v1800 = vrot.slane %v552, 1
      %v1801 = vrot.slane %v553, 1
      %v1802 = vrot.slane %v554, 1
      %v1803 = vrot.slane %v555, 1
      %v1804 = vrot.slane %v556, 1
      %v1805 = vrot.slane %v557, 1
      %v1806 = vrot.slane %v558, 1
      %v1807 = vrot.slane %v559, 1
      %v1808 = vrot.slane %v560, 1
      %v1809 = vrot.slane %v561, 1
      %v1810 = vrot.slane %v562, 1
      %v1811 = vsel %vm787, %v1809, %v1810
      %v1812 = vsel %vm787, %v1808, %v1809
      %v1813 = vsel %vm787, %v1807, %v1808
      %v1814 = vsel %vm787, %v1806, %v1807
      %v1815 = vsel %vm787, %v1805, %v1806
      %v1816 = vsel %vm787, %v1804, %v1805
      %v1817 = vsel %vm787, %v1803, %v1804
      %v1818 = vsel %vm787, %v1802, %v1803
      %v1819 = vsel %vm787, %v1801, %v1802
      %v1820 = vsel %vm787, %v1800, %v1801
      %v1821 = vsel %vm787, %v1799, %v1800
      %v1822 = vsel %vm787, %v1798, %v1799
      %v1823 = vsel %vm787, %v1797, %v1798
      %v1824 = vsel %vm787, %v1796, %v1797
      %v1825 = vsel %vm787, %v1795, %v1796
      %v1826 = vsel %vm787, %v1810, %v1795
      %v1827 = vsel %vm820, %v1825, 0.0
      %v1828 = vsel %vm821, %v1824, 0.0
      %v1829 = vsel %vm822, %v1823, 0.0
      %v1830 = vsel %vm823, %v1822, 0.0
      %v1831 = vsel %vm824, %v1821, 0.0
      %v1832 = vsel %vm825, %v1820, 0.0
      %v1833 = vsel %vm826, %v1819, 0.0
      %v1834 = vsel %vm827, %v1818, 0.0
      %v1835 = vsel %vm828, %v1817, 0.0
      %v1836 = vsel %vm829, %v1816, 0.0
      %v1837 = vsel %vm830, %v1815, 0.0
      %v1838 = vsel %vm831, %v1814, 0.0
      %v1839 = vsel %vm832, %v1813, 0.0
      %v1840 = vsel %vm833, %v1812, 0.0
      %v1841 = vsel %vm834, %v1811, 0.0
      %v1842 = vsel %vm835, %v1826, 0.0
      %v1843 = vpack.c.bf16 %v1828, %v1827
      %v1844 = vpack.c.bf16 %v1830, %v1829
      %v1845 = vpack.c.bf16 %v1832, %v1831
      %v1846 = vpack.c.bf16 %v1834, %v1833
      %v1847 = vpack.c.bf16 %v1836, %v1835
      %v1848 = vpack.c.bf16 %v1838, %v1837
      %v1849 = vpack.c.bf16 %v1840, %v1839
      %v1850 = vpack.c.bf16 %v1842, %v1841
      %v1851 = vld [vmem:[%s6] sm:$0xf]
      %v1852 = vld [vmem:[%s6 + $0x4] sm:$0xf]
      %v1853 = vld [vmem:[%s6 + $0x8] sm:$0xf]
      %v1854 = vld [vmem:[%s6 + $0xc] sm:$0xf]
      %v1855 = vld [vmem:[%s6 + $0x10] sm:$0xf]
      %v1856 = vld [vmem:[%s6 + $0x14] sm:$0xf]
      %v1857 = vld [vmem:[%s6 + $0x18] sm:$0xf]
      %v1858 = vld [vmem:[%s6 + $0x1c] sm:$0xf]
      %v1859 = vld [vmem:[%s6 + $0x20] sm:$0xf]
      %v1860 = vld [vmem:[%s6 + $0x24] sm:$0xf]
      %v1861 = vld [vmem:[%s6 + $0x28] sm:$0xf]
      %v1862 = vld [vmem:[%s6 + $0x2c] sm:$0xf]
      %v1863 = vld [vmem:[%s6 + $0x30] sm:$0xf]
      %v1864 = vld [vmem:[%s6 + $0x34] sm:$0xf]
      %v1865 = vld [vmem:[%s6 + $0x38] sm:$0xf]
      %v1866 = vld [vmem:[%s6 + $0x3c] sm:$0xf]
      %v1867 = vld [vmem:[%s6 + $0x40] sm:$0xf]
      %v1868 = vld [vmem:[%s6 + $0x44] sm:$0xf]
      %v1869 = vld [vmem:[%s6 + $0x48] sm:$0xf]
      %v1870 = vld [vmem:[%s6 + $0x4c] sm:$0xf]
      %v1871 = vld [vmem:[%s6 + $0x50] sm:$0xf]
      %v1872 = vld [vmem:[%s6 + $0x54] sm:$0xf]
      %v1873 = vld [vmem:[%s6 + $0x58] sm:$0xf]
      %v1874 = vld [vmem:[%s6 + $0x5c] sm:$0xf]
      %v1875 = vld [vmem:[%s6 + $0x60] sm:$0xf]
      %v1876 = vld [vmem:[%s6 + $0x64] sm:$0xf]
      %v1877 = vld [vmem:[%s6 + $0x68] sm:$0xf]
      %v1878 = vld [vmem:[%s6 + $0x6c] sm:$0xf]
      %v1879 = vld [vmem:[%s6 + $0x70] sm:$0xf]
      %v1880 = vld [vmem:[%s6 + $0x74] sm:$0xf]
      %v1881 = vld [vmem:[%s6 + $0x78] sm:$0xf]
      %v1882 = vld [vmem:[%s6 + $0x7c] sm:$0xf]
      %v1883 = vld [vmem:[%s7] sm:$0xf]
      %v1884 = vld [vmem:[%s7 + $0x4] sm:$0xf]
      %v1885 = vld [vmem:[%s7 + $0x8] sm:$0xf]
      %v1886 = vld [vmem:[%s7 + $0xc] sm:$0xf]
      %v1887 = vld [vmem:[%s7 + $0x10] sm:$0xf]
      %v1888 = vld [vmem:[%s7 + $0x14] sm:$0xf]
      %v1889 = vld [vmem:[%s7 + $0x18] sm:$0xf]
      %v1890 = vld [vmem:[%s7 + $0x1c] sm:$0xf]
      %v1891 = vld [vmem:[%s7 + $0x20] sm:$0xf]
      %v1892 = vld [vmem:[%s7 + $0x24] sm:$0xf]
      %v1893 = vld [vmem:[%s7 + $0x28] sm:$0xf]
      %v1894 = vld [vmem:[%s7 + $0x2c] sm:$0xf]
      %v1895 = vld [vmem:[%s7 + $0x30] sm:$0xf]
      %v1896 = vld [vmem:[%s7 + $0x34] sm:$0xf]
      %v1897 = vld [vmem:[%s7 + $0x38] sm:$0xf]
      %v1898 = vld [vmem:[%s7 + $0x3c] sm:$0xf]
      %v1899 = vld [vmem:[%s7 + $0x40] sm:$0xf]
      %v1900 = vld [vmem:[%s7 + $0x44] sm:$0xf]
      %v1901 = vld [vmem:[%s7 + $0x48] sm:$0xf]
      %v1902 = vld [vmem:[%s7 + $0x4c] sm:$0xf]
      %v1903 = vld [vmem:[%s7 + $0x50] sm:$0xf]
      %v1904 = vld [vmem:[%s7 + $0x54] sm:$0xf]
      %v1905 = vld [vmem:[%s7 + $0x58] sm:$0xf]
      %v1906 = vld [vmem:[%s7 + $0x5c] sm:$0xf]
      %v1907 = vld [vmem:[%s7 + $0x60] sm:$0xf]
      %v1908 = vld [vmem:[%s7 + $0x64] sm:$0xf]
      %v1909 = vld [vmem:[%s7 + $0x68] sm:$0xf]
      %v1910 = vld [vmem:[%s7 + $0x6c] sm:$0xf]
      %v1911 = vld [vmem:[%s7 + $0x70] sm:$0xf]
      %v1912 = vld [vmem:[%s7 + $0x74] sm:$0xf]
      %v1913 = vld [vmem:[%s7 + $0x78] sm:$0xf]
      %v1914 = vld [vmem:[%s7 + $0x7c] sm:$0xf]
      %v1915 = vld [vmem:[%s8] sm:$0x7]
      %v1916 = vlaneseq
      %v1917 = vshrl.u32 %v1916, 7
      %v1918 = vsub.s32 0, %v1917
      %v1919 = vrot.slane %v1915, %v1918
      %v1952 = vunpack.c.l.b16 %v1851
      %v1953 = vunpack.c.l.b16 %v1852
      %v1954 = vunpack.c.l.b16 %v1853
      %v1955 = vunpack.c.l.b16 %v1854
      %v1956 = vunpack.c.l.b16 %v1855
      %v1957 = vunpack.c.l.b16 %v1856
      %v1958 = vunpack.c.l.b16 %v1857
      %v1959 = vunpack.c.l.b16 %v1858
      %v1960 = vunpack.c.l.b16 %v1859
      %v1961 = vunpack.c.l.b16 %v1860
      %v1962 = vunpack.c.l.b16 %v1861
      %v1963 = vunpack.c.l.b16 %v1862
      %v1964 = vunpack.c.l.b16 %v1863
      %v1965 = vunpack.c.l.b16 %v1864
      %v1966 = vunpack.c.l.b16 %v1865
      %v1967 = vunpack.c.l.b16 %v1866
      %v1968 = vunpack.c.l.b16 %v1867
      %v1969 = vunpack.c.l.b16 %v1868
      %v1970 = vunpack.c.l.b16 %v1869
      %v1971 = vunpack.c.l.b16 %v1870
      %v1972 = vunpack.c.l.b16 %v1871
      %v1973 = vunpack.c.l.b16 %v1872
      %v1974 = vunpack.c.l.b16 %v1873
      %v1975 = vunpack.c.l.b16 %v1874
      %v1976 = vunpack.c.l.b16 %v1875
      %v1977 = vunpack.c.l.b16 %v1876
      %v1978 = vunpack.c.l.b16 %v1877
      %v1979 = vunpack.c.l.b16 %v1878
      %v1980 = vunpack.c.l.b16 %v1879
      %v1981 = vunpack.c.l.b16 %v1880
      %v1982 = vunpack.c.l.b16 %v1881
      %v1983 = vunpack.c.l.b16 %v1882
      %v1984 = vpack.c.b16 %v1953, %v1952
      %v1985 = vpack.c.b16 %v1955, %v1954
      %v1986 = vpack.c.b16 %v1957, %v1956
      %v1987 = vpack.c.b16 %v1959, %v1958
      %v1988 = vpack.c.b16 %v1961, %v1960
      %v1989 = vpack.c.b16 %v1963, %v1962
      %v1990 = vpack.c.b16 %v1965, %v1964
      %v1991 = vpack.c.b16 %v1967, %v1966
      %v1992 = vpack.c.b16 %v1969, %v1968
      %v1993 = vpack.c.b16 %v1971, %v1970
      %v1994 = vpack.c.b16 %v1973, %v1972
      %v1995 = vpack.c.b16 %v1975, %v1974
      %v1996 = vpack.c.b16 %v1977, %v1976
      %v1997 = vpack.c.b16 %v1979, %v1978
      %v1998 = vpack.c.b16 %v1981, %v1980
      %v1999 = vpack.c.b16 %v1983, %v1982
      %2016 = vmatprep.subr.bf16.mxu0 0
      %2017 = vmatpush1.bf16.msra.mxu0 %v1984
      %2018 = vmatprep.subr.bf16.mxu0 0
      %2019 = vmatpush1.bf16.msra.mxu0 %v1985
      %2020 = vmatprep.subr.bf16.mxu0 0
      %2021 = vmatpush1.bf16.msra.mxu0 %v1986
      %2022 = vmatprep.subr.bf16.mxu0 0
      %2023 = vmatpush1.bf16.msra.mxu0 %v1987
      %2024 = vmatprep.subr.bf16.mxu0 0
      %2025 = vmatpush1.bf16.msra.mxu0 %v1988
      %2026 = vmatprep.subr.bf16.mxu0 0
      %2027 = vmatpush1.bf16.msra.mxu0 %v1989
      %2028 = vmatprep.subr.bf16.mxu0 0
      %2029 = vmatpush1.bf16.msra.mxu0 %v1990
      %2030 = vmatprep.subr.bf16.mxu0 0
      %2031 = vmatpush1.bf16.msra.mxu0 %v1991
      %2032 = vmatprep.subr.bf16.mxu0 0
      %2033 = vmatpush1.bf16.msra.mxu0 %v1992
      %2034 = vmatprep.subr.bf16.mxu0 0
      %2035 = vmatpush1.bf16.msra.mxu0 %v1993
      %2036 = vmatprep.subr.bf16.mxu0 0
      %2037 = vmatpush1.bf16.msra.mxu0 %v1994
      %2038 = vmatprep.subr.bf16.mxu0 0
      %2039 = vmatpush1.bf16.msra.mxu0 %v1995
      %2040 = vmatprep.subr.bf16.mxu0 0
      %2041 = vmatpush1.bf16.msra.mxu0 %v1996
      %2042 = vmatprep.subr.bf16.mxu0 0
      %2043 = vmatpush1.bf16.msra.mxu0 %v1997
      %2044 = vmatprep.subr.bf16.mxu0 0
      %2045 = vmatpush1.bf16.msra.mxu0 %v1998
      %2046 = vmatprep.subr.bf16.mxu0 0
      %2047 = vmatpush1.bf16.msra.mxu0 %v1999
      %2048 = vmatprep.mubr.bf16.mxu0 %v1731
      %2049 = vmatmul.mubr.bf16.gmra.mrb[0].mxu0 %v1787
      %v2050 = vpop.f32.mrb[0].mxu0
      %v2051 = vadd.f32 %v1919, %v2050
      %v2052 = vpop.f32.mrb[0].mxu0
      %v2053 = vpop.f32.mrb[0].mxu0
      %v2054 = vadd.f32 %v1919, %v2053
      %v2055 = vpop.f32.mrb[0].mxu0
      %2056 = vmatprep.mubr.bf16.mxu0 %v1732
      %2057 = vmatmul.mubr.bf16.gmra.mrb[0].mxu0 %v1788
      %v2058 = vpop.f32.mrb[0].mxu0
      %v2059 = vadd.f32 %v1919, %v2058
      %v2060 = vpop.f32.mrb[0].mxu0
      %v2061 = vpop.f32.mrb[0].mxu0
      %v2062 = vadd.f32 %v1919, %v2061
      %v2063 = vpop.f32.mrb[0].mxu0
      %2064 = vmatprep.mubr.bf16.mxu0 %v1733
      %2065 = vmatmul.mubr.bf16.gmra.mrb[0].mxu0 %v1789
      %v2066 = vpop.f32.mrb[0].mxu0
      %v2067 = vadd.f32 %v1919, %v2066
      %v2068 = vpop.f32.mrb[0].mxu0
      %v2069 = vpop.f32.mrb[0].mxu0
      %v2070 = vadd.f32 %v1919, %v2069
      %v2071 = vpop.f32.mrb[0].mxu0
      %2072 = vmatprep.mubr.bf16.mxu0 %v1734
      %2073 = vmatmul.mubr.bf16.gmra.mrb[0].mxu0 %v1790
      %v2074 = vpop.f32.mrb[0].mxu0
      %v2075 = vadd.f32 %v1919, %v2074
      %v2076 = vpop.f32.mrb[0].mxu0
      %v2077 = vpop.f32.mrb[0].mxu0
      %v2078 = vadd.f32 %v1919, %v2077
      %v2079 = vpop.f32.mrb[0].mxu0
      %2080 = vmatprep.mubr.bf16.mxu0 %v1735
      %2081 = vmatmul.mubr.bf16.gmra.mrb[0].mxu0 %v1791
      %v2082 = vpop.f32.mrb[0].mxu0
      %v2083 = vadd.f32 %v1919, %v2082
      %v2084 = vpop.f32.mrb[0].mxu0
      %v2085 = vpop.f32.mrb[0].mxu0
      %v2086 = vadd.f32 %v1919, %v2085
      %v2087 = vpop.f32.mrb[0].mxu0
      %2088 = vmatprep.mubr.bf16.mxu0 %v1736
      %2089 = vmatmul.mubr.bf16.gmra.mrb[0].mxu0 %v1792
      %v2090 = vpop.f32.mrb[0].mxu0
      %v2091 = vadd.f32 %v1919, %v2090
      %v2092 = vpop.f32.mrb[0].mxu0
      %v2093 = vpop.f32.mrb[0].mxu0
      %v2094 = vadd.f32 %v1919, %v2093
      %v2095 = vpop.f32.mrb[0].mxu0
      %2096 = vmatprep.mubr.bf16.mxu0 %v1737
      %2097 = vmatmul.mubr.bf16.gmra.mrb[0].mxu0 %v1793
      %v2098 = vpop.f32.mrb[0].mxu0
      %v2099 = vadd.f32 %v1919, %v2098
      %v2100 = vpop.f32.mrb[0].mxu0
      %v2101 = vpop.f32.mrb[0].mxu0
      %v2102 = vadd.f32 %v1919, %v2101
      %v2103 = vpop.f32.mrb[0].mxu0
      %2104 = vmatprep.mubr.bf16.mxu0 %v1738
      %2105 = vmatmul.mubr.bf16.gmra.mrb[0].mxu0 %v1794
      %v2106 = vpop.f32.mrb[0].mxu0
      %v2107 = vadd.f32 %v1919, %v2106
      %v2108 = vpop.f32.mrb[0].mxu0
      %v2109 = vpop.f32.mrb[0].mxu0
      %v2110 = vadd.f32 %v1919, %v2109
      %v2111 = vpop.f32.mrb[0].mxu0
      %2112 = vdwg.mxu0
      %v2113 = vlaneseq
      %v2114 = vshrl.u32 %v2113, 7
      %v2115 = vsub.s32 1, %v2114
      %v2116 = vrot.slane %v1915, %v2115
      %v2117 = vmul.f32 %v1138, %v2116
      %v2118 = vmul.f32 %v1139, %v2116
      %v2119 = vmul.f32 %v1140, %v2116
      %v2120 = vmul.f32 %v1141, %v2116
      %v2121 = vmul.f32 %v1142, %v2116
      %v2122 = vmul.f32 %v1143, %v2116
      %v2123 = vmul.f32 %v1144, %v2116
      %v2124 = vmul.f32 %v1145, %v2116
      %v2125 = vmul.f32 %v1146, %v2116
      %v2126 = vmul.f32 %v1147, %v2116
      %v2127 = vmul.f32 %v1148, %v2116
      %v2128 = vmul.f32 %v1149, %v2116
      %v2129 = vmul.f32 %v1150, %v2116
      %v2130 = vmul.f32 %v1151, %v2116
      %v2131 = vmul.f32 %v1152, %v2116
      %v2132 = vmul.f32 %v1153, %v2116
      %v2133 = vsub.f32 %v2051, %v2117
      %v2134 = vsub.f32 %v2054, %v2118
      %v2135 = vsub.f32 %v2059, %v2119
      %v2136 = vsub.f32 %v2062, %v2120
      %v2137 = vsub.f32 %v2067, %v2121
      %v2138 = vsub.f32 %v2070, %v2122
      %v2139 = vsub.f32 %v2075, %v2123
      %v2140 = vsub.f32 %v2078, %v2124
      %v2141 = vsub.f32 %v2083, %v2125
      %v2142 = vsub.f32 %v2086, %v2126
      %v2143 = vsub.f32 %v2091, %v2127
      %v2144 = vsub.f32 %v2094, %v2128
      %v2145 = vsub.f32 %v2099, %v2129
      %v2146 = vsub.f32 %v2102, %v2130
      %v2147 = vsub.f32 %v2107, %v2131
      %v2148 = vsub.f32 %v2110, %v2132
      %v2181 = vunpack.c.l.b16 %v1883
      %v2182 = vunpack.c.l.b16 %v1884
      %v2183 = vunpack.c.l.b16 %v1885
      %v2184 = vunpack.c.l.b16 %v1886
      %v2185 = vunpack.c.l.b16 %v1887
      %v2186 = vunpack.c.l.b16 %v1888
      %v2187 = vunpack.c.l.b16 %v1889
      %v2188 = vunpack.c.l.b16 %v1890
      %v2189 = vunpack.c.l.b16 %v1891
      %v2190 = vunpack.c.l.b16 %v1892
      %v2191 = vunpack.c.l.b16 %v1893
      %v2192 = vunpack.c.l.b16 %v1894
      %v2193 = vunpack.c.l.b16 %v1895
      %v2194 = vunpack.c.l.b16 %v1896
      %v2195 = vunpack.c.l.b16 %v1897
      %v2196 = vunpack.c.l.b16 %v1898
      %v2197 = vunpack.c.l.b16 %v1899
      %v2198 = vunpack.c.l.b16 %v1900
      %v2199 = vunpack.c.l.b16 %v1901
      %v2200 = vunpack.c.l.b16 %v1902
      %v2201 = vunpack.c.l.b16 %v1903
      %v2202 = vunpack.c.l.b16 %v1904
      %v2203 = vunpack.c.l.b16 %v1905
      %v2204 = vunpack.c.l.b16 %v1906
      %v2205 = vunpack.c.l.b16 %v1907
      %v2206 = vunpack.c.l.b16 %v1908
      %v2207 = vunpack.c.l.b16 %v1909
      %v2208 = vunpack.c.l.b16 %v1910
      %v2209 = vunpack.c.l.b16 %v1911
      %v2210 = vunpack.c.l.b16 %v1912
      %v2211 = vunpack.c.l.b16 %v1913
      %v2212 = vunpack.c.l.b16 %v1914
      %v2213 = vpack.c.b16 %v2182, %v2181
      %v2214 = vpack.c.b16 %v2184, %v2183
      %v2215 = vpack.c.b16 %v2186, %v2185
      %v2216 = vpack.c.b16 %v2188, %v2187
      %v2217 = vpack.c.b16 %v2190, %v2189
      %v2218 = vpack.c.b16 %v2192, %v2191
      %v2219 = vpack.c.b16 %v2194, %v2193
      %v2220 = vpack.c.b16 %v2196, %v2195
      %v2221 = vpack.c.b16 %v2198, %v2197
      %v2222 = vpack.c.b16 %v2200, %v2199
      %v2223 = vpack.c.b16 %v2202, %v2201
      %v2224 = vpack.c.b16 %v2204, %v2203
      %v2225 = vpack.c.b16 %v2206, %v2205
      %v2226 = vpack.c.b16 %v2208, %v2207
      %v2227 = vpack.c.b16 %v2210, %v2209
      %v2228 = vpack.c.b16 %v2212, %v2211
      %2245 = vmatprep.subr.bf16.mxu0 0
      %2246 = vmatpush1.bf16.msra.mxu0 %v2213
      %2247 = vmatprep.subr.bf16.mxu0 0
      %2248 = vmatpush1.bf16.msra.mxu0 %v2214
      %2249 = vmatprep.subr.bf16.mxu0 0
      %2250 = vmatpush1.bf16.msra.mxu0 %v2215
      %2251 = vmatprep.subr.bf16.mxu0 0
      %2252 = vmatpush1.bf16.msra.mxu0 %v2216
      %2253 = vmatprep.subr.bf16.mxu0 0
      %2254 = vmatpush1.bf16.msra.mxu0 %v2217
      %2255 = vmatprep.subr.bf16.mxu0 0
      %2256 = vmatpush1.bf16.msra.mxu0 %v2218
      %2257 = vmatprep.subr.bf16.mxu0 0
      %2258 = vmatpush1.bf16.msra.mxu0 %v2219
      %2259 = vmatprep.subr.bf16.mxu0 0
      %2260 = vmatpush1.bf16.msra.mxu0 %v2220
      %2261 = vmatprep.subr.bf16.mxu0 0
      %2262 = vmatpush1.bf16.msra.mxu0 %v2221
      %2263 = vmatprep.subr.bf16.mxu0 0
      %2264 = vmatpush1.bf16.msra.mxu0 %v2222
      %2265 = vmatprep.subr.bf16.mxu0 0
      %2266 = vmatpush1.bf16.msra.mxu0 %v2223
      %2267 = vmatprep.subr.bf16.mxu0 0
      %2268 = vmatpush1.bf16.msra.mxu0 %v2224
      %2269 = vmatprep.subr.bf16.mxu0 0
      %2270 = vmatpush1.bf16.msra.mxu0 %v2225
      %2271 = vmatprep.subr.bf16.mxu0 0
      %2272 = vmatpush1.bf16.msra.mxu0 %v2226
      %2273 = vmatprep.subr.bf16.mxu0 0
      %2274 = vmatpush1.bf16.msra.mxu0 %v2227
      %2275 = vmatprep.subr.bf16.mxu0 0
      %2276 = vmatpush1.bf16.msra.mxu0 %v2228
      %2277 = vmatprep.mubr.bf16.mxu0 %v1843
      %2278 = vmatmul.mubr.bf16.gmra.mrb[0].mxu0 %v1731
      %v2279 = vpop.f32.mrb[0].mxu0
      %v2280 = vadd.f32 %v1919, %v2279
      %v2281 = vpop.f32.mrb[0].mxu0
      %v2282 = vpop.f32.mrb[0].mxu0
      %v2283 = vadd.f32 %v1919, %v2282
      %v2284 = vpop.f32.mrb[0].mxu0
      %2285 = vmatprep.mubr.bf16.mxu0 %v1844
      %2286 = vmatmul.mubr.bf16.gmra.mrb[0].mxu0 %v1732
      %v2287 = vpop.f32.mrb[0].mxu0
      %v2288 = vadd.f32 %v1919, %v2287
      %v2289 = vpop.f32.mrb[0].mxu0
      %v2290 = vpop.f32.mrb[0].mxu0
      %v2291 = vadd.f32 %v1919, %v2290
      %v2292 = vpop.f32.mrb[0].mxu0
      %2293 = vmatprep.mubr.bf16.mxu0 %v1845
      %2294 = vmatmul.mubr.bf16.gmra.mrb[0].mxu0 %v1733
      %v2295 = vpop.f32.mrb[0].mxu0
      %v2296 = vadd.f32 %v1919, %v2295
      %v2297 = vpop.f32.mrb[0].mxu0
      %v2298 = vpop.f32.mrb[0].mxu0
      %v2299 = vadd.f32 %v1919, %v2298
      %v2300 = vpop.f32.mrb[0].mxu0
      %2301 = vmatprep.mubr.bf16.mxu0 %v1846
      %2302 = vmatmul.mubr.bf16.gmra.mrb[0].mxu0 %v1734
      %v2303 = vpop.f32.mrb[0].mxu0
      %v2304 = vadd.f32 %v1919, %v2303
      %v2305 = vpop.f32.mrb[0].mxu0
      %v2306 = vpop.f32.mrb[0].mxu0
      %v2307 = vadd.f32 %v1919, %v2306
      %v2308 = vpop.f32.mrb[0].mxu0
      %2309 = vmatprep.mubr.bf16.mxu0 %v1847
      %2310 = vmatmul.mubr.bf16.gmra.mrb[0].mxu0 %v1735
      %v2311 = vpop.f32.mrb[0].mxu0
      %v2312 = vadd.f32 %v1919, %v2311
      %v2313 = vpop.f32.mrb[0].mxu0
      %v2314 = vpop.f32.mrb[0].mxu0
      %v2315 = vadd.f32 %v1919, %v2314
      %v2316 = vpop.f32.mrb[0].mxu0
      %2317 = vmatprep.mubr.bf16.mxu0 %v1848
      %2318 = vmatmul.mubr.bf16.gmra.mrb[0].mxu0 %v1736
      %v2319 = vpop.f32.mrb[0].mxu0
      %v2320 = vadd.f32 %v1919, %v2319
      %v2321 = vpop.f32.mrb[0].mxu0
      %v2322 = vpop.f32.mrb[0].mxu0
      %v2323 = vadd.f32 %v1919, %v2322
      %v2324 = vpop.f32.mrb[0].mxu0
      %2325 = vmatprep.mubr.bf16.mxu0 %v1849
      %2326 = vmatmul.mubr.bf16.gmra.mrb[0].mxu0 %v1737
      %v2327 = vpop.f32.mrb[0].mxu0
      %v2328 = vadd.f32 %v1919, %v2327
      %v2329 = vpop.f32.mrb[0].mxu0
      %v2330 = vpop.f32.mrb[0].mxu0
      %v2331 = vadd.f32 %v1919, %v2330
      %v2332 = vpop.f32.mrb[0].mxu0
      %2333 = vmatprep.mubr.bf16.mxu0 %v1850
      %2334 = vmatmul.mubr.bf16.gmra.mrb[0].mxu0 %v1738
      %v2335 = vpop.f32.mrb[0].mxu0
      %v2336 = vadd.f32 %v1919, %v2335
      %v2337 = vpop.f32.mrb[0].mxu0
      %v2338 = vpop.f32.mrb[0].mxu0
      %v2339 = vadd.f32 %v1919, %v2338
      %v2340 = vpop.f32.mrb[0].mxu0
      %2341 = vdwg.mxu0
      %v2342 = vlaneseq
      %v2343 = vshrl.u32 %v2342, 7
      %v2344 = vsub.s32 2, %v2343
      %v2345 = vrot.slane %v1915, %v2344
      %v2346 = vmul.f32 %v1399, %v2345
      %v2347 = vmul.f32 %v1400, %v2345
      %v2348 = vmul.f32 %v1401, %v2345
      %v2349 = vmul.f32 %v1402, %v2345
      %v2350 = vmul.f32 %v1403, %v2345
      %v2351 = vmul.f32 %v1404, %v2345
      %v2352 = vmul.f32 %v1405, %v2345
      %v2353 = vmul.f32 %v1406, %v2345
      %v2354 = vmul.f32 %v1407, %v2345
      %v2355 = vmul.f32 %v1408, %v2345
      %v2356 = vmul.f32 %v1409, %v2345
      %v2357 = vmul.f32 %v1410, %v2345
      %v2358 = vmul.f32 %v1411, %v2345
      %v2359 = vmul.f32 %v1412, %v2345
      %v2360 = vmul.f32 %v1413, %v2345
      %v2361 = vmul.f32 %v1414, %v2345
      %v2362 = vsub.f32 %v2280, %v2346
      %v2363 = vsub.f32 %v2283, %v2347
      %v2364 = vsub.f32 %v2288, %v2348
      %v2365 = vsub.f32 %v2291, %v2349
      %v2366 = vsub.f32 %v2296, %v2350
      %v2367 = vsub.f32 %v2299, %v2351
      %v2368 = vsub.f32 %v2304, %v2352
      %v2369 = vsub.f32 %v2307, %v2353
      %v2370 = vsub.f32 %v2312, %v2354
      %v2371 = vsub.f32 %v2315, %v2355
      %v2372 = vsub.f32 %v2320, %v2356
      %v2373 = vsub.f32 %v2323, %v2357
      %v2374 = vsub.f32 %v2328, %v2358
      %v2375 = vsub.f32 %v2331, %v2359
      %v2376 = vsub.f32 %v2336, %v2360
      %v2377 = vsub.f32 %v2339, %v2361
      %2378 = vst [vmem:[%s532] sm:$0xff] %v2133
      %2379 = vst [vmem:[%s532 + $0x10] sm:$0xff] %v2134
      %2380 = vst [vmem:[%s532 + $0x20] sm:$0xff] %v2135
      %2381 = vst [vmem:[%s532 + $0x30] sm:$0xff] %v2136
      %2382 = vst [vmem:[%s532 + $0x40] sm:$0xff] %v2137
      %2383 = vst [vmem:[%s532 + $0x50] sm:$0xff] %v2138
      %2384 = vst [vmem:[%s532 + $0x60] sm:$0xff] %v2139
      %2385 = vst [vmem:[%s532 + $0x70] sm:$0xff] %v2140
      %2386 = vst [vmem:[%s532 + $0x80] sm:$0xff] %v2141
      %2387 = vst [vmem:[%s532 + $0x90] sm:$0xff] %v2142
      %2388 = vst [vmem:[%s532 + $0xa0] sm:$0xff] %v2143
      %2389 = vst [vmem:[%s532 + $0xb0] sm:$0xff] %v2144
      %2390 = vst [vmem:[%s532 + $0xc0] sm:$0xff] %v2145
      %2391 = vst [vmem:[%s532 + $0xd0] sm:$0xff] %v2146
      %2392 = vst [vmem:[%s532 + $0xe0] sm:$0xff] %v2147
      %2393 = vst [vmem:[%s532 + $0xf0] sm:$0xff] %v2148
      %2394 = vst [vmem:[%s532 + $0x8] sm:$0xff] %v2362
      %2395 = vst [vmem:[%s532 + $0x18] sm:$0xff] %v2363
      %2396 = vst [vmem:[%s532 + $0x28] sm:$0xff] %v2364
      %2397 = vst [vmem:[%s532 + $0x38] sm:$0xff] %v2365
      %2398 = vst [vmem:[%s532 + $0x48] sm:$0xff] %v2366
      %2399 = vst [vmem:[%s532 + $0x58] sm:$0xff] %v2367
      %2400 = vst [vmem:[%s532 + $0x68] sm:$0xff] %v2368
      %2401 = vst [vmem:[%s532 + $0x78] sm:$0xff] %v2369
      %2402 = vst [vmem:[%s532 + $0x88] sm:$0xff] %v2370
      %2403 = vst [vmem:[%s532 + $0x98] sm:$0xff] %v2371
      %2404 = vst [vmem:[%s532 + $0xa8] sm:$0xff] %v2372
      %2405 = vst [vmem:[%s532 + $0xb8] sm:$0xff] %v2373
      %2406 = vst [vmem:[%s532 + $0xc8] sm:$0xff] %v2374
      %2407 = vst [vmem:[%s532 + $0xd8] sm:$0xff] %v2375
      %2408 = vst [vmem:[%s532 + $0xe8] sm:$0xff] %v2376
      %2409 = vst [vmem:[%s532 + $0xf8] sm:$0xff] %v2377
      %v2410 = vadd.f32 %v2133, %v2134
      %v2411 = vadd.f32 %v2410, %v2135
      %v2412 = vadd.f32 %v2411, %v2136
      %v2413 = vadd.f32 %v2412, %v2137
      %v2414 = vadd.f32 %v2413, %v2138
      %v2415 = vadd.f32 %v2414, %v2139
      %v2416 = vadd.f32 %v2415, %v2140
      %v2417 = vadd.f32 %v2416, %v2141
      %v2418 = vadd.f32 %v2417, %v2142
      %v2419 = vadd.f32 %v2418, %v2143
      %v2420 = vadd.f32 %v2419, %v2144
      %v2421 = vadd.f32 %v2420, %v2145
      %v2422 = vadd.f32 %v2421, %v2146
      %v2423 = vadd.f32 %v2422, %v2147
      %v2424 = vadd.f32 %v2423, %v2148
      %v2425 = vrot.slane %v2424, 4
      %v2426 = vadd.f32 %v2424, %v2425
      %v2427 = vrot.slane %v2426, 2
      %v2428 = vadd.f32 %v2426, %v2427
      %v2429 = vrot.slane %v2428, 1
      %v2430 = vadd.f32 %v2428, %v2429
      %v2431 = vadd.f32 %v2362, %v2363
      %v2432 = vadd.f32 %v2431, %v2364
      %v2433 = vadd.f32 %v2432, %v2365
      %v2434 = vadd.f32 %v2433, %v2366
      %v2435 = vadd.f32 %v2434, %v2367
      %v2436 = vadd.f32 %v2435, %v2368
      %v2437 = vadd.f32 %v2436, %v2369
      %v2438 = vadd.f32 %v2437, %v2370
      %v2439 = vadd.f32 %v2438, %v2371
      %v2440 = vadd.f32 %v2439, %v2372
      %v2441 = vadd.f32 %v2440, %v2373
      %v2442 = vadd.f32 %v2441, %v2374
      %v2443 = vadd.f32 %v2442, %v2375
      %v2444 = vadd.f32 %v2443, %v2376
      %v2445 = vadd.f32 %v2444, %v2377
      %v2446 = vrot.slane %v2445, 4
      %v2447 = vadd.f32 %v2445, %v2446
      %v2448 = vrot.slane %v2447, 2
      %v2449 = vadd.f32 %v2447, %v2448
      %v2450 = vrot.slane %v2449, 1
      %v2451 = vadd.f32 %v2449, %v2450
      %v2452 = vadd.f32 %v2430, %v2451
      %2453 = vst [vmem:[%s542] sm:$0x1] %v2452
      %v2454 = vmul.f32 %v2133, %v2133
      %v2455 = vmul.f32 %v2134, %v2134
      %v2456 = vmul.f32 %v2135, %v2135
      %v2457 = vmul.f32 %v2136, %v2136
      %v2458 = vmul.f32 %v2137, %v2137
      %v2459 = vmul.f32 %v2138, %v2138
      %v2460 = vmul.f32 %v2139, %v2139
      %v2461 = vmul.f32 %v2140, %v2140
      %v2462 = vmul.f32 %v2141, %v2141
      %v2463 = vmul.f32 %v2142, %v2142
      %v2464 = vmul.f32 %v2143, %v2143
      %v2465 = vmul.f32 %v2144, %v2144
      %v2466 = vmul.f32 %v2145, %v2145
      %v2467 = vmul.f32 %v2146, %v2146
      %v2468 = vmul.f32 %v2147, %v2147
      %v2469 = vmul.f32 %v2148, %v2148
      %v2470 = vadd.f32 %v2454, %v2455
      %v2471 = vadd.f32 %v2470, %v2456
      %v2472 = vadd.f32 %v2471, %v2457
      %v2473 = vadd.f32 %v2472, %v2458
      %v2474 = vadd.f32 %v2473, %v2459
      %v2475 = vadd.f32 %v2474, %v2460
      %v2476 = vadd.f32 %v2475, %v2461
      %v2477 = vadd.f32 %v2476, %v2462
      %v2478 = vadd.f32 %v2477, %v2463
      %v2479 = vadd.f32 %v2478, %v2464
      %v2480 = vadd.f32 %v2479, %v2465
      %v2481 = vadd.f32 %v2480, %v2466
      %v2482 = vadd.f32 %v2481, %v2467
      %v2483 = vadd.f32 %v2482, %v2468
      %v2484 = vadd.f32 %v2483, %v2469
      %v2485 = vrot.slane %v2484, 4
      %v2486 = vadd.f32 %v2484, %v2485
      %v2487 = vrot.slane %v2486, 2
      %v2488 = vadd.f32 %v2486, %v2487
      %v2489 = vrot.slane %v2488, 1
      %v2490 = vadd.f32 %v2488, %v2489
      %v2491 = vmul.f32 %v2362, %v2362
      %v2492 = vmul.f32 %v2363, %v2363
      %v2493 = vmul.f32 %v2364, %v2364
      %v2494 = vmul.f32 %v2365, %v2365
      %v2495 = vmul.f32 %v2366, %v2366
      %v2496 = vmul.f32 %v2367, %v2367
      %v2497 = vmul.f32 %v2368, %v2368
      %v2498 = vmul.f32 %v2369, %v2369
      %v2499 = vmul.f32 %v2370, %v2370
      %v2500 = vmul.f32 %v2371, %v2371
      %v2501 = vmul.f32 %v2372, %v2372
      %v2502 = vmul.f32 %v2373, %v2373
      %v2503 = vmul.f32 %v2374, %v2374
      %v2504 = vmul.f32 %v2375, %v2375
      %v2505 = vmul.f32 %v2376, %v2376
      %v2506 = vmul.f32 %v2377, %v2377
      %v2507 = vadd.f32 %v2491, %v2492
      %v2508 = vadd.f32 %v2507, %v2493
      %v2509 = vadd.f32 %v2508, %v2494
      %v2510 = vadd.f32 %v2509, %v2495
      %v2511 = vadd.f32 %v2510, %v2496
      %v2512 = vadd.f32 %v2511, %v2497
      %v2513 = vadd.f32 %v2512, %v2498
      %v2514 = vadd.f32 %v2513, %v2499
      %v2515 = vadd.f32 %v2514, %v2500
      %v2516 = vadd.f32 %v2515, %v2501
      %v2517 = vadd.f32 %v2516, %v2502
      %v2518 = vadd.f32 %v2517, %v2503
      %v2519 = vadd.f32 %v2518, %v2504
      %v2520 = vadd.f32 %v2519, %v2505
      %v2521 = vadd.f32 %v2520, %v2506
      %v2522 = vrot.slane %v2521, 4
      %v2523 = vadd.f32 %v2521, %v2522
      %v2524 = vrot.slane %v2523, 2
      %v2525 = vadd.f32 %v2523, %v2524
      %v2526 = vrot.slane %v2525, 1
      %v2527 = vadd.f32 %v2525, %v2526
      %v2528 = vadd.f32 %v2490, %v2527
      %2529 = vst [vmem:[%s545] sm:$0x1] %v2528
      %p2530 = scmp.lt.s32.totalorder %s26, 1
      %s2531 = scalar_select %p2530, %s26, 1
      %s2532 = smul.addr %s2531, 32
      %s2533 = smul.addr %s2532, 4
      %s2534 = scalar_lea.vmem %s9, %s2533
      %s2535 = sadd.s32 %s26, 6
      %p2536 = scmp.lt.s32.totalorder %s2535, 7
      %s2537 = scalar_select %p2536, %s2535, 7
      %s2538 = smul.addr %s2537, 32
      %s2539 = smul.addr %s2538, 8
      %s2540 = scalar_lea.vmem %s10, %s2539
      %p2541 = scmp.lt.s32.totalorder %s26, 1
      %s2542 = scalar_select %p2541, %s26, 1
      %s2543 = scalar_lea.vmem %s11, %s2542
      %p2544 = scmp.lt.s32.totalorder %s26, 1
      %s2545 = scalar_select %p2544, %s26, 1
      %s2546 = scalar_lea.vmem %s12, %s2545
      %p2547 = scmp.lt.s32.totalorder %s26, 1
      %s2548 = scalar_select %p2547, %s26, 1
      %s2549 = scalar_lea.vmem %s13, %s2548
      %p2550 = scmp.lt.s32.totalorder %s26, 1
      %s2551 = scalar_select %p2550, %s26, 1
      %s2552 = scalar_lea.vmem %s14, %s2551
      // Predicated region
      $region57: #{gblock_forward.6} parent=55 // pred_check
        %p2553 = pneg %p248
      $region58: #{gblock_forward.6} parent=55 // pred_check_branch
        %2555 = sbr.rel (%p2553) target = $region60
      $region59: #{gblock_forward.6} parent=55 // pred_region
        _
      $region60: #{gblock_forward.6} parent=55 // pred_fallthru
        _
      // Predicated region
      $region61: #{gblock_forward.6} parent=55 // pred_check
        %p2556 = pneg %p276
      $region62: #{gblock_forward.6} parent=55 // pred_check_branch
        %2558 = sbr.rel (%p2556) target = $region64
      $region63: #{gblock_forward.6} parent=55 // pred_region
        %s2559 = sadd.s32 %s26, 6
      $region64: #{gblock_forward.6} parent=55 // pred_fallthru
        _
      // Predicated region
      $region65: #{gblock_forward.6} parent=55 // pred_check
        %p2560 = pneg %p302
      $region66: #{gblock_forward.6} parent=55 // pred_check_branch
        %2562 = sbr.rel (%p2560) target = $region68
      $region67: #{gblock_forward.6} parent=55 // pred_region
        _
      $region68: #{gblock_forward.6} parent=55 // pred_fallthru
        _
      // Predicated region
      $region69: #{gblock_forward.6} parent=55 // pred_check
        %p2563 = pneg %p328
      $region70: #{gblock_forward.6} parent=55 // pred_check_branch
        %2565 = sbr.rel (%p2563) target = $region72
      $region71: #{gblock_forward.6} parent=55 // pred_region
        _
      $region72: #{gblock_forward.6} parent=55 // pred_fallthru
        _
      // Predicated region
      $region73: #{gblock_forward.6} parent=55 // pred_check
        %p2566 = pneg %p354
      $region74: #{gblock_forward.6} parent=55 // pred_check_branch
        %2568 = sbr.rel (%p2566) target = $region76
      $region75: #{gblock_forward.6} parent=55 // pred_region
        _
      $region76: #{gblock_forward.6} parent=55 // pred_fallthru
        _
      // Predicated region
      $region77: #{gblock_forward.6} parent=55 // pred_check
        %p2569 = pneg %p380
      $region78: #{gblock_forward.6} parent=55 // pred_check_branch
        %2571 = sbr.rel (%p2569) target = $region80
      $region79: #{gblock_forward.6} parent=55 // pred_region
        _
      $region80: #{gblock_forward.6} parent=55 // pred_fallthru
        _
    $region56: #{gblock_forward.6} parent=5 // pred_fallthru
      _
    %p2572 = scmp.le.s32.totalorder 2, %s21
    // Predicated region
    $region81: #{gblock_forward.6} parent=5 // pred_check
      %p2573 = pneg %p2572
    $region82: #{gblock_forward.6} parent=5 // pred_check_branch
      %2575 = sbr.rel (%p2573) target = $region84
    $region83: #{gblock_forward.6} parent=5 // pred_region
      %s2576 = ssub.s32 %s21, 2
      // Predicated region
      $region85: #{gblock_forward.6} parent=83 // pred_check
        %p2577 = pneg %p254
      $region86: #{gblock_forward.6} parent=83 // pred_check_branch
        %2579 = sbr.rel (%p2577) target = $region88
      $region87: #{gblock_forward.6} parent=83 // pred_region
        %p2580 = scmp.lt.s32.totalorder %s27, 1
        %s2581 = scalar_select %p2580, %s27, 1
        %s2582 = smul.addr %s2581, 32
        %s2583 = smul.addr %s2582, 4
        %s2584 = scalar_lea.vmem %s9, %s2583
      $region88: #{gblock_forward.6} parent=83 // pred_fallthru
        _
      // Predicated region
      $region89: #{gblock_forward.6} parent=83 // pred_check
        %p2585 = pneg %p282
      $region90: #{gblock_forward.6} parent=83 // pred_check_branch
        %2587 = sbr.rel (%p2585) target = $region92
      $region91: #{gblock_forward.6} parent=83 // pred_region
        %s2588 = sadd.s32 %s27, 6
        %p2589 = scmp.lt.s32.totalorder %s2588, 7
        %s2590 = scalar_select %p2589, %s2588, 7
        %s2591 = smul.addr %s2590, 32
        %s2592 = smul.addr %s2591, 8
        %s2593 = scalar_lea.vmem %s10, %s2592
      $region92: #{gblock_forward.6} parent=83 // pred_fallthru
        _
      // Predicated region
      $region93: #{gblock_forward.6} parent=83 // pred_check
        %p2594 = pneg %p308
      $region94: #{gblock_forward.6} parent=83 // pred_check_branch
        %2596 = sbr.rel (%p2594) target = $region96
      $region95: #{gblock_forward.6} parent=83 // pred_region
        %p2597 = scmp.lt.s32.totalorder %s27, 1
        %s2598 = scalar_select %p2597, %s27, 1
        %s2599 = scalar_lea.vmem %s11, %s2598
      $region96: #{gblock_forward.6} parent=83 // pred_fallthru
        _
      // Predicated region
      $region97: #{gblock_forward.6} parent=83 // pred_check
        %p2600 = pneg %p334
      $region98: #{gblock_forward.6} parent=83 // pred_check_branch
        %2602 = sbr.rel (%p2600) target = $region100
      $region99: #{gblock_forward.6} parent=83 // pred_region
        %p2603 = scmp.lt.s32.totalorder %s27, 1
        %s2604 = scalar_select %p2603, %s27, 1
        %s2605 = scalar_lea.vmem %s12, %s2604
      $region100: #{gblock_forward.6} parent=83 // pred_fallthru
        _
      // Predicated region
      $region101: #{gblock_forward.6} parent=83 // pred_check
        %p2606 = pneg %p360
      $region102: #{gblock_forward.6} parent=83 // pred_check_branch
        %2608 = sbr.rel (%p2606) target = $region104
      $region103: #{gblock_forward.6} parent=83 // pred_region
        %p2609 = scmp.lt.s32.totalorder %s27, 1
        %s2610 = scalar_select %p2609, %s27, 1
        %s2611 = scalar_lea.vmem %s13, %s2610
      $region104: #{gblock_forward.6} parent=83 // pred_fallthru
        _
      // Predicated region
      $region105: #{gblock_forward.6} parent=83 // pred_check
        %p2612 = pneg %p386
      $region106: #{gblock_forward.6} parent=83 // pred_check_branch
        %2614 = sbr.rel (%p2612) target = $region108
      $region107: #{gblock_forward.6} parent=83 // pred_region
        %p2615 = scmp.lt.s32.totalorder %s27, 1
        %s2616 = scalar_select %p2615, %s27, 1
        %s2617 = scalar_lea.vmem %s14, %s2616
      $region108: #{gblock_forward.6} parent=83 // pred_fallthru
        _
    $region84: #{gblock_forward.6} parent=5 // pred_fallthru
      _
  $region6: #{gblock_forward.6} parent=0 // loop_footer
    %s25 = sadd.s32 1, %s21
  $region7: #{gblock_forward.6} parent=0 // loop_footer_branch
    %20 = sbr.rel target = $region3
  $region8: #{gblock_forward.6} parent=0 // loop_exit
    _

// kernel: gblock_forward.9
$region0: #{gblock_forward.9}
  #allocation0 [shape = 'u32[]', space=smem, size = 0x4, offset = 0x4, fixed_abs, tag = 'smem constant byte address 0x4 - core index']
  #allocation1 [shape = 'u32[144,128]{1,0:T(1,128)}', space=vmem, size = 0x12000, scoped, tag = 'internal scratch']
  %s0 = inlined_call_operand.vmem [shape: bf16[4,256,128], index: 0, kind: input, shape index: {}]
  %s1 = inlined_call_operand.vmem [shape: f32[4,1,128], index: 1, kind: input, shape index: {}]
  %s2 = inlined_call_operand.vmem [shape: f32[4,1,128], index: 2, kind: input, shape index: {}]
  %s3 = inlined_call_operand.vmem [shape: bf16[384,128], index: 3, kind: input, shape index: {}]
  %s4 = inlined_call_operand.vmem [shape: f32[1,128], index: 4, kind: input, shape index: {}]
  %s5 = inlined_call_operand.hbm [shape: f32[8,256,128], index: 5, kind: input, shape index: {}, may-alias: {5,6}]
  %s6 = inlined_call_operand.hbm [shape: f32[8,256,128], index: 6, kind: output, shape index: {}, may-alias: {5,6}]
  %s7 = sld [smem:[#allocation0]]
  $region53: #{gblock_forward.9} parent=0
    _
  %s9 = ssub.s32 1, %s7
  %s10 = scalar_select 0, %s9, %s7
  $region1: #{gblock_forward.9} parent=0
    #allocation2 [shape = 'u8[262144]{0}', space=vmem, size = 0x40000, scoped, tag = 'output window, operand 0']
    #allocation3 [shape = 's32[2]{0}', space=sflag, size = 0x8, scoped, tag = 'scoped memory for gblock_forward.9']
    %11 = vsyncpa [#allocation3], 0
    %s12 = scalar_lea.sflag [#allocation3], 1
    %13 = vsyncpa %s12, 0
    loop: start=0, step=1, limit=6
    $region2: #{gblock_forward.9} parent=1 // loop_pre_header
      _
    $region3: #{gblock_forward.9} parent=1 // loop_header
      %s15 = sphi 0, %s19
      %p16 = scmp.ge.s32.totalorder %s15, 6
      %s25 = sphi 0, %s27
      %s28 = sphi 0, %s25
      %s29 = sphi 0, %s28
      %s45 = sphi 0, %s29
      %s51 = sphi 0, %s53
      %s54 = sphi 0, %s51
      %s55 = sphi 0, %s54
      %s71 = sphi 0, %s55
      %s77 = sphi 0, %s79
      %s80 = sphi 0, %s77
      %s81 = sphi 0, %s80
      %s97 = sphi 0, %s81
      %s101 = sphi 0, %s101
      %s103 = sphi 0, %s101
      %s104 = sphi 0, %s103
      %s118 = sphi 0, %s104
      %s122 = sphi 0, %s122
      %s124 = sphi 0, %s122
      %s125 = sphi 0, %s124
      %s139 = sphi 0, %s125
      %s145 = sphi 0, %s147
      %s148 = sphi 0, %s145
      %s149 = sphi 0, %s148
      %s165 = sphi 0, %s149
    $region4: #{gblock_forward.9} parent=1 // loop_header_branch
      %18 = sbr.rel (%p16) target = $region8
    $region5: #{gblock_forward.9} parent=1 // loop_body
      %s20 = ssub.s32 %s15, 1
      %s21 = ssub.s32 %s15, 2
      %s22 = sadd.s32 %s15, 1
      %s23 = ssub.s32 %s15, %s22
      %p24 = scmp.eq.s32.totalorder %s23, 0
      %s26 = sadd.s32 %s25, 1
      %s27 = scalar_select %p24, %s25, %s26
      %p30 = pneg %p24
      %p31 = scmp.eq.s32.totalorder %s15, 3
      %p32 = por %p30, %p31
      %p33 = scmp.ne.s32.totalorder %s25, %s28
      %p34 = scmp.eq.s32.totalorder %s15, 0
      %p35 = por %p33, %p34
      %p36 = scmp.ne.s32.totalorder %s25, %s28
      %p37 = scmp.eq.s32.totalorder %s20, 3
      %p38 = por %p36, %p37
      %p39 = scmp.ne.s32.totalorder %s28, %s29
      %p40 = scmp.eq.s32.totalorder %s20, 0
      %p41 = por %p39, %p40
      %p42 = scmp.ne.s32.totalorder %s28, %s29
      %p43 = scmp.eq.s32.totalorder %s21, 3
      %p44 = por %p42, %p43
      %p46 = scmp.ne.s32.totalorder %s29, %s45
      %p47 = scmp.eq.s32.totalorder %s21, 0
      %p48 = por %p46, %p47
      %s49 = ssub.s32 %s15, %s22
      %p50 = scmp.eq.s32.totalorder %s49, 0
      %s52 = sadd.s32 %s51, 1
      %s53 = scalar_select %p50, %s51, %s52
      %p56 = pneg %p50
      %p57 = scmp.eq.s32.totalorder %s15, 3
      %p58 = por %p56, %p57
      %p59 = scmp.ne.s32.totalorder %s51, %s54
      %p60 = scmp.eq.s32.totalorder %s15, 0
      %p61 = por %p59, %p60
      %p62 = scmp.ne.s32.totalorder %s51, %s54
      %p63 = scmp.eq.s32.totalorder %s20, 3
      %p64 = por %p62, %p63
      %p65 = scmp.ne.s32.totalorder %s54, %s55
      %p66 = scmp.eq.s32.totalorder %s20, 0
      %p67 = por %p65, %p66
      %p68 = scmp.ne.s32.totalorder %s54, %s55
      %p69 = scmp.eq.s32.totalorder %s21, 3
      %p70 = por %p68, %p69
      %p72 = scmp.ne.s32.totalorder %s55, %s71
      %p73 = scmp.eq.s32.totalorder %s21, 0
      %p74 = por %p72, %p73
      %s75 = ssub.s32 %s15, %s22
      %p76 = scmp.eq.s32.totalorder %s75, 0
      %s78 = sadd.s32 %s77, 1
      %s79 = scalar_select %p76, %s77, %s78
      %p82 = pneg %p76
      %p83 = scmp.eq.s32.totalorder %s15, 3
      %p84 = por %p82, %p83
      %p85 = scmp.ne.s32.totalorder %s77, %s80
      %p86 = scmp.eq.s32.totalorder %s15, 0
      %p87 = por %p85, %p86
      %p88 = scmp.ne.s32.totalorder %s77, %s80
      %p89 = scmp.eq.s32.totalorder %s20, 3
      %p90 = por %p88, %p89
      %p91 = scmp.ne.s32.totalorder %s80, %s81
      %p92 = scmp.eq.s32.totalorder %s20, 0
      %p93 = por %p91, %p92
      %p94 = scmp.ne.s32.totalorder %s80, %s81
      %p95 = scmp.eq.s32.totalorder %s21, 3
      %p96 = por %p94, %p95
      %p98 = scmp.ne.s32.totalorder %s81, %s97
      %p99 = scmp.eq.s32.totalorder %s21, 0
      %p100 = por %p98, %p99
      %s102 = sadd.s32 %s101, 1
      %p105 = scmp.eq.s32.totalorder %s15, 3
      %p106 = scmp.ne.s32.totalorder %s101, %s103
      %p107 = scmp.eq.s32.totalorder %s15, 0
      %p108 = por %p106, %p107
      %p109 = scmp.ne.s32.totalorder %s101, %s103
      %p110 = scmp.eq.s32.totalorder %s20, 3
      %p111 = por %p109, %p110
      %p112 = scmp.ne.s32.totalorder %s103, %s104
      %p113 = scmp.eq.s32.totalorder %s20, 0
      %p114 = por %p112, %p113
      %p115 = scmp.ne.s32.totalorder %s103, %s104
      %p116 = scmp.eq.s32.totalorder %s21, 3
      %p117 = por %p115, %p116
      %p119 = scmp.ne.s32.totalorder %s104, %s118
      %p120 = scmp.eq.s32.totalorder %s21, 0
      %p121 = por %p119, %p120
      %s123 = sadd.s32 %s122, 1
      %p126 = scmp.eq.s32.totalorder %s15, 3
      %p127 = scmp.ne.s32.totalorder %s122, %s124
      %p128 = scmp.eq.s32.totalorder %s15, 0
      %p129 = por %p127, %p128
      %p130 = scmp.ne.s32.totalorder %s122, %s124
      %p131 = scmp.eq.s32.totalorder %s20, 3
      %p132 = por %p130, %p131
      %p133 = scmp.ne.s32.totalorder %s124, %s125
      %p134 = scmp.eq.s32.totalorder %s20, 0
      %p135 = por %p133, %p134
      %p136 = scmp.ne.s32.totalorder %s124, %s125
      %p137 = scmp.eq.s32.totalorder %s21, 3
      %p138 = por %p136, %p137
      %p140 = scmp.ne.s32.totalorder %s125, %s139
      %p141 = scmp.eq.s32.totalorder %s21, 0
      %p142 = por %p140, %p141
      %s143 = ssub.s32 %s15, %s22
      %p144 = scmp.eq.s32.totalorder %s143, 0
      %s146 = sadd.s32 %s145, 1
      %s147 = scalar_select %p144, %s145, %s146
      %p150 = pneg %p144
      %p151 = scmp.eq.s32.totalorder %s15, 3
      %p152 = por %p150, %p151
      %p153 = scmp.ne.s32.totalorder %s145, %s148
      %p154 = scmp.eq.s32.totalorder %s15, 0
      %p155 = por %p153, %p154
      %p156 = scmp.ne.s32.totalorder %s145, %s148
      %p157 = scmp.eq.s32.totalorder %s20, 3
      %p158 = por %p156, %p157
      %p159 = scmp.ne.s32.totalorder %s148, %s149
      %p160 = scmp.eq.s32.totalorder %s20, 0
      %p161 = por %p159, %p160
      %p162 = scmp.ne.s32.totalorder %s148, %s149
      %p163 = scmp.eq.s32.totalorder %s21, 3
      %p164 = por %p162, %p163
      %p166 = scmp.ne.s32.totalorder %s149, %s165
      %p167 = scmp.eq.s32.totalorder %s21, 0
      %p168 = por %p166, %p167
      %p169 = scmp.le.s32.totalorder 1, %s15
      %p170 = scmp.lt.s32.totalorder %s15, 5
      %p171 = pnand %p169, %p170
      %p172 = pneg %p171
      // Predicated region
      $region9: #{gblock_forward.9} parent=5 // pred_check
        _
      $region10: #{gblock_forward.9} parent=5 // pred_check_branch
        %174 = sbr.rel (%p171) target = $region12
      $region11: #{gblock_forward.9} parent=5 // pred_region
        %s175 = ssub.s32 %s15, 1
        // Predicated region
        $region13: #{gblock_forward.9} parent=11 // pred_check
          %p176 = pneg %p114
        $region14: #{gblock_forward.9} parent=11 // pred_check_branch
          %178 = sbr.rel (%p176) target = $region16
        $region15: #{gblock_forward.9} parent=11 // pred_region
          _
        $region16: #{gblock_forward.9} parent=11 // pred_fallthru
          _
        // Predicated region
        $region17: #{gblock_forward.9} parent=11 // pred_check
          %p179 = pneg %p135
        $region18: #{gblock_forward.9} parent=11 // pred_check_branch
          %181 = sbr.rel (%p179) target = $region20
        $region19: #{gblock_forward.9} parent=11 // pred_region
          _
        $region20: #{gblock_forward.9} parent=11 // pred_fallthru
          _
      $region12: #{gblock_forward.9} parent=5 // pred_fallthru
        _
      %p182 = scmp.lt.s32.totalorder %s15, 4
      // Predicated region
      $region21: #{gblock_forward.9} parent=5 // pred_check
        %p183 = pneg %p182
      $region22: #{gblock_forward.9} parent=5 // pred_check_branch
        %185 = sbr.rel (%p183) target = $region24
      $region23: #{gblock_forward.9} parent=5 // pred_region
        // Predicated region
        $region25: #{gblock_forward.9} parent=23 // pred_check
          %p186 = pneg %p35
        $region26: #{gblock_forward.9} parent=23 // pred_check_branch
          %188 = sbr.rel (%p186) target = $region28
        $region27: #{gblock_forward.9} parent=23 // pred_region
          %p189 = scmp.lt.s32.totalorder %s15, 3
          %s190 = scalar_select %p189, %s15, 3
          %s191 = smul.addr %s190, 32
          %s192 = smul.addr %s191, 4
          %s193 = scalar_lea.vmem %s0, %s192
        $region28: #{gblock_forward.9} parent=23 // pred_fallthru
          _
        // Predicated region
        $region29: #{gblock_forward.9} parent=23 // pred_check
          %p194 = pneg %p61
        $region30: #{gblock_forward.9} parent=23 // pred_check_branch
          %196 = sbr.rel (%p194) target = $region32
        $region31: #{gblock_forward.9} parent=23 // pred_region
          %p197 = scmp.lt.s32.totalorder %s15, 3
          %s198 = scalar_select %p197, %s15, 3
          %s199 = scalar_lea.vmem %s1, %s198
        $region32: #{gblock_forward.9} parent=23 // pred_fallthru
          _
        // Predicated region
        $region33: #{gblock_forward.9} parent=23 // pred_check
          %p200 = pneg %p87
        $region34: #{gblock_forward.9} parent=23 // pred_check_branch
          %202 = sbr.rel (%p200) target = $region36
        $region35: #{gblock_forward.9} parent=23 // pred_region
          %p203 = scmp.lt.s32.totalorder %s15, 3
          %s204 = scalar_select %p203, %s15, 3
          %s205 = scalar_lea.vmem %s2, %s204
        $region36: #{gblock_forward.9} parent=23 // pred_fallthru
          _
      $region24: #{gblock_forward.9} parent=5 // pred_fallthru
        _
      %p206 = scmp.le.s32.totalorder 1, %s15
      %p207 = scmp.lt.s32.totalorder %s15, 5
      %p208 = pnand %p206, %p207
      %p209 = pneg %p208
      // Predicated region
      $region37: #{gblock_forward.9} parent=5 // pred_check
        _
      $region38: #{gblock_forward.9} parent=5 // pred_check_branch
        %211 = sbr.rel (%p208) target = $region40
      $region39: #{gblock_forward.9} parent=5 // pred_region
        %s212 = ssub.s32 %s15, 1
        %p213 = scmp.lt.s32.totalorder %s20, 3
        %s214 = scalar_select %p213, %s20, 3
        %s215 = smul.addr %s214, 32
        %s216 = smul.addr %s215, 4
        %s217 = scalar_lea.vmem %s0, %s216
        %p218 = pneg %p41
        %p219 = pneg %p38
        %p220 = scmp.lt.s32.totalorder %s20, 3
        %s221 = scalar_select %p220, %s20, 3
        %s222 = scalar_lea.vmem %s1, %s221
        %p223 = pneg %p67
        %p224 = pneg %p64
        %p225 = scmp.lt.s32.totalorder %s20, 3
        %s226 = scalar_select %p225, %s20, 3
        %s227 = scalar_lea.vmem %s2, %s226
        %p228 = pneg %p93
        %p229 = pneg %p90
        %p230 = pneg %p114
        %p231 = pneg %p111
        %p232 = pneg %p135
        %p233 = pneg %p132
        %p234 = pneg %p161
        %p235 = pneg %p158
        %s236 = sand.u32 %s148, 1
        %s237 = scalar_lea.sflag [#allocation3], %s236
        %s238 = sand.u32 %s148, 1
        %s239 = smul.addr %s238, 256
        %s240 = scalar_lea.vmem [#allocation2], %s239
        %p241 = scmp.lt.s32.totalorder %s20, 3
        %s242 = scalar_select %p241, %s20, 3
        %s243 = smul.addr %s242, 32
        %s244 = smul.addr %s243, 4
        %s245 = scalar_lea.vmem %s0, %s244
        %p246 = scmp.lt.s32.totalorder %s20, 3
        %s247 = scalar_select %p246, %s20, 3
        %s248 = scalar_lea.vmem %s1, %s247
        %p249 = scmp.lt.s32.totalorder %s20, 3
        %s250 = scalar_select %p249, %s20, 3
        %s251 = scalar_lea.vmem %s2, %s250
        %v253 = vld [vmem:[%s245] sm:$0xf]
        %v254 = vld [vmem:[%s245 + $0x4] sm:$0xf]
        %v255 = vld [vmem:[%s245 + $0x8] sm:$0xf]
        %v256 = vld [vmem:[%s245 + $0xc] sm:$0xf]
        %v257 = vld [vmem:[%s245 + $0x10] sm:$0xf]
        %v258 = vld [vmem:[%s245 + $0x14] sm:$0xf]
        %v259 = vld [vmem:[%s245 + $0x18] sm:$0xf]
        %v260 = vld [vmem:[%s245 + $0x1c] sm:$0xf]
        %v261 = vld [vmem:[%s245 + $0x20] sm:$0xf]
        %v262 = vld [vmem:[%s245 + $0x24] sm:$0xf]
        %v263 = vld [vmem:[%s245 + $0x28] sm:$0xf]
        %v264 = vld [vmem:[%s245 + $0x2c] sm:$0xf]
        %v265 = vld [vmem:[%s245 + $0x30] sm:$0xf]
        %v266 = vld [vmem:[%s245 + $0x34] sm:$0xf]
        %v267 = vld [vmem:[%s245 + $0x38] sm:$0xf]
        %v268 = vld [vmem:[%s245 + $0x3c] sm:$0xf]
        %v269 = vld [vmem:[%s245 + $0x40] sm:$0xf]
        %v270 = vld [vmem:[%s245 + $0x44] sm:$0xf]
        %v271 = vld [vmem:[%s245 + $0x48] sm:$0xf]
        %v272 = vld [vmem:[%s245 + $0x4c] sm:$0xf]
        %v273 = vld [vmem:[%s245 + $0x50] sm:$0xf]
        %v274 = vld [vmem:[%s245 + $0x54] sm:$0xf]
        %v275 = vld [vmem:[%s245 + $0x58] sm:$0xf]
        %v276 = vld [vmem:[%s245 + $0x5c] sm:$0xf]
        %v277 = vld [vmem:[%s245 + $0x60] sm:$0xf]
        %v278 = vld [vmem:[%s245 + $0x64] sm:$0xf]
        %v279 = vld [vmem:[%s245 + $0x68] sm:$0xf]
        %v280 = vld [vmem:[%s245 + $0x6c] sm:$0xf]
        %v281 = vld [vmem:[%s245 + $0x70] sm:$0xf]
        %v282 = vld [vmem:[%s245 + $0x74] sm:$0xf]
        %v283 = vld [vmem:[%s245 + $0x78] sm:$0xf]
        %v284 = vld [vmem:[%s245 + $0x7c] sm:$0xf]
        %v285 = vunpack.c.l.bf16 %v253
        %v286 = vunpack.c.l.bf16 %v254
        %v287 = vunpack.c.l.bf16 %v255
        %v288 = vunpack.c.l.bf16 %v256
        %v289 = vunpack.c.l.bf16 %v257
        %v290 = vunpack.c.l.bf16 %v258
        %v291 = vunpack.c.l.bf16 %v259
        %v292 = vunpack.c.l.bf16 %v260
        %v293 = vunpack.c.l.bf16 %v261
        %v294 = vunpack.c.l.bf16 %v262
        %v295 = vunpack.c.l.bf16 %v263
        %v296 = vunpack.c.l.bf16 %v264
        %v297 = vunpack.c.l.bf16 %v265
        %v298 = vunpack.c.l.bf16 %v266
        %v299 = vunpack.c.l.bf16 %v267
        %v300 = vunpack.c.l.bf16 %v268
        %v301 = vunpack.c.l.bf16 %v269
        %v302 = vunpack.c.l.bf16 %v270
        %v303 = vunpack.c.l.bf16 %v271
        %v304 = vunpack.c.l.bf16 %v272
        %v305 = vunpack.c.l.bf16 %v273
        %v306 = vunpack.c.l.bf16 %v274
        %v307 = vunpack.c.l.bf16 %v275
        %v308 = vunpack.c.l.bf16 %v276
        %v309 = vunpack.c.l.bf16 %v277
        %v310 = vunpack.c.l.bf16 %v278
        %v311 = vunpack.c.l.bf16 %v279
        %v312 = vunpack.c.l.bf16 %v280
        %v313 = vunpack.c.l.bf16 %v281
        %v314 = vunpack.c.l.bf16 %v282
        %v315 = vunpack.c.l.bf16 %v283
        %v316 = vunpack.c.l.bf16 %v284
        %v317 = vld [vmem:[%s248] sm:$0x1]
        %v319 = vlaneseq
        %v320 = vshrl.u32 %v319, 7
        %v321 = vsub.s32 0, %v320
        %v322 = vrot.slane %v317, %v321
        %v324 = vmul.f32 %v285, %v322
        %v325 = vmul.f32 %v286, %v322
        %v326 = vmul.f32 %v287, %v322
        %v327 = vmul.f32 %v288, %v322
        %v328 = vmul.f32 %v289, %v322
        %v329 = vmul.f32 %v290, %v322
        %v330 = vmul.f32 %v291, %v322
        %v331 = vmul.f32 %v292, %v322
        %v332 = vmul.f32 %v293, %v322
        %v333 = vmul.f32 %v294, %v322
        %v334 = vmul.f32 %v295, %v322
        %v335 = vmul.f32 %v296, %v322
        %v336 = vmul.f32 %v297, %v322
        %v337 = vmul.f32 %v298, %v322
        %v338 = vmul.f32 %v299, %v322
        %v339 = vmul.f32 %v300, %v322
        %v340 = vmul.f32 %v301, %v322
        %v341 = vmul.f32 %v302, %v322
        %v342 = vmul.f32 %v303, %v322
        %v343 = vmul.f32 %v304, %v322
        %v344 = vmul.f32 %v305, %v322
        %v345 = vmul.f32 %v306, %v322
        %v346 = vmul.f32 %v307, %v322
        %v347 = vmul.f32 %v308, %v322
        %v348 = vmul.f32 %v309, %v322
        %v349 = vmul.f32 %v310, %v322
        %v350 = vmul.f32 %v311, %v322
        %v351 = vmul.f32 %v312, %v322
        %v352 = vmul.f32 %v313, %v322
        %v353 = vmul.f32 %v314, %v322
        %v354 = vmul.f32 %v315, %v322
        %v355 = vmul.f32 %v316, %v322
        %v356 = vld [vmem:[%s251] sm:$0x1]
        %v358 = vlaneseq
        %v359 = vshrl.u32 %v358, 7
        %v360 = vsub.s32 0, %v359
        %v361 = vrot.slane %v356, %v360
        %v363 = vadd.f32 %v324, %v361
        %v364 = vadd.f32 %v325, %v361
        %v365 = vadd.f32 %v326, %v361
        %v366 = vadd.f32 %v327, %v361
        %v367 = vadd.f32 %v328, %v361
        %v368 = vadd.f32 %v329, %v361
        %v369 = vadd.f32 %v330, %v361
        %v370 = vadd.f32 %v331, %v361
        %v371 = vadd.f32 %v332, %v361
        %v372 = vadd.f32 %v333, %v361
        %v373 = vadd.f32 %v334, %v361
        %v374 = vadd.f32 %v335, %v361
        %v375 = vadd.f32 %v336, %v361
        %v376 = vadd.f32 %v337, %v361
        %v377 = vadd.f32 %v338, %v361
        %v378 = vadd.f32 %v339, %v361
        %v379 = vadd.f32 %v340, %v361
        %v380 = vadd.f32 %v341, %v361
        %v381 = vadd.f32 %v342, %v361
        %v382 = vadd.f32 %v343, %v361
        %v383 = vadd.f32 %v344, %v361
        %v384 = vadd.f32 %v345, %v361
        %v385 = vadd.f32 %v346, %v361
        %v386 = vadd.f32 %v347, %v361
        %v387 = vadd.f32 %v348, %v361
        %v388 = vadd.f32 %v349, %v361
        %v389 = vadd.f32 %v350, %v361
        %v390 = vadd.f32 %v351, %v361
        %v391 = vadd.f32 %v352, %v361
        %v392 = vadd.f32 %v353, %v361
        %v393 = vadd.f32 %v354, %v361
        %v394 = vadd.f32 %v355, %v361
        %v395 = vmax.f32 %v363, 0.0
        %v396 = vmax.f32 %v364, 0.0
        %v397 = vmax.f32 %v365, 0.0
        %v398 = vmax.f32 %v366, 0.0
        %v399 = vmax.f32 %v367, 0.0
        %v400 = vmax.f32 %v368, 0.0
        %v401 = vmax.f32 %v369, 0.0
        %v402 = vmax.f32 %v370, 0.0
        %v403 = vmax.f32 %v371, 0.0
        %v404 = vmax.f32 %v372, 0.0
        %v405 = vmax.f32 %v373, 0.0
        %v406 = vmax.f32 %v374, 0.0
        %v407 = vmax.f32 %v375, 0.0
        %v408 = vmax.f32 %v376, 0.0
        %v409 = vmax.f32 %v377, 0.0
        %v410 = vmax.f32 %v378, 0.0
        %v411 = vmax.f32 %v379, 0.0
        %v412 = vmax.f32 %v380, 0.0
        %v413 = vmax.f32 %v381, 0.0
        %v414 = vmax.f32 %v382, 0.0
        %v415 = vmax.f32 %v383, 0.0
        %v416 = vmax.f32 %v384, 0.0
        %v417 = vmax.f32 %v385, 0.0
        %v418 = vmax.f32 %v386, 0.0
        %v419 = vmax.f32 %v387, 0.0
        %v420 = vmax.f32 %v388, 0.0
        %v421 = vmax.f32 %v389, 0.0
        %v422 = vmax.f32 %v390, 0.0
        %v423 = vmax.f32 %v391, 0.0
        %v424 = vmax.f32 %v392, 0.0
        %v425 = vmax.f32 %v393, 0.0
        %v426 = vmax.f32 %v394, 0.0
        %v427 = vlaneseq
        %v428 = vshrl.u32 %v427, 7
        %v429 = vadd.s32 %v428, 8
        %v430 = vadd.s32 %v428, 16
        %v431 = vadd.s32 %v428, 24
        %v432 = vadd.s32 %v428, 32
        %v433 = vadd.s32 %v428, 40
        %v434 = vadd.s32 %v428, 48
        %v435 = vadd.s32 %v428, 56
        %v436 = vadd.s32 %v428, 64
        %v437 = vadd.s32 %v428, 72
        %v438 = vadd.s32 %v428, 80
        %v439 = vadd.s32 %v428, 88
        %v440 = vadd.s32 %v428, 96
        %v441 = vadd.s32 %v428, 104
        %v442 = vadd.s32 %v428, 112
        %v443 = vadd.s32 %v428, 120
        %v444 = vadd.s32 %v428, 128
        %v445 = vadd.s32 %v428, 136
        %v446 = vadd.s32 %v428, 144
        %v447 = vadd.s32 %v428, 152
        %v448 = vadd.s32 %v428, 160
        %v449 = vadd.s32 %v428, 168
        %v450 = vadd.s32 %v428, 176
        %v451 = vadd.s32 %v428, 184
        %v452 = vadd.s32 %v428, 192
        %v453 = vadd.s32 %v428, 200
        %v454 = vadd.s32 %v428, 208
        %v455 = vadd.s32 %v428, 216
        %v456 = vadd.s32 %v428, 224
        %v457 = vadd.s32 %v428, 232
        %v458 = vadd.s32 %v428, 240
        %v459 = vadd.s32 %v428, 248
        %v460 = vpack.c.bf16 %v396, %v395
        %v461 = vpack.c.bf16 %v398, %v397
        %v462 = vpack.c.bf16 %v400, %v399
        %v463 = vpack.c.bf16 %v402, %v401
        %v464 = vpack.c.bf16 %v404, %v403
        %v465 = vpack.c.bf16 %v406, %v405
        %v466 = vpack.c.bf16 %v408, %v407
        %v467 = vpack.c.bf16 %v410, %v409
        %v468 = vpack.c.bf16 %v412, %v411
        %v469 = vpack.c.bf16 %v414, %v413
        %v470 = vpack.c.bf16 %v416, %v415
        %v471 = vpack.c.bf16 %v418, %v417
        %v472 = vpack.c.bf16 %v420, %v419
        %v473 = vpack.c.bf16 %v422, %v421
        %v474 = vpack.c.bf16 %v424, %v423
        %v475 = vpack.c.bf16 %v426, %v425
        %vm476 = vcmp.gt.s32.totalorder %v428, 0
        %vm477 = vcmp.gt.s32.totalorder %v429, 0
        %vm478 = vcmp.gt.s32.totalorder %v430, 0
        %vm479 = vcmp.gt.s32.totalorder %v431, 0
        %vm480 = vcmp.gt.s32.totalorder %v432, 0
        %vm481 = vcmp.gt.s32.totalorder %v433, 0
        %vm482 = vcmp.gt.s32.totalorder %v434, 0
        %vm483 = vcmp.gt.s32.totalorder %v435, 0
        %vm484 = vcmp.gt.s32.totalorder %v436, 0
        %vm485 = vcmp.gt.s32.totalorder %v437, 0
        %vm486 = vcmp.gt.s32.totalorder %v438, 0
        %vm487 = vcmp.gt.s32.totalorder %v439, 0
        %vm488 = vcmp.gt.s32.totalorder %v440, 0
        %vm489 = vcmp.gt.s32.totalorder %v441, 0
        %vm490 = vcmp.gt.s32.totalorder %v442, 0
        %vm491 = vcmp.gt.s32.totalorder %v443, 0
        %vm492 = vcmp.gt.s32.totalorder %v444, 0
        %vm493 = vcmp.gt.s32.totalorder %v445, 0
        %vm494 = vcmp.gt.s32.totalorder %v446, 0
        %vm495 = vcmp.gt.s32.totalorder %v447, 0
        %vm496 = vcmp.gt.s32.totalorder %v448, 0
        %vm497 = vcmp.gt.s32.totalorder %v449, 0
        %vm498 = vcmp.gt.s32.totalorder %v450, 0
        %vm499 = vcmp.gt.s32.totalorder %v451, 0
        %vm500 = vcmp.gt.s32.totalorder %v452, 0
        %vm501 = vcmp.gt.s32.totalorder %v453, 0
        %vm502 = vcmp.gt.s32.totalorder %v454, 0
        %vm503 = vcmp.gt.s32.totalorder %v455, 0
        %vm504 = vcmp.gt.s32.totalorder %v456, 0
        %vm505 = vcmp.gt.s32.totalorder %v457, 0
        %vm506 = vcmp.gt.s32.totalorder %v458, 0
        %vm507 = vcmp.gt.s32.totalorder %v459, 0
        %v508 = vrot.slane %v395, 7
        %v509 = vrot.slane %v396, 7
        %v510 = vrot.slane %v397, 7
        %v511 = vrot.slane %v398, 7
        %v512 = vrot.slane %v399, 7
        %v513 = vrot.slane %v400, 7
        %v514 = vrot.slane %v401, 7
        %v515 = vrot.slane %v402, 7
        %v516 = vrot.slane %v403, 7
        %v517 = vrot.slane %v404, 7
        %v518 = vrot.slane %v405, 7
        %v519 = vrot.slane %v406, 7
        %v520 = vrot.slane %v407, 7
        %v521 = vrot.slane %v408, 7
        %v522 = vrot.slane %v409, 7
        %v523 = vrot.slane %v410, 7
        %v524 = vrot.slane %v411, 7
        %v525 = vrot.slane %v412, 7
        %v526 = vrot.slane %v413, 7
        %v527 = vrot.slane %v414, 7
        %v528 = vrot.slane %v415, 7
        %v529 = vrot.slane %v416, 7
        %v530 = vrot.slane %v417, 7
        %v531 = vrot.slane %v418, 7
        %v532 = vrot.slane %v419, 7
        %v533 = vrot.slane %v420, 7
        %v534 = vrot.slane %v421, 7
        %v535 = vrot.slane %v422, 7
        %v536 = vrot.slane %v423, 7
        %v537 = vrot.slane %v424, 7
        %v538 = vrot.slane %v425, 7
        %v539 = vrot.slane %v426, 7
        %vm540 = vcmp.lt.s32.totalorder %v428, 1
        %v541 = vsel %vm540, %v538, %v539
        %v542 = vsel %vm540, %v537, %v538
        %v543 = vsel %vm540, %v536, %v537
        %v544 = vsel %vm540, %v535, %v536
        %v545 = vsel %vm540, %v534, %v535
        %v546 = vsel %vm540, %v533, %v534
        %v547 = vsel %vm540, %v532, %v533
        %v548 = vsel %vm540, %v531, %v532
        %v549 = vsel %vm540, %v530, %v531
        %v550 = vsel %vm540, %v529, %v530
        %v551 = vsel %vm540, %v528, %v529
        %v552 = vsel %vm540, %v527, %v528
        %v553 = vsel %vm540, %v526, %v527
        %v554 = vsel %vm540, %v525, %v526
        %v555 = vsel %vm540, %v524, %v525
        %v556 = vsel %vm540, %v523, %v524
        %v557 = vsel %vm540, %v522, %v523
        %v558 = vsel %vm540, %v521, %v522
        %v559 = vsel %vm540, %v520, %v521
        %v560 = vsel %vm540, %v519, %v520
        %v561 = vsel %vm540, %v518, %v519
        %v562 = vsel %vm540, %v517, %v518
        %v563 = vsel %vm540, %v516, %v517
        %v564 = vsel %vm540, %v515, %v516
        %v565 = vsel %vm540, %v514, %v515
        %v566 = vsel %vm540, %v513, %v514
        %v567 = vsel %vm540, %v512, %v513
        %v568 = vsel %vm540, %v511, %v512
        %v569 = vsel %vm540, %v510, %v511
        %v570 = vsel %vm540, %v509, %v510
        %v571 = vsel %vm540, %v508, %v509
        %v572 = vsel %vm540, %v539, %v508
        %v573 = vsel %vm476, 1, 0
        %v574 = vsel %vm477, 1, 0
        %v575 = vsel %vm478, 1, 0
        %v576 = vsel %vm479, 1, 0
        %v577 = vsel %vm480, 1, 0
        %v578 = vsel %vm481, 1, 0
        %v579 = vsel %vm482, 1, 0
        %v580 = vsel %vm483, 1, 0
        %v581 = vsel %vm484, 1, 0
        %v582 = vsel %vm485, 1, 0
        %v583 = vsel %vm486, 1, 0
        %v584 = vsel %vm487, 1, 0
        %v585 = vsel %vm488, 1, 0
        %v586 = vsel %vm489, 1, 0
        %v587 = vsel %vm490, 1, 0
        %v588 = vsel %vm491, 1, 0
        %v589 = vsel %vm492, 1, 0
        %v590 = vsel %vm493, 1, 0
        %v591 = vsel %vm494, 1, 0
        %v592 = vsel %vm495, 1, 0
        %v593 = vsel %vm496, 1, 0
        %v594 = vsel %vm497, 1, 0
        %v595 = vsel %vm498, 1, 0
        %v596 = vsel %vm499, 1, 0
        %v597 = vsel %vm500, 1, 0
        %v598 = vsel %vm501, 1, 0
        %v599 = vsel %vm502, 1, 0
        %v600 = vsel %vm503, 1, 0
        %v601 = vsel %vm504, 1, 0
        %v602 = vsel %vm505, 1, 0
        %v603 = vsel %vm506, 1, 0
        %v604 = vsel %vm507, 1, 0
        %vm605 = vcmp.eq.s32.totalorder %v573, 1
        %vm606 = vcmp.eq.s32.totalorder %v574, 1
        %vm607 = vcmp.eq.s32.totalorder %v575, 1
        %vm608 = vcmp.eq.s32.totalorder %v576, 1
        %vm609 = vcmp.eq.s32.totalorder %v577, 1
        %vm610 = vcmp.eq.s32.totalorder %v578, 1
        %vm611 = vcmp.eq.s32.totalorder %v579, 1
        %vm612 = vcmp.eq.s32.totalorder %v580, 1
        %vm613 = vcmp.eq.s32.totalorder %v581, 1
        %vm614 = vcmp.eq.s32.totalorder %v582, 1
        %vm615 = vcmp.eq.s32.totalorder %v583, 1
        %vm616 = vcmp.eq.s32.totalorder %v584, 1
        %vm617 = vcmp.eq.s32.totalorder %v585, 1
        %vm618 = vcmp.eq.s32.totalorder %v586, 1
        %vm619 = vcmp.eq.s32.totalorder %v587, 1
        %vm620 = vcmp.eq.s32.totalorder %v588, 1
        %vm621 = vcmp.eq.s32.totalorder %v589, 1
        %vm622 = vcmp.eq.s32.totalorder %v590, 1
        %vm623 = vcmp.eq.s32.totalorder %v591, 1
        %vm624 = vcmp.eq.s32.totalorder %v592, 1
        %vm625 = vcmp.eq.s32.totalorder %v593, 1
        %vm626 = vcmp.eq.s32.totalorder %v594, 1
        %vm627 = vcmp.eq.s32.totalorder %v595, 1
        %vm628 = vcmp.eq.s32.totalorder %v596, 1
        %vm629 = vcmp.eq.s32.totalorder %v597, 1
        %vm630 = vcmp.eq.s32.totalorder %v598, 1
        %vm631 = vcmp.eq.s32.totalorder %v599, 1
        %vm632 = vcmp.eq.s32.totalorder %v600, 1
        %vm633 = vcmp.eq.s32.totalorder %v601, 1
        %vm634 = vcmp.eq.s32.totalorder %v602, 1
        %vm635 = vcmp.eq.s32.totalorder %v603, 1
        %vm636 = vcmp.eq.s32.totalorder %v604, 1
        %v637 = vsel %vm605, %v572, 0.0
        %v638 = vsel %vm606, %v571, 0.0
        %v639 = vsel %vm607, %v570, 0.0
        %v640 = vsel %vm608, %v569, 0.0
        %v641 = vsel %vm609, %v568, 0.0
        %v642 = vsel %vm610, %v567, 0.0
        %v643 = vsel %vm611, %v566, 0.0
        %v644 = vsel %vm612, %v565, 0.0
        %v645 = vsel %vm613, %v564, 0.0
        %v646 = vsel %vm614, %v563, 0.0
        %v647 = vsel %vm615, %v562, 0.0
        %v648 = vsel %vm616, %v561, 0.0
        %v649 = vsel %vm617, %v560, 0.0
        %v650 = vsel %vm618, %v559, 0.0
        %v651 = vsel %vm619, %v558, 0.0
        %v652 = vsel %vm620, %v557, 0.0
        %v653 = vsel %vm621, %v556, 0.0
        %v654 = vsel %vm622, %v555, 0.0
        %v655 = vsel %vm623, %v554, 0.0
        %v656 = vsel %vm624, %v553, 0.0
        %v657 = vsel %vm625, %v552, 0.0
        %v658 = vsel %vm626, %v551, 0.0
        %v659 = vsel %vm627, %v550, 0.0
        %v660 = vsel %vm628, %v549, 0.0
        %v661 = vsel %vm629, %v548, 0.0
        %v662 = vsel %vm630, %v547, 0.0
        %v663 = vsel %vm631, %v546, 0.0
        %v664 = vsel %vm632, %v545, 0.0
        %v665 = vsel %vm633, %v544, 0.0
        %v666 = vsel %vm634, %v543, 0.0
        %v667 = vsel %vm635, %v542, 0.0
        %v668 = vsel %vm636, %v541, 0.0
        %v669 = vpack.c.bf16 %v638, %v637
        %v670 = vpack.c.bf16 %v640, %v639
        %v671 = vpack.c.bf16 %v642, %v641
        %v672 = vpack.c.bf16 %v644, %v643
        %v673 = vpack.c.bf16 %v646, %v645
        %v674 = vpack.c.bf16 %v648, %v647
        %v675 = vpack.c.bf16 %v650, %v649
        %v676 = vpack.c.bf16 %v652, %v651
        %v677 = vpack.c.bf16 %v654, %v653
        %v678 = vpack.c.bf16 %v656, %v655
        %v679 = vpack.c.bf16 %v658, %v657
        %v680 = vpack.c.bf16 %v660, %v659
        %v681 = vpack.c.bf16 %v662, %v661
        %v682 = vpack.c.bf16 %v664, %v663
        %v683 = vpack.c.bf16 %v666, %v665
        %v684 = vpack.c.bf16 %v668, %v667
        %vm685 = vcmp.lt.s32.totalorder %v428, 255
        %vm686 = vcmp.lt.s32.totalorder %v429, 255
        %vm687 = vcmp.lt.s32.totalorder %v430, 255
        %vm688 = vcmp.lt.s32.totalorder %v431, 255
        %vm689 = vcmp.lt.s32.totalorder %v432, 255
        %vm690 = vcmp.lt.s32.totalorder %v433, 255
        %vm691 = vcmp.lt.s32.totalorder %v434, 255
        %vm692 = vcmp.lt.s32.totalorder %v435, 255
        %vm693 = vcmp.lt.s32.totalorder %v436, 255
        %vm694 = vcmp.lt.s32.totalorder %v437, 255
        %vm695 = vcmp.lt.s32.totalorder %v438, 255
        %vm696 = vcmp.lt.s32.totalorder %v439, 255
        %vm697 = vcmp.lt.s32.totalorder %v440, 255
        %vm698 = vcmp.lt.s32.totalorder %v441, 255
        %vm699 = vcmp.lt.s32.totalorder %v442, 255
        %vm700 = vcmp.lt.s32.totalorder %v443, 255
        %vm701 = vcmp.lt.s32.totalorder %v444, 255
        %vm702 = vcmp.lt.s32.totalorder %v445, 255
        %vm703 = vcmp.lt.s32.totalorder %v446, 255
        %vm704 = vcmp.lt.s32.totalorder %v447, 255
        %vm705 = vcmp.lt.s32.totalorder %v448, 255
        %vm706 = vcmp.lt.s32.totalorder %v449, 255
        %vm707 = vcmp.lt.s32.totalorder %v450, 255
        %vm708 = vcmp.lt.s32.totalorder %v451, 255
        %vm709 = vcmp.lt.s32.totalorder %v452, 255
        %vm710 = vcmp.lt.s32.totalorder %v453, 255
        %vm711 = vcmp.lt.s32.totalorder %v454, 255
        %vm712 = vcmp.lt.s32.totalorder %v455, 255
        %vm713 = vcmp.lt.s32.totalorder %v456, 255
        %vm714 = vcmp.lt.s32.totalorder %v457, 255
        %vm715 = vcmp.lt.s32.totalorder %v458, 255
        %vm716 = vcmp.lt.s32.totalorder %v459, 255
        %v717 = vrot.slane %v395, 1
        %v718 = vrot.slane %v396, 1
        %v719 = vrot.slane %v397, 1
        %v720 = vrot.slane %v398, 1
        %v721 = vrot.slane %v399, 1
        %v722 = vrot.slane %v400, 1
        %v723 = vrot.slane %v401, 1
        %v724 = vrot.slane %v402, 1
        %v725 = vrot.slane %v403, 1
        %v726 = vrot.slane %v404, 1
        %v727 = vrot.slane %v405, 1
        %v728 = vrot.slane %v406, 1
        %v729 = vrot.slane %v407, 1
        %v730 = vrot.slane %v408, 1
        %v731 = vrot.slane %v409, 1
        %v732 = vrot.slane %v410, 1
        %v733 = vrot.slane %v411, 1
        %v734 = vrot.slane %v412, 1
        %v735 = vrot.slane %v413, 1
        %v736 = vrot.slane %v414, 1
        %v737 = vrot.slane %v415, 1
        %v738 = vrot.slane %v416, 1
        %v739 = vrot.slane %v417, 1
        %v740 = vrot.slane %v418, 1
        %v741 = vrot.slane %v419, 1
        %v742 = vrot.slane %v420, 1
        %v743 = vrot.slane %v421, 1
        %v744 = vrot.slane %v422, 1
        %v745 = vrot.slane %v423, 1
        %v746 = vrot.slane %v424, 1
        %v747 = vrot.slane %v425, 1
        %v748 = vrot.slane %v426, 1
        %vm749 = vcmp.lt.s32.totalorder %v428, 7
        %v750 = vsel %vm749, %v747, %v748
        %v751 = vsel %vm749, %v746, %v747
        %v752 = vsel %vm749, %v745, %v746
        %v753 = vsel %vm749, %v744, %v745
        %v754 = vsel %vm749, %v743, %v744
        %v755 = vsel %vm749, %v742, %v743
        %v756 = vsel %vm749, %v741, %v742
        %v757 = vsel %vm749, %v740, %v741
        %v758 = vsel %vm749, %v739, %v740
        %v759 = vsel %vm749, %v738, %v739
        %v760 = vsel %vm749, %v737, %v738
        %v761 = vsel %vm749, %v736, %v737
        %v762 = vsel %vm749, %v735, %v736
        %v763 = vsel %vm749, %v734, %v735
        %v764 = vsel %vm749, %v733, %v734
        %v765 = vsel %vm749, %v732, %v733
        %v766 = vsel %vm749, %v731, %v732
        %v767 = vsel %vm749, %v730, %v731
        %v768 = vsel %vm749, %v729, %v730
        %v769 = vsel %vm749, %v728, %v729
        %v770 = vsel %vm749, %v727, %v728
        %v771 = vsel %vm749, %v726, %v727
        %v772 = vsel %vm749, %v725, %v726
        %v773 = vsel %vm749, %v724, %v725
        %v774 = vsel %vm749, %v723, %v724
        %v775 = vsel %vm749, %v722, %v723
        %v776 = vsel %vm749, %v721, %v722
        %v777 = vsel %vm749, %v720, %v721
        %v778 = vsel %vm749, %v719, %v720
        %v779 = vsel %vm749, %v718, %v719
        %v780 = vsel %vm749, %v717, %v718
        %v781 = vsel %vm749, %v748, %v717
        %v782 = vsel %vm685, 1, 0
        %v783 = vsel %vm686, 1, 0
        %v784 = vsel %vm687, 1, 0
        %v785 = vsel %vm688, 1, 0
        %v786 = vsel %vm689, 1, 0
        %v787 = vsel %vm690, 1, 0
        %v788 = vsel %vm691, 1, 0
        %v789 = vsel %vm692, 1, 0
        %v790 = vsel %vm693, 1, 0
        %v791 = vsel %vm694, 1, 0
        %v792 = vsel %vm695, 1, 0
        %v793 = vsel %vm696, 1, 0
        %v794 = vsel %vm697, 1, 0
        %v795 = vsel %vm698, 1, 0
        %v796 = vsel %vm699, 1, 0
        %v797 = vsel %vm700, 1, 0
        %v798 = vsel %vm701, 1, 0
        %v799 = vsel %vm702, 1, 0
        %v800 = vsel %vm703, 1, 0
        %v801 = vsel %vm704, 1, 0
        %v802 = vsel %vm705, 1, 0
        %v803 = vsel %vm706, 1, 0
        %v804 = vsel %vm707, 1, 0
        %v805 = vsel %vm708, 1, 0
        %v806 = vsel %vm709, 1, 0
        %v807 = vsel %vm710, 1, 0
        %v808 = vsel %vm711, 1, 0
        %v809 = vsel %vm712, 1, 0
        %v810 = vsel %vm713, 1, 0
        %v811 = vsel %vm714, 1, 0
        %v812 = vsel %vm715, 1, 0
        %v813 = vsel %vm716, 1, 0
        %vm814 = vcmp.eq.s32.totalorder %v782, 1
        %vm815 = vcmp.eq.s32.totalorder %v783, 1
        %vm816 = vcmp.eq.s32.totalorder %v784, 1
        %vm817 = vcmp.eq.s32.totalorder %v785, 1
        %vm818 = vcmp.eq.s32.totalorder %v786, 1
        %vm819 = vcmp.eq.s32.totalorder %v787, 1
        %vm820 = vcmp.eq.s32.totalorder %v788, 1
        %vm821 = vcmp.eq.s32.totalorder %v789, 1
        %vm822 = vcmp.eq.s32.totalorder %v790, 1
        %vm823 = vcmp.eq.s32.totalorder %v791, 1
        %vm824 = vcmp.eq.s32.totalorder %v792, 1
        %vm825 = vcmp.eq.s32.totalorder %v793, 1
        %vm826 = vcmp.eq.s32.totalorder %v794, 1
        %vm827 = vcmp.eq.s32.totalorder %v795, 1
        %vm828 = vcmp.eq.s32.totalorder %v796, 1
        %vm829 = vcmp.eq.s32.totalorder %v797, 1
        %vm830 = vcmp.eq.s32.totalorder %v798, 1
        %vm831 = vcmp.eq.s32.totalorder %v799, 1
        %vm832 = vcmp.eq.s32.totalorder %v800, 1
        %vm833 = vcmp.eq.s32.totalorder %v801, 1
        %vm834 = vcmp.eq.s32.totalorder %v802, 1
        %vm835 = vcmp.eq.s32.totalorder %v803, 1
        %vm836 = vcmp.eq.s32.totalorder %v804, 1
        %vm837 = vcmp.eq.s32.totalorder %v805, 1
        %vm838 = vcmp.eq.s32.totalorder %v806, 1
        %vm839 = vcmp.eq.s32.totalorder %v807, 1
        %vm840 = vcmp.eq.s32.totalorder %v808, 1
        %vm841 = vcmp.eq.s32.totalorder %v809, 1
        %vm842 = vcmp.eq.s32.totalorder %v810, 1
        %vm843 = vcmp.eq.s32.totalorder %v811, 1
        %vm844 = vcmp.eq.s32.totalorder %v812, 1
        %vm845 = vcmp.eq.s32.totalorder %v813, 1
        %v846 = vsel %vm814, %v780, 0.0
        %v847 = vsel %vm815, %v779, 0.0
        %v848 = vsel %vm816, %v778, 0.0
        %v849 = vsel %vm817, %v777, 0.0
        %v850 = vsel %vm818, %v776, 0.0
        %v851 = vsel %vm819, %v775, 0.0
        %v852 = vsel %vm820, %v774, 0.0
        %v853 = vsel %vm821, %v773, 0.0
        %v854 = vsel %vm822, %v772, 0.0
        %v855 = vsel %vm823, %v771, 0.0
        %v856 = vsel %vm824, %v770, 0.0
        %v857 = vsel %vm825, %v769, 0.0
        %v858 = vsel %vm826, %v768, 0.0
        %v859 = vsel %vm827, %v767, 0.0
        %v860 = vsel %vm828, %v766, 0.0
        %v861 = vsel %vm829, %v765, 0.0
        %v862 = vsel %vm830, %v764, 0.0
        %v863 = vsel %vm831, %v763, 0.0
        %v864 = vsel %vm832, %v762, 0.0
        %v865 = vsel %vm833, %v761, 0.0
        %v866 = vsel %vm834, %v760, 0.0
        %v867 = vsel %vm835, %v759, 0.0
        %v868 = vsel %vm836, %v758, 0.0
        %v869 = vsel %vm837, %v757, 0.0
        %v870 = vsel %vm838, %v756, 0.0
        %v871 = vsel %vm839, %v755, 0.0
        %v872 = vsel %vm840, %v754, 0.0
        %v873 = vsel %vm841, %v753, 0.0
        %v874 = vsel %vm842, %v752, 0.0
        %v875 = vsel %vm843, %v751, 0.0
        %v876 = vsel %vm844, %v750, 0.0
        %v877 = vsel %vm845, %v781, 0.0
        %v878 = vpack.c.bf16 %v847, %v846
        %v879 = vpack.c.bf16 %v849, %v848
        %v880 = vpack.c.bf16 %v851, %v850
        %v881 = vpack.c.bf16 %v853, %v852
        %v882 = vpack.c.bf16 %v855, %v854
        %v883 = vpack.c.bf16 %v857, %v856
        %v884 = vpack.c.bf16 %v859, %v858
        %v885 = vpack.c.bf16 %v861, %v860
        %v886 = vpack.c.bf16 %v863, %v862
        %v887 = vpack.c.bf16 %v865, %v864
        %v888 = vpack.c.bf16 %v867, %v866
        %v889 = vpack.c.bf16 %v869, %v868
        %v890 = vpack.c.bf16 %v871, %v870
        %v891 = vpack.c.bf16 %v873, %v872
        %v892 = vpack.c.bf16 %v875, %v874
        %v893 = vpack.c.bf16 %v877, %v876
        %v894 = vld [vmem:[%s3] sm:$0xf]
        %v895 = vld [vmem:[%s3 + $0x4] sm:$0xf]
        %v896 = vld [vmem:[%s3 + $0x8] sm:$0xf]
        %v897 = vld [vmem:[%s3 + $0xc] sm:$0xf]
        %v898 = vld [vmem:[%s3 + $0x10] sm:$0xf]
        %v899 = vld [vmem:[%s3 + $0x14] sm:$0xf]
        %v900 = vld [vmem:[%s3 + $0x18] sm:$0xf]
        %v901 = vld [vmem:[%s3 + $0x1c] sm:$0xf]
        %v902 = vld [vmem:[%s3 + $0x20] sm:$0xf]
        %v903 = vld [vmem:[%s3 + $0x24] sm:$0xf]
        %v904 = vld [vmem:[%s3 + $0x28] sm:$0xf]
        %v905 = vld [vmem:[%s3 + $0x2c] sm:$0xf]
        %v906 = vld [vmem:[%s3 + $0x30] sm:$0xf]
        %v907 = vld [vmem:[%s3 + $0x34] sm:$0xf]
        %v908 = vld [vmem:[%s3 + $0x38] sm:$0xf]
        %v909 = vld [vmem:[%s3 + $0x3c] sm:$0xf]
        %v910 = vld [vmem:[%s3 + $0x40] sm:$0xf]
        %v911 = vld [vmem:[%s3 + $0x44] sm:$0xf]
        %v912 = vld [vmem:[%s3 + $0x48] sm:$0xf]
        %v913 = vld [vmem:[%s3 + $0x4c] sm:$0xf]
        %v914 = vld [vmem:[%s3 + $0x50] sm:$0xf]
        %v915 = vld [vmem:[%s3 + $0x54] sm:$0xf]
        %v916 = vld [vmem:[%s3 + $0x58] sm:$0xf]
        %v917 = vld [vmem:[%s3 + $0x5c] sm:$0xf]
        %v918 = vld [vmem:[%s3 + $0x60] sm:$0xf]
        %v919 = vld [vmem:[%s3 + $0x64] sm:$0xf]
        %v920 = vld [vmem:[%s3 + $0x68] sm:$0xf]
        %v921 = vld [vmem:[%s3 + $0x6c] sm:$0xf]
        %v922 = vld [vmem:[%s3 + $0x70] sm:$0xf]
        %v923 = vld [vmem:[%s3 + $0x74] sm:$0xf]
        %v924 = vld [vmem:[%s3 + $0x78] sm:$0xf]
        %v925 = vld [vmem:[%s3 + $0x7c] sm:$0xf]
        %v926 = vld [vmem:[%s3 + $0x80] sm:$0xf]
        %v927 = vld [vmem:[%s3 + $0x84] sm:$0xf]
        %v928 = vld [vmem:[%s3 + $0x88] sm:$0xf]
        %v929 = vld [vmem:[%s3 + $0x8c] sm:$0xf]
        %v930 = vld [vmem:[%s3 + $0x90] sm:$0xf]
        %v931 = vld [vmem:[%s3 + $0x94] sm:$0xf]
        %v932 = vld [vmem:[%s3 + $0x98] sm:$0xf]
        %v933 = vld [vmem:[%s3 + $0x9c] sm:$0xf]
        %v934 = vld [vmem:[%s3 + $0xa0] sm:$0xf]
        %v935 = vld [vmem:[%s3 + $0xa4] sm:$0xf]
        %v936 = vld [vmem:[%s3 + $0xa8] sm:$0xf]
        %v937 = vld [vmem:[%s3 + $0xac] sm:$0xf]
        %v938 = vld [vmem:[%s3 + $0xb0] sm:$0xf]
        %v939 = vld [vmem:[%s3 + $0xb4] sm:$0xf]
        %v940 = vld [vmem:[%s3 + $0xb8] sm:$0xf]
        %v941 = vld [vmem:[%s3 + $0xbc] sm:$0xf]
        %v942 = vld [vmem:[%s4] sm:$0x1]
        %v944 = vlaneseq
        %v945 = vshrl.u32 %v944, 7
        %v946 = vsub.s32 0, %v945
        %v947 = vrot.slane %v942, %v946
        %v997 = vunpack.c.l.b16 %v894
        %v998 = vunpack.c.l.b16 %v895
        %v999 = vunpack.c.l.b16 %v896
        %v1000 = vunpack.c.l.b16 %v897
        %v1001 = vunpack.c.l.b16 %v898
        %v1002 = vunpack.c.l.b16 %v899
        %v1003 = vunpack.c.l.b16 %v900
        %v1004 = vunpack.c.l.b16 %v901
        %v1005 = vunpack.c.l.b16 %v902
        %v1006 = vunpack.c.l.b16 %v903
        %v1007 = vunpack.c.l.b16 %v904
        %v1008 = vunpack.c.l.b16 %v905
        %v1009 = vunpack.c.l.b16 %v906
        %v1010 = vunpack.c.l.b16 %v907
        %v1011 = vunpack.c.l.b16 %v908
        %v1012 = vunpack.c.l.b16 %v909
        %v1013 = vunpack.c.l.b16 %v910
        %v1014 = vunpack.c.l.b16 %v911
        %v1015 = vunpack.c.l.b16 %v912
        %v1016 = vunpack.c.l.b16 %v913
        %v1017 = vunpack.c.l.b16 %v914
        %v1018 = vunpack.c.l.b16 %v915
        %v1019 = vunpack.c.l.b16 %v916
        %v1020 = vunpack.c.l.b16 %v917
        %v1021 = vunpack.c.l.b16 %v918
        %v1022 = vunpack.c.l.b16 %v919
        %v1023 = vunpack.c.l.b16 %v920
        %v1024 = vunpack.c.l.b16 %v921
        %v1025 = vunpack.c.l.b16 %v922
        %v1026 = vunpack.c.l.b16 %v923
        %v1027 = vunpack.c.l.b16 %v924
        %v1028 = vunpack.c.l.b16 %v925
        %v1029 = vunpack.c.l.b16 %v926
        %v1030 = vunpack.c.l.b16 %v927
        %v1031 = vunpack.c.l.b16 %v928
        %v1032 = vunpack.c.l.b16 %v929
        %v1033 = vunpack.c.l.b16 %v930
        %v1034 = vunpack.c.l.b16 %v931
        %v1035 = vunpack.c.l.b16 %v932
        %v1036 = vunpack.c.l.b16 %v933
        %v1037 = vunpack.c.l.b16 %v934
        %v1038 = vunpack.c.l.b16 %v935
        %v1039 = vunpack.c.l.b16 %v936
        %v1040 = vunpack.c.l.b16 %v937
        %v1041 = vunpack.c.l.b16 %v938
        %v1042 = vunpack.c.l.b16 %v939
        %v1043 = vunpack.c.l.b16 %v940
        %v1044 = vunpack.c.l.b16 %v941
        %v1045 = vpack.c.b16 %v998, %v997
        %v1046 = vpack.c.b16 %v1000, %v999
        %v1047 = vpack.c.b16 %v1002, %v1001
        %v1048 = vpack.c.b16 %v1004, %v1003
        %v1049 = vpack.c.b16 %v1006, %v1005
        %v1050 = vpack.c.b16 %v1008, %v1007
        %v1051 = vpack.c.b16 %v1010, %v1009
        %v1052 = vpack.c.b16 %v1012, %v1011
        %v1053 = vpack.c.b16 %v1014, %v1013
        %v1054 = vpack.c.b16 %v1016, %v1015
        %v1055 = vpack.c.b16 %v1018, %v1017
        %v1056 = vpack.c.b16 %v1020, %v1019
        %v1057 = vpack.c.b16 %v1022, %v1021
        %v1058 = vpack.c.b16 %v1024, %v1023
        %v1059 = vpack.c.b16 %v1026, %v1025
        %v1060 = vpack.c.b16 %v1028, %v1027
        %v1061 = vpack.c.b16 %v1030, %v1029
        %v1062 = vpack.c.b16 %v1032, %v1031
        %v1063 = vpack.c.b16 %v1034, %v1033
        %v1064 = vpack.c.b16 %v1036, %v1035
        %v1065 = vpack.c.b16 %v1038, %v1037
        %v1066 = vpack.c.b16 %v1040, %v1039
        %v1067 = vpack.c.b16 %v1042, %v1041
        %v1068 = vpack.c.b16 %v1044, %v1043
        %1093 = vmatprep.subr.bf16.mxu0 0
        %1094 = vmatpush1.bf16.msra.mxu0 %v1045
        %1095 = vmatprep.subr.bf16.mxu0 0
        %1096 = vmatpush1.bf16.msra.mxu0 %v1046
        %1097 = vmatprep.subr.bf16.mxu0 0
        %1098 = vmatpush1.bf16.msra.mxu0 %v1047
        %1099 = vmatprep.subr.bf16.mxu0 0
        %1100 = vmatpush1.bf16.msra.mxu0 %v1048
        %1101 = vmatprep.subr.bf16.mxu0 0
        %1102 = vmatpush1.bf16.msra.mxu0 %v1049
        %1103 = vmatprep.subr.bf16.mxu0 0
        %1104 = vmatpush1.bf16.msra.mxu0 %v1050
        %1105 = vmatprep.subr.bf16.mxu0 0
        %1106 = vmatpush1.bf16.msra.mxu0 %v1051
        %1107 = vmatprep.subr.bf16.mxu0 0
        %1108 = vmatpush1.bf16.msra.mxu0 %v1052
        %1109 = vmatprep.subr.bf16.mxu0 0
        %1110 = vmatpush1.bf16.msra.mxu0 %v1053
        %1111 = vmatprep.subr.bf16.mxu0 0
        %1112 = vmatpush1.bf16.msra.mxu0 %v1054
        %1113 = vmatprep.subr.bf16.mxu0 0
        %1114 = vmatpush1.bf16.msra.mxu0 %v1055
        %1115 = vmatprep.subr.bf16.mxu0 0
        %1116 = vmatpush1.bf16.msra.mxu0 %v1056
        %1117 = vmatprep.subr.bf16.mxu0 0
        %1118 = vmatpush1.bf16.msra.mxu0 %v1057
        %1119 = vmatprep.subr.bf16.mxu0 0
        %1120 = vmatpush1.bf16.msra.mxu0 %v1058
        %1121 = vmatprep.subr.bf16.mxu0 0
        %1122 = vmatpush1.bf16.msra.mxu0 %v1059
        %1123 = vmatprep.subr.bf16.mxu0 0
        %1124 = vmatpush1.bf16.msra.mxu0 %v1060
        %1125 = vmatprep.mubr.bf16.mxu0 %v460
        %1126 = vmatmul.mubr.bf16.gmra.mrb[0].mxu0 %v669
        %v1127 = vpop.f32.mrb[0].mxu0
        %v1128 = vadd.f32 %v947, %v1127
        %v1129 = vpop.f32.mrb[0].mxu0
        %v1130 = vpop.f32.mrb[0].mxu0
        %v1131 = vadd.f32 %v947, %v1130
        %v1132 = vpop.f32.mrb[0].mxu0
        %1133 = vmatprep.mubr.bf16.mxu0 %v461
        %1134 = vmatmul.mubr.bf16.gmra.mrb[0].mxu0 %v670
        %v1135 = vpop.f32.mrb[0].mxu0
        %v1136 = vadd.f32 %v947, %v1135
        %v1137 = vpop.f32.mrb[0].mxu0
        %v1138 = vpop.f32.mrb[0].mxu0
        %v1139 = vadd.f32 %v947, %v1138
        %v1140 = vpop.f32.mrb[0].mxu0
        %1141 = vmatprep.mubr.bf16.mxu0 %v462
        %1142 = vmatmul.mubr.bf16.gmra.mrb[0].mxu0 %v671
        %v1143 = vpop.f32.mrb[0].mxu0
        %v1144 = vadd.f32 %v947, %v1143
        %v1145 = vpop.f32.mrb[0].mxu0
        %v1146 = vpop.f32.mrb[0].mxu0
        %v1147 = vadd.f32 %v947, %v1146
        %v1148 = vpop.f32.mrb[0].mxu0
        %1149 = vmatprep.mubr.bf16.mxu0 %v463
        %1150 = vmatmul.mubr.bf16.gmra.mrb[0].mxu0 %v672
        %v1151 = vpop.f32.mrb[0].mxu0
        %v1152 = vadd.f32 %v947, %v1151
        %v1153 = vpop.f32.mrb[0].mxu0
        %v1154 = vpop.f32.mrb[0].mxu0
        %v1155 = vadd.f32 %v947, %v1154
        %v1156 = vpop.f32.mrb[0].mxu0
        %1157 = vmatprep.mubr.bf16.mxu0 %v464
        %1158 = vmatmul.mubr.bf16.gmra.mrb[0].mxu0 %v673
        %v1159 = vpop.f32.mrb[0].mxu0
        %v1160 = vadd.f32 %v947, %v1159
        %v1161 = vpop.f32.mrb[0].mxu0
        %v1162 = vpop.f32.mrb[0].mxu0
        %v1163 = vadd.f32 %v947, %v1162
        %v1164 = vpop.f32.mrb[0].mxu0
        %1165 = vmatprep.mubr.bf16.mxu0 %v465
        %1166 = vmatmul.mubr.bf16.gmra.mrb[0].mxu0 %v674
        %v1167 = vpop.f32.mrb[0].mxu0
        %v1168 = vadd.f32 %v947, %v1167
        %v1169 = vpop.f32.mrb[0].mxu0
        %v1170 = vpop.f32.mrb[0].mxu0
        %v1171 = vadd.f32 %v947, %v1170
        %v1172 = vpop.f32.mrb[0].mxu0
        %1173 = vmatprep.mubr.bf16.mxu0 %v466
        %1174 = vmatmul.mubr.bf16.gmra.mrb[0].mxu0 %v675
        %v1175 = vpop.f32.mrb[0].mxu0
        %v1176 = vadd.f32 %v947, %v1175
        %v1177 = vpop.f32.mrb[0].mxu0
        %v1178 = vpop.f32.mrb[0].mxu0
        %v1179 = vadd.f32 %v947, %v1178
        %v1180 = vpop.f32.mrb[0].mxu0
        %1181 = vmatprep.mubr.bf16.mxu0 %v467
        %1182 = vmatmul.mubr.bf16.gmra.mrb[0].mxu0 %v676
        %v1183 = vpop.f32.mrb[0].mxu0
        %v1184 = vadd.f32 %v947, %v1183
        %v1185 = vpop.f32.mrb[0].mxu0
        %v1186 = vpop.f32.mrb[0].mxu0
        %v1187 = vadd.f32 %v947, %v1186
        %v1188 = vpop.f32.mrb[0].mxu0
        %1189 = vmatprep.mubr.bf16.mxu0 %v468
        %1190 = vmatmul.mubr.bf16.gmra.mrb[0].mxu0 %v677
        %v1191 = vpop.f32.mrb[0].mxu0
        %v1192 = vadd.f32 %v947, %v1191
        %v1193 = vpop.f32.mrb[0].mxu0
        %v1194 = vpop.f32.mrb[0].mxu0
        %v1195 = vadd.f32 %v947, %v1194
        %v1196 = vpop.f32.mrb[0].mxu0
        %1197 = vmatprep.mubr.bf16.mxu0 %v469
        %1198 = vmatmul.mubr.bf16.gmra.mrb[0].mxu0 %v678
        %v1199 = vpop.f32.mrb[0].mxu0
        %v1200 = vadd.f32 %v947, %v1199
        %v1201 = vpop.f32.mrb[0].mxu0
        %v1202 = vpop.f32.mrb[0].mxu0
        %v1203 = vadd.f32 %v947, %v1202
        %v1204 = vpop.f32.mrb[0].mxu0
        %1205 = vmatprep.mubr.bf16.mxu0 %v470
        %1206 = vmatmul.mubr.bf16.gmra.mrb[0].mxu0 %v679
        %v1207 = vpop.f32.mrb[0].mxu0
        %v1208 = vadd.f32 %v947, %v1207
        %v1209 = vpop.f32.mrb[0].mxu0
        %v1210 = vpop.f32.mrb[0].mxu0
        %v1211 = vadd.f32 %v947, %v1210
        %v1212 = vpop.f32.mrb[0].mxu0
        %1213 = vmatprep.mubr.bf16.mxu0 %v471
        %1214 = vmatmul.mubr.bf16.gmra.mrb[0].mxu0 %v680
        %v1215 = vpop.f32.mrb[0].mxu0
        %v1216 = vadd.f32 %v947, %v1215
        %v1217 = vpop.f32.mrb[0].mxu0
        %v1218 = vpop.f32.mrb[0].mxu0
        %v1219 = vadd.f32 %v947, %v1218
        %v1220 = vpop.f32.mrb[0].mxu0
        %1221 = vmatprep.mubr.bf16.mxu0 %v472
        %1222 = vmatmul.mubr.bf16.gmra.mrb[0].mxu0 %v681
        %v1223 = vpop.f32.mrb[0].mxu0
        %v1224 = vadd.f32 %v947, %v1223
        %v1225 = vpop.f32.mrb[0].mxu0
        %v1226 = vpop.f32.mrb[0].mxu0
        %v1227 = vadd.f32 %v947, %v1226
        %v1228 = vpop.f32.mrb[0].mxu0
        %1229 = vmatprep.mubr.bf16.mxu0 %v473
        %1230 = vmatmul.mubr.bf16.gmra.mrb[0].mxu0 %v682
        %v1231 = vpop.f32.mrb[0].mxu0
        %v1232 = vadd.f32 %v947, %v1231
        %v1233 = vpop.f32.mrb[0].mxu0
        %v1234 = vpop.f32.mrb[0].mxu0
        %v1235 = vadd.f32 %v947, %v1234
        %v1236 = vpop.f32.mrb[0].mxu0
        %1237 = vmatprep.mubr.bf16.mxu0 %v474
        %1238 = vmatmul.mubr.bf16.gmra.mrb[0].mxu0 %v683
        %v1239 = vpop.f32.mrb[0].mxu0
        %v1240 = vadd.f32 %v947, %v1239
        %v1241 = vpop.f32.mrb[0].mxu0
        %v1242 = vpop.f32.mrb[0].mxu0
        %v1243 = vadd.f32 %v947, %v1242
        %v1244 = vpop.f32.mrb[0].mxu0
        %1245 = vmatprep.mubr.bf16.mxu0 %v475
        %1246 = vmatmul.mubr.bf16.gmra.mrb[0].mxu0 %v684
        %v1247 = vpop.f32.mrb[0].mxu0
        %v1248 = vadd.f32 %v947, %v1247
        %v1249 = vpop.f32.mrb[0].mxu0
        %v1250 = vpop.f32.mrb[0].mxu0
        %v1251 = vadd.f32 %v947, %v1250
        %v1252 = vpop.f32.mrb[0].mxu0
        %1253 = vdwg.mxu0
        %1254 = vmatprep.subr.bf16.mxu0 0
        %1255 = vmatpush1.bf16.msra.mxu0 %v1061
        %1256 = vmatprep.subr.bf16.mxu0 0
        %1257 = vmatpush1.bf16.msra.mxu0 %v1062
        %1258 = vmatprep.subr.bf16.mxu0 0
        %1259 = vmatpush1.bf16.msra.mxu0 %v1063
        %1260 = vmatprep.subr.bf16.mxu0 0
        %1261 = vmatpush1.bf16.msra.mxu0 %v1064
        %1262 = vmatprep.subr.bf16.mxu0 0
        %1263 = vmatpush1.bf16.msra.mxu0 %v1065
        %1264 = vmatprep.subr.bf16.mxu0 0
        %1265 = vmatpush1.bf16.msra.mxu0 %v1066
        %1266 = vmatprep.subr.bf16.mxu0 0
        %1267 = vmatpush1.bf16.msra.mxu0 %v1067
        %1268 = vmatprep.subr.bf16.mxu0 0
        %1269 = vmatpush1.bf16.msra.mxu0 %v1068
        %1270 = vmatprep.subr.bf16.mxu0 0
        %1271 = vmatpush1.bf16.msra.mxu0 0
        %1272 = vmatprep.subr.bf16.mxu0 0
        %1273 = vmatpush1.bf16.msra.mxu0 0
        %1274 = vmatprep.subr.bf16.mxu0 0
        %1275 = vmatpush1.bf16.msra.mxu0 0
        %1276 = vmatprep.subr.bf16.mxu0 0
        %1277 = vmatpush1.bf16.msra.mxu0 0
        %1278 = vmatprep.subr.bf16.mxu0 0
        %1279 = vmatpush1.bf16.msra.mxu0 0
        %1280 = vmatprep.subr.bf16.mxu0 0
        %1281 = vmatpush1.bf16.msra.mxu0 0
        %1282 = vmatprep.subr.bf16.mxu0 0
        %1283 = vmatpush1.bf16.msra.mxu0 0
        %1284 = vmatprep.subr.bf16.mxu0 0
        %1285 = vmatpush1.bf16.msra.mxu0 0
        %1286 = vmatprep.mubr.bf16.mxu0 0
        %1287 = vmatmul.mubr.bf16.gmra.mrb[0].mxu0 %v878
        %v1288 = vpop.f32.mrb[0].mxu0
        %v1289 = vadd.f32 %v1128, %v1288
        %v1290 = vpop.f32.mrb[0].mxu0
        %v1291 = vpop.f32.mrb[0].mxu0
        %v1292 = vadd.f32 %v1131, %v1291
        %v1293 = vpop.f32.mrb[0].mxu0
        %1294 = vmatprep.mubr.bf16.mxu0 0
        %1295 = vmatmul.mubr.bf16.gmra.mrb[0].mxu0 %v879
        %v1296 = vpop.f32.mrb[0].mxu0
        %v1297 = vadd.f32 %v1136, %v1296
        %v1298 = vpop.f32.mrb[0].mxu0
        %v1299 = vpop.f32.mrb[0].mxu0
        %v1300 = vadd.f32 %v1139, %v1299
        %v1301 = vpop.f32.mrb[0].mxu0
        %1302 = vmatprep.mubr.bf16.mxu0 0
        %1303 = vmatmul.mubr.bf16.gmra.mrb[0].mxu0 %v880
        %v1304 = vpop.f32.mrb[0].mxu0
        %v1305 = vadd.f32 %v1144, %v1304
        %v1306 = vpop.f32.mrb[0].mxu0
        %v1307 = vpop.f32.mrb[0].mxu0
        %v1308 = vadd.f32 %v1147, %v1307
        %v1309 = vpop.f32.mrb[0].mxu0
        %1310 = vmatprep.mubr.bf16.mxu0 0
        %1311 = vmatmul.mubr.bf16.gmra.mrb[0].mxu0 %v881
        %v1312 = vpop.f32.mrb[0].mxu0
        %v1313 = vadd.f32 %v1152, %v1312
        %v1314 = vpop.f32.mrb[0].mxu0
        %v1315 = vpop.f32.mrb[0].mxu0
        %v1316 = vadd.f32 %v1155, %v1315
        %v1317 = vpop.f32.mrb[0].mxu0
        %1318 = vmatprep.mubr.bf16.mxu0 0
        %1319 = vmatmul.mubr.bf16.gmra.mrb[0].mxu0 %v882
        %v1320 = vpop.f32.mrb[0].mxu0
        %v1321 = vadd.f32 %v1160, %v1320
        %v1322 = vpop.f32.mrb[0].mxu0
        %v1323 = vpop.f32.mrb[0].mxu0
        %v1324 = vadd.f32 %v1163, %v1323
        %v1325 = vpop.f32.mrb[0].mxu0
        %1326 = vmatprep.mubr.bf16.mxu0 0
        %1327 = vmatmul.mubr.bf16.gmra.mrb[0].mxu0 %v883
        %v1328 = vpop.f32.mrb[0].mxu0
        %v1329 = vadd.f32 %v1168, %v1328
        %v1330 = vpop.f32.mrb[0].mxu0
        %v1331 = vpop.f32.mrb[0].mxu0
        %v1332 = vadd.f32 %v1171, %v1331
        %v1333 = vpop.f32.mrb[0].mxu0
        %1334 = vmatprep.mubr.bf16.mxu0 0
        %1335 = vmatmul.mubr.bf16.gmra.mrb[0].mxu0 %v884
        %v1336 = vpop.f32.mrb[0].mxu0
        %v1337 = vadd.f32 %v1176, %v1336
        %v1338 = vpop.f32.mrb[0].mxu0
        %v1339 = vpop.f32.mrb[0].mxu0
        %v1340 = vadd.f32 %v1179, %v1339
        %v1341 = vpop.f32.mrb[0].mxu0
        %1342 = vmatprep.mubr.bf16.mxu0 0
        %1343 = vmatmul.mubr.bf16.gmra.mrb[0].mxu0 %v885
        %v1344 = vpop.f32.mrb[0].mxu0
        %v1345 = vadd.f32 %v1184, %v1344
        %v1346 = vpop.f32.mrb[0].mxu0
        %v1347 = vpop.f32.mrb[0].mxu0
        %v1348 = vadd.f32 %v1187, %v1347
        %v1349 = vpop.f32.mrb[0].mxu0
        %1350 = vmatprep.mubr.bf16.mxu0 0
        %1351 = vmatmul.mubr.bf16.gmra.mrb[0].mxu0 %v886
        %v1352 = vpop.f32.mrb[0].mxu0
        %v1353 = vadd.f32 %v1192, %v1352
        %v1354 = vpop.f32.mrb[0].mxu0
        %v1355 = vpop.f32.mrb[0].mxu0
        %v1356 = vadd.f32 %v1195, %v1355
        %v1357 = vpop.f32.mrb[0].mxu0
        %1358 = vmatprep.mubr.bf16.mxu0 0
        %1359 = vmatmul.mubr.bf16.gmra.mrb[0].mxu0 %v887
        %v1360 = vpop.f32.mrb[0].mxu0
        %v1361 = vadd.f32 %v1200, %v1360
        %v1362 = vpop.f32.mrb[0].mxu0
        %v1363 = vpop.f32.mrb[0].mxu0
        %v1364 = vadd.f32 %v1203, %v1363
        %v1365 = vpop.f32.mrb[0].mxu0
        %1366 = vmatprep.mubr.bf16.mxu0 0
        %1367 = vmatmul.mubr.bf16.gmra.mrb[0].mxu0 %v888
        %v1368 = vpop.f32.mrb[0].mxu0
        %v1369 = vadd.f32 %v1208, %v1368
        %v1370 = vpop.f32.mrb[0].mxu0
        %v1371 = vpop.f32.mrb[0].mxu0
        %v1372 = vadd.f32 %v1211, %v1371
        %v1373 = vpop.f32.mrb[0].mxu0
        %1374 = vmatprep.mubr.bf16.mxu0 0
        %1375 = vmatmul.mubr.bf16.gmra.mrb[0].mxu0 %v889
        %v1376 = vpop.f32.mrb[0].mxu0
        %v1377 = vadd.f32 %v1216, %v1376
        %v1378 = vpop.f32.mrb[0].mxu0
        %v1379 = vpop.f32.mrb[0].mxu0
        %v1380 = vadd.f32 %v1219, %v1379
        %v1381 = vpop.f32.mrb[0].mxu0
        %1382 = vmatprep.mubr.bf16.mxu0 0
        %1383 = vmatmul.mubr.bf16.gmra.mrb[0].mxu0 %v890
        %v1384 = vpop.f32.mrb[0].mxu0
        %v1385 = vadd.f32 %v1224, %v1384
        %v1386 = vpop.f32.mrb[0].mxu0
        %v1387 = vpop.f32.mrb[0].mxu0
        %v1388 = vadd.f32 %v1227, %v1387
        %v1389 = vpop.f32.mrb[0].mxu0
        %1390 = vmatprep.mubr.bf16.mxu0 0
        %1391 = vmatmul.mubr.bf16.gmra.mrb[0].mxu0 %v891
        %v1392 = vpop.f32.mrb[0].mxu0
        %v1393 = vadd.f32 %v1232, %v1392
        %v1394 = vpop.f32.mrb[0].mxu0
        %v1395 = vpop.f32.mrb[0].mxu0
        %v1396 = vadd.f32 %v1235, %v1395
        %v1397 = vpop.f32.mrb[0].mxu0
        %1398 = vmatprep.mubr.bf16.mxu0 0
        %1399 = vmatmul.mubr.bf16.gmra.mrb[0].mxu0 %v892
        %v1400 = vpop.f32.mrb[0].mxu0
        %v1401 = vadd.f32 %v1240, %v1400
        %v1402 = vpop.f32.mrb[0].mxu0
        %v1403 = vpop.f32.mrb[0].mxu0
        %v1404 = vadd.f32 %v1243, %v1403
        %v1405 = vpop.f32.mrb[0].mxu0
        %1406 = vmatprep.mubr.bf16.mxu0 0
        %1407 = vmatmul.mubr.bf16.gmra.mrb[0].mxu0 %v893
        %v1408 = vpop.f32.mrb[0].mxu0
        %v1409 = vadd.f32 %v1248, %v1408
        %v1410 = vpop.f32.mrb[0].mxu0
        %v1411 = vpop.f32.mrb[0].mxu0
        %v1412 = vadd.f32 %v1251, %v1411
        %v1413 = vpop.f32.mrb[0].mxu0
        %1414 = vdwg.mxu0
        %1415 = vst [vmem:[%s240] sm:$0xff] %v1289
        %1416 = vst [vmem:[%s240 + $0x8] sm:$0xff] %v1292
        %1417 = vst [vmem:[%s240 + $0x10] sm:$0xff] %v1297
        %1418 = vst [vmem:[%s240 + $0x18] sm:$0xff] %v1300
        %1419 = vst [vmem:[%s240 + $0x20] sm:$0xff] %v1305
        %1420 = vst [vmem:[%s240 + $0x28] sm:$0xff] %v1308
        %1421 = vst [vmem:[%s240 + $0x30] sm:$0xff] %v1313
        %1422 = vst [vmem:[%s240 + $0x38] sm:$0xff] %v1316
        %1423 = vst [vmem:[%s240 + $0x40] sm:$0xff] %v1321
        %1424 = vst [vmem:[%s240 + $0x48] sm:$0xff] %v1324
        %1425 = vst [vmem:[%s240 + $0x50] sm:$0xff] %v1329
        %1426 = vst [vmem:[%s240 + $0x58] sm:$0xff] %v1332
        %1427 = vst [vmem:[%s240 + $0x60] sm:$0xff] %v1337
        %1428 = vst [vmem:[%s240 + $0x68] sm:$0xff] %v1340
        %1429 = vst [vmem:[%s240 + $0x70] sm:$0xff] %v1345
        %1430 = vst [vmem:[%s240 + $0x78] sm:$0xff] %v1348
        %1431 = vst [vmem:[%s240 + $0x80] sm:$0xff] %v1353
        %1432 = vst [vmem:[%s240 + $0x88] sm:$0xff] %v1356
        %1433 = vst [vmem:[%s240 + $0x90] sm:$0xff] %v1361
        %1434 = vst [vmem:[%s240 + $0x98] sm:$0xff] %v1364
        %1435 = vst [vmem:[%s240 + $0xa0] sm:$0xff] %v1369
        %1436 = vst [vmem:[%s240 + $0xa8] sm:$0xff] %v1372
        %1437 = vst [vmem:[%s240 + $0xb0] sm:$0xff] %v1377
        %1438 = vst [vmem:[%s240 + $0xb8] sm:$0xff] %v1380
        %1439 = vst [vmem:[%s240 + $0xc0] sm:$0xff] %v1385
        %1440 = vst [vmem:[%s240 + $0xc8] sm:$0xff] %v1388
        %1441 = vst [vmem:[%s240 + $0xd0] sm:$0xff] %v1393
        %1442 = vst [vmem:[%s240 + $0xd8] sm:$0xff] %v1396
        %1443 = vst [vmem:[%s240 + $0xe0] sm:$0xff] %v1401
        %1444 = vst [vmem:[%s240 + $0xe8] sm:$0xff] %v1404
        %1445 = vst [vmem:[%s240 + $0xf0] sm:$0xff] %v1409
        %1446 = vst [vmem:[%s240 + $0xf8] sm:$0xff] %v1412
        %s1447 = sand.u32 %s148, 1
        %s1448 = scalar_lea.sflag [#allocation3], %s1447
        %s1449 = sand.u32 %s148, 1
        %s1450 = smul.addr %s1449, 256
        %s1451 = scalar_lea.vmem [#allocation2], %s1450
        // Predicated region
        $region41: #{gblock_forward.9} parent=39 // pred_check
          %p1452 = pneg %p158
        $region42: #{gblock_forward.9} parent=39 // pred_check_branch
          %1454 = sbr.rel (%p1452) target = $region44
        $region43: #{gblock_forward.9} parent=39 // pred_region
          %s1456 = ssub.s32 4096, 4096
          %1457 = vsyncadd %s1448, %s1456
          %s1458 = smul.addr %s20, 32
          %s1459 = smul.addr %s1458, 128
          %s1460 = scalar_lea.hbm %s6, %s1459
          %s1461 = sshll.u32 %s1451, 4
          %s1462 = int_to_ptr.vmem [resolvable:$true] %s1461
          %1467 = dma.vmem_to_hbm [thread:$0]  %s1462, 4096, %s1460, %s1448, 128, 128, 8
        $region44: #{gblock_forward.9} parent=39 // pred_fallthru
          _
      $region40: #{gblock_forward.9} parent=5 // pred_fallthru
        _
      %p1468 = scmp.le.s32.totalorder 2, %s15
      // Predicated region
      $region45: #{gblock_forward.9} parent=5 // pred_check
        %p1469 = pneg %p1468
      $region46: #{gblock_forward.9} parent=5 // pred_check_branch
        %1471 = sbr.rel (%p1469) target = $region48
      $region47: #{gblock_forward.9} parent=5 // pred_region
        %s1472 = ssub.s32 %s15, 2
        // Predicated region
        $region49: #{gblock_forward.9} parent=47 // pred_check
          %p1473 = pneg %p164
        $region50: #{gblock_forward.9} parent=47 // pred_check_branch
          %1475 = sbr.rel (%p1473) target = $region52
        $region51: #{gblock_forward.9} parent=47 // pred_region
          %s1476 = sand.u32 %s149, 1
          %s1477 = scalar_lea.sflag [#allocation3], %s1476
          %s1478 = sand.u32 %s149, 1
          %s1479 = smul.addr %s1478, 256
          %s1480 = scalar_lea.vmem [#allocation2], %s1479
          %1481 = dma.done %s1477, 4096
        $region52: #{gblock_forward.9} parent=47 // pred_fallthru
          _
      $region48: #{gblock_forward.9} parent=5 // pred_fallthru
        _
    $region6: #{gblock_forward.9} parent=1 // loop_footer
      %s19 = sadd.s32 1, %s15
    $region7: #{gblock_forward.9} parent=1 // loop_footer_branch
      %14 = sbr.rel target = $region3
    $region8: #{gblock_forward.9} parent=1 // loop_exit
      _
    %1482 = vsyncpa [#allocation3], 1
    %s1483 = scalar_lea.sflag [#allocation3], 1
    %1484 = vsyncpa %s1483, 1

// kernel: gblock_forward.8
$region0: #{gblock_forward.8}
  #allocation0 [shape = 'u32[]', space=smem, size = 0x4, offset = 0x4, fixed_abs, tag = 'smem constant byte address 0x4 - core index']
  #allocation1 [shape = 'u32[144,128]{1,0:T(1,128)}', space=vmem, size = 0x12000, scoped, tag = 'internal scratch']
  %s0 = inlined_call_operand.vmem [shape: f32[8,256,128], index: 0, kind: input, shape index: {}]
  %s1 = inlined_call_operand.vmem [shape: f32[4,1,128], index: 1, kind: input, shape index: {}]
  %s2 = inlined_call_operand.vmem [shape: f32[4,1,128], index: 2, kind: input, shape index: {}]
  %s3 = inlined_call_operand.vmem [shape: bf16[384,128], index: 3, kind: input, shape index: {}]
  %s4 = inlined_call_operand.vmem [shape: f32[1,128], index: 4, kind: input, shape index: {}]
  %s5 = inlined_call_operand.vmem [shape: bf16[4,256,128], index: 5, kind: output, shape index: {0}]
  %s6 = inlined_call_operand.vmem [shape: f32[4,1,128], index: 6, kind: output, shape index: {1}]
  %s7 = inlined_call_operand.vmem [shape: f32[4,1,128], index: 7, kind: output, shape index: {2}]
  %8 = xla_tuple %s5, %s6, %s7
  %s9 = sld [smem:[#allocation0]]
  $region69: #{gblock_forward.8} parent=0
    _
  %s11 = ssub.s32 1, %s9
  %s12 = scalar_select 0, %s11, %s9
  loop: start=0, step=1, limit=6
  $region2: #{gblock_forward.8} parent=0 // loop_pre_header
    _
  $region3: #{gblock_forward.8} parent=0 // loop_header
    %s14 = sphi 0, %s18
    %p15 = scmp.ge.s32.totalorder %s14, 6
    %s26 = sphi 0, %s28
    %s29 = sphi 0, %s26
    %s30 = sphi 0, %s29
    %s46 = sphi 0, %s30
    %s52 = sphi 0, %s54
    %s55 = sphi 0, %s52
    %s56 = sphi 0, %s55
    %s72 = sphi 0, %s56
    %s78 = sphi 0, %s80
    %s81 = sphi 0, %s78
    %s82 = sphi 0, %s81
    %s98 = sphi 0, %s82
    %s102 = sphi 0, %s102
    %s104 = sphi 0, %s102
    %s105 = sphi 0, %s104
    %s119 = sphi 0, %s105
    %s123 = sphi 0, %s123
    %s125 = sphi 0, %s123
    %s126 = sphi 0, %s125
    %s140 = sphi 0, %s126
    %s146 = sphi 0, %s148
    %s149 = sphi 0, %s146
    %s150 = sphi 0, %s149
    %s166 = sphi 0, %s150
    %s172 = sphi 0, %s174
    %s175 = sphi 0, %s172
    %s176 = sphi 0, %s175
    %s192 = sphi 0, %s176
    %s198 = sphi 0, %s200
    %s201 = sphi 0, %s198
    %s202 = sphi 0, %s201
    %s218 = sphi 0, %s202
  $region4: #{gblock_forward.8} parent=0 // loop_header_branch
    %17 = sbr.rel (%p15) target = $region8
  $region5: #{gblock_forward.8} parent=0 // loop_body
    %s19 = ssub.s32 %s14, 1
    %s20 = ssub.s32 %s14, 2
    %s21 = sadd.s32 %s14, 1
    %s22 = sadd.s32 %s14, 4
    %s23 = sadd.s32 %s21, 4
    %s24 = ssub.s32 %s22, %s23
    %p25 = scmp.eq.s32.totalorder %s24, 0
    %s27 = sadd.s32 %s26, 1
    %s28 = scalar_select %p25, %s26, %s27
    %p31 = pneg %p25
    %p32 = scmp.eq.s32.totalorder %s14, 3
    %p33 = por %p31, %p32
    %p34 = scmp.ne.s32.totalorder %s26, %s29
    %p35 = scmp.eq.s32.totalorder %s14, 0
    %p36 = por %p34, %p35
    %p37 = scmp.ne.s32.totalorder %s26, %s29
    %p38 = scmp.eq.s32.totalorder %s19, 3
    %p39 = por %p37, %p38
    %p40 = scmp.ne.s32.totalorder %s29, %s30
    %p41 = scmp.eq.s32.totalorder %s19, 0
    %p42 = por %p40, %p41
    %p43 = scmp.ne.s32.totalorder %s29, %s30
    %p44 = scmp.eq.s32.totalorder %s20, 3
    %p45 = por %p43, %p44
    %p47 = scmp.ne.s32.totalorder %s30, %s46
    %p48 = scmp.eq.s32.totalorder %s20, 0
    %p49 = por %p47, %p48
    %s50 = ssub.s32 %s14, %s21
    %p51 = scmp.eq.s32.totalorder %s50, 0
    %s53 = sadd.s32 %s52, 1
    %s54 = scalar_select %p51, %s52, %s53
    %p57 = pneg %p51
    %p58 = scmp.eq.s32.totalorder %s14, 3
    %p59 = por %p57, %p58
    %p60 = scmp.ne.s32.totalorder %s52, %s55
    %p61 = scmp.eq.s32.totalorder %s14, 0
    %p62 = por %p60, %p61
    %p63 = scmp.ne.s32.totalorder %s52, %s55
    %p64 = scmp.eq.s32.totalorder %s19, 3
    %p65 = por %p63, %p64
    %p66 = scmp.ne.s32.totalorder %s55, %s56
    %p67 = scmp.eq.s32.totalorder %s19, 0
    %p68 = por %p66, %p67
    %p69 = scmp.ne.s32.totalorder %s55, %s56
    %p70 = scmp.eq.s32.totalorder %s20, 3
    %p71 = por %p69, %p70
    %p73 = scmp.ne.s32.totalorder %s56, %s72
    %p74 = scmp.eq.s32.totalorder %s20, 0
    %p75 = por %p73, %p74
    %s76 = ssub.s32 %s14, %s21
    %p77 = scmp.eq.s32.totalorder %s76, 0
    %s79 = sadd.s32 %s78, 1
    %s80 = scalar_select %p77, %s78, %s79
    %p83 = pneg %p77
    %p84 = scmp.eq.s32.totalorder %s14, 3
    %p85 = por %p83, %p84
    %p86 = scmp.ne.s32.totalorder %s78, %s81
    %p87 = scmp.eq.s32.totalorder %s14, 0
    %p88 = por %p86, %p87
    %p89 = scmp.ne.s32.totalorder %s78, %s81
    %p90 = scmp.eq.s32.totalorder %s19, 3
    %p91 = por %p89, %p90
    %p92 = scmp.ne.s32.totalorder %s81, %s82
    %p93 = scmp.eq.s32.totalorder %s19, 0
    %p94 = por %p92, %p93
    %p95 = scmp.ne.s32.totalorder %s81, %s82
    %p96 = scmp.eq.s32.totalorder %s20, 3
    %p97 = por %p95, %p96
    %p99 = scmp.ne.s32.totalorder %s82, %s98
    %p100 = scmp.eq.s32.totalorder %s20, 0
    %p101 = por %p99, %p100
    %s103 = sadd.s32 %s102, 1
    %p106 = scmp.eq.s32.totalorder %s14, 3
    %p107 = scmp.ne.s32.totalorder %s102, %s104
    %p108 = scmp.eq.s32.totalorder %s14, 0
    %p109 = por %p107, %p108
    %p110 = scmp.ne.s32.totalorder %s102, %s104
    %p111 = scmp.eq.s32.totalorder %s19, 3
    %p112 = por %p110, %p111
    %p113 = scmp.ne.s32.totalorder %s104, %s105
    %p114 = scmp.eq.s32.totalorder %s19, 0
    %p115 = por %p113, %p114
    %p116 = scmp.ne.s32.totalorder %s104, %s105
    %p117 = scmp.eq.s32.totalorder %s20, 3
    %p118 = por %p116, %p117
    %p120 = scmp.ne.s32.totalorder %s105, %s119
    %p121 = scmp.eq.s32.totalorder %s20, 0
    %p122 = por %p120, %p121
    %s124 = sadd.s32 %s123, 1
    %p127 = scmp.eq.s32.totalorder %s14, 3
    %p128 = scmp.ne.s32.totalorder %s123, %s125
    %p129 = scmp.eq.s32.totalorder %s14, 0
    %p130 = por %p128, %p129
    %p131 = scmp.ne.s32.totalorder %s123, %s125
    %p132 = scmp.eq.s32.totalorder %s19, 3
    %p133 = por %p131, %p132
    %p134 = scmp.ne.s32.totalorder %s125, %s126
    %p135 = scmp.eq.s32.totalorder %s19, 0
    %p136 = por %p134, %p135
    %p137 = scmp.ne.s32.totalorder %s125, %s126
    %p138 = scmp.eq.s32.totalorder %s20, 3
    %p139 = por %p137, %p138
    %p141 = scmp.ne.s32.totalorder %s126, %s140
    %p142 = scmp.eq.s32.totalorder %s20, 0
    %p143 = por %p141, %p142
    %s144 = ssub.s32 %s14, %s21
    %p145 = scmp.eq.s32.totalorder %s144, 0
    %s147 = sadd.s32 %s146, 1
    %s148 = scalar_select %p145, %s146, %s147
    %p151 = pneg %p145
    %p152 = scmp.eq.s32.totalorder %s14, 3
    %p153 = por %p151, %p152
    %p154 = scmp.ne.s32.totalorder %s146, %s149
    %p155 = scmp.eq.s32.totalorder %s14, 0
    %p156 = por %p154, %p155
    %p157 = scmp.ne.s32.totalorder %s146, %s149
    %p158 = scmp.eq.s32.totalorder %s19, 3
    %p159 = por %p157, %p158
    %p160 = scmp.ne.s32.totalorder %s149, %s150
    %p161 = scmp.eq.s32.totalorder %s19, 0
    %p162 = por %p160, %p161
    %p163 = scmp.ne.s32.totalorder %s149, %s150
    %p164 = scmp.eq.s32.totalorder %s20, 3
    %p165 = por %p163, %p164
    %p167 = scmp.ne.s32.totalorder %s150, %s166
    %p168 = scmp.eq.s32.totalorder %s20, 0
    %p169 = por %p167, %p168
    %s170 = ssub.s32 %s14, %s21
    %p171 = scmp.eq.s32.totalorder %s170, 0
    %s173 = sadd.s32 %s172, 1
    %s174 = scalar_select %p171, %s172, %s173
    %p177 = pneg %p171
    %p178 = scmp.eq.s32.totalorder %s14, 3
    %p179 = por %p177, %p178
    %p180 = scmp.ne.s32.totalorder %s172, %s175
    %p181 = scmp.eq.s32.totalorder %s14, 0
    %p182 = por %p180, %p181
    %p183 = scmp.ne.s32.totalorder %s172, %s175
    %p184 = scmp.eq.s32.totalorder %s19, 3
    %p185 = por %p183, %p184
    %p186 = scmp.ne.s32.totalorder %s175, %s176
    %p187 = scmp.eq.s32.totalorder %s19, 0
    %p188 = por %p186, %p187
    %p189 = scmp.ne.s32.totalorder %s175, %s176
    %p190 = scmp.eq.s32.totalorder %s20, 3
    %p191 = por %p189, %p190
    %p193 = scmp.ne.s32.totalorder %s176, %s192
    %p194 = scmp.eq.s32.totalorder %s20, 0
    %p195 = por %p193, %p194
    %s196 = ssub.s32 %s14, %s21
    %p197 = scmp.eq.s32.totalorder %s196, 0
    %s199 = sadd.s32 %s198, 1
    %s200 = scalar_select %p197, %s198, %s199
    %p203 = pneg %p197
    %p204 = scmp.eq.s32.totalorder %s14, 3
    %p205 = por %p203, %p204
    %p206 = scmp.ne.s32.totalorder %s198, %s201
    %p207 = scmp.eq.s32.totalorder %s14, 0
    %p208 = por %p206, %p207
    %p209 = scmp.ne.s32.totalorder %s198, %s201
    %p210 = scmp.eq.s32.totalorder %s19, 3
    %p211 = por %p209, %p210
    %p212 = scmp.ne.s32.totalorder %s201, %s202
    %p213 = scmp.eq.s32.totalorder %s19, 0
    %p214 = por %p212, %p213
    %p215 = scmp.ne.s32.totalorder %s201, %s202
    %p216 = scmp.eq.s32.totalorder %s20, 3
    %p217 = por %p215, %p216
    %p219 = scmp.ne.s32.totalorder %s202, %s218
    %p220 = scmp.eq.s32.totalorder %s20, 0
    %p221 = por %p219, %p220
    %p222 = scmp.le.s32.totalorder 1, %s14
    %p223 = scmp.lt.s32.totalorder %s14, 5
    %p224 = pnand %p222, %p223
    %p225 = pneg %p224
    // Predicated region
    $region9: #{gblock_forward.8} parent=5 // pred_check
      _
    $region10: #{gblock_forward.8} parent=5 // pred_check_branch
      %227 = sbr.rel (%p224) target = $region12
    $region11: #{gblock_forward.8} parent=5 // pred_region
      %s228 = ssub.s32 %s14, 1
      // Predicated region
      $region13: #{gblock_forward.8} parent=11 // pred_check
        %p229 = pneg %p115
      $region14: #{gblock_forward.8} parent=11 // pred_check_branch
        %231 = sbr.rel (%p229) target = $region16
      $region15: #{gblock_forward.8} parent=11 // pred_region
        _
      $region16: #{gblock_forward.8} parent=11 // pred_fallthru
        _
      // Predicated region
      $region17: #{gblock_forward.8} parent=11 // pred_check
        %p232 = pneg %p136
      $region18: #{gblock_forward.8} parent=11 // pred_check_branch
        %234 = sbr.rel (%p232) target = $region20
      $region19: #{gblock_forward.8} parent=11 // pred_region
        _
      $region20: #{gblock_forward.8} parent=11 // pred_fallthru
        _
    $region12: #{gblock_forward.8} parent=5 // pred_fallthru
      _
    %p235 = scmp.lt.s32.totalorder %s14, 4
    // Predicated region
    $region21: #{gblock_forward.8} parent=5 // pred_check
      %p236 = pneg %p235
    $region22: #{gblock_forward.8} parent=5 // pred_check_branch
      %238 = sbr.rel (%p236) target = $region24
    $region23: #{gblock_forward.8} parent=5 // pred_region
      // Predicated region
      $region25: #{gblock_forward.8} parent=23 // pred_check
        %p239 = pneg %p36
      $region26: #{gblock_forward.8} parent=23 // pred_check_branch
        %241 = sbr.rel (%p239) target = $region28
      $region27: #{gblock_forward.8} parent=23 // pred_region
        %s242 = sadd.s32 %s14, 4
        %p243 = scmp.lt.s32.totalorder %s242, 7
        %s244 = scalar_select %p243, %s242, 7
        %s245 = smul.addr %s244, 32
        %s246 = smul.addr %s245, 8
        %s247 = scalar_lea.vmem %s0, %s246
        %s248 = sadd.s32 %s14, 4
      $region28: #{gblock_forward.8} parent=23 // pred_fallthru
        _
      // Predicated region
      $region29: #{gblock_forward.8} parent=23 // pred_check
        %p249 = pneg %p62
      $region30: #{gblock_forward.8} parent=23 // pred_check_branch
        %251 = sbr.rel (%p249) target = $region32
      $region31: #{gblock_forward.8} parent=23 // pred_region
        %p252 = scmp.lt.s32.totalorder %s14, 3
        %s253 = scalar_select %p252, %s14, 3
        %s254 = scalar_lea.vmem %s1, %s253
      $region32: #{gblock_forward.8} parent=23 // pred_fallthru
        _
      // Predicated region
      $region33: #{gblock_forward.8} parent=23 // pred_check
        %p255 = pneg %p88
      $region34: #{gblock_forward.8} parent=23 // pred_check_branch
        %257 = sbr.rel (%p255) target = $region36
      $region35: #{gblock_forward.8} parent=23 // pred_region
        %p258 = scmp.lt.s32.totalorder %s14, 3
        %s259 = scalar_select %p258, %s14, 3
        %s260 = scalar_lea.vmem %s2, %s259
      $region36: #{gblock_forward.8} parent=23 // pred_fallthru
        _
    $region24: #{gblock_forward.8} parent=5 // pred_fallthru
      _
    %p261 = scmp.le.s32.totalorder 1, %s14
    %p262 = scmp.lt.s32.totalorder %s14, 5
    %p263 = pnand %p261, %p262
    %p264 = pneg %p263
    // Predicated region
    $region37: #{gblock_forward.8} parent=5 // pred_check
      _
    $region38: #{gblock_forward.8} parent=5 // pred_check_branch
      %266 = sbr.rel (%p263) target = $region40
    $region39: #{gblock_forward.8} parent=5 // pred_region
      %s267 = ssub.s32 %s14, 1
      %s268 = sadd.s32 %s19, 4
      %p269 = scmp.lt.s32.totalorder %s268, 7
      %s270 = scalar_select %p269, %s268, 7
      %s271 = smul.addr %s270, 32
      %s272 = smul.addr %s271, 8
      %s273 = scalar_lea.vmem %s0, %s272
      %p274 = pneg %p42
      %p275 = pneg %p39
      %p276 = scmp.lt.s32.totalorder %s19, 3
      %s277 = scalar_select %p276, %s19, 3
      %s278 = scalar_lea.vmem %s1, %s277
      %p279 = pneg %p68
      %p280 = pneg %p65
      %p281 = scmp.lt.s32.totalorder %s19, 3
      %s282 = scalar_select %p281, %s19, 3
      %s283 = scalar_lea.vmem %s2, %s282
      %p284 = pneg %p94
      %p285 = pneg %p91
      %p286 = pneg %p115
      %p287 = pneg %p112
      %p288 = pneg %p136
      %p289 = pneg %p133
      %p290 = pneg %p162
      %p291 = pneg %p159
      %p292 = scmp.lt.s32.totalorder %s19, 3
      %s293 = scalar_select %p292, %s19, 3
      %s294 = smul.addr %s293, 32
      %s295 = smul.addr %s294, 4
      %s296 = scalar_lea.vmem %s5, %s295
      %p297 = pneg %p188
      %p298 = pneg %p185
      %p299 = scmp.lt.s32.totalorder %s19, 3
      %s300 = scalar_select %p299, %s19, 3
      %s301 = scalar_lea.vmem %s6, %s300
      %p302 = pneg %p214
      %p303 = pneg %p211
      %p304 = scmp.lt.s32.totalorder %s19, 3
      %s305 = scalar_select %p304, %s19, 3
      %s306 = scalar_lea.vmem %s7, %s305
      %s307 = sadd.s32 %s19, 4
      %p308 = scmp.lt.s32.totalorder %s307, 7
      %s309 = scalar_select %p308, %s307, 7
      %s310 = smul.addr %s309, 32
      %s311 = smul.addr %s310, 8
      %s312 = scalar_lea.vmem %s0, %s311
      %s313 = sadd.s32 %s19, 4
      %p314 = scmp.lt.s32.totalorder %s19, 3
      %s315 = scalar_select %p314, %s19, 3
      %s316 = scalar_lea.vmem %s1, %s315
      %p317 = scmp.lt.s32.totalorder %s19, 3
      %s318 = scalar_select %p317, %s19, 3
      %s319 = scalar_lea.vmem %s2, %s318
      %p320 = scmp.lt.s32.totalorder %s19, 3
      %s321 = scalar_select %p320, %s19, 3
      %s322 = smul.addr %s321, 32
      %s323 = smul.addr %s322, 4
      %s324 = scalar_lea.vmem %s5, %s323
      %p325 = scmp.lt.s32.totalorder %s19, 3
      %s326 = scalar_select %p325, %s19, 3
      %s327 = scalar_lea.vmem %s6, %s326
      %p328 = scmp.lt.s32.totalorder %s19, 3
      %s329 = scalar_select %p328, %s19, 3
      %s330 = scalar_lea.vmem %s7, %s329
      %v332 = vld [vmem:[%s312] sm:$0xff]
      %v333 = vld [vmem:[%s312 + $0x8] sm:$0xff]
      %v334 = vld [vmem:[%s312 + $0x10] sm:$0xff]
      %v335 = vld [vmem:[%s312 + $0x18] sm:$0xff]
      %v336 = vld [vmem:[%s312 + $0x20] sm:$0xff]
      %v337 = vld [vmem:[%s312 + $0x28] sm:$0xff]
      %v338 = vld [vmem:[%s312 + $0x30] sm:$0xff]
      %v339 = vld [vmem:[%s312 + $0x38] sm:$0xff]
      %v340 = vld [vmem:[%s312 + $0x40] sm:$0xff]
      %v341 = vld [vmem:[%s312 + $0x48] sm:$0xff]
      %v342 = vld [vmem:[%s312 + $0x50] sm:$0xff]
      %v343 = vld [vmem:[%s312 + $0x58] sm:$0xff]
      %v344 = vld [vmem:[%s312 + $0x60] sm:$0xff]
      %v345 = vld [vmem:[%s312 + $0x68] sm:$0xff]
      %v346 = vld [vmem:[%s312 + $0x70] sm:$0xff]
      %v347 = vld [vmem:[%s312 + $0x78] sm:$0xff]
      %v348 = vld [vmem:[%s312 + $0x80] sm:$0xff]
      %v349 = vld [vmem:[%s312 + $0x88] sm:$0xff]
      %v350 = vld [vmem:[%s312 + $0x90] sm:$0xff]
      %v351 = vld [vmem:[%s312 + $0x98] sm:$0xff]
      %v352 = vld [vmem:[%s312 + $0xa0] sm:$0xff]
      %v353 = vld [vmem:[%s312 + $0xa8] sm:$0xff]
      %v354 = vld [vmem:[%s312 + $0xb0] sm:$0xff]
      %v355 = vld [vmem:[%s312 + $0xb8] sm:$0xff]
      %v356 = vld [vmem:[%s312 + $0xc0] sm:$0xff]
      %v357 = vld [vmem:[%s312 + $0xc8] sm:$0xff]
      %v358 = vld [vmem:[%s312 + $0xd0] sm:$0xff]
      %v359 = vld [vmem:[%s312 + $0xd8] sm:$0xff]
      %v360 = vld [vmem:[%s312 + $0xe0] sm:$0xff]
      %v361 = vld [vmem:[%s312 + $0xe8] sm:$0xff]
      %v362 = vld [vmem:[%s312 + $0xf0] sm:$0xff]
      %v363 = vld [vmem:[%s312 + $0xf8] sm:$0xff]
      %v364 = vld [vmem:[%s316] sm:$0x1]
      %v366 = vlaneseq
      %v367 = vshrl.u32 %v366, 7
      %v368 = vsub.s32 0, %v367
      %v369 = vrot.slane %v364, %v368
      %v371 = vmul.f32 %v332, %v369
      %v372 = vmul.f32 %v333, %v369
      %v373 = vmul.f32 %v334, %v369
      %v374 = vmul.f32 %v335, %v369
      %v375 = vmul.f32 %v336, %v369
      %v376 = vmul.f32 %v337, %v369
      %v377 = vmul.f32 %v338, %v369
      %v378 = vmul.f32 %v339, %v369
      %v379 = vmul.f32 %v340, %v369
      %v380 = vmul.f32 %v341, %v369
      %v381 = vmul.f32 %v342, %v369
      %v382 = vmul.f32 %v343, %v369
      %v383 = vmul.f32 %v344, %v369
      %v384 = vmul.f32 %v345, %v369
      %v385 = vmul.f32 %v346, %v369
      %v386 = vmul.f32 %v347, %v369
      %v387 = vmul.f32 %v348, %v369
      %v388 = vmul.f32 %v349, %v369
      %v389 = vmul.f32 %v350, %v369
      %v390 = vmul.f32 %v351, %v369
      %v391 = vmul.f32 %v352, %v369
      %v392 = vmul.f32 %v353, %v369
      %v393 = vmul.f32 %v354, %v369
      %v394 = vmul.f32 %v355, %v369
      %v395 = vmul.f32 %v356, %v369
      %v396 = vmul.f32 %v357, %v369
      %v397 = vmul.f32 %v358, %v369
      %v398 = vmul.f32 %v359, %v369
      %v399 = vmul.f32 %v360, %v369
      %v400 = vmul.f32 %v361, %v369
      %v401 = vmul.f32 %v362, %v369
      %v402 = vmul.f32 %v363, %v369
      %v403 = vld [vmem:[%s319] sm:$0x1]
      %v405 = vlaneseq
      %v406 = vshrl.u32 %v405, 7
      %v407 = vsub.s32 0, %v406
      %v408 = vrot.slane %v403, %v407
      %v410 = vadd.f32 %v371, %v408
      %v411 = vadd.f32 %v372, %v408
      %v412 = vadd.f32 %v373, %v408
      %v413 = vadd.f32 %v374, %v408
      %v414 = vadd.f32 %v375, %v408
      %v415 = vadd.f32 %v376, %v408
      %v416 = vadd.f32 %v377, %v408
      %v417 = vadd.f32 %v378, %v408
      %v418 = vadd.f32 %v379, %v408
      %v419 = vadd.f32 %v380, %v408
      %v420 = vadd.f32 %v381, %v408
      %v421 = vadd.f32 %v382, %v408
      %v422 = vadd.f32 %v383, %v408
      %v423 = vadd.f32 %v384, %v408
      %v424 = vadd.f32 %v385, %v408
      %v425 = vadd.f32 %v386, %v408
      %v426 = vadd.f32 %v387, %v408
      %v427 = vadd.f32 %v388, %v408
      %v428 = vadd.f32 %v389, %v408
      %v429 = vadd.f32 %v390, %v408
      %v430 = vadd.f32 %v391, %v408
      %v431 = vadd.f32 %v392, %v408
      %v432 = vadd.f32 %v393, %v408
      %v433 = vadd.f32 %v394, %v408
      %v434 = vadd.f32 %v395, %v408
      %v435 = vadd.f32 %v396, %v408
      %v436 = vadd.f32 %v397, %v408
      %v437 = vadd.f32 %v398, %v408
      %v438 = vadd.f32 %v399, %v408
      %v439 = vadd.f32 %v400, %v408
      %v440 = vadd.f32 %v401, %v408
      %v441 = vadd.f32 %v402, %v408
      %v442 = vmax.f32 %v410, 0.0
      %v443 = vmax.f32 %v411, 0.0
      %v444 = vmax.f32 %v412, 0.0
      %v445 = vmax.f32 %v413, 0.0
      %v446 = vmax.f32 %v414, 0.0
      %v447 = vmax.f32 %v415, 0.0
      %v448 = vmax.f32 %v416, 0.0
      %v449 = vmax.f32 %v417, 0.0
      %v450 = vmax.f32 %v418, 0.0
      %v451 = vmax.f32 %v419, 0.0
      %v452 = vmax.f32 %v420, 0.0
      %v453 = vmax.f32 %v421, 0.0
      %v454 = vmax.f32 %v422, 0.0
      %v455 = vmax.f32 %v423, 0.0
      %v456 = vmax.f32 %v424, 0.0
      %v457 = vmax.f32 %v425, 0.0
      %v458 = vmax.f32 %v426, 0.0
      %v459 = vmax.f32 %v427, 0.0
      %v460 = vmax.f32 %v428, 0.0
      %v461 = vmax.f32 %v429, 0.0
      %v462 = vmax.f32 %v430, 0.0
      %v463 = vmax.f32 %v431, 0.0
      %v464 = vmax.f32 %v432, 0.0
      %v465 = vmax.f32 %v433, 0.0
      %v466 = vmax.f32 %v434, 0.0
      %v467 = vmax.f32 %v435, 0.0
      %v468 = vmax.f32 %v436, 0.0
      %v469 = vmax.f32 %v437, 0.0
      %v470 = vmax.f32 %v438, 0.0
      %v471 = vmax.f32 %v439, 0.0
      %v472 = vmax.f32 %v440, 0.0
      %v473 = vmax.f32 %v441, 0.0
      %v474 = vlaneseq
      %v475 = vshrl.u32 %v474, 7
      %v476 = vadd.s32 %v475, 8
      %v477 = vadd.s32 %v475, 16
      %v478 = vadd.s32 %v475, 24
      %v479 = vadd.s32 %v475, 32
      %v480 = vadd.s32 %v475, 40
      %v481 = vadd.s32 %v475, 48
      %v482 = vadd.s32 %v475, 56
      %v483 = vadd.s32 %v475, 64
      %v484 = vadd.s32 %v475, 72
      %v485 = vadd.s32 %v475, 80
      %v486 = vadd.s32 %v475, 88
      %v487 = vadd.s32 %v475, 96
      %v488 = vadd.s32 %v475, 104
      %v489 = vadd.s32 %v475, 112
      %v490 = vadd.s32 %v475, 120
      %v491 = vadd.s32 %v475, 128
      %v492 = vadd.s32 %v475, 136
      %v493 = vadd.s32 %v475, 144
      %v494 = vadd.s32 %v475, 152
      %v495 = vadd.s32 %v475, 160
      %v496 = vadd.s32 %v475, 168
      %v497 = vadd.s32 %v475, 176
      %v498 = vadd.s32 %v475, 184
      %v499 = vadd.s32 %v475, 192
      %v500 = vadd.s32 %v475, 200
      %v501 = vadd.s32 %v475, 208
      %v502 = vadd.s32 %v475, 216
      %v503 = vadd.s32 %v475, 224
      %v504 = vadd.s32 %v475, 232
      %v505 = vadd.s32 %v475, 240
      %v506 = vadd.s32 %v475, 248
      %v507 = vpack.c.bf16 %v443, %v442
      %v508 = vpack.c.bf16 %v445, %v444
      %v509 = vpack.c.bf16 %v447, %v446
      %v510 = vpack.c.bf16 %v449, %v448
      %v511 = vpack.c.bf16 %v451, %v450
      %v512 = vpack.c.bf16 %v453, %v452
      %v513 = vpack.c.bf16 %v455, %v454
      %v514 = vpack.c.bf16 %v457, %v456
      %v515 = vpack.c.bf16 %v459, %v458
      %v516 = vpack.c.bf16 %v461, %v460
      %v517 = vpack.c.bf16 %v463, %v462
      %v518 = vpack.c.bf16 %v465, %v464
      %v519 = vpack.c.bf16 %v467, %v466
      %v520 = vpack.c.bf16 %v469, %v468
      %v521 = vpack.c.bf16 %v471, %v470
      %v522 = vpack.c.bf16 %v473, %v472
      %vm523 = vcmp.gt.s32.totalorder %v475, 0
      %vm524 = vcmp.gt.s32.totalorder %v476, 0
      %vm525 = vcmp.gt.s32.totalorder %v477, 0
      %vm526 = vcmp.gt.s32.totalorder %v478, 0
      %vm527 = vcmp.gt.s32.totalorder %v479, 0
      %vm528 = vcmp.gt.s32.totalorder %v480, 0
      %vm529 = vcmp.gt.s32.totalorder %v481, 0
      %vm530 = vcmp.gt.s32.totalorder %v482, 0
      %vm531 = vcmp.gt.s32.totalorder %v483, 0
      %vm532 = vcmp.gt.s32.totalorder %v484, 0
      %vm533 = vcmp.gt.s32.totalorder %v485, 0
      %vm534 = vcmp.gt.s32.totalorder %v486, 0
      %vm535 = vcmp.gt.s32.totalorder %v487, 0
      %vm536 = vcmp.gt.s32.totalorder %v488, 0
      %vm537 = vcmp.gt.s32.totalorder %v489, 0
      %vm538 = vcmp.gt.s32.totalorder %v490, 0
      %vm539 = vcmp.gt.s32.totalorder %v491, 0
      %vm540 = vcmp.gt.s32.totalorder %v492, 0
      %vm541 = vcmp.gt.s32.totalorder %v493, 0
      %vm542 = vcmp.gt.s32.totalorder %v494, 0
      %vm543 = vcmp.gt.s32.totalorder %v495, 0
      %vm544 = vcmp.gt.s32.totalorder %v496, 0
      %vm545 = vcmp.gt.s32.totalorder %v497, 0
      %vm546 = vcmp.gt.s32.totalorder %v498, 0
      %vm547 = vcmp.gt.s32.totalorder %v499, 0
      %vm548 = vcmp.gt.s32.totalorder %v500, 0
      %vm549 = vcmp.gt.s32.totalorder %v501, 0
      %vm550 = vcmp.gt.s32.totalorder %v502, 0
      %vm551 = vcmp.gt.s32.totalorder %v503, 0
      %vm552 = vcmp.gt.s32.totalorder %v504, 0
      %vm553 = vcmp.gt.s32.totalorder %v505, 0
      %vm554 = vcmp.gt.s32.totalorder %v506, 0
      %v555 = vrot.slane %v442, 7
      %v556 = vrot.slane %v443, 7
      %v557 = vrot.slane %v444, 7
      %v558 = vrot.slane %v445, 7
      %v559 = vrot.slane %v446, 7
      %v560 = vrot.slane %v447, 7
      %v561 = vrot.slane %v448, 7
      %v562 = vrot.slane %v449, 7
      %v563 = vrot.slane %v450, 7
      %v564 = vrot.slane %v451, 7
      %v565 = vrot.slane %v452, 7
      %v566 = vrot.slane %v453, 7
      %v567 = vrot.slane %v454, 7
      %v568 = vrot.slane %v455, 7
      %v569 = vrot.slane %v456, 7
      %v570 = vrot.slane %v457, 7
      %v571 = vrot.slane %v458, 7
      %v572 = vrot.slane %v459, 7
      %v573 = vrot.slane %v460, 7
      %v574 = vrot.slane %v461, 7
      %v575 = vrot.slane %v462, 7
      %v576 = vrot.slane %v463, 7
      %v577 = vrot.slane %v464, 7
      %v578 = vrot.slane %v465, 7
      %v579 = vrot.slane %v466, 7
      %v580 = vrot.slane %v467, 7
      %v581 = vrot.slane %v468, 7
      %v582 = vrot.slane %v469, 7
      %v583 = vrot.slane %v470, 7
      %v584 = vrot.slane %v471, 7
      %v585 = vrot.slane %v472, 7
      %v586 = vrot.slane %v473, 7
      %vm587 = vcmp.lt.s32.totalorder %v475, 1
      %v588 = vsel %vm587, %v585, %v586
      %v589 = vsel %vm587, %v584, %v585
      %v590 = vsel %vm587, %v583, %v584
      %v591 = vsel %vm587, %v582, %v583
      %v592 = vsel %vm587, %v581, %v582
      %v593 = vsel %vm587, %v580, %v581
      %v594 = vsel %vm587, %v579, %v580
      %v595 = vsel %vm587, %v578, %v579
      %v596 = vsel %vm587, %v577, %v578
      %v597 = vsel %vm587, %v576, %v577
      %v598 = vsel %vm587, %v575, %v576
      %v599 = vsel %vm587, %v574, %v575
      %v600 = vsel %vm587, %v573, %v574
      %v601 = vsel %vm587, %v572, %v573
      %v602 = vsel %vm587, %v571, %v572
      %v603 = vsel %vm587, %v570, %v571
      %v604 = vsel %vm587, %v569, %v570
      %v605 = vsel %vm587, %v568, %v569
      %v606 = vsel %vm587, %v567, %v568
      %v607 = vsel %vm587, %v566, %v567
      %v608 = vsel %vm587, %v565, %v566
      %v609 = vsel %vm587, %v564, %v565
      %v610 = vsel %vm587, %v563, %v564
      %v611 = vsel %vm587, %v562, %v563
      %v612 = vsel %vm587, %v561, %v562
      %v613 = vsel %vm587, %v560, %v561
      %v614 = vsel %vm587, %v559, %v560
      %v615 = vsel %vm587, %v558, %v559
      %v616 = vsel %vm587, %v557, %v558
      %v617 = vsel %vm587, %v556, %v557
      %v618 = vsel %vm587, %v555, %v556
      %v619 = vsel %vm587, %v586, %v555
      %v620 = vsel %vm523, 1, 0
      %v621 = vsel %vm524, 1, 0
      %v622 = vsel %vm525, 1, 0
      %v623 = vsel %vm526, 1, 0
      %v624 = vsel %vm527, 1, 0
      %v625 = vsel %vm528, 1, 0
      %v626 = vsel %vm529, 1, 0
      %v627 = vsel %vm530, 1, 0
      %v628 = vsel %vm531, 1, 0
      %v629 = vsel %vm532, 1, 0
      %v630 = vsel %vm533, 1, 0
      %v631 = vsel %vm534, 1, 0
      %v632 = vsel %vm535, 1, 0
      %v633 = vsel %vm536, 1, 0
      %v634 = vsel %vm537, 1, 0
      %v635 = vsel %vm538, 1, 0
      %v636 = vsel %vm539, 1, 0
      %v637 = vsel %vm540, 1, 0
      %v638 = vsel %vm541, 1, 0
      %v639 = vsel %vm542, 1, 0
      %v640 = vsel %vm543, 1, 0
      %v641 = vsel %vm544, 1, 0
      %v642 = vsel %vm545, 1, 0
      %v643 = vsel %vm546, 1, 0
      %v644 = vsel %vm547, 1, 0
      %v645 = vsel %vm548, 1, 0
      %v646 = vsel %vm549, 1, 0
      %v647 = vsel %vm550, 1, 0
      %v648 = vsel %vm551, 1, 0
      %v649 = vsel %vm552, 1, 0
      %v650 = vsel %vm553, 1, 0
      %v651 = vsel %vm554, 1, 0
      %vm652 = vcmp.eq.s32.totalorder %v620, 1
      %vm653 = vcmp.eq.s32.totalorder %v621, 1
      %vm654 = vcmp.eq.s32.totalorder %v622, 1
      %vm655 = vcmp.eq.s32.totalorder %v623, 1
      %vm656 = vcmp.eq.s32.totalorder %v624, 1
      %vm657 = vcmp.eq.s32.totalorder %v625, 1
      %vm658 = vcmp.eq.s32.totalorder %v626, 1
      %vm659 = vcmp.eq.s32.totalorder %v627, 1
      %vm660 = vcmp.eq.s32.totalorder %v628, 1
      %vm661 = vcmp.eq.s32.totalorder %v629, 1
      %vm662 = vcmp.eq.s32.totalorder %v630, 1
      %vm663 = vcmp.eq.s32.totalorder %v631, 1
      %vm664 = vcmp.eq.s32.totalorder %v632, 1
      %vm665 = vcmp.eq.s32.totalorder %v633, 1
      %vm666 = vcmp.eq.s32.totalorder %v634, 1
      %vm667 = vcmp.eq.s32.totalorder %v635, 1
      %vm668 = vcmp.eq.s32.totalorder %v636, 1
      %vm669 = vcmp.eq.s32.totalorder %v637, 1
      %vm670 = vcmp.eq.s32.totalorder %v638, 1
      %vm671 = vcmp.eq.s32.totalorder %v639, 1
      %vm672 = vcmp.eq.s32.totalorder %v640, 1
      %vm673 = vcmp.eq.s32.totalorder %v641, 1
      %vm674 = vcmp.eq.s32.totalorder %v642, 1
      %vm675 = vcmp.eq.s32.totalorder %v643, 1
      %vm676 = vcmp.eq.s32.totalorder %v644, 1
      %vm677 = vcmp.eq.s32.totalorder %v645, 1
      %vm678 = vcmp.eq.s32.totalorder %v646, 1
      %vm679 = vcmp.eq.s32.totalorder %v647, 1
      %vm680 = vcmp.eq.s32.totalorder %v648, 1
      %vm681 = vcmp.eq.s32.totalorder %v649, 1
      %vm682 = vcmp.eq.s32.totalorder %v650, 1
      %vm683 = vcmp.eq.s32.totalorder %v651, 1
      %v684 = vsel %vm652, %v619, 0.0
      %v685 = vsel %vm653, %v618, 0.0
      %v686 = vsel %vm654, %v617, 0.0
      %v687 = vsel %vm655, %v616, 0.0
      %v688 = vsel %vm656, %v615, 0.0
      %v689 = vsel %vm657, %v614, 0.0
      %v690 = vsel %vm658, %v613, 0.0
      %v691 = vsel %vm659, %v612, 0.0
      %v692 = vsel %vm660, %v611, 0.0
      %v693 = vsel %vm661, %v610, 0.0
      %v694 = vsel %vm662, %v609, 0.0
      %v695 = vsel %vm663, %v608, 0.0
      %v696 = vsel %vm664, %v607, 0.0
      %v697 = vsel %vm665, %v606, 0.0
      %v698 = vsel %vm666, %v605, 0.0
      %v699 = vsel %vm667, %v604, 0.0
      %v700 = vsel %vm668, %v603, 0.0
      %v701 = vsel %vm669, %v602, 0.0
      %v702 = vsel %vm670, %v601, 0.0
      %v703 = vsel %vm671, %v600, 0.0
      %v704 = vsel %vm672, %v599, 0.0
      %v705 = vsel %vm673, %v598, 0.0
      %v706 = vsel %vm674, %v597, 0.0
      %v707 = vsel %vm675, %v596, 0.0
      %v708 = vsel %vm676, %v595, 0.0
      %v709 = vsel %vm677, %v594, 0.0
      %v710 = vsel %vm678, %v593, 0.0
      %v711 = vsel %vm679, %v592, 0.0
      %v712 = vsel %vm680, %v591, 0.0
      %v713 = vsel %vm681, %v590, 0.0
      %v714 = vsel %vm682, %v589, 0.0
      %v715 = vsel %vm683, %v588, 0.0
      %v716 = vpack.c.bf16 %v685, %v684
      %v717 = vpack.c.bf16 %v687, %v686
      %v718 = vpack.c.bf16 %v689, %v688
      %v719 = vpack.c.bf16 %v691, %v690
      %v720 = vpack.c.bf16 %v693, %v692
      %v721 = vpack.c.bf16 %v695, %v694
      %v722 = vpack.c.bf16 %v697, %v696
      %v723 = vpack.c.bf16 %v699, %v698
      %v724 = vpack.c.bf16 %v701, %v700
      %v725 = vpack.c.bf16 %v703, %v702
      %v726 = vpack.c.bf16 %v705, %v704
      %v727 = vpack.c.bf16 %v707, %v706
      %v728 = vpack.c.bf16 %v709, %v708
      %v729 = vpack.c.bf16 %v711, %v710
      %v730 = vpack.c.bf16 %v713, %v712
      %v731 = vpack.c.bf16 %v715, %v714
      %vm732 = vcmp.lt.s32.totalorder %v475, 255
      %vm733 = vcmp.lt.s32.totalorder %v476, 255
      %vm734 = vcmp.lt.s32.totalorder %v477, 255
      %vm735 = vcmp.lt.s32.totalorder %v478, 255
      %vm736 = vcmp.lt.s32.totalorder %v479, 255
      %vm737 = vcmp.lt.s32.totalorder %v480, 255
      %vm738 = vcmp.lt.s32.totalorder %v481, 255
      %vm739 = vcmp.lt.s32.totalorder %v482, 255
      %vm740 = vcmp.lt.s32.totalorder %v483, 255
      %vm741 = vcmp.lt.s32.totalorder %v484, 255
      %vm742 = vcmp.lt.s32.totalorder %v485, 255
      %vm743 = vcmp.lt.s32.totalorder %v486, 255
      %vm744 = vcmp.lt.s32.totalorder %v487, 255
      %vm745 = vcmp.lt.s32.totalorder %v488, 255
      %vm746 = vcmp.lt.s32.totalorder %v489, 255
      %vm747 = vcmp.lt.s32.totalorder %v490, 255
      %vm748 = vcmp.lt.s32.totalorder %v491, 255
      %vm749 = vcmp.lt.s32.totalorder %v492, 255
      %vm750 = vcmp.lt.s32.totalorder %v493, 255
      %vm751 = vcmp.lt.s32.totalorder %v494, 255
      %vm752 = vcmp.lt.s32.totalorder %v495, 255
      %vm753 = vcmp.lt.s32.totalorder %v496, 255
      %vm754 = vcmp.lt.s32.totalorder %v497, 255
      %vm755 = vcmp.lt.s32.totalorder %v498, 255
      %vm756 = vcmp.lt.s32.totalorder %v499, 255
      %vm757 = vcmp.lt.s32.totalorder %v500, 255
      %vm758 = vcmp.lt.s32.totalorder %v501, 255
      %vm759 = vcmp.lt.s32.totalorder %v502, 255
      %vm760 = vcmp.lt.s32.totalorder %v503, 255
      %vm761 = vcmp.lt.s32.totalorder %v504, 255
      %vm762 = vcmp.lt.s32.totalorder %v505, 255
      %vm763 = vcmp.lt.s32.totalorder %v506, 255
      %v764 = vrot.slane %v442, 1
      %v765 = vrot.slane %v443, 1
      %v766 = vrot.slane %v444, 1
      %v767 = vrot.slane %v445, 1
      %v768 = vrot.slane %v446, 1
      %v769 = vrot.slane %v447, 1
      %v770 = vrot.slane %v448, 1
      %v771 = vrot.slane %v449, 1
      %v772 = vrot.slane %v450, 1
      %v773 = vrot.slane %v451, 1
      %v774 = vrot.slane %v452, 1
      %v775 = vrot.slane %v453, 1
      %v776 = vrot.slane %v454, 1
      %v777 = vrot.slane %v455, 1
      %v778 = vrot.slane %v456, 1
      %v779 = vrot.slane %v457, 1
      %v780 = vrot.slane %v458, 1
      %v781 = vrot.slane %v459, 1
      %v782 = vrot.slane %v460, 1
      %v783 = vrot.slane %v461, 1
      %v784 = vrot.slane %v462, 1
      %v785 = vrot.slane %v463, 1
      %v786 = vrot.slane %v464, 1
      %v787 = vrot.slane %v465, 1
      %v788 = vrot.slane %v466, 1
      %v789 = vrot.slane %v467, 1
      %v790 = vrot.slane %v468, 1
      %v791 = vrot.slane %v469, 1
      %v792 = vrot.slane %v470, 1
      %v793 = vrot.slane %v471, 1
      %v794 = vrot.slane %v472, 1
      %v795 = vrot.slane %v473, 1
      %vm796 = vcmp.lt.s32.totalorder %v475, 7
      %v797 = vsel %vm796, %v794, %v795
      %v798 = vsel %vm796, %v793, %v794
      %v799 = vsel %vm796, %v792, %v793
      %v800 = vsel %vm796, %v791, %v792
      %v801 = vsel %vm796, %v790, %v791
      %v802 = vsel %vm796, %v789, %v790
      %v803 = vsel %vm796, %v788, %v789
      %v804 = vsel %vm796, %v787, %v788
      %v805 = vsel %vm796, %v786, %v787
      %v806 = vsel %vm796, %v785, %v786
      %v807 = vsel %vm796, %v784, %v785
      %v808 = vsel %vm796, %v783, %v784
      %v809 = vsel %vm796, %v782, %v783
      %v810 = vsel %vm796, %v781, %v782
      %v811 = vsel %vm796, %v780, %v781
      %v812 = vsel %vm796, %v779, %v780
      %v813 = vsel %vm796, %v778, %v779
      %v814 = vsel %vm796, %v777, %v778
      %v815 = vsel %vm796, %v776, %v777
      %v816 = vsel %vm796, %v775, %v776
      %v817 = vsel %vm796, %v774, %v775
      %v818 = vsel %vm796, %v773, %v774
      %v819 = vsel %vm796, %v772, %v773
      %v820 = vsel %vm796, %v771, %v772
      %v821 = vsel %vm796, %v770, %v771
      %v822 = vsel %vm796, %v769, %v770
      %v823 = vsel %vm796, %v768, %v769
      %v824 = vsel %vm796, %v767, %v768
      %v825 = vsel %vm796, %v766, %v767
      %v826 = vsel %vm796, %v765, %v766
      %v827 = vsel %vm796, %v764, %v765
      %v828 = vsel %vm796, %v795, %v764
      %v829 = vsel %vm732, 1, 0
      %v830 = vsel %vm733, 1, 0
      %v831 = vsel %vm734, 1, 0
      %v832 = vsel %vm735, 1, 0
      %v833 = vsel %vm736, 1, 0
      %v834 = vsel %vm737, 1, 0
      %v835 = vsel %vm738, 1, 0
      %v836 = vsel %vm739, 1, 0
      %v837 = vsel %vm740, 1, 0
      %v838 = vsel %vm741, 1, 0
      %v839 = vsel %vm742, 1, 0
      %v840 = vsel %vm743, 1, 0
      %v841 = vsel %vm744, 1, 0
      %v842 = vsel %vm745, 1, 0
      %v843 = vsel %vm746, 1, 0
      %v844 = vsel %vm747, 1, 0
      %v845 = vsel %vm748, 1, 0
      %v846 = vsel %vm749, 1, 0
      %v847 = vsel %vm750, 1, 0
      %v848 = vsel %vm751, 1, 0
      %v849 = vsel %vm752, 1, 0
      %v850 = vsel %vm753, 1, 0
      %v851 = vsel %vm754, 1, 0
      %v852 = vsel %vm755, 1, 0
      %v853 = vsel %vm756, 1, 0
      %v854 = vsel %vm757, 1, 0
      %v855 = vsel %vm758, 1, 0
      %v856 = vsel %vm759, 1, 0
      %v857 = vsel %vm760, 1, 0
      %v858 = vsel %vm761, 1, 0
      %v859 = vsel %vm762, 1, 0
      %v860 = vsel %vm763, 1, 0
      %vm861 = vcmp.eq.s32.totalorder %v829, 1
      %vm862 = vcmp.eq.s32.totalorder %v830, 1
      %vm863 = vcmp.eq.s32.totalorder %v831, 1
      %vm864 = vcmp.eq.s32.totalorder %v832, 1
      %vm865 = vcmp.eq.s32.totalorder %v833, 1
      %vm866 = vcmp.eq.s32.totalorder %v834, 1
      %vm867 = vcmp.eq.s32.totalorder %v835, 1
      %vm868 = vcmp.eq.s32.totalorder %v836, 1
      %vm869 = vcmp.eq.s32.totalorder %v837, 1
      %vm870 = vcmp.eq.s32.totalorder %v838, 1
      %vm871 = vcmp.eq.s32.totalorder %v839, 1
      %vm872 = vcmp.eq.s32.totalorder %v840, 1
      %vm873 = vcmp.eq.s32.totalorder %v841, 1
      %vm874 = vcmp.eq.s32.totalorder %v842, 1
      %vm875 = vcmp.eq.s32.totalorder %v843, 1
      %vm876 = vcmp.eq.s32.totalorder %v844, 1
      %vm877 = vcmp.eq.s32.totalorder %v845, 1
      %vm878 = vcmp.eq.s32.totalorder %v846, 1
      %vm879 = vcmp.eq.s32.totalorder %v847, 1
      %vm880 = vcmp.eq.s32.totalorder %v848, 1
      %vm881 = vcmp.eq.s32.totalorder %v849, 1
      %vm882 = vcmp.eq.s32.totalorder %v850, 1
      %vm883 = vcmp.eq.s32.totalorder %v851, 1
      %vm884 = vcmp.eq.s32.totalorder %v852, 1
      %vm885 = vcmp.eq.s32.totalorder %v853, 1
      %vm886 = vcmp.eq.s32.totalorder %v854, 1
      %vm887 = vcmp.eq.s32.totalorder %v855, 1
      %vm888 = vcmp.eq.s32.totalorder %v856, 1
      %vm889 = vcmp.eq.s32.totalorder %v857, 1
      %vm890 = vcmp.eq.s32.totalorder %v858, 1
      %vm891 = vcmp.eq.s32.totalorder %v859, 1
      %vm892 = vcmp.eq.s32.totalorder %v860, 1
      %v893 = vsel %vm861, %v827, 0.0
      %v894 = vsel %vm862, %v826, 0.0
      %v895 = vsel %vm863, %v825, 0.0
      %v896 = vsel %vm864, %v824, 0.0
      %v897 = vsel %vm865, %v823, 0.0
      %v898 = vsel %vm866, %v822, 0.0
      %v899 = vsel %vm867, %v821, 0.0
      %v900 = vsel %vm868, %v820, 0.0
      %v901 = vsel %vm869, %v819, 0.0
      %v902 = vsel %vm870, %v818, 0.0
      %v903 = vsel %vm871, %v817, 0.0
      %v904 = vsel %vm872, %v816, 0.0
      %v905 = vsel %vm873, %v815, 0.0
      %v906 = vsel %vm874, %v814, 0.0
      %v907 = vsel %vm875, %v813, 0.0
      %v908 = vsel %vm876, %v812, 0.0
      %v909 = vsel %vm877, %v811, 0.0
      %v910 = vsel %vm878, %v810, 0.0
      %v911 = vsel %vm879, %v809, 0.0
      %v912 = vsel %vm880, %v808, 0.0
      %v913 = vsel %vm881, %v807, 0.0
      %v914 = vsel %vm882, %v806, 0.0
      %v915 = vsel %vm883, %v805, 0.0
      %v916 = vsel %vm884, %v804, 0.0
      %v917 = vsel %vm885, %v803, 0.0
      %v918 = vsel %vm886, %v802, 0.0
      %v919 = vsel %vm887, %v801, 0.0
      %v920 = vsel %vm888, %v800, 0.0
      %v921 = vsel %vm889, %v799, 0.0
      %v922 = vsel %vm890, %v798, 0.0
      %v923 = vsel %vm891, %v797, 0.0
      %v924 = vsel %vm892, %v828, 0.0
      %v925 = vpack.c.bf16 %v894, %v893
      %v926 = vpack.c.bf16 %v896, %v895
      %v927 = vpack.c.bf16 %v898, %v897
      %v928 = vpack.c.bf16 %v900, %v899
      %v929 = vpack.c.bf16 %v902, %v901
      %v930 = vpack.c.bf16 %v904, %v903
      %v931 = vpack.c.bf16 %v906, %v905
      %v932 = vpack.c.bf16 %v908, %v907
      %v933 = vpack.c.bf16 %v910, %v909
      %v934 = vpack.c.bf16 %v912, %v911
      %v935 = vpack.c.bf16 %v914, %v913
      %v936 = vpack.c.bf16 %v916, %v915
      %v937 = vpack.c.bf16 %v918, %v917
      %v938 = vpack.c.bf16 %v920, %v919
      %v939 = vpack.c.bf16 %v922, %v921
      %v940 = vpack.c.bf16 %v924, %v923
      %v941 = vld [vmem:[%s3] sm:$0xf]
      %v942 = vld [vmem:[%s3 + $0x4] sm:$0xf]
      %v943 = vld [vmem:[%s3 + $0x8] sm:$0xf]
      %v944 = vld [vmem:[%s3 + $0xc] sm:$0xf]
      %v945 = vld [vmem:[%s3 + $0x10] sm:$0xf]
      %v946 = vld [vmem:[%s3 + $0x14] sm:$0xf]
      %v947 = vld [vmem:[%s3 + $0x18] sm:$0xf]
      %v948 = vld [vmem:[%s3 + $0x1c] sm:$0xf]
      %v949 = vld [vmem:[%s3 + $0x20] sm:$0xf]
      %v950 = vld [vmem:[%s3 + $0x24] sm:$0xf]
      %v951 = vld [vmem:[%s3 + $0x28] sm:$0xf]
      %v952 = vld [vmem:[%s3 + $0x2c] sm:$0xf]
      %v953 = vld [vmem:[%s3 + $0x30] sm:$0xf]
      %v954 = vld [vmem:[%s3 + $0x34] sm:$0xf]
      %v955 = vld [vmem:[%s3 + $0x38] sm:$0xf]
      %v956 = vld [vmem:[%s3 + $0x3c] sm:$0xf]
      %v957 = vld [vmem:[%s3 + $0x40] sm:$0xf]
      %v958 = vld [vmem:[%s3 + $0x44] sm:$0xf]
      %v959 = vld [vmem:[%s3 + $0x48] sm:$0xf]
      %v960 = vld [vmem:[%s3 + $0x4c] sm:$0xf]
      %v961 = vld [vmem:[%s3 + $0x50] sm:$0xf]
      %v962 = vld [vmem:[%s3 + $0x54] sm:$0xf]
      %v963 = vld [vmem:[%s3 + $0x58] sm:$0xf]
      %v964 = vld [vmem:[%s3 + $0x5c] sm:$0xf]
      %v965 = vld [vmem:[%s3 + $0x60] sm:$0xf]
      %v966 = vld [vmem:[%s3 + $0x64] sm:$0xf]
      %v967 = vld [vmem:[%s3 + $0x68] sm:$0xf]
      %v968 = vld [vmem:[%s3 + $0x6c] sm:$0xf]
      %v969 = vld [vmem:[%s3 + $0x70] sm:$0xf]
      %v970 = vld [vmem:[%s3 + $0x74] sm:$0xf]
      %v971 = vld [vmem:[%s3 + $0x78] sm:$0xf]
      %v972 = vld [vmem:[%s3 + $0x7c] sm:$0xf]
      %v973 = vld [vmem:[%s3 + $0x80] sm:$0xf]
      %v974 = vld [vmem:[%s3 + $0x84] sm:$0xf]
      %v975 = vld [vmem:[%s3 + $0x88] sm:$0xf]
      %v976 = vld [vmem:[%s3 + $0x8c] sm:$0xf]
      %v977 = vld [vmem:[%s3 + $0x90] sm:$0xf]
      %v978 = vld [vmem:[%s3 + $0x94] sm:$0xf]
      %v979 = vld [vmem:[%s3 + $0x98] sm:$0xf]
      %v980 = vld [vmem:[%s3 + $0x9c] sm:$0xf]
      %v981 = vld [vmem:[%s3 + $0xa0] sm:$0xf]
      %v982 = vld [vmem:[%s3 + $0xa4] sm:$0xf]
      %v983 = vld [vmem:[%s3 + $0xa8] sm:$0xf]
      %v984 = vld [vmem:[%s3 + $0xac] sm:$0xf]
      %v985 = vld [vmem:[%s3 + $0xb0] sm:$0xf]
      %v986 = vld [vmem:[%s3 + $0xb4] sm:$0xf]
      %v987 = vld [vmem:[%s3 + $0xb8] sm:$0xf]
      %v988 = vld [vmem:[%s3 + $0xbc] sm:$0xf]
      %v989 = vld [vmem:[%s4] sm:$0x1]
      %v991 = vlaneseq
      %v992 = vshrl.u32 %v991, 7
      %v993 = vsub.s32 0, %v992
      %v994 = vrot.slane %v989, %v993
      %v1044 = vunpack.c.l.b16 %v941
      %v1045 = vunpack.c.l.b16 %v942
      %v1046 = vunpack.c.l.b16 %v943
      %v1047 = vunpack.c.l.b16 %v944
      %v1048 = vunpack.c.l.b16 %v945
      %v1049 = vunpack.c.l.b16 %v946
      %v1050 = vunpack.c.l.b16 %v947
      %v1051 = vunpack.c.l.b16 %v948
      %v1052 = vunpack.c.l.b16 %v949
      %v1053 = vunpack.c.l.b16 %v950
      %v1054 = vunpack.c.l.b16 %v951
      %v1055 = vunpack.c.l.b16 %v952
      %v1056 = vunpack.c.l.b16 %v953
      %v1057 = vunpack.c.l.b16 %v954
      %v1058 = vunpack.c.l.b16 %v955
      %v1059 = vunpack.c.l.b16 %v956
      %v1060 = vunpack.c.l.b16 %v957
      %v1061 = vunpack.c.l.b16 %v958
      %v1062 = vunpack.c.l.b16 %v959
      %v1063 = vunpack.c.l.b16 %v960
      %v1064 = vunpack.c.l.b16 %v961
      %v1065 = vunpack.c.l.b16 %v962
      %v1066 = vunpack.c.l.b16 %v963
      %v1067 = vunpack.c.l.b16 %v964
      %v1068 = vunpack.c.l.b16 %v965
      %v1069 = vunpack.c.l.b16 %v966
      %v1070 = vunpack.c.l.b16 %v967
      %v1071 = vunpack.c.l.b16 %v968
      %v1072 = vunpack.c.l.b16 %v969
      %v1073 = vunpack.c.l.b16 %v970
      %v1074 = vunpack.c.l.b16 %v971
      %v1075 = vunpack.c.l.b16 %v972
      %v1076 = vunpack.c.l.b16 %v973
      %v1077 = vunpack.c.l.b16 %v974
      %v1078 = vunpack.c.l.b16 %v975
      %v1079 = vunpack.c.l.b16 %v976
      %v1080 = vunpack.c.l.b16 %v977
      %v1081 = vunpack.c.l.b16 %v978
      %v1082 = vunpack.c.l.b16 %v979
      %v1083 = vunpack.c.l.b16 %v980
      %v1084 = vunpack.c.l.b16 %v981
      %v1085 = vunpack.c.l.b16 %v982
      %v1086 = vunpack.c.l.b16 %v983
      %v1087 = vunpack.c.l.b16 %v984
      %v1088 = vunpack.c.l.b16 %v985
      %v1089 = vunpack.c.l.b16 %v986
      %v1090 = vunpack.c.l.b16 %v987
      %v1091 = vunpack.c.l.b16 %v988
      %v1092 = vpack.c.b16 %v1045, %v1044
      %v1093 = vpack.c.b16 %v1047, %v1046
      %v1094 = vpack.c.b16 %v1049, %v1048
      %v1095 = vpack.c.b16 %v1051, %v1050
      %v1096 = vpack.c.b16 %v1053, %v1052
      %v1097 = vpack.c.b16 %v1055, %v1054
      %v1098 = vpack.c.b16 %v1057, %v1056
      %v1099 = vpack.c.b16 %v1059, %v1058
      %v1100 = vpack.c.b16 %v1061, %v1060
      %v1101 = vpack.c.b16 %v1063, %v1062
      %v1102 = vpack.c.b16 %v1065, %v1064
      %v1103 = vpack.c.b16 %v1067, %v1066
      %v1104 = vpack.c.b16 %v1069, %v1068
      %v1105 = vpack.c.b16 %v1071, %v1070
      %v1106 = vpack.c.b16 %v1073, %v1072
      %v1107 = vpack.c.b16 %v1075, %v1074
      %v1108 = vpack.c.b16 %v1077, %v1076
      %v1109 = vpack.c.b16 %v1079, %v1078
      %v1110 = vpack.c.b16 %v1081, %v1080
      %v1111 = vpack.c.b16 %v1083, %v1082
      %v1112 = vpack.c.b16 %v1085, %v1084
      %v1113 = vpack.c.b16 %v1087, %v1086
      %v1114 = vpack.c.b16 %v1089, %v1088
      %v1115 = vpack.c.b16 %v1091, %v1090
      %1140 = vmatprep.subr.bf16.mxu0 0
      %1141 = vmatpush1.bf16.msra.mxu0 %v1092
      %1142 = vmatprep.subr.bf16.mxu0 0
      %1143 = vmatpush1.bf16.msra.mxu0 %v1093
      %1144 = vmatprep.subr.bf16.mxu0 0
      %1145 = vmatpush1.bf16.msra.mxu0 %v1094
      %1146 = vmatprep.subr.bf16.mxu0 0
      %1147 = vmatpush1.bf16.msra.mxu0 %v1095
      %1148 = vmatprep.subr.bf16.mxu0 0
      %1149 = vmatpush1.bf16.msra.mxu0 %v1096
      %1150 = vmatprep.subr.bf16.mxu0 0
      %1151 = vmatpush1.bf16.msra.mxu0 %v1097
      %1152 = vmatprep.subr.bf16.mxu0 0
      %1153 = vmatpush1.bf16.msra.mxu0 %v1098
      %1154 = vmatprep.subr.bf16.mxu0 0
      %1155 = vmatpush1.bf16.msra.mxu0 %v1099
      %1156 = vmatprep.subr.bf16.mxu0 0
      %1157 = vmatpush1.bf16.msra.mxu0 %v1100
      %1158 = vmatprep.subr.bf16.mxu0 0
      %1159 = vmatpush1.bf16.msra.mxu0 %v1101
      %1160 = vmatprep.subr.bf16.mxu0 0
      %1161 = vmatpush1.bf16.msra.mxu0 %v1102
      %1162 = vmatprep.subr.bf16.mxu0 0
      %1163 = vmatpush1.bf16.msra.mxu0 %v1103
      %1164 = vmatprep.subr.bf16.mxu0 0
      %1165 = vmatpush1.bf16.msra.mxu0 %v1104
      %1166 = vmatprep.subr.bf16.mxu0 0
      %1167 = vmatpush1.bf16.msra.mxu0 %v1105
      %1168 = vmatprep.subr.bf16.mxu0 0
      %1169 = vmatpush1.bf16.msra.mxu0 %v1106
      %1170 = vmatprep.subr.bf16.mxu0 0
      %1171 = vmatpush1.bf16.msra.mxu0 %v1107
      %1172 = vmatprep.mubr.bf16.mxu0 %v507
      %1173 = vmatmul.mubr.bf16.gmra.mrb[0].mxu0 %v716
      %v1174 = vpop.f32.mrb[0].mxu0
      %v1175 = vadd.f32 %v994, %v1174
      %v1176 = vpop.f32.mrb[0].mxu0
      %v1177 = vpop.f32.mrb[0].mxu0
      %v1178 = vadd.f32 %v994, %v1177
      %v1179 = vpop.f32.mrb[0].mxu0
      %1180 = vmatprep.mubr.bf16.mxu0 %v508
      %1181 = vmatmul.mubr.bf16.gmra.mrb[0].mxu0 %v717
      %v1182 = vpop.f32.mrb[0].mxu0
      %v1183 = vadd.f32 %v994, %v1182
      %v1184 = vpop.f32.mrb[0].mxu0
      %v1185 = vpop.f32.mrb[0].mxu0
      %v1186 = vadd.f32 %v994, %v1185
      %v1187 = vpop.f32.mrb[0].mxu0
      %1188 = vmatprep.mubr.bf16.mxu0 %v509
      %1189 = vmatmul.mubr.bf16.gmra.mrb[0].mxu0 %v718
      %v1190 = vpop.f32.mrb[0].mxu0
      %v1191 = vadd.f32 %v994, %v1190
      %v1192 = vpop.f32.mrb[0].mxu0
      %v1193 = vpop.f32.mrb[0].mxu0
      %v1194 = vadd.f32 %v994, %v1193
      %v1195 = vpop.f32.mrb[0].mxu0
      %1196 = vmatprep.mubr.bf16.mxu0 %v510
      %1197 = vmatmul.mubr.bf16.gmra.mrb[0].mxu0 %v719
      %v1198 = vpop.f32.mrb[0].mxu0
      %v1199 = vadd.f32 %v994, %v1198
      %v1200 = vpop.f32.mrb[0].mxu0
      %v1201 = vpop.f32.mrb[0].mxu0
      %v1202 = vadd.f32 %v994, %v1201
      %v1203 = vpop.f32.mrb[0].mxu0
      %1204 = vmatprep.mubr.bf16.mxu0 %v511
      %1205 = vmatmul.mubr.bf16.gmra.mrb[0].mxu0 %v720
      %v1206 = vpop.f32.mrb[0].mxu0
      %v1207 = vadd.f32 %v994, %v1206
      %v1208 = vpop.f32.mrb[0].mxu0
      %v1209 = vpop.f32.mrb[0].mxu0
      %v1210 = vadd.f32 %v994, %v1209
      %v1211 = vpop.f32.mrb[0].mxu0
      %1212 = vmatprep.mubr.bf16.mxu0 %v512
      %1213 = vmatmul.mubr.bf16.gmra.mrb[0].mxu0 %v721
      %v1214 = vpop.f32.mrb[0].mxu0
      %v1215 = vadd.f32 %v994, %v1214
      %v1216 = vpop.f32.mrb[0].mxu0
      %v1217 = vpop.f32.mrb[0].mxu0
      %v1218 = vadd.f32 %v994, %v1217
      %v1219 = vpop.f32.mrb[0].mxu0
      %1220 = vmatprep.mubr.bf16.mxu0 %v513
      %1221 = vmatmul.mubr.bf16.gmra.mrb[0].mxu0 %v722
      %v1222 = vpop.f32.mrb[0].mxu0
      %v1223 = vadd.f32 %v994, %v1222
      %v1224 = vpop.f32.mrb[0].mxu0
      %v1225 = vpop.f32.mrb[0].mxu0
      %v1226 = vadd.f32 %v994, %v1225
      %v1227 = vpop.f32.mrb[0].mxu0
      %1228 = vmatprep.mubr.bf16.mxu0 %v514
      %1229 = vmatmul.mubr.bf16.gmra.mrb[0].mxu0 %v723
      %v1230 = vpop.f32.mrb[0].mxu0
      %v1231 = vadd.f32 %v994, %v1230
      %v1232 = vpop.f32.mrb[0].mxu0
      %v1233 = vpop.f32.mrb[0].mxu0
      %v1234 = vadd.f32 %v994, %v1233
      %v1235 = vpop.f32.mrb[0].mxu0
      %1236 = vmatprep.mubr.bf16.mxu0 %v515
      %1237 = vmatmul.mubr.bf16.gmra.mrb[0].mxu0 %v724
      %v1238 = vpop.f32.mrb[0].mxu0
      %v1239 = vadd.f32 %v994, %v1238
      %v1240 = vpop.f32.mrb[0].mxu0
      %v1241 = vpop.f32.mrb[0].mxu0
      %v1242 = vadd.f32 %v994, %v1241
      %v1243 = vpop.f32.mrb[0].mxu0
      %1244 = vmatprep.mubr.bf16.mxu0 %v516
      %1245 = vmatmul.mubr.bf16.gmra.mrb[0].mxu0 %v725
      %v1246 = vpop.f32.mrb[0].mxu0
      %v1247 = vadd.f32 %v994, %v1246
      %v1248 = vpop.f32.mrb[0].mxu0
      %v1249 = vpop.f32.mrb[0].mxu0
      %v1250 = vadd.f32 %v994, %v1249
      %v1251 = vpop.f32.mrb[0].mxu0
      %1252 = vmatprep.mubr.bf16.mxu0 %v517
      %1253 = vmatmul.mubr.bf16.gmra.mrb[0].mxu0 %v726
      %v1254 = vpop.f32.mrb[0].mxu0
      %v1255 = vadd.f32 %v994, %v1254
      %v1256 = vpop.f32.mrb[0].mxu0
      %v1257 = vpop.f32.mrb[0].mxu0
      %v1258 = vadd.f32 %v994, %v1257
      %v1259 = vpop.f32.mrb[0].mxu0
      %1260 = vmatprep.mubr.bf16.mxu0 %v518
      %1261 = vmatmul.mubr.bf16.gmra.mrb[0].mxu0 %v727
      %v1262 = vpop.f32.mrb[0].mxu0
      %v1263 = vadd.f32 %v994, %v1262
      %v1264 = vpop.f32.mrb[0].mxu0
      %v1265 = vpop.f32.mrb[0].mxu0
      %v1266 = vadd.f32 %v994, %v1265
      %v1267 = vpop.f32.mrb[0].mxu0
      %1268 = vmatprep.mubr.bf16.mxu0 %v519
      %1269 = vmatmul.mubr.bf16.gmra.mrb[0].mxu0 %v728
      %v1270 = vpop.f32.mrb[0].mxu0
      %v1271 = vadd.f32 %v994, %v1270
      %v1272 = vpop.f32.mrb[0].mxu0
      %v1273 = vpop.f32.mrb[0].mxu0
      %v1274 = vadd.f32 %v994, %v1273
      %v1275 = vpop.f32.mrb[0].mxu0
      %1276 = vmatprep.mubr.bf16.mxu0 %v520
      %1277 = vmatmul.mubr.bf16.gmra.mrb[0].mxu0 %v729
      %v1278 = vpop.f32.mrb[0].mxu0
      %v1279 = vadd.f32 %v994, %v1278
      %v1280 = vpop.f32.mrb[0].mxu0
      %v1281 = vpop.f32.mrb[0].mxu0
      %v1282 = vadd.f32 %v994, %v1281
      %v1283 = vpop.f32.mrb[0].mxu0
      %1284 = vmatprep.mubr.bf16.mxu0 %v521
      %1285 = vmatmul.mubr.bf16.gmra.mrb[0].mxu0 %v730
      %v1286 = vpop.f32.mrb[0].mxu0
      %v1287 = vadd.f32 %v994, %v1286
      %v1288 = vpop.f32.mrb[0].mxu0
      %v1289 = vpop.f32.mrb[0].mxu0
      %v1290 = vadd.f32 %v994, %v1289
      %v1291 = vpop.f32.mrb[0].mxu0
      %1292 = vmatprep.mubr.bf16.mxu0 %v522
      %1293 = vmatmul.mubr.bf16.gmra.mrb[0].mxu0 %v731
      %v1294 = vpop.f32.mrb[0].mxu0
      %v1295 = vadd.f32 %v994, %v1294
      %v1296 = vpop.f32.mrb[0].mxu0
      %v1297 = vpop.f32.mrb[0].mxu0
      %v1298 = vadd.f32 %v994, %v1297
      %v1299 = vpop.f32.mrb[0].mxu0
      %1300 = vdwg.mxu0
      %1301 = vmatprep.subr.bf16.mxu0 0
      %1302 = vmatpush1.bf16.msra.mxu0 %v1108
      %1303 = vmatprep.subr.bf16.mxu0 0
      %1304 = vmatpush1.bf16.msra.mxu0 %v1109
      %1305 = vmatprep.subr.bf16.mxu0 0
      %1306 = vmatpush1.bf16.msra.mxu0 %v1110
      %1307 = vmatprep.subr.bf16.mxu0 0
      %1308 = vmatpush1.bf16.msra.mxu0 %v1111
      %1309 = vmatprep.subr.bf16.mxu0 0
      %1310 = vmatpush1.bf16.msra.mxu0 %v1112
      %1311 = vmatprep.subr.bf16.mxu0 0
      %1312 = vmatpush1.bf16.msra.mxu0 %v1113
      %1313 = vmatprep.subr.bf16.mxu0 0
      %1314 = vmatpush1.bf16.msra.mxu0 %v1114
      %1315 = vmatprep.subr.bf16.mxu0 0
      %1316 = vmatpush1.bf16.msra.mxu0 %v1115
      %1317 = vmatprep.subr.bf16.mxu0 0
      %1318 = vmatpush1.bf16.msra.mxu0 0
      %1319 = vmatprep.subr.bf16.mxu0 0
      %1320 = vmatpush1.bf16.msra.mxu0 0
      %1321 = vmatprep.subr.bf16.mxu0 0
      %1322 = vmatpush1.bf16.msra.mxu0 0
      %1323 = vmatprep.subr.bf16.mxu0 0
      %1324 = vmatpush1.bf16.msra.mxu0 0
      %1325 = vmatprep.subr.bf16.mxu0 0
      %1326 = vmatpush1.bf16.msra.mxu0 0
      %1327 = vmatprep.subr.bf16.mxu0 0
      %1328 = vmatpush1.bf16.msra.mxu0 0
      %1329 = vmatprep.subr.bf16.mxu0 0
      %1330 = vmatpush1.bf16.msra.mxu0 0
      %1331 = vmatprep.subr.bf16.mxu0 0
      %1332 = vmatpush1.bf16.msra.mxu0 0
      %1333 = vmatprep.mubr.bf16.mxu0 0
      %1334 = vmatmul.mubr.bf16.gmra.mrb[0].mxu0 %v925
      %v1335 = vpop.f32.mrb[0].mxu0
      %v1336 = vadd.f32 %v1175, %v1335
      %v1337 = vpop.f32.mrb[0].mxu0
      %v1338 = vpop.f32.mrb[0].mxu0
      %v1339 = vadd.f32 %v1178, %v1338
      %v1340 = vpop.f32.mrb[0].mxu0
      %1341 = vmatprep.mubr.bf16.mxu0 0
      %1342 = vmatmul.mubr.bf16.gmra.mrb[0].mxu0 %v926
      %v1343 = vpop.f32.mrb[0].mxu0
      %v1344 = vadd.f32 %v1183, %v1343
      %v1345 = vpop.f32.mrb[0].mxu0
      %v1346 = vpop.f32.mrb[0].mxu0
      %v1347 = vadd.f32 %v1186, %v1346
      %v1348 = vpop.f32.mrb[0].mxu0
      %1349 = vmatprep.mubr.bf16.mxu0 0
      %1350 = vmatmul.mubr.bf16.gmra.mrb[0].mxu0 %v927
      %v1351 = vpop.f32.mrb[0].mxu0
      %v1352 = vadd.f32 %v1191, %v1351
      %v1353 = vpop.f32.mrb[0].mxu0
      %v1354 = vpop.f32.mrb[0].mxu0
      %v1355 = vadd.f32 %v1194, %v1354
      %v1356 = vpop.f32.mrb[0].mxu0
      %1357 = vmatprep.mubr.bf16.mxu0 0
      %1358 = vmatmul.mubr.bf16.gmra.mrb[0].mxu0 %v928
      %v1359 = vpop.f32.mrb[0].mxu0
      %v1360 = vadd.f32 %v1199, %v1359
      %v1361 = vpop.f32.mrb[0].mxu0
      %v1362 = vpop.f32.mrb[0].mxu0
      %v1363 = vadd.f32 %v1202, %v1362
      %v1364 = vpop.f32.mrb[0].mxu0
      %1365 = vmatprep.mubr.bf16.mxu0 0
      %1366 = vmatmul.mubr.bf16.gmra.mrb[0].mxu0 %v929
      %v1367 = vpop.f32.mrb[0].mxu0
      %v1368 = vadd.f32 %v1207, %v1367
      %v1369 = vpop.f32.mrb[0].mxu0
      %v1370 = vpop.f32.mrb[0].mxu0
      %v1371 = vadd.f32 %v1210, %v1370
      %v1372 = vpop.f32.mrb[0].mxu0
      %1373 = vmatprep.mubr.bf16.mxu0 0
      %1374 = vmatmul.mubr.bf16.gmra.mrb[0].mxu0 %v930
      %v1375 = vpop.f32.mrb[0].mxu0
      %v1376 = vadd.f32 %v1215, %v1375
      %v1377 = vpop.f32.mrb[0].mxu0
      %v1378 = vpop.f32.mrb[0].mxu0
      %v1379 = vadd.f32 %v1218, %v1378
      %v1380 = vpop.f32.mrb[0].mxu0
      %1381 = vmatprep.mubr.bf16.mxu0 0
      %1382 = vmatmul.mubr.bf16.gmra.mrb[0].mxu0 %v931
      %v1383 = vpop.f32.mrb[0].mxu0
      %v1384 = vadd.f32 %v1223, %v1383
      %v1385 = vpop.f32.mrb[0].mxu0
      %v1386 = vpop.f32.mrb[0].mxu0
      %v1387 = vadd.f32 %v1226, %v1386
      %v1388 = vpop.f32.mrb[0].mxu0
      %1389 = vmatprep.mubr.bf16.mxu0 0
      %1390 = vmatmul.mubr.bf16.gmra.mrb[0].mxu0 %v932
      %v1391 = vpop.f32.mrb[0].mxu0
      %v1392 = vadd.f32 %v1231, %v1391
      %v1393 = vpop.f32.mrb[0].mxu0
      %v1394 = vpop.f32.mrb[0].mxu0
      %v1395 = vadd.f32 %v1234, %v1394
      %v1396 = vpop.f32.mrb[0].mxu0
      %1397 = vmatprep.mubr.bf16.mxu0 0
      %1398 = vmatmul.mubr.bf16.gmra.mrb[0].mxu0 %v933
      %v1399 = vpop.f32.mrb[0].mxu0
      %v1400 = vadd.f32 %v1239, %v1399
      %v1401 = vpop.f32.mrb[0].mxu0
      %v1402 = vpop.f32.mrb[0].mxu0
      %v1403 = vadd.f32 %v1242, %v1402
      %v1404 = vpop.f32.mrb[0].mxu0
      %1405 = vmatprep.mubr.bf16.mxu0 0
      %1406 = vmatmul.mubr.bf16.gmra.mrb[0].mxu0 %v934
      %v1407 = vpop.f32.mrb[0].mxu0
      %v1408 = vadd.f32 %v1247, %v1407
      %v1409 = vpop.f32.mrb[0].mxu0
      %v1410 = vpop.f32.mrb[0].mxu0
      %v1411 = vadd.f32 %v1250, %v1410
      %v1412 = vpop.f32.mrb[0].mxu0
      %1413 = vmatprep.mubr.bf16.mxu0 0
      %1414 = vmatmul.mubr.bf16.gmra.mrb[0].mxu0 %v935
      %v1415 = vpop.f32.mrb[0].mxu0
      %v1416 = vadd.f32 %v1255, %v1415
      %v1417 = vpop.f32.mrb[0].mxu0
      %v1418 = vpop.f32.mrb[0].mxu0
      %v1419 = vadd.f32 %v1258, %v1418
      %v1420 = vpop.f32.mrb[0].mxu0
      %1421 = vmatprep.mubr.bf16.mxu0 0
      %1422 = vmatmul.mubr.bf16.gmra.mrb[0].mxu0 %v936
      %v1423 = vpop.f32.mrb[0].mxu0
      %v1424 = vadd.f32 %v1263, %v1423
      %v1425 = vpop.f32.mrb[0].mxu0
      %v1426 = vpop.f32.mrb[0].mxu0
      %v1427 = vadd.f32 %v1266, %v1426
      %v1428 = vpop.f32.mrb[0].mxu0
      %1429 = vmatprep.mubr.bf16.mxu0 0
      %1430 = vmatmul.mubr.bf16.gmra.mrb[0].mxu0 %v937
      %v1431 = vpop.f32.mrb[0].mxu0
      %v1432 = vadd.f32 %v1271, %v1431
      %v1433 = vpop.f32.mrb[0].mxu0
      %v1434 = vpop.f32.mrb[0].mxu0
      %v1435 = vadd.f32 %v1274, %v1434
      %v1436 = vpop.f32.mrb[0].mxu0
      %1437 = vmatprep.mubr.bf16.mxu0 0
      %1438 = vmatmul.mubr.bf16.gmra.mrb[0].mxu0 %v938
      %v1439 = vpop.f32.mrb[0].mxu0
      %v1440 = vadd.f32 %v1279, %v1439
      %v1441 = vpop.f32.mrb[0].mxu0
      %v1442 = vpop.f32.mrb[0].mxu0
      %v1443 = vadd.f32 %v1282, %v1442
      %v1444 = vpop.f32.mrb[0].mxu0
      %1445 = vmatprep.mubr.bf16.mxu0 0
      %1446 = vmatmul.mubr.bf16.gmra.mrb[0].mxu0 %v939
      %v1447 = vpop.f32.mrb[0].mxu0
      %v1448 = vadd.f32 %v1287, %v1447
      %v1449 = vpop.f32.mrb[0].mxu0
      %v1450 = vpop.f32.mrb[0].mxu0
      %v1451 = vadd.f32 %v1290, %v1450
      %v1452 = vpop.f32.mrb[0].mxu0
      %1453 = vmatprep.mubr.bf16.mxu0 0
      %1454 = vmatmul.mubr.bf16.gmra.mrb[0].mxu0 %v940
      %v1455 = vpop.f32.mrb[0].mxu0
      %v1456 = vadd.f32 %v1295, %v1455
      %v1457 = vpop.f32.mrb[0].mxu0
      %v1458 = vpop.f32.mrb[0].mxu0
      %v1459 = vadd.f32 %v1298, %v1458
      %v1460 = vpop.f32.mrb[0].mxu0
      %1461 = vdwg.mxu0
      %v1462 = vpack.c.bf16 %v1339, %v1336
      %v1463 = vpack.c.bf16 %v1347, %v1344
      %v1464 = vpack.c.bf16 %v1355, %v1352
      %v1465 = vpack.c.bf16 %v1363, %v1360
      %v1466 = vpack.c.bf16 %v1371, %v1368
      %v1467 = vpack.c.bf16 %v1379, %v1376
      %v1468 = vpack.c.bf16 %v1387, %v1384
      %v1469 = vpack.c.bf16 %v1395, %v1392
      %v1470 = vpack.c.bf16 %v1403, %v1400
      %v1471 = vpack.c.bf16 %v1411, %v1408
      %v1472 = vpack.c.bf16 %v1419, %v1416
      %v1473 = vpack.c.bf16 %v1427, %v1424
      %v1474 = vpack.c.bf16 %v1435, %v1432
      %v1475 = vpack.c.bf16 %v1443, %v1440
      %v1476 = vpack.c.bf16 %v1451, %v1448
      %v1477 = vpack.c.bf16 %v1459, %v1456
      %v1494 = vunpack.c.l.b16 %v1462
      %v1495 = vunpack.c.h.b16 %v1462
      %v1496 = vunpack.c.l.b16 %v1463
      %v1497 = vunpack.c.h.b16 %v1463
      %v1498 = vunpack.c.l.b16 %v1464
      %v1499 = vunpack.c.h.b16 %v1464
      %v1500 = vunpack.c.l.b16 %v1465
      %v1501 = vunpack.c.h.b16 %v1465
      %v1502 = vunpack.c.l.b16 %v1466
      %v1503 = vunpack.c.h.b16 %v1466
      %v1504 = vunpack.c.l.b16 %v1467
      %v1505 = vunpack.c.h.b16 %v1467
      %v1506 = vunpack.c.l.b16 %v1468
      %v1507 = vunpack.c.h.b16 %v1468
      %v1508 = vunpack.c.l.b16 %v1469
      %v1509 = vunpack.c.h.b16 %v1469
      %v1510 = vunpack.c.l.b16 %v1470
      %v1511 = vunpack.c.h.b16 %v1470
      %v1512 = vunpack.c.l.b16 %v1471
      %v1513 = vunpack.c.h.b16 %v1471
      %v1514 = vunpack.c.l.b16 %v1472
      %v1515 = vunpack.c.h.b16 %v1472
      %v1516 = vunpack.c.l.b16 %v1473
      %v1517 = vunpack.c.h.b16 %v1473
      %v1518 = vunpack.c.l.b16 %v1474
      %v1519 = vunpack.c.h.b16 %v1474
      %v1520 = vunpack.c.l.b16 %v1475
      %v1521 = vunpack.c.h.b16 %v1475
      %v1522 = vunpack.c.l.b16 %v1476
      %v1523 = vunpack.c.h.b16 %v1476
      %v1524 = vunpack.c.l.b16 %v1477
      %v1525 = vunpack.c.h.b16 %v1477
      %v1526 = vpack.c.b16 %v1494, %v1494
      %v1527 = vpack.c.b16 %v1495, %v1495
      %v1528 = vpack.c.b16 %v1496, %v1496
      %v1529 = vpack.c.b16 %v1497, %v1497
      %v1530 = vpack.c.b16 %v1498, %v1498
      %v1531 = vpack.c.b16 %v1499, %v1499
      %v1532 = vpack.c.b16 %v1500, %v1500
      %v1533 = vpack.c.b16 %v1501, %v1501
      %v1534 = vpack.c.b16 %v1502, %v1502
      %v1535 = vpack.c.b16 %v1503, %v1503
      %v1536 = vpack.c.b16 %v1504, %v1504
      %v1537 = vpack.c.b16 %v1505, %v1505
      %v1538 = vpack.c.b16 %v1506, %v1506
      %v1539 = vpack.c.b16 %v1507, %v1507
      %v1540 = vpack.c.b16 %v1508, %v1508
      %v1541 = vpack.c.b16 %v1509, %v1509
      %v1542 = vpack.c.b16 %v1510, %v1510
      %v1543 = vpack.c.b16 %v1511, %v1511
      %v1544 = vpack.c.b16 %v1512, %v1512
      %v1545 = vpack.c.b16 %v1513, %v1513
      %v1546 = vpack.c.b16 %v1514, %v1514
      %v1547 = vpack.c.b16 %v1515, %v1515
      %v1548 = vpack.c.b16 %v1516, %v1516
      %v1549 = vpack.c.b16 %v1517, %v1517
      %v1550 = vpack.c.b16 %v1518, %v1518
      %v1551 = vpack.c.b16 %v1519, %v1519
      %v1552 = vpack.c.b16 %v1520, %v1520
      %v1553 = vpack.c.b16 %v1521, %v1521
      %v1554 = vpack.c.b16 %v1522, %v1522
      %v1555 = vpack.c.b16 %v1523, %v1523
      %v1556 = vpack.c.b16 %v1524, %v1524
      %v1557 = vpack.c.b16 %v1525, %v1525
      %1590 = vst [vmem:[%s324] sm:$0xf] %v1526
      %1591 = vst [vmem:[%s324 + $0x4] sm:$0xf] %v1527
      %1592 = vst [vmem:[%s324 + $0x8] sm:$0xf] %v1528
      %1593 = vst [vmem:[%s324 + $0xc] sm:$0xf] %v1529
      %1594 = vst [vmem:[%s324 + $0x10] sm:$0xf] %v1530
      %1595 = vst [vmem:[%s324 + $0x14] sm:$0xf] %v1531
      %1596 = vst [vmem:[%s324 + $0x18] sm:$0xf] %v1532
      %1597 = vst [vmem:[%s324 + $0x1c] sm:$0xf] %v1533
      %1598 = vst [vmem:[%s324 + $0x20] sm:$0xf] %v1534
      %1599 = vst [vmem:[%s324 + $0x24] sm:$0xf] %v1535
      %1600 = vst [vmem:[%s324 + $0x28] sm:$0xf] %v1536
      %1601 = vst [vmem:[%s324 + $0x2c] sm:$0xf] %v1537
      %1602 = vst [vmem:[%s324 + $0x30] sm:$0xf] %v1538
      %1603 = vst [vmem:[%s324 + $0x34] sm:$0xf] %v1539
      %1604 = vst [vmem:[%s324 + $0x38] sm:$0xf] %v1540
      %1605 = vst [vmem:[%s324 + $0x3c] sm:$0xf] %v1541
      %1606 = vst [vmem:[%s324 + $0x40] sm:$0xf] %v1542
      %1607 = vst [vmem:[%s324 + $0x44] sm:$0xf] %v1543
      %1608 = vst [vmem:[%s324 + $0x48] sm:$0xf] %v1544
      %1609 = vst [vmem:[%s324 + $0x4c] sm:$0xf] %v1545
      %1610 = vst [vmem:[%s324 + $0x50] sm:$0xf] %v1546
      %1611 = vst [vmem:[%s324 + $0x54] sm:$0xf] %v1547
      %1612 = vst [vmem:[%s324 + $0x58] sm:$0xf] %v1548
      %1613 = vst [vmem:[%s324 + $0x5c] sm:$0xf] %v1549
      %1614 = vst [vmem:[%s324 + $0x60] sm:$0xf] %v1550
      %1615 = vst [vmem:[%s324 + $0x64] sm:$0xf] %v1551
      %1616 = vst [vmem:[%s324 + $0x68] sm:$0xf] %v1552
      %1617 = vst [vmem:[%s324 + $0x6c] sm:$0xf] %v1553
      %1618 = vst [vmem:[%s324 + $0x70] sm:$0xf] %v1554
      %1619 = vst [vmem:[%s324 + $0x74] sm:$0xf] %v1555
      %1620 = vst [vmem:[%s324 + $0x78] sm:$0xf] %v1556
      %1621 = vst [vmem:[%s324 + $0x7c] sm:$0xf] %v1557
      %v1622 = vadd.f32 %v1336, %v1339
      %v1623 = vadd.f32 %v1622, %v1344
      %v1624 = vadd.f32 %v1623, %v1347
      %v1625 = vadd.f32 %v1624, %v1352
      %v1626 = vadd.f32 %v1625, %v1355
      %v1627 = vadd.f32 %v1626, %v1360
      %v1628 = vadd.f32 %v1627, %v1363
      %v1629 = vadd.f32 %v1628, %v1368
      %v1630 = vadd.f32 %v1629, %v1371
      %v1631 = vadd.f32 %v1630, %v1376
      %v1632 = vadd.f32 %v1631, %v1379
      %v1633 = vadd.f32 %v1632, %v1384
      %v1634 = vadd.f32 %v1633, %v1387
      %v1635 = vadd.f32 %v1634, %v1392
      %v1636 = vadd.f32 %v1635, %v1395
      %v1637 = vadd.f32 %v1636, %v1400
      %v1638 = vadd.f32 %v1637, %v1403
      %v1639 = vadd.f32 %v1638, %v1408
      %v1640 = vadd.f32 %v1639, %v1411
      %v1641 = vadd.f32 %v1640, %v1416
      %v1642 = vadd.f32 %v1641, %v1419
      %v1643 = vadd.f32 %v1642, %v1424
      %v1644 = vadd.f32 %v1643, %v1427
      %v1645 = vadd.f32 %v1644, %v1432
      %v1646 = vadd.f32 %v1645, %v1435
      %v1647 = vadd.f32 %v1646, %v1440
      %v1648 = vadd.f32 %v1647, %v1443
      %v1649 = vadd.f32 %v1648, %v1448
      %v1650 = vadd.f32 %v1649, %v1451
      %v1651 = vadd.f32 %v1650, %v1456
      %v1652 = vadd.f32 %v1651, %v1459
      %v1653 = vrot.slane %v1652, 4
      %v1654 = vadd.f32 %v1652, %v1653
      %v1655 = vrot.slane %v1654, 2
      %v1656 = vadd.f32 %v1654, %v1655
      %v1657 = vrot.slane %v1656, 1
      %v1658 = vadd.f32 %v1656, %v1657
      %1659 = vst [vmem:[%s327] sm:$0x1] %v1658
      %v1660 = vmul.f32 %v1336, %v1336
      %v1661 = vmul.f32 %v1339, %v1339
      %v1662 = vmul.f32 %v1344, %v1344
      %v1663 = vmul.f32 %v1347, %v1347
      %v1664 = vmul.f32 %v1352, %v1352
      %v1665 = vmul.f32 %v1355, %v1355
      %v1666 = vmul.f32 %v1360, %v1360
      %v1667 = vmul.f32 %v1363, %v1363
      %v1668 = vmul.f32 %v1368, %v1368
      %v1669 = vmul.f32 %v1371, %v1371
      %v1670 = vmul.f32 %v1376, %v1376
      %v1671 = vmul.f32 %v1379, %v1379
      %v1672 = vmul.f32 %v1384, %v1384
      %v1673 = vmul.f32 %v1387, %v1387
      %v1674 = vmul.f32 %v1392, %v1392
      %v1675 = vmul.f32 %v1395, %v1395
      %v1676 = vmul.f32 %v1400, %v1400
      %v1677 = vmul.f32 %v1403, %v1403
      %v1678 = vmul.f32 %v1408, %v1408
      %v1679 = vmul.f32 %v1411, %v1411
      %v1680 = vmul.f32 %v1416, %v1416
      %v1681 = vmul.f32 %v1419, %v1419
      %v1682 = vmul.f32 %v1424, %v1424
      %v1683 = vmul.f32 %v1427, %v1427
      %v1684 = vmul.f32 %v1432, %v1432
      %v1685 = vmul.f32 %v1435, %v1435
      %v1686 = vmul.f32 %v1440, %v1440
      %v1687 = vmul.f32 %v1443, %v1443
      %v1688 = vmul.f32 %v1448, %v1448
      %v1689 = vmul.f32 %v1451, %v1451
      %v1690 = vmul.f32 %v1456, %v1456
      %v1691 = vmul.f32 %v1459, %v1459
      %v1692 = vadd.f32 %v1660, %v1661
      %v1693 = vadd.f32 %v1692, %v1662
      %v1694 = vadd.f32 %v1693, %v1663
      %v1695 = vadd.f32 %v1694, %v1664
      %v1696 = vadd.f32 %v1695, %v1665
      %v1697 = vadd.f32 %v1696, %v1666
      %v1698 = vadd.f32 %v1697, %v1667
      %v1699 = vadd.f32 %v1698, %v1668
      %v1700 = vadd.f32 %v1699, %v1669
      %v1701 = vadd.f32 %v1700, %v1670
      %v1702 = vadd.f32 %v1701, %v1671
      %v1703 = vadd.f32 %v1702, %v1672
      %v1704 = vadd.f32 %v1703, %v1673
      %v1705 = vadd.f32 %v1704, %v1674
      %v1706 = vadd.f32 %v1705, %v1675
      %v1707 = vadd.f32 %v1706, %v1676
      %v1708 = vadd.f32 %v1707, %v1677
      %v1709 = vadd.f32 %v1708, %v1678
      %v1710 = vadd.f32 %v1709, %v1679
      %v1711 = vadd.f32 %v1710, %v1680
      %v1712 = vadd.f32 %v1711, %v1681
      %v1713 = vadd.f32 %v1712, %v1682
      %v1714 = vadd.f32 %v1713, %v1683
      %v1715 = vadd.f32 %v1714, %v1684
      %v1716 = vadd.f32 %v1715, %v1685
      %v1717 = vadd.f32 %v1716, %v1686
      %v1718 = vadd.f32 %v1717, %v1687
      %v1719 = vadd.f32 %v1718, %v1688
      %v1720 = vadd.f32 %v1719, %v1689
      %v1721 = vadd.f32 %v1720, %v1690
      %v1722 = vadd.f32 %v1721, %v1691
      %v1723 = vrot.slane %v1722, 4
      %v1724 = vadd.f32 %v1722, %v1723
      %v1725 = vrot.slane %v1724, 2
      %v1726 = vadd.f32 %v1724, %v1725
      %v1727 = vrot.slane %v1726, 1
      %v1728 = vadd.f32 %v1726, %v1727
      %1729 = vst [vmem:[%s330] sm:$0x1] %v1728
      %p1730 = scmp.lt.s32.totalorder %s19, 3
      %s1731 = scalar_select %p1730, %s19, 3
      %s1732 = smul.addr %s1731, 32
      %s1733 = smul.addr %s1732, 4
      %s1734 = scalar_lea.vmem %s5, %s1733
      %p1735 = scmp.lt.s32.totalorder %s19, 3
      %s1736 = scalar_select %p1735, %s19, 3
      %s1737 = scalar_lea.vmem %s6, %s1736
      %p1738 = scmp.lt.s32.totalorder %s19, 3
      %s1739 = scalar_select %p1738, %s19, 3
      %s1740 = scalar_lea.vmem %s7, %s1739
      // Predicated region
      $region41: #{gblock_forward.8} parent=39 // pred_check
        %p1741 = pneg %p159
      $region42: #{gblock_forward.8} parent=39 // pred_check_branch
        %1743 = sbr.rel (%p1741) target = $region44
      $region43: #{gblock_forward.8} parent=39 // pred_region
        _
      $region44: #{gblock_forward.8} parent=39 // pred_fallthru
        _
      // Predicated region
      $region45: #{gblock_forward.8} parent=39 // pred_check
        %p1744 = pneg %p185
      $region46: #{gblock_forward.8} parent=39 // pred_check_branch
        %1746 = sbr.rel (%p1744) target = $region48
      $region47: #{gblock_forward.8} parent=39 // pred_region
        _
      $region48: #{gblock_forward.8} parent=39 // pred_fallthru
        _
      // Predicated region
      $region49: #{gblock_forward.8} parent=39 // pred_check
        %p1747 = pneg %p211
      $region50: #{gblock_forward.8} parent=39 // pred_check_branch
        %1749 = sbr.rel (%p1747) target = $region52
      $region51: #{gblock_forward.8} parent=39 // pred_region
        _
      $region52: #{gblock_forward.8} parent=39 // pred_fallthru
        _
    $region40: #{gblock_forward.8} parent=5 // pred_fallthru
      _
    %p1750 = scmp.le.s32.totalorder 2, %s14
    // Predicated region
    $region53: #{gblock_forward.8} parent=5 // pred_check
      %p1751 = pneg %p1750
    $region54: #{gblock_forward.8} parent=5 // pred_check_branch
      %1753 = sbr.rel (%p1751) target = $region56
    $region55: #{gblock_forward.8} parent=5 // pred_region
      %s1754 = ssub.s32 %s14, 2
      // Predicated region
      $region57: #{gblock_forward.8} parent=55 // pred_check
        %p1755 = pneg %p165
      $region58: #{gblock_forward.8} parent=55 // pred_check_branch
        %1757 = sbr.rel (%p1755) target = $region60
      $region59: #{gblock_forward.8} parent=55 // pred_region
        %p1758 = scmp.lt.s32.totalorder %s20, 3
        %s1759 = scalar_select %p1758, %s20, 3
        %s1760 = smul.addr %s1759, 32
        %s1761 = smul.addr %s1760, 4
        %s1762 = scalar_lea.vmem %s5, %s1761
      $region60: #{gblock_forward.8} parent=55 // pred_fallthru
        _
      // Predicated region
      $region61: #{gblock_forward.8} parent=55 // pred_check
        %p1763 = pneg %p191
      $region62: #{gblock_forward.8} parent=55 // pred_check_branch
        %1765 = sbr.rel (%p1763) target = $region64
      $region63: #{gblock_forward.8} parent=55 // pred_region
        %p1766 = scmp.lt.s32.totalorder %s20, 3
        %s1767 = scalar_select %p1766, %s20, 3
        %s1768 = scalar_lea.vmem %s6, %s1767
      $region64: #{gblock_forward.8} parent=55 // pred_fallthru
        _
      // Predicated region
      $region65: #{gblock_forward.8} parent=55 // pred_check
        %p1769 = pneg %p217
      $region66: #{gblock_forward.8} parent=55 // pred_check_branch
        %1771 = sbr.rel (%p1769) target = $region68
      $region67: #{gblock_forward.8} parent=55 // pred_region
        %p1772 = scmp.lt.s32.totalorder %s20, 3
        %s1773 = scalar_select %p1772, %s20, 3
        %s1774 = scalar_lea.vmem %s7, %s1773
      $region68: #{gblock_forward.8} parent=55 // pred_fallthru
        _
    $region56: #{gblock_forward.8} parent=5 // pred_fallthru
      _
  $region6: #{gblock_forward.8} parent=0 // loop_footer
    %s18 = sadd.s32 1, %s14
  $region7: #{gblock_forward.8} parent=0 // loop_footer_branch
    %13 = sbr.rel target = $region3
  $region8: #{gblock_forward.8} parent=0 // loop_exit
    _

</llo_original>
